<compile_context>
chip_gen: v7x
topology: tpu7x:2x2x1
jax: 0.10.0
libtpu: 0.0.40
codegen_flags: <defaults>
</compile_context>

<pallas_src>
import numpy as np

import jax
import jax.numpy as jnp
from jax import lax
from jax.experimental import pallas as pl
from jax.experimental.pallas import tpu as pltpu

GAP = 8        # 8-row (sublane-tile aligned) zero gap around each image block
CIN0_PAD = 8   # pad the RGB (3) input channels to 8 (zero weights keep math exact)


# ----------------------------------------------------------------------------
# Static model config
# ----------------------------------------------------------------------------
def build_cfg(blocks_seq, planes_seq, in_ch=3, H=16, W=16, in_pool=True):
    cfg = [dict(k=5, p=2, H=H, W=W, cin=in_ch, cin_k=CIN0_PAD,
                cout=planes_seq[0], pool=in_pool)]
    planes = planes_seq[0]
    h, w = (H // 2, W // 2) if in_pool else (H, W)
    for nb, pp in zip(blocks_seq, planes_seq):
        for _ in range(nb):
            cfg.append(dict(k=3, p=1, H=h, W=w, cin=planes, cin_k=planes,
                            cout=pp, pool=False))
            planes = pp
    return cfg


# ----------------------------------------------------------------------------
# Fused whole-network kernel (one grid step == G stacked images)
# ----------------------------------------------------------------------------
def make_kernel(cfg, G):
    L = len(cfg)

    def kernel(*refs):
        # refs = x, (wT_l, bias_l)*L, SE, SO, TE, TO, W_head, b_head,
        #        out, act_buf_1 .. act_buf_{L-1}
        x_ref = refs[0]
        wb = [(refs[1 + 2 * l], refs[2 + 2 * l]) for l in range(L)]
        base = 1 + 2 * L
        se_ref, so_ref, te_ref, to_ref, wh_ref, bh_ref = refs[base:base + 6]
        o_ref = refs[base + 6]
        bufs = refs[base + 7:]

        # Zero ONLY the +-p halo rows each conv actually reads (image rows are
        # fully overwritten every step, so no full-buffer memset).  Done every
        # step so it is correct when the parallel grid is split across cores.
        for l in range(1, L):
            c = cfg[l]
            buf = bufs[l - 1]
            Hn, p = c['H'], c['p']
            lanes = c['W'] * c['cin_k']
            stride = Hn + GAP
            z = jnp.zeros((p, lanes), jnp.float32)
            for g in range(G):
                s0 = GAP + g * stride
                buf[s0 - p:s0, :] = z
                buf[s0 + Hn:s0 + Hn + p, :] = z

        for l, c in enumerate(cfg):
            KH, p, H = c['k'], c['p'], c['H']
            wt_ref, b_ref = wb[l]
            stride = H + GAP
            M = (G - 1) * stride + H                 # output-row span (all images)
            lo, hi = GAP - p, GAP + (G - 1) * stride + H + p

            # Hoisted single bf16 cast of the needed row span (layer 0's slab
            # already arrives in bf16 from the host).
            if l == 0:
                span = x_ref[0, lo:hi, :]
            else:
                span = bufs[l - 1][lo:hi, :].astype(jnp.bfloat16)

            # conv: KH fat bf16 matmuls with block-Toeplitz weights (W taps and
            # W-boundary zero padding folded in); f32 accumulation.
            acc = None
            for kh in range(KH):
                t = jnp.dot(span[kh:kh + M, :], wt_ref[kh],
                            preferred_element_type=jnp.float32)
                acc = t if acc is None else acc + t

            # fused BN (scale folded into weights) + ReLU epilogue, in f32.
            y = jnp.maximum(acc + b_ref[...], 0.0)   # (M, W*Cout)
            # TODO(synk): att='idt' (identity attention) is a no-op.

            if c['pool']:
                # fused 2x2/stride-2 max pool via exact 0/1 selection matrices
                # on the bf16 MXU path (rows then columns).
                y_bf = y.astype(jnp.bfloat16)
                rmax = jnp.maximum(
                    jnp.dot(se_ref[...], y_bf, preferred_element_type=jnp.float32),
                    jnp.dot(so_ref[...], y_bf, preferred_element_type=jnp.float32))
                r_bf = rmax.astype(jnp.bfloat16)
                y = jnp.maximum(
                    jnp.dot(r_bf, te_ref[...], preferred_element_type=jnp.float32),
                    jnp.dot(r_bf, to_ref[...], preferred_element_type=jnp.float32))
                H = H // 2
                img_stride = H                       # image g at y rows [g*H, g*H+H)
            else:
                img_stride = stride                  # image g at y rows [g*stride, ...)

            if l + 1 < L:
                # Store each image's rows at its 8-aligned offset in the next
                # layer's halo buffer (aligned full-tile f32 stores).
                buf = bufs[l]
                stride_n = cfg[l + 1]['H'] + GAP
                for g in range(G):
                    buf[GAP + g * stride_n: GAP + g * stride_n + H, :] = (
                        y[g * img_stride: g * img_stride + H, :])
            else:
                # fused head: per-image spatial row-sum (1/(H*W) folded into
                # W_head) then a tiny bf16 matmul; classes padded to 128 lanes.
                for g in range(G):
                    ysum = jnp.sum(y[g * img_stride: g * img_stride + H, :],
                                   axis=0, keepdims=True)
                    lg = jnp.dot(ysum.astype(jnp.bfloat16), wh_ref[...],
                                 preferred_element_type=jnp.float32) + bh_ref[...]
                    o_ref[0, g:g + 1, :] = lg

    return kernel


def make_forward(cfg, num_classes, G):
    L = len(cfg)
    kernel = make_kernel(cfg, G)
    c0 = cfg[0]
    lane0 = c0['W'] * c0['cin_k']
    R0 = GAP + G * (c0['H'] + GAP)

    scratch_shapes = [
        pltpu.VMEM((GAP + G * (c['H'] + GAP), c['W'] * c['cin_k']), jnp.float32)
        for c in cfg[1:]
    ]

    @jax.jit
    def forward(x_nchw, ops):
        N = x_nchw.shape[0]
        assert N % G == 0
        S = N // G
        # One-time input prep: NCHW -> (rows, W*C) channels-minor, channel pad,
        # G images stacked along rows with 8-row zero gaps; cast to bf16.
        x = jnp.transpose(x_nchw, (0, 2, 3, 1)).astype(jnp.float32)       # NHWC
        x = jnp.pad(x, ((0, 0), (0, 0), (0, 0), (0, c0['cin_k'] - c0['cin'])))
        x = x.reshape(N, c0['H'], lane0)
        x = x.reshape(S, G, c0['H'], lane0)
        x = jnp.pad(x, ((0, 0), (0, 0), (0, GAP), (0, 0)))     # per-image bottom gap
        x = x.reshape(S, G * (c0['H'] + GAP), lane0)
        x = jnp.pad(x, ((0, 0), (GAP, 0), (0, 0)))             # top gap
        x = x.astype(jnp.bfloat16)

        in_specs = [pl.BlockSpec((1, R0, lane0), lambda s: (s, 0, 0))]
        for op in ops:
            in_specs.append(
                pl.BlockSpec(op.shape, (lambda s, nd=op.ndim: (0,) * nd)))

        out = pl.pallas_call(
            kernel,
            out_shape=jax.ShapeDtypeStruct((S, G, 128), jnp.float32),
            grid=(S,),
            in_specs=in_specs,
            out_specs=pl.BlockSpec((1, G, 128), lambda s: (s, 0, 0)),
            scratch_shapes=scratch_shapes,
            compiler_params=pltpu.CompilerParams(
                dimension_semantics=("parallel",)),   # v7x: 2 TCs share the grid
        )(x, *ops)
        return out.reshape(N, 128)[:, :num_classes]

    return forward


# ----------------------------------------------------------------------------
# Parameter init (deterministic, synthetic) + host-side kernel-operand prep
# ----------------------------------------------------------------------------
def init_params(key, cfg, num_classes):
    def conv_bn(k, ks_, cin, cout):
        ks = jax.random.split(k, 5)
        fan_in = ks_ * ks_ * cin
        w = jax.random.normal(ks[0], (ks_, ks_, cin, cout), jnp.float32) * (
            2.0 / fan_in) ** 0.5
        gamma = 1.0 + 0.1 * jax.random.normal(ks[1], (cout,), jnp.float32)
        beta = 0.1 * jax.random.normal(ks[2], (cout,), jnp.float32)
        mean = 0.1 * jax.random.normal(ks[3], (cout,), jnp.float32)
        var = jnp.abs(1.0 + 0.1 * jax.random.normal(ks[4], (cout,), jnp.float32))
        scale = gamma * lax.rsqrt(var + 1e-5)     # eval-mode BN folded to affine
        bias = beta - mean * scale
        return (w, scale, bias)

    keys = jax.random.split(key, len(cfg) + 1)
    conv_params = [conv_bn(keys[i], c['k'], c['cin'], c['cout'])
                   for i, c in enumerate(cfg)]
    kfw, kfb = jax.random.split(keys[-1])
    C = cfg[-1]['cout']
    wfc = jax.random.normal(kfw, (C, num_classes), jnp.float32) / C ** 0.5
    bfc = 0.1 * jax.random.normal(kfb, (num_classes,), jnp.float32)
    return conv_params, (wfc, bfc)


def prepare_params(conv_params, fc_params, cfg, num_classes, G):
    """One-time host-side weight transform into fused-kernel operands."""
    assert cfg[0]['pool'] and not any(c['pool'] for c in cfg[1:])
    assert num_classes <= 128
    ops = []
    for (w, scale, bias), c in zip(conv_params, cfg):
        w = np.asarray(w, np.float32)
        scale = np.asarray(scale, np.float32)
        bias = np.asarray(bias, np.float32)
        KH, KW, cin, cout = w.shape
        if c['cin_k'] != cin:                       # pad RGB channels to 8
            w = np.pad(w, ((0, 0), (0, 0), (0, c['cin_k'] - cin), (0, 0)))
            cin = c['cin_k']
        w = w * scale[None, None, None, :]          # fold BN scale into weights
        Wsp, p = c['W'], c['p']
        # block-Toeplitz per-kh matrices: (W*Cin, W*Cout); W-boundary zero
        # padding is encoded by the absent blocks.
        wt = np.zeros((KH, Wsp * cin, Wsp * cout), np.float32)
        for kh in range(KH):
            for j in range(Wsp):
                for kw in range(KW):
                    jj = j + kw - p
                    if 0 <= jj < Wsp:
                        wt[kh, jj * cin:(jj + 1) * cin,
                           j * cout:(j + 1) * cout] = w[kh, kw]
        bias_t = np.tile(bias, Wsp)[None, :]        # (1, W*Cout) lane vector
        ops.append(jnp.asarray(wt, jnp.bfloat16))   # bf16 MXU inputs
        ops.append(jnp.asarray(bias_t, jnp.float32))

    # 2x2 max-pool selection matrices (exact 0/1 selections -> bf16 is exact).
    c0 = cfg[0]
    H0, W0, C0 = c0['H'], c0['W'], c0['cout']
    stride0 = H0 + GAP
    M0 = (G - 1) * stride0 + H0
    Hh, Wh = H0 // 2, W0 // 2
    se = np.zeros((G * Hh, M0), np.float32)
    so = np.zeros((G * Hh, M0), np.float32)
    for g in range(G):
        for i in range(Hh):
            se[g * Hh + i, g * stride0 + 2 * i] = 1.0
            so[g * Hh + i, g * stride0 + 2 * i + 1] = 1.0
    te = np.zeros((W0 * C0, Wh * C0), np.float32)
    to = np.zeros((W0 * C0, Wh * C0), np.float32)
    eye = np.eye(C0, dtype=np.float32)
    for j2 in range(Wh):
        te[(2 * j2) * C0:(2 * j2 + 1) * C0, j2 * C0:(j2 + 1) * C0] = eye
        to[(2 * j2 + 1) * C0:(2 * j2 + 2) * C0, j2 * C0:(j2 + 1) * C0] = eye
    ops += [jnp.asarray(a, jnp.bfloat16) for a in (se, so, te, to)]

    # Head: fold 1/(H*W) average pool into the classifier, pad classes to 128.
    wfc = np.asarray(fc_params[0], np.float32)
    bfc = np.asarray(fc_params[1], np.float32)
    cl = cfg[-1]
    wh = np.tile(wfc / (cl['H'] * cl['W']), (cl['W'], 1))   # (W*C, nc)
    wh = np.pad(wh, ((0, 0), (0, 128 - num_classes)))
    bh = np.pad(bfc, (0, 128 - num_classes))[None, :]
    ops += [jnp.asarray(wh, jnp.bfloat16), jnp.asarray(bh, jnp.float32)]
    return tuple(ops)


# ----------------------------------------------------------------------------
# Pure-JAX reference (same math, f32, independent algorithm/layout)
# ----------------------------------------------------------------------------
def reference_forward(x_nchw, conv_params, fc_params, cfg):
    x = jnp.transpose(x_nchw, (0, 2, 3, 1)).astype(jnp.float32)
    for (w, scale, bias), c in zip(conv_params, cfg):
        y = lax.conv_general_dilated(
            x, w, window_strides=(1, 1),
            padding=[(c['p'], c['p']), (c['p'], c['p'])],
            dimension_numbers=("NHWC", "HWIO", "NHWC"),
            precision=lax.Precision.HIGHEST)
        x = jnp.maximum(y * scale + bias, 0.0)
        if c['pool']:
            N, H, W, C = x.shape
            x = x.reshape(N, H // 2, 2, W // 2, 2, C).max(axis=(2, 4))
    pooled = x.mean(axis=(1, 2))
    return jnp.dot(pooled, fc_params[0],
                   precision=lax.Precision.HIGHEST) + fc_params[1]


# ----------------------------------------------------------------------------
if __name__ == "__main__":
    # Small-but-consistent instantiation of VGG_CIFAR(blocks_seq, planes_seq).
    blocks_seq = [1, 2, 2, 1]
    planes_seq = [16, 32, 32, 64]
    num_classes = 10

    key = jax.random.PRNGKey(0)
    kx, kp = jax.random.split(key)
    x = jax.random.normal(kx, (2, 3, 16, 16), jnp.float32)   # NCHW, like PyTorch

    cfg = build_cfg(blocks_seq, planes_seq)
    conv_params, fc_params = init_params(kp, cfg, num_classes)

    ref = reference_forward(x, conv_params, fc_params, cfg)
    ref_mag = float(jnp.max(jnp.abs(ref))) + 1.0

    # Config G=1: 1 image per grid step (2 parallel steps -> both v7x TCs busy).
    # Config G=2: whole batch stacked along rows in a single grid step (fatter
    # MXU M dimension / fewer invocations; the v5e/v6e recommendation).
    for imgs_per_step in (1, 2):
        ops = prepare_params(conv_params, fc_params, cfg, num_classes,
                             imgs_per_step)
        forward = make_forward(cfg, num_classes, imgs_per_step)
        out = jax.block_until_ready(forward(x, ops))
        assert out.shape == (2, num_classes), out.shape
        max_err = float(jnp.max(jnp.abs(out - ref)))
        # 5e-2 relative tolerance accommodates the deliberate bf16 MXU inputs
        # (f32 accumulation / epilogue); the all-f32 reference is ground truth.
        assert max_err <= 5e-2 * ref_mag, (
            f"mismatch (G={imgs_per_step}): max_err={max_err}, ref_mag={ref_mag}")

    print("KERNEL_OK")
</pallas_src>

<mosaic_0001>
module attributes {stable_mosaic.version = 11 : i64} {
  func.func @kernel(%arg0: i32, %arg1: memref<1x32x128xbf16, #tpu.memory_space<vmem>>, %arg2: memref<5x128x256xbf16, #tpu.memory_space<vmem>>, %arg3: memref<1x256xf32, #tpu.memory_space<vmem>>, %arg4: memref<3x128x128xbf16, #tpu.memory_space<vmem>>, %arg5: memref<1x128xf32, #tpu.memory_space<vmem>>, %arg6: memref<3x128x256xbf16, #tpu.memory_space<vmem>>, %arg7: memref<1x256xf32, #tpu.memory_space<vmem>>, %arg8: memref<3x256x256xbf16, #tpu.memory_space<vmem>>, %arg9: memref<1x256xf32, #tpu.memory_space<vmem>>, %arg10: memref<3x256x256xbf16, #tpu.memory_space<vmem>>, %arg11: memref<1x256xf32, #tpu.memory_space<vmem>>, %arg12: memref<3x256x256xbf16, #tpu.memory_space<vmem>>, %arg13: memref<1x256xf32, #tpu.memory_space<vmem>>, %arg14: memref<3x256x512xbf16, #tpu.memory_space<vmem>>, %arg15: memref<1x512xf32, #tpu.memory_space<vmem>>, %arg16: memref<8x16xbf16, #tpu.memory_space<vmem>>, %arg17: memref<8x16xbf16, #tpu.memory_space<vmem>>, %arg18: memref<256x128xbf16, #tpu.memory_space<vmem>>, %arg19: memref<256x128xbf16, #tpu.memory_space<vmem>>, %arg20: memref<512x128xbf16, #tpu.memory_space<vmem>>, %arg21: memref<1x128xf32, #tpu.memory_space<vmem>>, %arg22: memref<1x1x128xf32, #tpu.memory_space<vmem>>, %arg23: memref<24x128xf32, #tpu.memory_space<vmem>>, %arg24: memref<24x128xf32, #tpu.memory_space<vmem>>, %arg25: memref<24x256xf32, #tpu.memory_space<vmem>>, %arg26: memref<24x256xf32, #tpu.memory_space<vmem>>, %arg27: memref<24x256xf32, #tpu.memory_space<vmem>>, %arg28: memref<24x256xf32, #tpu.memory_space<vmem>>) attributes {dimension_semantics = [#tpu.dimension_semantics<parallel>], iteration_bounds = array<i64: 2>, scalar_prefetch = 0 : i64, scratch_operands = 6 : i64, tpu.core_type = #tpu.core_type<tc>, window_params = [{transform_indices = @transform_0, window_bounds = array<i64: 1, 32, 128>}, {pipeline_mode = #tpu.pipeline_mode<synchronous>, transform_indices = @transform_1, window_bounds = array<i64: 5, 128, 256>}, {pipeline_mode = #tpu.pipeline_mode<synchronous>, transform_indices = @transform_2, window_bounds = array<i64: 1, 256>}, {pipeline_mode = #tpu.pipeline_mode<synchronous>, transform_indices = @transform_3, window_bounds = array<i64: 3, 128, 128>}, {pipeline_mode = #tpu.pipeline_mode<synchronous>, transform_indices = @transform_4, window_bounds = array<i64: 1, 128>}, {pipeline_mode = #tpu.pipeline_mode<synchronous>, transform_indices = @transform_5, window_bounds = array<i64: 3, 128, 256>}, {pipeline_mode = #tpu.pipeline_mode<synchronous>, transform_indices = @transform_6, window_bounds = array<i64: 1, 256>}, {pipeline_mode = #tpu.pipeline_mode<synchronous>, transform_indices = @transform_7, window_bounds = array<i64: 3, 256, 256>}, {pipeline_mode = #tpu.pipeline_mode<synchronous>, transform_indices = @transform_8, window_bounds = array<i64: 1, 256>}, {pipeline_mode = #tpu.pipeline_mode<synchronous>, transform_indices = @transform_9, window_bounds = array<i64: 3, 256, 256>}, {pipeline_mode = #tpu.pipeline_mode<synchronous>, transform_indices = @transform_10, window_bounds = array<i64: 1, 256>}, {pipeline_mode = #tpu.pipeline_mode<synchronous>, transform_indices = @transform_11, window_bounds = array<i64: 3, 256, 256>}, {pipeline_mode = #tpu.pipeline_mode<synchronous>, transform_indices = @transform_12, window_bounds = array<i64: 1, 256>}, {pipeline_mode = #tpu.pipeline_mode<synchronous>, transform_indices = @transform_13, window_bounds = array<i64: 3, 256, 512>}, {pipeline_mode = #tpu.pipeline_mode<synchronous>, transform_indices = @transform_14, window_bounds = array<i64: 1, 512>}, {pipeline_mode = #tpu.pipeline_mode<synchronous>, transform_indices = @transform_15, window_bounds = array<i64: 8, 16>}, {pipeline_mode = #tpu.pipeline_mode<synchronous>, transform_indices = @transform_16, window_bounds = array<i64: 8, 16>}, {pipeline_mode = #tpu.pipeline_mode<synchronous>, transform_indices = @transform_17, window_bounds = array<i64: 256, 128>}, {pipeline_mode = #tpu.pipeline_mode<synchronous>, transform_indices = @transform_18, window_bounds = array<i64: 256, 128>}, {pipeline_mode = #tpu.pipeline_mode<synchronous>, transform_indices = @transform_19, window_bounds = array<i64: 512, 128>}, {pipeline_mode = #tpu.pipeline_mode<synchronous>, transform_indices = @transform_20, window_bounds = array<i64: 1, 128>}, {transform_indices = @transform_21, window_bounds = array<i64: 1, 1, 128>}]} {
    %cst = arith.constant 0.000000e+00 : f32
    %0 = vector.broadcast %cst : f32 to vector<1x128xf32>
    %c7 = arith.constant 7 : index
    %c0 = arith.constant 0 : index
    %1 = vector.load %arg23[%c7, %c0] : memref<24x128xf32, #tpu.memory_space<vmem>>, vector<1x128xf32>
    tpu.vector_store %arg23[%c7, %c0], %0 {strides = array<i32>} : memref<24x128xf32, #tpu.memory_space<vmem>>, vector<1x128xf32>,
    %c16 = arith.constant 16 : index
    %c0_0 = arith.constant 0 : index
    %2 = vector.load %arg23[%c16, %c0_0] : memref<24x128xf32, #tpu.memory_space<vmem>>, vector<1x128xf32>
    tpu.vector_store %arg23[%c16, %c0_0], %0 {strides = array<i32>} : memref<24x128xf32, #tpu.memory_space<vmem>>, vector<1x128xf32>,
    %cst_1 = arith.constant 0.000000e+00 : f32
    %3 = vector.broadcast %cst_1 : f32 to vector<1x128xf32>
    %c7_2 = arith.constant 7 : index
    %c0_3 = arith.constant 0 : index
    %4 = vector.load %arg24[%c7_2, %c0_3] : memref<24x128xf32, #tpu.memory_space<vmem>>, vector<1x128xf32>
    tpu.vector_store %arg24[%c7_2, %c0_3], %3 {strides = array<i32>} : memref<24x128xf32, #tpu.memory_space<vmem>>, vector<1x128xf32>,
    %c16_4 = arith.constant 16 : index
    %c0_5 = arith.constant 0 : index
    %5 = vector.load %arg24[%c16_4, %c0_5] : memref<24x128xf32, #tpu.memory_space<vmem>>, vector<1x128xf32>
    tpu.vector_store %arg24[%c16_4, %c0_5], %3 {strides = array<i32>} : memref<24x128xf32, #tpu.memory_space<vmem>>, vector<1x128xf32>,
    %cst_6 = arith.constant 0.000000e+00 : f32
    %6 = vector.broadcast %cst_6 : f32 to vector<1x256xf32>
    %c7_7 = arith.constant 7 : index
    %c0_8 = arith.constant 0 : index
    %7 = vector.load %arg25[%c7_7, %c0_8] : memref<24x256xf32, #tpu.memory_space<vmem>>, vector<1x256xf32>
    tpu.vector_store %arg25[%c7_7, %c0_8], %6 {strides = array<i32>} : memref<24x256xf32, #tpu.memory_space<vmem>>, vector<1x256xf32>,
    %c16_9 = arith.constant 16 : index
    %c0_10 = arith.constant 0 : index
    %8 = vector.load %arg25[%c16_9, %c0_10] : memref<24x256xf32, #tpu.memory_space<vmem>>, vector<1x256xf32>
    tpu.vector_store %arg25[%c16_9, %c0_10], %6 {strides = array<i32>} : memref<24x256xf32, #tpu.memory_space<vmem>>, vector<1x256xf32>,
    %cst_11 = arith.constant 0.000000e+00 : f32
    %9 = vector.broadcast %cst_11 : f32 to vector<1x256xf32>
    %c7_12 = arith.constant 7 : index
    %c0_13 = arith.constant 0 : index
    %10 = vector.load %arg26[%c7_12, %c0_13] : memref<24x256xf32, #tpu.memory_space<vmem>>, vector<1x256xf32>
    tpu.vector_store %arg26[%c7_12, %c0_13], %9 {strides = array<i32>} : memref<24x256xf32, #tpu.memory_space<vmem>>, vector<1x256xf32>,
    %c16_14 = arith.constant 16 : index
    %c0_15 = arith.constant 0 : index
    %11 = vector.load %arg26[%c16_14, %c0_15] : memref<24x256xf32, #tpu.memory_space<vmem>>, vector<1x256xf32>
    tpu.vector_store %arg26[%c16_14, %c0_15], %9 {strides = array<i32>} : memref<24x256xf32, #tpu.memory_space<vmem>>, vector<1x256xf32>,
    %cst_16 = arith.constant 0.000000e+00 : f32
    %12 = vector.broadcast %cst_16 : f32 to vector<1x256xf32>
    %c7_17 = arith.constant 7 : index
    %c0_18 = arith.constant 0 : index
    %13 = vector.load %arg27[%c7_17, %c0_18] : memref<24x256xf32, #tpu.memory_space<vmem>>, vector<1x256xf32>
    tpu.vector_store %arg27[%c7_17, %c0_18], %12 {strides = array<i32>} : memref<24x256xf32, #tpu.memory_space<vmem>>, vector<1x256xf32>,
    %c16_19 = arith.constant 16 : index
    %c0_20 = arith.constant 0 : index
    %14 = vector.load %arg27[%c16_19, %c0_20] : memref<24x256xf32, #tpu.memory_space<vmem>>, vector<1x256xf32>
    tpu.vector_store %arg27[%c16_19, %c0_20], %12 {strides = array<i32>} : memref<24x256xf32, #tpu.memory_space<vmem>>, vector<1x256xf32>,
    %cst_21 = arith.constant 0.000000e+00 : f32
    %15 = vector.broadcast %cst_21 : f32 to vector<1x256xf32>
    %c7_22 = arith.constant 7 : index
    %c0_23 = arith.constant 0 : index
    %16 = vector.load %arg28[%c7_22, %c0_23] : memref<24x256xf32, #tpu.memory_space<vmem>>, vector<1x256xf32>
    tpu.vector_store %arg28[%c7_22, %c0_23], %15 {strides = array<i32>} : memref<24x256xf32, #tpu.memory_space<vmem>>, vector<1x256xf32>,
    %c16_24 = arith.constant 16 : index
    %c0_25 = arith.constant 0 : index
    %17 = vector.load %arg28[%c16_24, %c0_25] : memref<24x256xf32, #tpu.memory_space<vmem>>, vector<1x256xf32>
    tpu.vector_store %arg28[%c16_24, %c0_25], %15 {strides = array<i32>} : memref<24x256xf32, #tpu.memory_space<vmem>>, vector<1x256xf32>,
    %c0_26 = arith.constant 0 : index
    %c6 = arith.constant 6 : index
    %c0_27 = arith.constant 0 : index
    %18 = vector.load %arg1[%c0_26, %c6, %c0_27] : memref<1x32x128xbf16, #tpu.memory_space<vmem>>, vector<1x20x128xbf16>
    %19 = vector.shape_cast %18 : vector<1x20x128xbf16> to vector<20x128xbf16>
    %20 = vector.extract_strided_slice %19 {offsets = [0, 0], sizes = [16, 128], strides = [1, 1]} : vector<20x128xbf16> to vector<16x128xbf16>
    %c0_28 = arith.constant 0 : index
    %c0_29 = arith.constant 0 : index
    %c0_30 = arith.constant 0 : index
    %21 = vector.load %arg2[%c0_28, %c0_29, %c0_30] : memref<5x128x256xbf16, #tpu.memory_space<vmem>>, vector<1x128x256xbf16>
    %22 = vector.shape_cast %21 : vector<1x128x256xbf16> to vector<128x256xbf16>
    %cst_31 = arith.constant dense<0.000000e+00> : vector<16x256xf32>
    %23 = tpu.matmul %20, %22, %cst_31 {dimension_numbers = #tpu.dot_dimension_numbers<[1], [0], [0], [1], [0, 0, 1, 1], [], []>} : vector<16x128xbf16>, vector<128x256xbf16>, vector<16x256xf32> -> vector<16x256xf32>
    %24 = vector.extract_strided_slice %19 {offsets = [1, 0], sizes = [16, 128], strides = [1, 1]} : vector<20x128xbf16> to vector<16x128xbf16>
    %c1 = arith.constant 1 : index
    %c0_32 = arith.constant 0 : index
    %c0_33 = arith.constant 0 : index
    %25 = vector.load %arg2[%c1, %c0_32, %c0_33] : memref<5x128x256xbf16, #tpu.memory_space<vmem>>, vector<1x128x256xbf16>
    %26 = vector.shape_cast %25 : vector<1x128x256xbf16> to vector<128x256xbf16>
    %cst_34 = arith.constant dense<0.000000e+00> : vector<16x256xf32>
    %27 = tpu.matmul %24, %26, %cst_34 {dimension_numbers = #tpu.dot_dimension_numbers<[1], [0], [0], [1], [0, 0, 1, 1], [], []>} : vector<16x128xbf16>, vector<128x256xbf16>, vector<16x256xf32> -> vector<16x256xf32>
    %28 = arith.addf %23, %27 : vector<16x256xf32>
    %29 = vector.extract_strided_slice %19 {offsets = [2, 0], sizes = [16, 128], strides = [1, 1]} : vector<20x128xbf16> to vector<16x128xbf16>
    %c2 = arith.constant 2 : index
    %c0_35 = arith.constant 0 : index
    %c0_36 = arith.constant 0 : index
    %30 = vector.load %arg2[%c2, %c0_35, %c0_36] : memref<5x128x256xbf16, #tpu.memory_space<vmem>>, vector<1x128x256xbf16>
    %31 = vector.shape_cast %30 : vector<1x128x256xbf16> to vector<128x256xbf16>
    %cst_37 = arith.constant dense<0.000000e+00> : vector<16x256xf32>
    %32 = tpu.matmul %29, %31, %cst_37 {dimension_numbers = #tpu.dot_dimension_numbers<[1], [0], [0], [1], [0, 0, 1, 1], [], []>} : vector<16x128xbf16>, vector<128x256xbf16>, vector<16x256xf32> -> vector<16x256xf32>
    %33 = arith.addf %28, %32 : vector<16x256xf32>
    %34 = vector.extract_strided_slice %19 {offsets = [3, 0], sizes = [16, 128], strides = [1, 1]} : vector<20x128xbf16> to vector<16x128xbf16>
    %c3 = arith.constant 3 : index
    %c0_38 = arith.constant 0 : index
    %c0_39 = arith.constant 0 : index
    %35 = vector.load %arg2[%c3, %c0_38, %c0_39] : memref<5x128x256xbf16, #tpu.memory_space<vmem>>, vector<1x128x256xbf16>
    %36 = vector.shape_cast %35 : vector<1x128x256xbf16> to vector<128x256xbf16>
    %cst_40 = arith.constant dense<0.000000e+00> : vector<16x256xf32>
    %37 = tpu.matmul %34, %36, %cst_40 {dimension_numbers = #tpu.dot_dimension_numbers<[1], [0], [0], [1], [0, 0, 1, 1], [], []>} : vector<16x128xbf16>, vector<128x256xbf16>, vector<16x256xf32> -> vector<16x256xf32>
    %38 = arith.addf %33, %37 : vector<16x256xf32>
    %39 = vector.extract_strided_slice %19 {offsets = [4, 0], sizes = [16, 128], strides = [1, 1]} : vector<20x128xbf16> to vector<16x128xbf16>
    %c4 = arith.constant 4 : index
    %c0_41 = arith.constant 0 : index
    %c0_42 = arith.constant 0 : index
    %40 = vector.load %arg2[%c4, %c0_41, %c0_42] : memref<5x128x256xbf16, #tpu.memory_space<vmem>>, vector<1x128x256xbf16>
    %41 = vector.shape_cast %40 : vector<1x128x256xbf16> to vector<128x256xbf16>
    %cst_43 = arith.constant dense<0.000000e+00> : vector<16x256xf32>
    %42 = tpu.matmul %39, %41, %cst_43 {dimension_numbers = #tpu.dot_dimension_numbers<[1], [0], [0], [1], [0, 0, 1, 1], [], []>} : vector<16x128xbf16>, vector<128x256xbf16>, vector<16x256xf32> -> vector<16x256xf32>
    %43 = arith.addf %38, %42 : vector<16x256xf32>
    %c0_44 = arith.constant 0 : index
    %c0_45 = arith.constant 0 : index
    %44 = vector.load %arg3[%c0_44, %c0_45] : memref<1x256xf32, #tpu.memory_space<vmem>>, vector<1x256xf32>
    %45 = vector.broadcast %44 : vector<1x256xf32> to vector<16x256xf32>
    %46 = arith.addf %43, %45 : vector<16x256xf32>
    %cst_46 = arith.constant 0.000000e+00 : f32
    %47 = vector.broadcast %cst_46 : f32 to vector<16x256xf32>
    %48 = arith.maximumf %46, %47 : vector<16x256xf32>
    %49 = arith.truncf %48 : vector<16x256xf32> to vector<16x256xbf16>
    %c0_47 = arith.constant 0 : index
    %c0_48 = arith.constant 0 : index
    %50 = vector.load %arg16[%c0_47, %c0_48] : memref<8x16xbf16, #tpu.memory_space<vmem>>, vector<8x16xbf16>
    %cst_49 = arith.constant dense<0.000000e+00> : vector<8x256xf32>
    %51 = tpu.matmul %50, %49, %cst_49 {dimension_numbers = #tpu.dot_dimension_numbers<[1], [0], [0], [1], [0, 0, 1, 1], [], []>} : vector<8x16xbf16>, vector<16x256xbf16>, vector<8x256xf32> -> vector<8x256xf32>
    %c0_50 = arith.constant 0 : index
    %c0_51 = arith.constant 0 : index
    %52 = vector.load %arg17[%c0_50, %c0_51] : memref<8x16xbf16, #tpu.memory_space<vmem>>, vector<8x16xbf16>
    %cst_52 = arith.constant dense<0.000000e+00> : vector<8x256xf32>
    %53 = tpu.matmul %52, %49, %cst_52 {dimension_numbers = #tpu.dot_dimension_numbers<[1], [0], [0], [1], [0, 0, 1, 1], [], []>} : vector<8x16xbf16>, vector<16x256xbf16>, vector<8x256xf32> -> vector<8x256xf32>
    %54 = arith.maximumf %51, %53 : vector<8x256xf32>
    %55 = arith.truncf %54 : vector<8x256xf32> to vector<8x256xbf16>
    %c0_53 = arith.constant 0 : index
    %c0_54 = arith.constant 0 : index
    %56 = vector.load %arg18[%c0_53, %c0_54] : memref<256x128xbf16, #tpu.memory_space<vmem>>, vector<256x128xbf16>
    %cst_55 = arith.constant dense<0.000000e+00> : vector<8x128xf32>
    %57 = tpu.matmul %55, %56, %cst_55 {dimension_numbers = #tpu.dot_dimension_numbers<[1], [0], [0], [1], [0, 0, 1, 1], [], []>} : vector<8x256xbf16>, vector<256x128xbf16>, vector<8x128xf32> -> vector<8x128xf32>
    %c0_56 = arith.constant 0 : index
    %c0_57 = arith.constant 0 : index
    %58 = vector.load %arg19[%c0_56, %c0_57] : memref<256x128xbf16, #tpu.memory_space<vmem>>, vector<256x128xbf16>
    %cst_58 = arith.constant dense<0.000000e+00> : vector<8x128xf32>
    %59 = tpu.matmul %55, %58, %cst_58 {dimension_numbers = #tpu.dot_dimension_numbers<[1], [0], [0], [1], [0, 0, 1, 1], [], []>} : vector<8x256xbf16>, vector<256x128xbf16>, vector<8x128xf32> -> vector<8x128xf32>
    %60 = arith.maximumf %57, %59 : vector<8x128xf32>
    %c8 = arith.constant 8 : index
    %c0_59 = arith.constant 0 : index
    %61 = vector.load %arg23[%c8, %c0_59] : memref<24x128xf32, #tpu.memory_space<vmem>>, vector<8x128xf32>
    tpu.vector_store %arg23[%c8, %c0_59], %60 {strides = array<i32>} : memref<24x128xf32, #tpu.memory_space<vmem>>, vector<8x128xf32>,
    %c7_60 = arith.constant 7 : index
    %c0_61 = arith.constant 0 : index
    %62 = vector.load %arg23[%c7_60, %c0_61] : memref<24x128xf32, #tpu.memory_space<vmem>>, vector<10x128xf32>
    %63 = arith.truncf %62 : vector<10x128xf32> to vector<10x128xbf16>
    %64 = vector.extract_strided_slice %63 {offsets = [0, 0], sizes = [8, 128], strides = [1, 1]} : vector<10x128xbf16> to vector<8x128xbf16>
    %c0_62 = arith.constant 0 : index
    %c0_63 = arith.constant 0 : index
    %c0_64 = arith.constant 0 : index
    %65 = vector.load %arg4[%c0_62, %c0_63, %c0_64] : memref<3x128x128xbf16, #tpu.memory_space<vmem>>, vector<1x128x128xbf16>
    %66 = vector.shape_cast %65 : vector<1x128x128xbf16> to vector<128x128xbf16>
    %cst_65 = arith.constant dense<0.000000e+00> : vector<8x128xf32>
    %67 = tpu.matmul %64, %66, %cst_65 {dimension_numbers = #tpu.dot_dimension_numbers<[1], [0], [0], [1], [0, 0, 1, 1], [], []>} : vector<8x128xbf16>, vector<128x128xbf16>, vector<8x128xf32> -> vector<8x128xf32>
    %68 = vector.extract_strided_slice %63 {offsets = [1, 0], sizes = [8, 128], strides = [1, 1]} : vector<10x128xbf16> to vector<8x128xbf16>
    %c1_66 = arith.constant 1 : index
    %c0_67 = arith.constant 0 : index
    %c0_68 = arith.constant 0 : index
    %69 = vector.load %arg4[%c1_66, %c0_67, %c0_68] : memref<3x128x128xbf16, #tpu.memory_space<vmem>>, vector<1x128x128xbf16>
    %70 = vector.shape_cast %69 : vector<1x128x128xbf16> to vector<128x128xbf16>
    %cst_69 = arith.constant dense<0.000000e+00> : vector<8x128xf32>
    %71 = tpu.matmul %68, %70, %cst_69 {dimension_numbers = #tpu.dot_dimension_numbers<[1], [0], [0], [1], [0, 0, 1, 1], [], []>} : vector<8x128xbf16>, vector<128x128xbf16>, vector<8x128xf32> -> vector<8x128xf32>
    %72 = arith.addf %67, %71 : vector<8x128xf32>
    %73 = vector.extract_strided_slice %63 {offsets = [2, 0], sizes = [8, 128], strides = [1, 1]} : vector<10x128xbf16> to vector<8x128xbf16>
    %c2_70 = arith.constant 2 : index
    %c0_71 = arith.constant 0 : index
    %c0_72 = arith.constant 0 : index
    %74 = vector.load %arg4[%c2_70, %c0_71, %c0_72] : memref<3x128x128xbf16, #tpu.memory_space<vmem>>, vector<1x128x128xbf16>
    %75 = vector.shape_cast %74 : vector<1x128x128xbf16> to vector<128x128xbf16>
    %cst_73 = arith.constant dense<0.000000e+00> : vector<8x128xf32>
    %76 = tpu.matmul %73, %75, %cst_73 {dimension_numbers = #tpu.dot_dimension_numbers<[1], [0], [0], [1], [0, 0, 1, 1], [], []>} : vector<8x128xbf16>, vector<128x128xbf16>, vector<8x128xf32> -> vector<8x128xf32>
    %77 = arith.addf %72, %76 : vector<8x128xf32>
    %c0_74 = arith.constant 0 : index
    %c0_75 = arith.constant 0 : index
    %78 = vector.load %arg5[%c0_74, %c0_75] : memref<1x128xf32, #tpu.memory_space<vmem>>, vector<1x128xf32>
    %79 = vector.broadcast %78 : vector<1x128xf32> to vector<8x128xf32>
    %80 = arith.addf %77, %79 : vector<8x128xf32>
    %cst_76 = arith.constant 0.000000e+00 : f32
    %81 = vector.broadcast %cst_76 : f32 to vector<8x128xf32>
    %82 = arith.maximumf %80, %81 : vector<8x128xf32>
    %c8_77 = arith.constant 8 : index
    %c0_78 = arith.constant 0 : index
    %83 = vector.load %arg24[%c8_77, %c0_78] : memref<24x128xf32, #tpu.memory_space<vmem>>, vector<8x128xf32>
    tpu.vector_store %arg24[%c8_77, %c0_78], %82 {strides = array<i32>} : memref<24x128xf32, #tpu.memory_space<vmem>>, vector<8x128xf32>,
    %c7_79 = arith.constant 7 : index
    %c0_80 = arith.constant 0 : index
    %84 = vector.load %arg24[%c7_79, %c0_80] : memref<24x128xf32, #tpu.memory_space<vmem>>, vector<10x128xf32>
    %85 = arith.truncf %84 : vector<10x128xf32> to vector<10x128xbf16>
    %86 = vector.extract_strided_slice %85 {offsets = [0, 0], sizes = [8, 128], strides = [1, 1]} : vector<10x128xbf16> to vector<8x128xbf16>
    %c0_81 = arith.constant 0 : index
    %c0_82 = arith.constant 0 : index
    %c0_83 = arith.constant 0 : index
    %87 = vector.load %arg6[%c0_81, %c0_82, %c0_83] : memref<3x128x256xbf16, #tpu.memory_space<vmem>>, vector<1x128x256xbf16>
    %88 = vector.shape_cast %87 : vector<1x128x256xbf16> to vector<128x256xbf16>
    %cst_84 = arith.constant dense<0.000000e+00> : vector<8x256xf32>
    %89 = tpu.matmul %86, %88, %cst_84 {dimension_numbers = #tpu.dot_dimension_numbers<[1], [0], [0], [1], [0, 0, 1, 1], [], []>} : vector<8x128xbf16>, vector<128x256xbf16>, vector<8x256xf32> -> vector<8x256xf32>
    %90 = vector.extract_strided_slice %85 {offsets = [1, 0], sizes = [8, 128], strides = [1, 1]} : vector<10x128xbf16> to vector<8x128xbf16>
    %c1_85 = arith.constant 1 : index
    %c0_86 = arith.constant 0 : index
    %c0_87 = arith.constant 0 : index
    %91 = vector.load %arg6[%c1_85, %c0_86, %c0_87] : memref<3x128x256xbf16, #tpu.memory_space<vmem>>, vector<1x128x256xbf16>
    %92 = vector.shape_cast %91 : vector<1x128x256xbf16> to vector<128x256xbf16>
    %cst_88 = arith.constant dense<0.000000e+00> : vector<8x256xf32>
    %93 = tpu.matmul %90, %92, %cst_88 {dimension_numbers = #tpu.dot_dimension_numbers<[1], [0], [0], [1], [0, 0, 1, 1], [], []>} : vector<8x128xbf16>, vector<128x256xbf16>, vector<8x256xf32> -> vector<8x256xf32>
    %94 = arith.addf %89, %93 : vector<8x256xf32>
    %95 = vector.extract_strided_slice %85 {offsets = [2, 0], sizes = [8, 128], strides = [1, 1]} : vector<10x128xbf16> to vector<8x128xbf16>
    %c2_89 = arith.constant 2 : index
    %c0_90 = arith.constant 0 : index
    %c0_91 = arith.constant 0 : index
    %96 = vector.load %arg6[%c2_89, %c0_90, %c0_91] : memref<3x128x256xbf16, #tpu.memory_space<vmem>>, vector<1x128x256xbf16>
    %97 = vector.shape_cast %96 : vector<1x128x256xbf16> to vector<128x256xbf16>
    %cst_92 = arith.constant dense<0.000000e+00> : vector<8x256xf32>
    %98 = tpu.matmul %95, %97, %cst_92 {dimension_numbers = #tpu.dot_dimension_numbers<[1], [0], [0], [1], [0, 0, 1, 1], [], []>} : vector<8x128xbf16>, vector<128x256xbf16>, vector<8x256xf32> -> vector<8x256xf32>
    %99 = arith.addf %94, %98 : vector<8x256xf32>
    %c0_93 = arith.constant 0 : index
    %c0_94 = arith.constant 0 : index
    %100 = vector.load %arg7[%c0_93, %c0_94] : memref<1x256xf32, #tpu.memory_space<vmem>>, vector<1x256xf32>
    %101 = vector.broadcast %100 : vector<1x256xf32> to vector<8x256xf32>
    %102 = arith.addf %99, %101 : vector<8x256xf32>
    %cst_95 = arith.constant 0.000000e+00 : f32
    %103 = vector.broadcast %cst_95 : f32 to vector<8x256xf32>
    %104 = arith.maximumf %102, %103 : vector<8x256xf32>
    %c8_96 = arith.constant 8 : index
    %c0_97 = arith.constant 0 : index
    %105 = vector.load %arg25[%c8_96, %c0_97] : memref<24x256xf32, #tpu.memory_space<vmem>>, vector<8x256xf32>
    tpu.vector_store %arg25[%c8_96, %c0_97], %104 {strides = array<i32>} : memref<24x256xf32, #tpu.memory_space<vmem>>, vector<8x256xf32>,
    %c7_98 = arith.constant 7 : index
    %c0_99 = arith.constant 0 : index
    %106 = vector.load %arg25[%c7_98, %c0_99] : memref<24x256xf32, #tpu.memory_space<vmem>>, vector<10x256xf32>
    %107 = arith.truncf %106 : vector<10x256xf32> to vector<10x256xbf16>
    %108 = vector.extract_strided_slice %107 {offsets = [0, 0], sizes = [8, 256], strides = [1, 1]} : vector<10x256xbf16> to vector<8x256xbf16>
    %c0_100 = arith.constant 0 : index
    %c0_101 = arith.constant 0 : index
    %c0_102 = arith.constant 0 : index
    %109 = vector.load %arg8[%c0_100, %c0_101, %c0_102] : memref<3x256x256xbf16, #tpu.memory_space<vmem>>, vector<1x256x256xbf16>
    %110 = vector.shape_cast %109 : vector<1x256x256xbf16> to vector<256x256xbf16>
    %cst_103 = arith.constant dense<0.000000e+00> : vector<8x256xf32>
    %111 = tpu.matmul %108, %110, %cst_103 {dimension_numbers = #tpu.dot_dimension_numbers<[1], [0], [0], [1], [0, 0, 1, 1], [], []>} : vector<8x256xbf16>, vector<256x256xbf16>, vector<8x256xf32> -> vector<8x256xf32>
    %112 = vector.extract_strided_slice %107 {offsets = [1, 0], sizes = [8, 256], strides = [1, 1]} : vector<10x256xbf16> to vector<8x256xbf16>
    %c1_104 = arith.constant 1 : index
    %c0_105 = arith.constant 0 : index
    %c0_106 = arith.constant 0 : index
    %113 = vector.load %arg8[%c1_104, %c0_105, %c0_106] : memref<3x256x256xbf16, #tpu.memory_space<vmem>>, vector<1x256x256xbf16>
    %114 = vector.shape_cast %113 : vector<1x256x256xbf16> to vector<256x256xbf16>
    %cst_107 = arith.constant dense<0.000000e+00> : vector<8x256xf32>
    %115 = tpu.matmul %112, %114, %cst_107 {dimension_numbers = #tpu.dot_dimension_numbers<[1], [0], [0], [1], [0, 0, 1, 1], [], []>} : vector<8x256xbf16>, vector<256x256xbf16>, vector<8x256xf32> -> vector<8x256xf32>
    %116 = arith.addf %111, %115 : vector<8x256xf32>
    %117 = vector.extract_strided_slice %107 {offsets = [2, 0], sizes = [8, 256], strides = [1, 1]} : vector<10x256xbf16> to vector<8x256xbf16>
    %c2_108 = arith.constant 2 : index
    %c0_109 = arith.constant 0 : index
    %c0_110 = arith.constant 0 : index
    %118 = vector.load %arg8[%c2_108, %c0_109, %c0_110] : memref<3x256x256xbf16, #tpu.memory_space<vmem>>, vector<1x256x256xbf16>
    %119 = vector.shape_cast %118 : vector<1x256x256xbf16> to vector<256x256xbf16>
    %cst_111 = arith.constant dense<0.000000e+00> : vector<8x256xf32>
    %120 = tpu.matmul %117, %119, %cst_111 {dimension_numbers = #tpu.dot_dimension_numbers<[1], [0], [0], [1], [0, 0, 1, 1], [], []>} : vector<8x256xbf16>, vector<256x256xbf16>, vector<8x256xf32> -> vector<8x256xf32>
    %121 = arith.addf %116, %120 : vector<8x256xf32>
    %c0_112 = arith.constant 0 : index
    %c0_113 = arith.constant 0 : index
    %122 = vector.load %arg9[%c0_112, %c0_113] : memref<1x256xf32, #tpu.memory_space<vmem>>, vector<1x256xf32>
    %123 = vector.broadcast %122 : vector<1x256xf32> to vector<8x256xf32>
    %124 = arith.addf %121, %123 : vector<8x256xf32>
    %cst_114 = arith.constant 0.000000e+00 : f32
    %125 = vector.broadcast %cst_114 : f32 to vector<8x256xf32>
    %126 = arith.maximumf %124, %125 : vector<8x256xf32>
    %c8_115 = arith.constant 8 : index
    %c0_116 = arith.constant 0 : index
    %127 = vector.load %arg26[%c8_115, %c0_116] : memref<24x256xf32, #tpu.memory_space<vmem>>, vector<8x256xf32>
    tpu.vector_store %arg26[%c8_115, %c0_116], %126 {strides = array<i32>} : memref<24x256xf32, #tpu.memory_space<vmem>>, vector<8x256xf32>,
    %c7_117 = arith.constant 7 : index
    %c0_118 = arith.constant 0 : index
    %128 = vector.load %arg26[%c7_117, %c0_118] : memref<24x256xf32, #tpu.memory_space<vmem>>, vector<10x256xf32>
    %129 = arith.truncf %128 : vector<10x256xf32> to vector<10x256xbf16>
    %130 = vector.extract_strided_slice %129 {offsets = [0, 0], sizes = [8, 256], strides = [1, 1]} : vector<10x256xbf16> to vector<8x256xbf16>
    %c0_119 = arith.constant 0 : index
    %c0_120 = arith.constant 0 : index
    %c0_121 = arith.constant 0 : index
    %131 = vector.load %arg10[%c0_119, %c0_120, %c0_121] : memref<3x256x256xbf16, #tpu.memory_space<vmem>>, vector<1x256x256xbf16>
    %132 = vector.shape_cast %131 : vector<1x256x256xbf16> to vector<256x256xbf16>
    %cst_122 = arith.constant dense<0.000000e+00> : vector<8x256xf32>
    %133 = tpu.matmul %130, %132, %cst_122 {dimension_numbers = #tpu.dot_dimension_numbers<[1], [0], [0], [1], [0, 0, 1, 1], [], []>} : vector<8x256xbf16>, vector<256x256xbf16>, vector<8x256xf32> -> vector<8x256xf32>
    %134 = vector.extract_strided_slice %129 {offsets = [1, 0], sizes = [8, 256], strides = [1, 1]} : vector<10x256xbf16> to vector<8x256xbf16>
    %c1_123 = arith.constant 1 : index
    %c0_124 = arith.constant 0 : index
    %c0_125 = arith.constant 0 : index
    %135 = vector.load %arg10[%c1_123, %c0_124, %c0_125] : memref<3x256x256xbf16, #tpu.memory_space<vmem>>, vector<1x256x256xbf16>
    %136 = vector.shape_cast %135 : vector<1x256x256xbf16> to vector<256x256xbf16>
    %cst_126 = arith.constant dense<0.000000e+00> : vector<8x256xf32>
    %137 = tpu.matmul %134, %136, %cst_126 {dimension_numbers = #tpu.dot_dimension_numbers<[1], [0], [0], [1], [0, 0, 1, 1], [], []>} : vector<8x256xbf16>, vector<256x256xbf16>, vector<8x256xf32> -> vector<8x256xf32>
    %138 = arith.addf %133, %137 : vector<8x256xf32>
    %139 = vector.extract_strided_slice %129 {offsets = [2, 0], sizes = [8, 256], strides = [1, 1]} : vector<10x256xbf16> to vector<8x256xbf16>
    %c2_127 = arith.constant 2 : index
    %c0_128 = arith.constant 0 : index
    %c0_129 = arith.constant 0 : index
    %140 = vector.load %arg10[%c2_127, %c0_128, %c0_129] : memref<3x256x256xbf16, #tpu.memory_space<vmem>>, vector<1x256x256xbf16>
    %141 = vector.shape_cast %140 : vector<1x256x256xbf16> to vector<256x256xbf16>
    %cst_130 = arith.constant dense<0.000000e+00> : vector<8x256xf32>
    %142 = tpu.matmul %139, %141, %cst_130 {dimension_numbers = #tpu.dot_dimension_numbers<[1], [0], [0], [1], [0, 0, 1, 1], [], []>} : vector<8x256xbf16>, vector<256x256xbf16>, vector<8x256xf32> -> vector<8x256xf32>
    %143 = arith.addf %138, %142 : vector<8x256xf32>
    %c0_131 = arith.constant 0 : index
    %c0_132 = arith.constant 0 : index
    %144 = vector.load %arg11[%c0_131, %c0_132] : memref<1x256xf32, #tpu.memory_space<vmem>>, vector<1x256xf32>
    %145 = vector.broadcast %144 : vector<1x256xf32> to vector<8x256xf32>
    %146 = arith.addf %143, %145 : vector<8x256xf32>
    %cst_133 = arith.constant 0.000000e+00 : f32
    %147 = vector.broadcast %cst_133 : f32 to vector<8x256xf32>
    %148 = arith.maximumf %146, %147 : vector<8x256xf32>
    %c8_134 = arith.constant 8 : index
    %c0_135 = arith.constant 0 : index
    %149 = vector.load %arg27[%c8_134, %c0_135] : memref<24x256xf32, #tpu.memory_space<vmem>>, vector<8x256xf32>
    tpu.vector_store %arg27[%c8_134, %c0_135], %148 {strides = array<i32>} : memref<24x256xf32, #tpu.memory_space<vmem>>, vector<8x256xf32>,
    %c7_136 = arith.constant 7 : index
    %c0_137 = arith.constant 0 : index
    %150 = vector.load %arg27[%c7_136, %c0_137] : memref<24x256xf32, #tpu.memory_space<vmem>>, vector<10x256xf32>
    %151 = arith.truncf %150 : vector<10x256xf32> to vector<10x256xbf16>
    %152 = vector.extract_strided_slice %151 {offsets = [0, 0], sizes = [8, 256], strides = [1, 1]} : vector<10x256xbf16> to vector<8x256xbf16>
    %c0_138 = arith.constant 0 : index
    %c0_139 = arith.constant 0 : index
    %c0_140 = arith.constant 0 : index
    %153 = vector.load %arg12[%c0_138, %c0_139, %c0_140] : memref<3x256x256xbf16, #tpu.memory_space<vmem>>, vector<1x256x256xbf16>
    %154 = vector.shape_cast %153 : vector<1x256x256xbf16> to vector<256x256xbf16>
    %cst_141 = arith.constant dense<0.000000e+00> : vector<8x256xf32>
    %155 = tpu.matmul %152, %154, %cst_141 {dimension_numbers = #tpu.dot_dimension_numbers<[1], [0], [0], [1], [0, 0, 1, 1], [], []>} : vector<8x256xbf16>, vector<256x256xbf16>, vector<8x256xf32> -> vector<8x256xf32>
    %156 = vector.extract_strided_slice %151 {offsets = [1, 0], sizes = [8, 256], strides = [1, 1]} : vector<10x256xbf16> to vector<8x256xbf16>
    %c1_142 = arith.constant 1 : index
    %c0_143 = arith.constant 0 : index
    %c0_144 = arith.constant 0 : index
    %157 = vector.load %arg12[%c1_142, %c0_143, %c0_144] : memref<3x256x256xbf16, #tpu.memory_space<vmem>>, vector<1x256x256xbf16>
    %158 = vector.shape_cast %157 : vector<1x256x256xbf16> to vector<256x256xbf16>
    %cst_145 = arith.constant dense<0.000000e+00> : vector<8x256xf32>
    %159 = tpu.matmul %156, %158, %cst_145 {dimension_numbers = #tpu.dot_dimension_numbers<[1], [0], [0], [1], [0, 0, 1, 1], [], []>} : vector<8x256xbf16>, vector<256x256xbf16>, vector<8x256xf32> -> vector<8x256xf32>
    %160 = arith.addf %155, %159 : vector<8x256xf32>
    %161 = vector.extract_strided_slice %151 {offsets = [2, 0], sizes = [8, 256], strides = [1, 1]} : vector<10x256xbf16> to vector<8x256xbf16>
    %c2_146 = arith.constant 2 : index
    %c0_147 = arith.constant 0 : index
    %c0_148 = arith.constant 0 : index
    %162 = vector.load %arg12[%c2_146, %c0_147, %c0_148] : memref<3x256x256xbf16, #tpu.memory_space<vmem>>, vector<1x256x256xbf16>
    %163 = vector.shape_cast %162 : vector<1x256x256xbf16> to vector<256x256xbf16>
    %cst_149 = arith.constant dense<0.000000e+00> : vector<8x256xf32>
    %164 = tpu.matmul %161, %163, %cst_149 {dimension_numbers = #tpu.dot_dimension_numbers<[1], [0], [0], [1], [0, 0, 1, 1], [], []>} : vector<8x256xbf16>, vector<256x256xbf16>, vector<8x256xf32> -> vector<8x256xf32>
    %165 = arith.addf %160, %164 : vector<8x256xf32>
    %c0_150 = arith.constant 0 : index
    %c0_151 = arith.constant 0 : index
    %166 = vector.load %arg13[%c0_150, %c0_151] : memref<1x256xf32, #tpu.memory_space<vmem>>, vector<1x256xf32>
    %167 = vector.broadcast %166 : vector<1x256xf32> to vector<8x256xf32>
    %168 = arith.addf %165, %167 : vector<8x256xf32>
    %cst_152 = arith.constant 0.000000e+00 : f32
    %169 = vector.broadcast %cst_152 : f32 to vector<8x256xf32>
    %170 = arith.maximumf %168, %169 : vector<8x256xf32>
    %c8_153 = arith.constant 8 : index
    %c0_154 = arith.constant 0 : index
    %171 = vector.load %arg28[%c8_153, %c0_154] : memref<24x256xf32, #tpu.memory_space<vmem>>, vector<8x256xf32>
    tpu.vector_store %arg28[%c8_153, %c0_154], %170 {strides = array<i32>} : memref<24x256xf32, #tpu.memory_space<vmem>>, vector<8x256xf32>,
    %c7_155 = arith.constant 7 : index
    %c0_156 = arith.constant 0 : index
    %172 = vector.load %arg28[%c7_155, %c0_156] : memref<24x256xf32, #tpu.memory_space<vmem>>, vector<10x256xf32>
    %173 = arith.truncf %172 : vector<10x256xf32> to vector<10x256xbf16>
    %174 = vector.extract_strided_slice %173 {offsets = [0, 0], sizes = [8, 256], strides = [1, 1]} : vector<10x256xbf16> to vector<8x256xbf16>
    %c0_157 = arith.constant 0 : index
    %c0_158 = arith.constant 0 : index
    %c0_159 = arith.constant 0 : index
    %175 = vector.load %arg14[%c0_157, %c0_158, %c0_159] : memref<3x256x512xbf16, #tpu.memory_space<vmem>>, vector<1x256x512xbf16>
    %176 = vector.shape_cast %175 : vector<1x256x512xbf16> to vector<256x512xbf16>
    %cst_160 = arith.constant dense<0.000000e+00> : vector<8x512xf32>
    %177 = tpu.matmul %174, %176, %cst_160 {dimension_numbers = #tpu.dot_dimension_numbers<[1], [0], [0], [1], [0, 0, 1, 1], [], []>} : vector<8x256xbf16>, vector<256x512xbf16>, vector<8x512xf32> -> vector<8x512xf32>
    %178 = vector.extract_strided_slice %173 {offsets = [1, 0], sizes = [8, 256], strides = [1, 1]} : vector<10x256xbf16> to vector<8x256xbf16>
    %c1_161 = arith.constant 1 : index
    %c0_162 = arith.constant 0 : index
    %c0_163 = arith.constant 0 : index
    %179 = vector.load %arg14[%c1_161, %c0_162, %c0_163] : memref<3x256x512xbf16, #tpu.memory_space<vmem>>, vector<1x256x512xbf16>
    %180 = vector.shape_cast %179 : vector<1x256x512xbf16> to vector<256x512xbf16>
    %cst_164 = arith.constant dense<0.000000e+00> : vector<8x512xf32>
    %181 = tpu.matmul %178, %180, %cst_164 {dimension_numbers = #tpu.dot_dimension_numbers<[1], [0], [0], [1], [0, 0, 1, 1], [], []>} : vector<8x256xbf16>, vector<256x512xbf16>, vector<8x512xf32> -> vector<8x512xf32>
    %182 = arith.addf %177, %181 : vector<8x512xf32>
    %183 = vector.extract_strided_slice %173 {offsets = [2, 0], sizes = [8, 256], strides = [1, 1]} : vector<10x256xbf16> to vector<8x256xbf16>
    %c2_165 = arith.constant 2 : index
    %c0_166 = arith.constant 0 : index
    %c0_167 = arith.constant 0 : index
    %184 = vector.load %arg14[%c2_165, %c0_166, %c0_167] : memref<3x256x512xbf16, #tpu.memory_space<vmem>>, vector<1x256x512xbf16>
    %185 = vector.shape_cast %184 : vector<1x256x512xbf16> to vector<256x512xbf16>
    %cst_168 = arith.constant dense<0.000000e+00> : vector<8x512xf32>
    %186 = tpu.matmul %183, %185, %cst_168 {dimension_numbers = #tpu.dot_dimension_numbers<[1], [0], [0], [1], [0, 0, 1, 1], [], []>} : vector<8x256xbf16>, vector<256x512xbf16>, vector<8x512xf32> -> vector<8x512xf32>
    %187 = arith.addf %182, %186 : vector<8x512xf32>
    %c0_169 = arith.constant 0 : index
    %c0_170 = arith.constant 0 : index
    %188 = vector.load %arg15[%c0_169, %c0_170] : memref<1x512xf32, #tpu.memory_space<vmem>>, vector<1x512xf32>
    %189 = vector.broadcast %188 : vector<1x512xf32> to vector<8x512xf32>
    %190 = arith.addf %187, %189 : vector<8x512xf32>
    %cst_171 = arith.constant 0.000000e+00 : f32
    %191 = vector.broadcast %cst_171 : f32 to vector<8x512xf32>
    %192 = arith.maximumf %190, %191 : vector<8x512xf32>
    %cst_172 = arith.constant dense<0.000000e+00> : vector<512xf32>
    %193 = vector.multi_reduction <add>, %192, %cst_172 [0] : vector<8x512xf32> to vector<512xf32>
    %194 = vector.shape_cast %193 : vector<512xf32> to vector<1x512xf32>
    %195 = arith.truncf %194 : vector<1x512xf32> to vector<1x512xbf16>
    %c0_173 = arith.constant 0 : index
    %c0_174 = arith.constant 0 : index
    %196 = vector.load %arg20[%c0_173, %c0_174] : memref<512x128xbf16, #tpu.memory_space<vmem>>, vector<512x128xbf16>
    %cst_175 = arith.constant dense<0.000000e+00> : vector<1x128xf32>
    %197 = tpu.matmul %195, %196, %cst_175 {dimension_numbers = #tpu.dot_dimension_numbers<[1], [0], [0], [1], [0, 0, 1, 1], [], []>} : vector<1x512xbf16>, vector<512x128xbf16>, vector<1x128xf32> -> vector<1x128xf32>
    %c0_176 = arith.constant 0 : index
    %c0_177 = arith.constant 0 : index
    %198 = vector.load %arg21[%c0_176, %c0_177] : memref<1x128xf32, #tpu.memory_space<vmem>>, vector<1x128xf32>
    %199 = arith.addf %197, %198 : vector<1x128xf32>
    %c0_178 = arith.constant 0 : index
    %c0_179 = arith.constant 0 : index
    %c0_180 = arith.constant 0 : index
    %200 = vector.load %arg22[%c0_178, %c0_179, %c0_180] : memref<1x1x128xf32, #tpu.memory_space<vmem>>, vector<1x1x128xf32>
    %201 = vector.shape_cast %200 : vector<1x1x128xf32> to vector<1x128xf32>
    %202 = vector.shape_cast %199 : vector<1x128xf32> to vector<1x1x128xf32>
    tpu.vector_store %arg22[%c0_178, %c0_179, %c0_180], %202 {strides = array<i32>} : memref<1x1x128xf32, #tpu.memory_space<vmem>>, vector<1x1x128xf32>,
    return
  }
  func.func @transform_0(%arg0: i32) -> (i32, i32, i32) {
    %c0_i32 = arith.constant 0 : i32
    %c0_i32_0 = arith.constant 0 : i32
    %c0_i32_1 = arith.constant 0 : i32
    return %arg0, %c0_i32, %c0_i32_0 : i32, i32, i32
  }
  func.func @transform_1(%arg0: i32) -> (i32, i32, i32) {
    %c0_i32 = arith.constant 0 : i32
    %c0_i32_0 = arith.constant 0 : i32
    %c0_i32_1 = arith.constant 0 : i32
    %c0_i32_2 = arith.constant 0 : i32
    return %c0_i32, %c0_i32_0, %c0_i32_1 : i32, i32, i32
  }
  func.func @transform_2(%arg0: i32) -> (i32, i32) {
    %c0_i32 = arith.constant 0 : i32
    %c0_i32_0 = arith.constant 0 : i32
    %c0_i32_1 = arith.constant 0 : i32
    return %c0_i32, %c0_i32_0 : i32, i32
  }
  func.func @transform_3(%arg0: i32) -> (i32, i32, i32) {
    %c0_i32 = arith.constant 0 : i32
    %c0_i32_0 = arith.constant 0 : i32
    %c0_i32_1 = arith.constant 0 : i32
    %c0_i32_2 = arith.constant 0 : i32
    return %c0_i32, %c0_i32_0, %c0_i32_1 : i32, i32, i32
  }
  func.func @transform_4(%arg0: i32) -> (i32, i32) {
    %c0_i32 = arith.constant 0 : i32
    %c0_i32_0 = arith.constant 0 : i32
    %c0_i32_1 = arith.constant 0 : i32
    return %c0_i32, %c0_i32_0 : i32, i32
  }
  func.func @transform_5(%arg0: i32) -> (i32, i32, i32) {
    %c0_i32 = arith.constant 0 : i32
    %c0_i32_0 = arith.constant 0 : i32
    %c0_i32_1 = arith.constant 0 : i32
    %c0_i32_2 = arith.constant 0 : i32
    return %c0_i32, %c0_i32_0, %c0_i32_1 : i32, i32, i32
  }
  func.func @transform_6(%arg0: i32) -> (i32, i32) {
    %c0_i32 = arith.constant 0 : i32
    %c0_i32_0 = arith.constant 0 : i32
    %c0_i32_1 = arith.constant 0 : i32
    return %c0_i32, %c0_i32_0 : i32, i32
  }
  func.func @transform_7(%arg0: i32) -> (i32, i32, i32) {
    %c0_i32 = arith.constant 0 : i32
    %c0_i32_0 = arith.constant 0 : i32
    %c0_i32_1 = arith.constant 0 : i32
    %c0_i32_2 = arith.constant 0 : i32
    return %c0_i32, %c0_i32_0, %c0_i32_1 : i32, i32, i32
  }
  func.func @transform_8(%arg0: i32) -> (i32, i32) {
    %c0_i32 = arith.constant 0 : i32
    %c0_i32_0 = arith.constant 0 : i32
    %c0_i32_1 = arith.constant 0 : i32
    return %c0_i32, %c0_i32_0 : i32, i32
  }
  func.func @transform_9(%arg0: i32) -> (i32, i32, i32) {
    %c0_i32 = arith.constant 0 : i32
    %c0_i32_0 = arith.constant 0 : i32
    %c0_i32_1 = arith.constant 0 : i32
    %c0_i32_2 = arith.constant 0 : i32
    return %c0_i32, %c0_i32_0, %c0_i32_1 : i32, i32, i32
  }
  func.func @transform_10(%arg0: i32) -> (i32, i32) {
    %c0_i32 = arith.constant 0 : i32
    %c0_i32_0 = arith.constant 0 : i32
    %c0_i32_1 = arith.constant 0 : i32
    return %c0_i32, %c0_i32_0 : i32, i32
  }
  func.func @transform_11(%arg0: i32) -> (i32, i32, i32) {
    %c0_i32 = arith.constant 0 : i32
    %c0_i32_0 = arith.constant 0 : i32
    %c0_i32_1 = arith.constant 0 : i32
    %c0_i32_2 = arith.constant 0 : i32
    return %c0_i32, %c0_i32_0, %c0_i32_1 : i32, i32, i32
  }
  func.func @transform_12(%arg0: i32) -> (i32, i32) {
    %c0_i32 = arith.constant 0 : i32
    %c0_i32_0 = arith.constant 0 : i32
    %c0_i32_1 = arith.constant 0 : i32
    return %c0_i32, %c0_i32_0 : i32, i32
  }
  func.func @transform_13(%arg0: i32) -> (i32, i32, i32) {
    %c0_i32 = arith.constant 0 : i32
    %c0_i32_0 = arith.constant 0 : i32
    %c0_i32_1 = arith.constant 0 : i32
    %c0_i32_2 = arith.constant 0 : i32
    return %c0_i32, %c0_i32_0, %c0_i32_1 : i32, i32, i32
  }
  func.func @transform_14(%arg0: i32) -> (i32, i32) {
    %c0_i32 = arith.constant 0 : i32
    %c0_i32_0 = arith.constant 0 : i32
    %c0_i32_1 = arith.constant 0 : i32
    return %c0_i32, %c0_i32_0 : i32, i32
  }
  func.func @transform_15(%arg0: i32) -> (i32, i32) {
    %c0_i32 = arith.constant 0 : i32
    %c0_i32_0 = arith.constant 0 : i32
    %c0_i32_1 = arith.constant 0 : i32
    return %c0_i32, %c0_i32_0 : i32, i32
  }
  func.func @transform_16(%arg0: i32) -> (i32, i32) {
    %c0_i32 = arith.constant 0 : i32
    %c0_i32_0 = arith.constant 0 : i32
    %c0_i32_1 = arith.constant 0 : i32
    return %c0_i32, %c0_i32_0 : i32, i32
  }
  func.func @transform_17(%arg0: i32) -> (i32, i32) {
    %c0_i32 = arith.constant 0 : i32
    %c0_i32_0 = arith.constant 0 : i32
    %c0_i32_1 = arith.constant 0 : i32
    return %c0_i32, %c0_i32_0 : i32, i32
  }
  func.func @transform_18(%arg0: i32) -> (i32, i32) {
    %c0_i32 = arith.constant 0 : i32
    %c0_i32_0 = arith.constant 0 : i32
    %c0_i32_1 = arith.constant 0 : i32
    return %c0_i32, %c0_i32_0 : i32, i32
  }
  func.func @transform_19(%arg0: i32) -> (i32, i32) {
    %c0_i32 = arith.constant 0 : i32
    %c0_i32_0 = arith.constant 0 : i32
    %c0_i32_1 = arith.constant 0 : i32
    return %c0_i32, %c0_i32_0 : i32, i32
  }
  func.func @transform_20(%arg0: i32) -> (i32, i32) {
    %c0_i32 = arith.constant 0 : i32
    %c0_i32_0 = arith.constant 0 : i32
    %c0_i32_1 = arith.constant 0 : i32
    return %c0_i32, %c0_i32_0 : i32, i32
  }
  func.func @transform_21(%arg0: i32) -> (i32, i32, i32) {
    %c0_i32 = arith.constant 0 : i32
    %c0_i32_0 = arith.constant 0 : i32
    %c0_i32_1 = arith.constant 0 : i32
    return %arg0, %c0_i32, %c0_i32_0 : i32, i32, i32
  }
}

</mosaic_0001>

<llo_original>
// kernel: forward.1
$region0: #{forward.1}
  #allocation0 [shape = 'u32[]', space=smem, size = 0x4, offset = 0x4, fixed_abs, tag = 'smem constant byte address 0x4 - core index']
  #allocation1 [shape = 'u32[144,128]{1,0:T(1,128)}', space=vmem, size = 0x12000, scoped, tag = 'internal scratch']
  #allocation2 [shape = 'f32[24,128]{1,0:T(8,128)}', space=vmem, size = 0x3000, scoped, tag = 'scratch operand']
  #allocation3 [shape = 'f32[24,128]{1,0:T(8,128)}', space=vmem, size = 0x3000, scoped, tag = 'scratch operand']
  #allocation4 [shape = 'f32[24,256]{1,0:T(8,128)}', space=vmem, size = 0x6000, scoped, tag = 'scratch operand']
  #allocation5 [shape = 'f32[24,256]{1,0:T(8,128)}', space=vmem, size = 0x6000, scoped, tag = 'scratch operand']
  #allocation6 [shape = 'f32[24,256]{1,0:T(8,128)}', space=vmem, size = 0x6000, scoped, tag = 'scratch operand']
  #allocation7 [shape = 'f32[24,256]{1,0:T(8,128)}', space=vmem, size = 0x6000, scoped, tag = 'scratch operand']
  %s0 = inlined_call_operand.vmem [shape: bf16[2,32,128], index: 0, kind: input, shape index: {}]
  %s1 = inlined_call_operand.vmem [shape: bf16[5,128,256], index: 1, kind: input, shape index: {}]
  %s2 = inlined_call_operand.vmem [shape: f32[1,256], index: 2, kind: input, shape index: {}]
  %s3 = inlined_call_operand.hbm [shape: bf16[3,128,128], index: 3, kind: input, shape index: {}]
  %s4 = inlined_call_operand.vmem [shape: f32[1,128], index: 4, kind: input, shape index: {}]
  %s5 = inlined_call_operand.hbm [shape: bf16[3,128,256], index: 5, kind: input, shape index: {}]
  %s6 = inlined_call_operand.vmem [shape: f32[1,256], index: 6, kind: input, shape index: {}]
  %s7 = inlined_call_operand.hbm [shape: bf16[3,256,256], index: 7, kind: input, shape index: {}]
  %s8 = inlined_call_operand.vmem [shape: f32[1,256], index: 8, kind: input, shape index: {}]
  %s9 = inlined_call_operand.hbm [shape: bf16[3,256,256], index: 9, kind: input, shape index: {}]
  %s10 = inlined_call_operand.vmem [shape: f32[1,256], index: 10, kind: input, shape index: {}]
  %s11 = inlined_call_operand.hbm [shape: bf16[3,256,256], index: 11, kind: input, shape index: {}]
  %s12 = inlined_call_operand.vmem [shape: f32[1,256], index: 12, kind: input, shape index: {}]
  %s13 = inlined_call_operand.hbm [shape: bf16[3,256,512], index: 13, kind: input, shape index: {}]
  %s14 = inlined_call_operand.vmem [shape: f32[1,512], index: 14, kind: input, shape index: {}]
  %s15 = inlined_call_operand.vmem [shape: bf16[8,16], index: 15, kind: input, shape index: {}]
  %s16 = inlined_call_operand.vmem [shape: bf16[8,16], index: 16, kind: input, shape index: {}]
  %s17 = inlined_call_operand.hbm [shape: bf16[256,128], index: 17, kind: input, shape index: {}]
  %s18 = inlined_call_operand.hbm [shape: bf16[256,128], index: 18, kind: input, shape index: {}]
  %s19 = inlined_call_operand.hbm [shape: bf16[512,128], index: 19, kind: input, shape index: {}]
  %s20 = inlined_call_operand.vmem [shape: f32[1,128], index: 20, kind: input, shape index: {}]
  %s21 = inlined_call_operand.hbm [shape: f32[2,1,128], index: 21, kind: output, shape index: {}]
  %s22 = sld [smem:[#allocation0]]
  $region153: #{forward.1} parent=0
    _
  %s24 = ssub.s32 1, %s22
  %s25 = scalar_select 0, %s24, %s22
  $region1: #{forward.1} parent=0
    #allocation8 [shape = 'u8[98304]{0}', space=vmem, size = 0x18000, scoped, tag = 'input window, operand 3, single buffered']
    #allocation9 [shape = 's32[2]{0}', space=sflag, size = 0x8, scoped, tag = 'scoped memory for forward.1']
    #allocation10 [shape = 's32[2]{0}', space=sflag, size = 0x8, scoped, tag = 'scoped memory for forward.1']
    #allocation11 [shape = 'u8[196608]{0}', space=vmem, size = 0x30000, scoped, tag = 'input window, operand 5, single buffered']
    #allocation12 [shape = 's32[1]{0}', space=sflag, size = 0x4, scoped, tag = 'scoped memory for forward.1']
    #allocation13 [shape = 'u8[393216]{0}', space=vmem, size = 0x60000, scoped, tag = 'input window, operand 7, single buffered']
    #allocation14 [shape = 'u8[393216]{0}', space=vmem, size = 0x60000, scoped, tag = 'input window, operand 9, single buffered']
    #allocation15 [shape = 's32[1]{0}', space=sflag, size = 0x4, scoped, tag = 'scoped memory for forward.1']
    #allocation16 [shape = 'u8[393216]{0}', space=vmem, size = 0x60000, scoped, tag = 'input window, operand 11, single buffered']
    #allocation17 [shape = 'u8[786432]{0}', space=vmem, size = 0xc0000, scoped, tag = 'input window, operand 13, single buffered']
    #allocation18 [shape = 's32[1]{0}', space=sflag, size = 0x4, scoped, tag = 'scoped memory for forward.1']
    #allocation19 [shape = 'u8[65536]{0}', space=vmem, size = 0x10000, scoped, tag = 'input window, operand 17, single buffered']
    #allocation20 [shape = 'u8[65536]{0}', space=vmem, size = 0x10000, scoped, tag = 'input window, operand 18, single buffered']
    #allocation21 [shape = 's32[1]{0}', space=sflag, size = 0x4, scoped, tag = 'scoped memory for forward.1']
    #allocation22 [shape = 'u8[131072]{0}', space=vmem, size = 0x20000, scoped, tag = 'input window, operand 19, single buffered']
    #allocation23 [shape = 'u8[1024]{0}', space=vmem, size = 0x400, scoped, tag = 'output window, operand 0']
    %26 = vsyncpa [#allocation9], 0
    %27 = vsyncpa [#allocation12], 0
    %28 = vsyncpa [#allocation15], 0
    %29 = vsyncpa [#allocation18], 0
    %30 = vsyncpa [#allocation21], 0
    %31 = vsyncpa [#allocation10], 0
    %s32 = scalar_lea.sflag [#allocation10], 1
    %33 = vsyncpa %s32, 0
    loop: start=0, step=1, limit=4
    $region2: #{forward.1} parent=1 // loop_pre_header
      _
    $region3: #{forward.1} parent=1 // loop_header
      %s35 = sphi 0, %s39
      %p36 = scmp.ge.s32.totalorder %s35, 4
      %s45 = sphi 0, %s47
      %s48 = sphi 0, %s45
      %s49 = sphi 0, %s48
      %s65 = sphi 0, %s49
      %s69 = sphi 0, %s69
      %s71 = sphi 0, %s69
      %s72 = sphi 0, %s71
      %s86 = sphi 0, %s72
      %s90 = sphi 0, %s90
      %s92 = sphi 0, %s90
      %s93 = sphi 0, %s92
      %s107 = sphi 0, %s93
      %s111 = sphi 0, %s111
      %s113 = sphi 0, %s111
      %s114 = sphi 0, %s113
      %s128 = sphi 0, %s114
      %s132 = sphi 0, %s132
      %s134 = sphi 0, %s132
      %s135 = sphi 0, %s134
      %s149 = sphi 0, %s135
      %s153 = sphi 0, %s153
      %s155 = sphi 0, %s153
      %s156 = sphi 0, %s155
      %s170 = sphi 0, %s156
      %s174 = sphi 0, %s174
      %s176 = sphi 0, %s174
      %s177 = sphi 0, %s176
      %s191 = sphi 0, %s177
      %s195 = sphi 0, %s195
      %s197 = sphi 0, %s195
      %s198 = sphi 0, %s197
      %s212 = sphi 0, %s198
      %s216 = sphi 0, %s216
      %s218 = sphi 0, %s216
      %s219 = sphi 0, %s218
      %s233 = sphi 0, %s219
      %s237 = sphi 0, %s237
      %s239 = sphi 0, %s237
      %s240 = sphi 0, %s239
      %s254 = sphi 0, %s240
      %s258 = sphi 0, %s258
      %s260 = sphi 0, %s258
      %s261 = sphi 0, %s260
      %s275 = sphi 0, %s261
      %s279 = sphi 0, %s279
      %s281 = sphi 0, %s279
      %s282 = sphi 0, %s281
      %s296 = sphi 0, %s282
      %s300 = sphi 0, %s300
      %s302 = sphi 0, %s300
      %s303 = sphi 0, %s302
      %s317 = sphi 0, %s303
      %s321 = sphi 0, %s321
      %s323 = sphi 0, %s321
      %s324 = sphi 0, %s323
      %s338 = sphi 0, %s324
      %s342 = sphi 0, %s342
      %s344 = sphi 0, %s342
      %s345 = sphi 0, %s344
      %s359 = sphi 0, %s345
      %s363 = sphi 0, %s363
      %s365 = sphi 0, %s363
      %s366 = sphi 0, %s365
      %s380 = sphi 0, %s366
      %s384 = sphi 0, %s384
      %s386 = sphi 0, %s384
      %s387 = sphi 0, %s386
      %s401 = sphi 0, %s387
      %s405 = sphi 0, %s405
      %s407 = sphi 0, %s405
      %s408 = sphi 0, %s407
      %s422 = sphi 0, %s408
      %s426 = sphi 0, %s426
      %s428 = sphi 0, %s426
      %s429 = sphi 0, %s428
      %s443 = sphi 0, %s429
      %s447 = sphi 0, %s447
      %s449 = sphi 0, %s447
      %s450 = sphi 0, %s449
      %s464 = sphi 0, %s450
      %s468 = sphi 0, %s468
      %s470 = sphi 0, %s468
      %s471 = sphi 0, %s470
      %s485 = sphi 0, %s471
      %s491 = sphi 0, %s493
      %s494 = sphi 0, %s491
      %s495 = sphi 0, %s494
      %s511 = sphi 0, %s495
    $region4: #{forward.1} parent=1 // loop_header_branch
      %38 = sbr.rel (%p36) target = $region8
    $region5: #{forward.1} parent=1 // loop_body
      %s40 = ssub.s32 %s35, 1
      %s41 = ssub.s32 %s35, 2
      %s42 = sadd.s32 %s35, 1
      %s43 = ssub.s32 %s35, %s42
      %p44 = scmp.eq.s32.totalorder %s43, 0
      %s46 = sadd.s32 %s45, 1
      %s47 = scalar_select %p44, %s45, %s46
      %p50 = pneg %p44
      %p51 = scmp.eq.s32.totalorder %s35, 1
      %p52 = por %p50, %p51
      %p53 = scmp.ne.s32.totalorder %s45, %s48
      %p54 = scmp.eq.s32.totalorder %s35, 0
      %p55 = por %p53, %p54
      %p56 = scmp.ne.s32.totalorder %s45, %s48
      %p57 = scmp.eq.s32.totalorder %s40, 1
      %p58 = por %p56, %p57
      %p59 = scmp.ne.s32.totalorder %s48, %s49
      %p60 = scmp.eq.s32.totalorder %s40, 0
      %p61 = por %p59, %p60
      %p62 = scmp.ne.s32.totalorder %s48, %s49
      %p63 = scmp.eq.s32.totalorder %s41, 1
      %p64 = por %p62, %p63
      %p66 = scmp.ne.s32.totalorder %s49, %s65
      %p67 = scmp.eq.s32.totalorder %s41, 0
      %p68 = por %p66, %p67
      %s70 = sadd.s32 %s69, 1
      %p73 = scmp.eq.s32.totalorder %s35, 1
      %p74 = scmp.ne.s32.totalorder %s69, %s71
      %p75 = scmp.eq.s32.totalorder %s35, 0
      %p76 = por %p74, %p75
      %p77 = scmp.ne.s32.totalorder %s69, %s71
      %p78 = scmp.eq.s32.totalorder %s40, 1
      %p79 = por %p77, %p78
      %p80 = scmp.ne.s32.totalorder %s71, %s72
      %p81 = scmp.eq.s32.totalorder %s40, 0
      %p82 = por %p80, %p81
      %p83 = scmp.ne.s32.totalorder %s71, %s72
      %p84 = scmp.eq.s32.totalorder %s41, 1
      %p85 = por %p83, %p84
      %p87 = scmp.ne.s32.totalorder %s72, %s86
      %p88 = scmp.eq.s32.totalorder %s41, 0
      %p89 = por %p87, %p88
      %s91 = sadd.s32 %s90, 1
      %p94 = scmp.eq.s32.totalorder %s35, 1
      %p95 = scmp.ne.s32.totalorder %s90, %s92
      %p96 = scmp.eq.s32.totalorder %s35, 0
      %p97 = por %p95, %p96
      %p98 = scmp.ne.s32.totalorder %s90, %s92
      %p99 = scmp.eq.s32.totalorder %s40, 1
      %p100 = por %p98, %p99
      %p101 = scmp.ne.s32.totalorder %s92, %s93
      %p102 = scmp.eq.s32.totalorder %s40, 0
      %p103 = por %p101, %p102
      %p104 = scmp.ne.s32.totalorder %s92, %s93
      %p105 = scmp.eq.s32.totalorder %s41, 1
      %p106 = por %p104, %p105
      %p108 = scmp.ne.s32.totalorder %s93, %s107
      %p109 = scmp.eq.s32.totalorder %s41, 0
      %p110 = por %p108, %p109
      %s112 = sadd.s32 %s111, 1
      %p115 = scmp.eq.s32.totalorder %s35, 1
      %p116 = scmp.ne.s32.totalorder %s111, %s113
      %p117 = scmp.eq.s32.totalorder %s35, 0
      %p118 = por %p116, %p117
      %p119 = scmp.ne.s32.totalorder %s111, %s113
      %p120 = scmp.eq.s32.totalorder %s40, 1
      %p121 = por %p119, %p120
      %p122 = scmp.ne.s32.totalorder %s113, %s114
      %p123 = scmp.eq.s32.totalorder %s40, 0
      %p124 = por %p122, %p123
      %p125 = scmp.ne.s32.totalorder %s113, %s114
      %p126 = scmp.eq.s32.totalorder %s41, 1
      %p127 = por %p125, %p126
      %p129 = scmp.ne.s32.totalorder %s114, %s128
      %p130 = scmp.eq.s32.totalorder %s41, 0
      %p131 = por %p129, %p130
      %s133 = sadd.s32 %s132, 1
      %p136 = scmp.eq.s32.totalorder %s35, 1
      %p137 = scmp.ne.s32.totalorder %s132, %s134
      %p138 = scmp.eq.s32.totalorder %s35, 0
      %p139 = por %p137, %p138
      %p140 = scmp.ne.s32.totalorder %s132, %s134
      %p141 = scmp.eq.s32.totalorder %s40, 1
      %p142 = por %p140, %p141
      %p143 = scmp.ne.s32.totalorder %s134, %s135
      %p144 = scmp.eq.s32.totalorder %s40, 0
      %p145 = por %p143, %p144
      %p146 = scmp.ne.s32.totalorder %s134, %s135
      %p147 = scmp.eq.s32.totalorder %s41, 1
      %p148 = por %p146, %p147
      %p150 = scmp.ne.s32.totalorder %s135, %s149
      %p151 = scmp.eq.s32.totalorder %s41, 0
      %p152 = por %p150, %p151
      %s154 = sadd.s32 %s153, 1
      %p157 = scmp.eq.s32.totalorder %s35, 1
      %p158 = scmp.ne.s32.totalorder %s153, %s155
      %p159 = scmp.eq.s32.totalorder %s35, 0
      %p160 = por %p158, %p159
      %p161 = scmp.ne.s32.totalorder %s153, %s155
      %p162 = scmp.eq.s32.totalorder %s40, 1
      %p163 = por %p161, %p162
      %p164 = scmp.ne.s32.totalorder %s155, %s156
      %p165 = scmp.eq.s32.totalorder %s40, 0
      %p166 = por %p164, %p165
      %p167 = scmp.ne.s32.totalorder %s155, %s156
      %p168 = scmp.eq.s32.totalorder %s41, 1
      %p169 = por %p167, %p168
      %p171 = scmp.ne.s32.totalorder %s156, %s170
      %p172 = scmp.eq.s32.totalorder %s41, 0
      %p173 = por %p171, %p172
      %s175 = sadd.s32 %s174, 1
      %p178 = scmp.eq.s32.totalorder %s35, 1
      %p179 = scmp.ne.s32.totalorder %s174, %s176
      %p180 = scmp.eq.s32.totalorder %s35, 0
      %p181 = por %p179, %p180
      %p182 = scmp.ne.s32.totalorder %s174, %s176
      %p183 = scmp.eq.s32.totalorder %s40, 1
      %p184 = por %p182, %p183
      %p185 = scmp.ne.s32.totalorder %s176, %s177
      %p186 = scmp.eq.s32.totalorder %s40, 0
      %p187 = por %p185, %p186
      %p188 = scmp.ne.s32.totalorder %s176, %s177
      %p189 = scmp.eq.s32.totalorder %s41, 1
      %p190 = por %p188, %p189
      %p192 = scmp.ne.s32.totalorder %s177, %s191
      %p193 = scmp.eq.s32.totalorder %s41, 0
      %p194 = por %p192, %p193
      %s196 = sadd.s32 %s195, 1
      %p199 = scmp.eq.s32.totalorder %s35, 1
      %p200 = scmp.ne.s32.totalorder %s195, %s197
      %p201 = scmp.eq.s32.totalorder %s35, 0
      %p202 = por %p200, %p201
      %p203 = scmp.ne.s32.totalorder %s195, %s197
      %p204 = scmp.eq.s32.totalorder %s40, 1
      %p205 = por %p203, %p204
      %p206 = scmp.ne.s32.totalorder %s197, %s198
      %p207 = scmp.eq.s32.totalorder %s40, 0
      %p208 = por %p206, %p207
      %p209 = scmp.ne.s32.totalorder %s197, %s198
      %p210 = scmp.eq.s32.totalorder %s41, 1
      %p211 = por %p209, %p210
      %p213 = scmp.ne.s32.totalorder %s198, %s212
      %p214 = scmp.eq.s32.totalorder %s41, 0
      %p215 = por %p213, %p214
      %s217 = sadd.s32 %s216, 1
      %p220 = scmp.eq.s32.totalorder %s35, 1
      %p221 = scmp.ne.s32.totalorder %s216, %s218
      %p222 = scmp.eq.s32.totalorder %s35, 0
      %p223 = por %p221, %p222
      %p224 = scmp.ne.s32.totalorder %s216, %s218
      %p225 = scmp.eq.s32.totalorder %s40, 1
      %p226 = por %p224, %p225
      %p227 = scmp.ne.s32.totalorder %s218, %s219
      %p228 = scmp.eq.s32.totalorder %s40, 0
      %p229 = por %p227, %p228
      %p230 = scmp.ne.s32.totalorder %s218, %s219
      %p231 = scmp.eq.s32.totalorder %s41, 1
      %p232 = por %p230, %p231
      %p234 = scmp.ne.s32.totalorder %s219, %s233
      %p235 = scmp.eq.s32.totalorder %s41, 0
      %p236 = por %p234, %p235
      %s238 = sadd.s32 %s237, 1
      %p241 = scmp.eq.s32.totalorder %s35, 1
      %p242 = scmp.ne.s32.totalorder %s237, %s239
      %p243 = scmp.eq.s32.totalorder %s35, 0
      %p244 = por %p242, %p243
      %p245 = scmp.ne.s32.totalorder %s237, %s239
      %p246 = scmp.eq.s32.totalorder %s40, 1
      %p247 = por %p245, %p246
      %p248 = scmp.ne.s32.totalorder %s239, %s240
      %p249 = scmp.eq.s32.totalorder %s40, 0
      %p250 = por %p248, %p249
      %p251 = scmp.ne.s32.totalorder %s239, %s240
      %p252 = scmp.eq.s32.totalorder %s41, 1
      %p253 = por %p251, %p252
      %p255 = scmp.ne.s32.totalorder %s240, %s254
      %p256 = scmp.eq.s32.totalorder %s41, 0
      %p257 = por %p255, %p256
      %s259 = sadd.s32 %s258, 1
      %p262 = scmp.eq.s32.totalorder %s35, 1
      %p263 = scmp.ne.s32.totalorder %s258, %s260
      %p264 = scmp.eq.s32.totalorder %s35, 0
      %p265 = por %p263, %p264
      %p266 = scmp.ne.s32.totalorder %s258, %s260
      %p267 = scmp.eq.s32.totalorder %s40, 1
      %p268 = por %p266, %p267
      %p269 = scmp.ne.s32.totalorder %s260, %s261
      %p270 = scmp.eq.s32.totalorder %s40, 0
      %p271 = por %p269, %p270
      %p272 = scmp.ne.s32.totalorder %s260, %s261
      %p273 = scmp.eq.s32.totalorder %s41, 1
      %p274 = por %p272, %p273
      %p276 = scmp.ne.s32.totalorder %s261, %s275
      %p277 = scmp.eq.s32.totalorder %s41, 0
      %p278 = por %p276, %p277
      %s280 = sadd.s32 %s279, 1
      %p283 = scmp.eq.s32.totalorder %s35, 1
      %p284 = scmp.ne.s32.totalorder %s279, %s281
      %p285 = scmp.eq.s32.totalorder %s35, 0
      %p286 = por %p284, %p285
      %p287 = scmp.ne.s32.totalorder %s279, %s281
      %p288 = scmp.eq.s32.totalorder %s40, 1
      %p289 = por %p287, %p288
      %p290 = scmp.ne.s32.totalorder %s281, %s282
      %p291 = scmp.eq.s32.totalorder %s40, 0
      %p292 = por %p290, %p291
      %p293 = scmp.ne.s32.totalorder %s281, %s282
      %p294 = scmp.eq.s32.totalorder %s41, 1
      %p295 = por %p293, %p294
      %p297 = scmp.ne.s32.totalorder %s282, %s296
      %p298 = scmp.eq.s32.totalorder %s41, 0
      %p299 = por %p297, %p298
      %s301 = sadd.s32 %s300, 1
      %p304 = scmp.eq.s32.totalorder %s35, 1
      %p305 = scmp.ne.s32.totalorder %s300, %s302
      %p306 = scmp.eq.s32.totalorder %s35, 0
      %p307 = por %p305, %p306
      %p308 = scmp.ne.s32.totalorder %s300, %s302
      %p309 = scmp.eq.s32.totalorder %s40, 1
      %p310 = por %p308, %p309
      %p311 = scmp.ne.s32.totalorder %s302, %s303
      %p312 = scmp.eq.s32.totalorder %s40, 0
      %p313 = por %p311, %p312
      %p314 = scmp.ne.s32.totalorder %s302, %s303
      %p315 = scmp.eq.s32.totalorder %s41, 1
      %p316 = por %p314, %p315
      %p318 = scmp.ne.s32.totalorder %s303, %s317
      %p319 = scmp.eq.s32.totalorder %s41, 0
      %p320 = por %p318, %p319
      %s322 = sadd.s32 %s321, 1
      %p325 = scmp.eq.s32.totalorder %s35, 1
      %p326 = scmp.ne.s32.totalorder %s321, %s323
      %p327 = scmp.eq.s32.totalorder %s35, 0
      %p328 = por %p326, %p327
      %p329 = scmp.ne.s32.totalorder %s321, %s323
      %p330 = scmp.eq.s32.totalorder %s40, 1
      %p331 = por %p329, %p330
      %p332 = scmp.ne.s32.totalorder %s323, %s324
      %p333 = scmp.eq.s32.totalorder %s40, 0
      %p334 = por %p332, %p333
      %p335 = scmp.ne.s32.totalorder %s323, %s324
      %p336 = scmp.eq.s32.totalorder %s41, 1
      %p337 = por %p335, %p336
      %p339 = scmp.ne.s32.totalorder %s324, %s338
      %p340 = scmp.eq.s32.totalorder %s41, 0
      %p341 = por %p339, %p340
      %s343 = sadd.s32 %s342, 1
      %p346 = scmp.eq.s32.totalorder %s35, 1
      %p347 = scmp.ne.s32.totalorder %s342, %s344
      %p348 = scmp.eq.s32.totalorder %s35, 0
      %p349 = por %p347, %p348
      %p350 = scmp.ne.s32.totalorder %s342, %s344
      %p351 = scmp.eq.s32.totalorder %s40, 1
      %p352 = por %p350, %p351
      %p353 = scmp.ne.s32.totalorder %s344, %s345
      %p354 = scmp.eq.s32.totalorder %s40, 0
      %p355 = por %p353, %p354
      %p356 = scmp.ne.s32.totalorder %s344, %s345
      %p357 = scmp.eq.s32.totalorder %s41, 1
      %p358 = por %p356, %p357
      %p360 = scmp.ne.s32.totalorder %s345, %s359
      %p361 = scmp.eq.s32.totalorder %s41, 0
      %p362 = por %p360, %p361
      %s364 = sadd.s32 %s363, 1
      %p367 = scmp.eq.s32.totalorder %s35, 1
      %p368 = scmp.ne.s32.totalorder %s363, %s365
      %p369 = scmp.eq.s32.totalorder %s35, 0
      %p370 = por %p368, %p369
      %p371 = scmp.ne.s32.totalorder %s363, %s365
      %p372 = scmp.eq.s32.totalorder %s40, 1
      %p373 = por %p371, %p372
      %p374 = scmp.ne.s32.totalorder %s365, %s366
      %p375 = scmp.eq.s32.totalorder %s40, 0
      %p376 = por %p374, %p375
      %p377 = scmp.ne.s32.totalorder %s365, %s366
      %p378 = scmp.eq.s32.totalorder %s41, 1
      %p379 = por %p377, %p378
      %p381 = scmp.ne.s32.totalorder %s366, %s380
      %p382 = scmp.eq.s32.totalorder %s41, 0
      %p383 = por %p381, %p382
      %s385 = sadd.s32 %s384, 1
      %p388 = scmp.eq.s32.totalorder %s35, 1
      %p389 = scmp.ne.s32.totalorder %s384, %s386
      %p390 = scmp.eq.s32.totalorder %s35, 0
      %p391 = por %p389, %p390
      %p392 = scmp.ne.s32.totalorder %s384, %s386
      %p393 = scmp.eq.s32.totalorder %s40, 1
      %p394 = por %p392, %p393
      %p395 = scmp.ne.s32.totalorder %s386, %s387
      %p396 = scmp.eq.s32.totalorder %s40, 0
      %p397 = por %p395, %p396
      %p398 = scmp.ne.s32.totalorder %s386, %s387
      %p399 = scmp.eq.s32.totalorder %s41, 1
      %p400 = por %p398, %p399
      %p402 = scmp.ne.s32.totalorder %s387, %s401
      %p403 = scmp.eq.s32.totalorder %s41, 0
      %p404 = por %p402, %p403
      %s406 = sadd.s32 %s405, 1
      %p409 = scmp.eq.s32.totalorder %s35, 1
      %p410 = scmp.ne.s32.totalorder %s405, %s407
      %p411 = scmp.eq.s32.totalorder %s35, 0
      %p412 = por %p410, %p411
      %p413 = scmp.ne.s32.totalorder %s405, %s407
      %p414 = scmp.eq.s32.totalorder %s40, 1
      %p415 = por %p413, %p414
      %p416 = scmp.ne.s32.totalorder %s407, %s408
      %p417 = scmp.eq.s32.totalorder %s40, 0
      %p418 = por %p416, %p417
      %p419 = scmp.ne.s32.totalorder %s407, %s408
      %p420 = scmp.eq.s32.totalorder %s41, 1
      %p421 = por %p419, %p420
      %p423 = scmp.ne.s32.totalorder %s408, %s422
      %p424 = scmp.eq.s32.totalorder %s41, 0
      %p425 = por %p423, %p424
      %s427 = sadd.s32 %s426, 1
      %p430 = scmp.eq.s32.totalorder %s35, 1
      %p431 = scmp.ne.s32.totalorder %s426, %s428
      %p432 = scmp.eq.s32.totalorder %s35, 0
      %p433 = por %p431, %p432
      %p434 = scmp.ne.s32.totalorder %s426, %s428
      %p435 = scmp.eq.s32.totalorder %s40, 1
      %p436 = por %p434, %p435
      %p437 = scmp.ne.s32.totalorder %s428, %s429
      %p438 = scmp.eq.s32.totalorder %s40, 0
      %p439 = por %p437, %p438
      %p440 = scmp.ne.s32.totalorder %s428, %s429
      %p441 = scmp.eq.s32.totalorder %s41, 1
      %p442 = por %p440, %p441
      %p444 = scmp.ne.s32.totalorder %s429, %s443
      %p445 = scmp.eq.s32.totalorder %s41, 0
      %p446 = por %p444, %p445
      %s448 = sadd.s32 %s447, 1
      %p451 = scmp.eq.s32.totalorder %s35, 1
      %p452 = scmp.ne.s32.totalorder %s447, %s449
      %p453 = scmp.eq.s32.totalorder %s35, 0
      %p454 = por %p452, %p453
      %p455 = scmp.ne.s32.totalorder %s447, %s449
      %p456 = scmp.eq.s32.totalorder %s40, 1
      %p457 = por %p455, %p456
      %p458 = scmp.ne.s32.totalorder %s449, %s450
      %p459 = scmp.eq.s32.totalorder %s40, 0
      %p460 = por %p458, %p459
      %p461 = scmp.ne.s32.totalorder %s449, %s450
      %p462 = scmp.eq.s32.totalorder %s41, 1
      %p463 = por %p461, %p462
      %p465 = scmp.ne.s32.totalorder %s450, %s464
      %p466 = scmp.eq.s32.totalorder %s41, 0
      %p467 = por %p465, %p466
      %s469 = sadd.s32 %s468, 1
      %p472 = scmp.eq.s32.totalorder %s35, 1
      %p473 = scmp.ne.s32.totalorder %s468, %s470
      %p474 = scmp.eq.s32.totalorder %s35, 0
      %p475 = por %p473, %p474
      %p476 = scmp.ne.s32.totalorder %s468, %s470
      %p477 = scmp.eq.s32.totalorder %s40, 1
      %p478 = por %p476, %p477
      %p479 = scmp.ne.s32.totalorder %s470, %s471
      %p480 = scmp.eq.s32.totalorder %s40, 0
      %p481 = por %p479, %p480
      %p482 = scmp.ne.s32.totalorder %s470, %s471
      %p483 = scmp.eq.s32.totalorder %s41, 1
      %p484 = por %p482, %p483
      %p486 = scmp.ne.s32.totalorder %s471, %s485
      %p487 = scmp.eq.s32.totalorder %s41, 0
      %p488 = por %p486, %p487
      %s489 = ssub.s32 %s35, %s42
      %p490 = scmp.eq.s32.totalorder %s489, 0
      %s492 = sadd.s32 %s491, 1
      %s493 = scalar_select %p490, %s491, %s492
      %p496 = pneg %p490
      %p497 = scmp.eq.s32.totalorder %s35, 1
      %p498 = por %p496, %p497
      %p499 = scmp.ne.s32.totalorder %s491, %s494
      %p500 = scmp.eq.s32.totalorder %s35, 0
      %p501 = por %p499, %p500
      %p502 = scmp.ne.s32.totalorder %s491, %s494
      %p503 = scmp.eq.s32.totalorder %s40, 1
      %p504 = por %p502, %p503
      %p505 = scmp.ne.s32.totalorder %s494, %s495
      %p506 = scmp.eq.s32.totalorder %s40, 0
      %p507 = por %p505, %p506
      %p508 = scmp.ne.s32.totalorder %s494, %s495
      %p509 = scmp.eq.s32.totalorder %s41, 1
      %p510 = por %p508, %p509
      %p512 = scmp.ne.s32.totalorder %s495, %s511
      %p513 = scmp.eq.s32.totalorder %s41, 0
      %p514 = por %p512, %p513
      %p515 = scmp.le.s32.totalorder 1, %s35
      %p516 = scmp.lt.s32.totalorder %s35, 3
      %p517 = pnand %p515, %p516
      %p518 = pneg %p517
      // Predicated region
      $region9: #{forward.1} parent=5 // pred_check
        _
      $region10: #{forward.1} parent=5 // pred_check_branch
        %520 = sbr.rel (%p517) target = $region12
      $region11: #{forward.1} parent=5 // pred_region
        %s521 = ssub.s32 %s35, 1
        // Predicated region
        $region13: #{forward.1} parent=11 // pred_check
          %p522 = pneg %p82
        $region14: #{forward.1} parent=11 // pred_check_branch
          %524 = sbr.rel (%p522) target = $region16
        $region15: #{forward.1} parent=11 // pred_region
          _
        $region16: #{forward.1} parent=11 // pred_fallthru
          _
        // Predicated region
        $region17: #{forward.1} parent=11 // pred_check
          %p525 = pneg %p103
        $region18: #{forward.1} parent=11 // pred_check_branch
          %527 = sbr.rel (%p525) target = $region20
        $region19: #{forward.1} parent=11 // pred_region
          _
        $region20: #{forward.1} parent=11 // pred_fallthru
          _
        // Predicated region
        $region21: #{forward.1} parent=11 // pred_check
          %p528 = pneg %p124
        $region22: #{forward.1} parent=11 // pred_check_branch
          %530 = sbr.rel (%p528) target = $region24
        $region23: #{forward.1} parent=11 // pred_region
          %s532 = ssub.s32 3072, 3072
          %533 = vsyncadd [#allocation9], %s532
          %s534 = sshll.u32 [#allocation8], 4
          %s535 = int_to_ptr.vmem [resolvable:$true] %s534
          %540 = dma.hbm_to_vmem [thread:$0]  %s3, 3072, %s535, [#allocation9], 64, 64, 4
        $region24: #{forward.1} parent=11 // pred_fallthru
          _
        // Predicated region
        $region25: #{forward.1} parent=11 // pred_check
          %p541 = pneg %p145
        $region26: #{forward.1} parent=11 // pred_check_branch
          %543 = sbr.rel (%p541) target = $region28
        $region27: #{forward.1} parent=11 // pred_region
          _
        $region28: #{forward.1} parent=11 // pred_fallthru
          _
        // Predicated region
        $region29: #{forward.1} parent=11 // pred_check
          %p544 = pneg %p166
        $region30: #{forward.1} parent=11 // pred_check_branch
          %546 = sbr.rel (%p544) target = $region32
        $region31: #{forward.1} parent=11 // pred_region
          %s548 = ssub.s32 6144, 6144
          %549 = vsyncadd [#allocation12], %s548
          %s550 = sshll.u32 [#allocation11], 4
          %s551 = int_to_ptr.vmem [resolvable:$true] %s550
          %556 = dma.hbm_to_vmem [thread:$0]  %s5, 6144, %s551, [#allocation12], 128, 128, 8
        $region32: #{forward.1} parent=11 // pred_fallthru
          _
        // Predicated region
        $region33: #{forward.1} parent=11 // pred_check
          %p557 = pneg %p187
        $region34: #{forward.1} parent=11 // pred_check_branch
          %559 = sbr.rel (%p557) target = $region36
        $region35: #{forward.1} parent=11 // pred_region
          _
        $region36: #{forward.1} parent=11 // pred_fallthru
          _
        // Predicated region
        $region37: #{forward.1} parent=11 // pred_check
          %p560 = pneg %p208
        $region38: #{forward.1} parent=11 // pred_check_branch
          %562 = sbr.rel (%p560) target = $region40
        $region39: #{forward.1} parent=11 // pred_region
          %s564 = ssub.s32 12288, 12288
          %565 = vsyncadd [#allocation12], %s564
          %s566 = sshll.u32 [#allocation13], 4
          %s567 = int_to_ptr.vmem [resolvable:$true] %s566
          %572 = dma.hbm_to_vmem [thread:$0]  %s7, 12288, %s567, [#allocation12], 128, 128, 8
        $region40: #{forward.1} parent=11 // pred_fallthru
          _
        // Predicated region
        $region41: #{forward.1} parent=11 // pred_check
          %p573 = pneg %p229
        $region42: #{forward.1} parent=11 // pred_check_branch
          %575 = sbr.rel (%p573) target = $region44
        $region43: #{forward.1} parent=11 // pred_region
          _
        $region44: #{forward.1} parent=11 // pred_fallthru
          _
        // Predicated region
        $region45: #{forward.1} parent=11 // pred_check
          %p576 = pneg %p250
        $region46: #{forward.1} parent=11 // pred_check_branch
          %578 = sbr.rel (%p576) target = $region48
        $region47: #{forward.1} parent=11 // pred_region
          %s580 = ssub.s32 12288, 12288
          %581 = vsyncadd [#allocation15], %s580
          %s582 = sshll.u32 [#allocation14], 4
          %s583 = int_to_ptr.vmem [resolvable:$true] %s582
          %588 = dma.hbm_to_vmem [thread:$0]  %s9, 12288, %s583, [#allocation15], 128, 128, 8
        $region48: #{forward.1} parent=11 // pred_fallthru
          _
        // Predicated region
        $region49: #{forward.1} parent=11 // pred_check
          %p589 = pneg %p271
        $region50: #{forward.1} parent=11 // pred_check_branch
          %591 = sbr.rel (%p589) target = $region52
        $region51: #{forward.1} parent=11 // pred_region
          _
        $region52: #{forward.1} parent=11 // pred_fallthru
          _
        // Predicated region
        $region53: #{forward.1} parent=11 // pred_check
          %p592 = pneg %p292
        $region54: #{forward.1} parent=11 // pred_check_branch
          %594 = sbr.rel (%p592) target = $region56
        $region55: #{forward.1} parent=11 // pred_region
          %s596 = ssub.s32 12288, 12288
          %597 = vsyncadd [#allocation15], %s596
          %s598 = sshll.u32 [#allocation16], 4
          %s599 = int_to_ptr.vmem [resolvable:$true] %s598
          %604 = dma.hbm_to_vmem [thread:$0]  %s11, 12288, %s599, [#allocation15], 128, 128, 8
        $region56: #{forward.1} parent=11 // pred_fallthru
          _
        // Predicated region
        $region57: #{forward.1} parent=11 // pred_check
          %p605 = pneg %p313
        $region58: #{forward.1} parent=11 // pred_check_branch
          %607 = sbr.rel (%p605) target = $region60
        $region59: #{forward.1} parent=11 // pred_region
          _
        $region60: #{forward.1} parent=11 // pred_fallthru
          _
        // Predicated region
        $region61: #{forward.1} parent=11 // pred_check
          %p608 = pneg %p334
        $region62: #{forward.1} parent=11 // pred_check_branch
          %610 = sbr.rel (%p608) target = $region64
        $region63: #{forward.1} parent=11 // pred_region
          %s612 = ssub.s32 24576, 24576
          %613 = vsyncadd [#allocation18], %s612
          %s614 = sshll.u32 [#allocation17], 4
          %s615 = int_to_ptr.vmem [resolvable:$true] %s614
          %620 = dma.hbm_to_vmem [thread:$0]  %s13, 24576, %s615, [#allocation18], 256, 256, 16
        $region64: #{forward.1} parent=11 // pred_fallthru
          _
        // Predicated region
        $region65: #{forward.1} parent=11 // pred_check
          %p621 = pneg %p355
        $region66: #{forward.1} parent=11 // pred_check_branch
          %623 = sbr.rel (%p621) target = $region68
        $region67: #{forward.1} parent=11 // pred_region
          _
        $region68: #{forward.1} parent=11 // pred_fallthru
          _
        // Predicated region
        $region69: #{forward.1} parent=11 // pred_check
          %p624 = pneg %p376
        $region70: #{forward.1} parent=11 // pred_check_branch
          %626 = sbr.rel (%p624) target = $region72
        $region71: #{forward.1} parent=11 // pred_region
          _
        $region72: #{forward.1} parent=11 // pred_fallthru
          _
        // Predicated region
        $region73: #{forward.1} parent=11 // pred_check
          %p627 = pneg %p397
        $region74: #{forward.1} parent=11 // pred_check_branch
          %629 = sbr.rel (%p627) target = $region76
        $region75: #{forward.1} parent=11 // pred_region
          _
        $region76: #{forward.1} parent=11 // pred_fallthru
          _
        // Predicated region
        $region77: #{forward.1} parent=11 // pred_check
          %p630 = pneg %p418
        $region78: #{forward.1} parent=11 // pred_check_branch
          %632 = sbr.rel (%p630) target = $region80
        $region79: #{forward.1} parent=11 // pred_region
          %s634 = ssub.s32 2048, 2048
          %635 = vsyncadd [#allocation18], %s634
          %s636 = sshll.u32 [#allocation19], 4
          %s637 = int_to_ptr.vmem [resolvable:$true] %s636
          %642 = dma.hbm_to_vmem [thread:$0]  %s17, 2048, %s637, [#allocation18], 64, 64, 4
        $region80: #{forward.1} parent=11 // pred_fallthru
          _
        // Predicated region
        $region81: #{forward.1} parent=11 // pred_check
          %p643 = pneg %p439
        $region82: #{forward.1} parent=11 // pred_check_branch
          %645 = sbr.rel (%p643) target = $region84
        $region83: #{forward.1} parent=11 // pred_region
          %s647 = ssub.s32 2048, 2048
          %648 = vsyncadd [#allocation21], %s647
          %s649 = sshll.u32 [#allocation20], 4
          %s650 = int_to_ptr.vmem [resolvable:$true] %s649
          %655 = dma.hbm_to_vmem [thread:$0]  %s18, 2048, %s650, [#allocation21], 64, 64, 4
        $region84: #{forward.1} parent=11 // pred_fallthru
          _
        // Predicated region
        $region85: #{forward.1} parent=11 // pred_check
          %p656 = pneg %p460
        $region86: #{forward.1} parent=11 // pred_check_branch
          %658 = sbr.rel (%p656) target = $region88
        $region87: #{forward.1} parent=11 // pred_region
          %s660 = ssub.s32 4096, 4096
          %661 = vsyncadd [#allocation21], %s660
          %s662 = sshll.u32 [#allocation22], 4
          %s663 = int_to_ptr.vmem [resolvable:$true] %s662
          %668 = dma.hbm_to_vmem [thread:$0]  %s19, 4096, %s663, [#allocation21], 64, 64, 4
        $region88: #{forward.1} parent=11 // pred_fallthru
          _
        // Predicated region
        $region89: #{forward.1} parent=11 // pred_check
          %p669 = pneg %p481
        $region90: #{forward.1} parent=11 // pred_check_branch
          %671 = sbr.rel (%p669) target = $region92
        $region91: #{forward.1} parent=11 // pred_region
          _
        $region92: #{forward.1} parent=11 // pred_fallthru
          _
      $region12: #{forward.1} parent=5 // pred_fallthru
        _
      %p672 = scmp.lt.s32.totalorder %s35, 2
      // Predicated region
      $region93: #{forward.1} parent=5 // pred_check
        %p673 = pneg %p672
      $region94: #{forward.1} parent=5 // pred_check_branch
        %675 = sbr.rel (%p673) target = $region96
      $region95: #{forward.1} parent=5 // pred_region
        // Predicated region
        $region97: #{forward.1} parent=95 // pred_check
          %p676 = pneg %p55
        $region98: #{forward.1} parent=95 // pred_check_branch
          %678 = sbr.rel (%p676) target = $region100
        $region99: #{forward.1} parent=95 // pred_region
          %p679 = scmp.lt.s32.totalorder %s35, 1
          %s680 = scalar_select %p679, %s35, 1
          %s681 = smul.addr %s680, 4
          %s682 = smul.addr %s681, 4
          %s683 = scalar_lea.vmem %s0, %s682
        $region100: #{forward.1} parent=95 // pred_fallthru
          _
      $region96: #{forward.1} parent=5 // pred_fallthru
        _
      %p684 = scmp.le.s32.totalorder 1, %s35
      %p685 = scmp.lt.s32.totalorder %s35, 3
      %p686 = pnand %p684, %p685
      %p687 = pneg %p686
      // Predicated region
      $region101: #{forward.1} parent=5 // pred_check
        _
      $region102: #{forward.1} parent=5 // pred_check_branch
        %689 = sbr.rel (%p686) target = $region104
      $region103: #{forward.1} parent=5 // pred_region
        %s690 = ssub.s32 %s35, 1
        // Predicated region
        $region105: #{forward.1} parent=103 // pred_check
          %p691 = pneg %p124
        $region106: #{forward.1} parent=103 // pred_check_branch
          %693 = sbr.rel (%p691) target = $region108
        $region107: #{forward.1} parent=103 // pred_region
          %694 = dma.done [#allocation9], 3072
        $region108: #{forward.1} parent=103 // pred_fallthru
          _
        // Predicated region
        $region109: #{forward.1} parent=103 // pred_check
          %p695 = pneg %p166
        $region110: #{forward.1} parent=103 // pred_check_branch
          %697 = sbr.rel (%p695) target = $region112
        $region111: #{forward.1} parent=103 // pred_region
          %698 = dma.done [#allocation12], 6144
        $region112: #{forward.1} parent=103 // pred_fallthru
          _
        // Predicated region
        $region113: #{forward.1} parent=103 // pred_check
          %p699 = pneg %p208
        $region114: #{forward.1} parent=103 // pred_check_branch
          %701 = sbr.rel (%p699) target = $region116
        $region115: #{forward.1} parent=103 // pred_region
          %702 = dma.done [#allocation12], 12288
        $region116: #{forward.1} parent=103 // pred_fallthru
          _
        // Predicated region
        $region117: #{forward.1} parent=103 // pred_check
          %p703 = pneg %p250
        $region118: #{forward.1} parent=103 // pred_check_branch
          %705 = sbr.rel (%p703) target = $region120
        $region119: #{forward.1} parent=103 // pred_region
          %706 = dma.done [#allocation15], 12288
        $region120: #{forward.1} parent=103 // pred_fallthru
          _
        // Predicated region
        $region121: #{forward.1} parent=103 // pred_check
          %p707 = pneg %p292
        $region122: #{forward.1} parent=103 // pred_check_branch
          %709 = sbr.rel (%p707) target = $region124
        $region123: #{forward.1} parent=103 // pred_region
          %710 = dma.done [#allocation15], 12288
        $region124: #{forward.1} parent=103 // pred_fallthru
          _
        // Predicated region
        $region125: #{forward.1} parent=103 // pred_check
          %p711 = pneg %p334
        $region126: #{forward.1} parent=103 // pred_check_branch
          %713 = sbr.rel (%p711) target = $region128
        $region127: #{forward.1} parent=103 // pred_region
          %714 = dma.done [#allocation18], 24576
        $region128: #{forward.1} parent=103 // pred_fallthru
          _
        // Predicated region
        $region129: #{forward.1} parent=103 // pred_check
          %p715 = pneg %p418
        $region130: #{forward.1} parent=103 // pred_check_branch
          %717 = sbr.rel (%p715) target = $region132
        $region131: #{forward.1} parent=103 // pred_region
          %718 = dma.done [#allocation18], 2048
        $region132: #{forward.1} parent=103 // pred_fallthru
          _
        // Predicated region
        $region133: #{forward.1} parent=103 // pred_check
          %p719 = pneg %p439
        $region134: #{forward.1} parent=103 // pred_check_branch
          %721 = sbr.rel (%p719) target = $region136
        $region135: #{forward.1} parent=103 // pred_region
          %722 = dma.done [#allocation21], 2048
        $region136: #{forward.1} parent=103 // pred_fallthru
          _
        // Predicated region
        $region137: #{forward.1} parent=103 // pred_check
          %p723 = pneg %p460
        $region138: #{forward.1} parent=103 // pred_check_branch
          %725 = sbr.rel (%p723) target = $region140
        $region139: #{forward.1} parent=103 // pred_region
          %726 = dma.done [#allocation21], 4096
        $region140: #{forward.1} parent=103 // pred_fallthru
          _
        %p727 = scmp.lt.s32.totalorder %s40, 1
        %s728 = scalar_select %p727, %s40, 1
        %s729 = smul.addr %s728, 4
        %s730 = smul.addr %s729, 4
        %s731 = scalar_lea.vmem %s0, %s730
        %p732 = pneg %p61
        %p733 = pneg %p58
        %p734 = pneg %p82
        %p735 = pneg %p79
        %p736 = pneg %p103
        %p737 = pneg %p100
        %p738 = pneg %p124
        %p739 = pneg %p121
        %p740 = pneg %p145
        %p741 = pneg %p142
        %p742 = pneg %p166
        %p743 = pneg %p163
        %p744 = pneg %p187
        %p745 = pneg %p184
        %p746 = pneg %p208
        %p747 = pneg %p205
        %p748 = pneg %p229
        %p749 = pneg %p226
        %p750 = pneg %p250
        %p751 = pneg %p247
        %p752 = pneg %p271
        %p753 = pneg %p268
        %p754 = pneg %p292
        %p755 = pneg %p289
        %p756 = pneg %p313
        %p757 = pneg %p310
        %p758 = pneg %p334
        %p759 = pneg %p331
        %p760 = pneg %p355
        %p761 = pneg %p352
        %p762 = pneg %p376
        %p763 = pneg %p373
        %p764 = pneg %p397
        %p765 = pneg %p394
        %p766 = pneg %p418
        %p767 = pneg %p415
        %p768 = pneg %p439
        %p769 = pneg %p436
        %p770 = pneg %p460
        %p771 = pneg %p457
        %p772 = pneg %p481
        %p773 = pneg %p478
        %p774 = pneg %p507
        %p775 = pneg %p504
        %s776 = sand.u32 %s494, 1
        %s777 = scalar_lea.sflag [#allocation10], %s776
        %s778 = sand.u32 %s494, 1
        %s779 = scalar_lea.vmem [#allocation23], %s778
        %p780 = scmp.lt.s32.totalorder %s40, 1
        %s781 = scalar_select %p780, %s40, 1
        %s782 = smul.addr %s781, 4
        %s783 = smul.addr %s782, 4
        %s784 = scalar_lea.vmem %s0, %s783
        %786 = vst [vmem:[#allocation2 + $0x7] sm:$0x1] 0.0
        %787 = vst [vmem:[#allocation2 + $0x10] sm:$0x1] 0.0
        %788 = vst [vmem:[#allocation3 + $0x7] sm:$0x1] 0.0
        %789 = vst [vmem:[#allocation3 + $0x10] sm:$0x1] 0.0
        %v790 = vlaneseq
        %vm791 = vcmp.ge.s32.totalorder %v790, 0
        %vm792 = vcmp.lt.s32.totalorder %v790, 256
        %vm793 = vmand %vm791, %vm792
        %s794 = scalar_lea.vmem [#allocation4], 7
        %795 = vst.msk [vmem:[%s794] ss:$8 sm:$0x3] %vm793, 0.0
        %796 = vst.msk [vmem:[%s794] ss:$8 sm:$0x0] %vm793, 0.0
        %s797 = scalar_lea.vmem [#allocation4], 32
        %798 = vst.msk [vmem:[%s797] ss:$8 sm:$0x3] %vm793, 0.0
        %799 = vst.msk [vmem:[%s797] ss:$8 sm:$0x0] %vm793, 0.0
        %s800 = scalar_lea.vmem [#allocation5], 7
        %801 = vst.msk [vmem:[%s800] ss:$8 sm:$0x3] %vm793, 0.0
        %802 = vst.msk [vmem:[%s800] ss:$8 sm:$0x0] %vm793, 0.0
        %s803 = scalar_lea.vmem [#allocation5], 32
        %804 = vst.msk [vmem:[%s803] ss:$8 sm:$0x3] %vm793, 0.0
        %805 = vst.msk [vmem:[%s803] ss:$8 sm:$0x0] %vm793, 0.0
        %s806 = scalar_lea.vmem [#allocation6], 7
        %807 = vst.msk [vmem:[%s806] ss:$8 sm:$0x3] %vm793, 0.0
        %808 = vst.msk [vmem:[%s806] ss:$8 sm:$0x0] %vm793, 0.0
        %s809 = scalar_lea.vmem [#allocation6], 32
        %810 = vst.msk [vmem:[%s809] ss:$8 sm:$0x3] %vm793, 0.0
        %811 = vst.msk [vmem:[%s809] ss:$8 sm:$0x0] %vm793, 0.0
        %s812 = scalar_lea.vmem [#allocation7], 7
        %813 = vst.msk [vmem:[%s812] ss:$8 sm:$0x3] %vm793, 0.0
        %814 = vst.msk [vmem:[%s812] ss:$8 sm:$0x0] %vm793, 0.0
        %s815 = scalar_lea.vmem [#allocation7], 32
        %816 = vst.msk [vmem:[%s815] ss:$8 sm:$0x3] %vm793, 0.0
        %817 = vst.msk [vmem:[%s815] ss:$8 sm:$0x0] %vm793, 0.0
        %v818 = vld [vmem:[%s784] sm:$0x8]
        %v819 = vld [vmem:[%s784 + $0x4] sm:$0xf]
        %v820 = vld [vmem:[%s784 + $0x8] sm:$0xf]
        %v821 = vld [vmem:[%s784 + $0xc] sm:$0x1]
        %v822 = vld [vmem:[%s1] sm:$0xff]
        %v823 = vld [vmem:[%s1 + $0x8] sm:$0xff]
        %v824 = vld [vmem:[%s1 + $0x10] sm:$0xff]
        %v825 = vld [vmem:[%s1 + $0x18] sm:$0xff]
        %v826 = vld [vmem:[%s1 + $0x20] sm:$0xff]
        %v827 = vld [vmem:[%s1 + $0x28] sm:$0xff]
        %v828 = vld [vmem:[%s1 + $0x30] sm:$0xff]
        %v829 = vld [vmem:[%s1 + $0x38] sm:$0xff]
        %v830 = vld [vmem:[%s1 + $0x40] sm:$0xff]
        %v831 = vld [vmem:[%s1 + $0x48] sm:$0xff]
        %v832 = vld [vmem:[%s1 + $0x50] sm:$0xff]
        %v833 = vld [vmem:[%s1 + $0x58] sm:$0xff]
        %v834 = vld [vmem:[%s1 + $0x60] sm:$0xff]
        %v835 = vld [vmem:[%s1 + $0x68] sm:$0xff]
        %v836 = vld [vmem:[%s1 + $0x70] sm:$0xff]
        %v837 = vld [vmem:[%s1 + $0x78] sm:$0xff]
        %s838 = scalar_lea.vmem %s1, 128
        %v839 = vld [vmem:[%s838] sm:$0xff]
        %v840 = vld [vmem:[%s838 + $0x8] sm:$0xff]
        %v841 = vld [vmem:[%s838 + $0x10] sm:$0xff]
        %v842 = vld [vmem:[%s838 + $0x18] sm:$0xff]
        %v843 = vld [vmem:[%s838 + $0x20] sm:$0xff]
        %v844 = vld [vmem:[%s838 + $0x28] sm:$0xff]
        %v845 = vld [vmem:[%s838 + $0x30] sm:$0xff]
        %v846 = vld [vmem:[%s838 + $0x38] sm:$0xff]
        %v847 = vld [vmem:[%s838 + $0x40] sm:$0xff]
        %v848 = vld [vmem:[%s838 + $0x48] sm:$0xff]
        %v849 = vld [vmem:[%s838 + $0x50] sm:$0xff]
        %v850 = vld [vmem:[%s838 + $0x58] sm:$0xff]
        %v851 = vld [vmem:[%s838 + $0x60] sm:$0xff]
        %v852 = vld [vmem:[%s838 + $0x68] sm:$0xff]
        %v853 = vld [vmem:[%s838 + $0x70] sm:$0xff]
        %v854 = vld [vmem:[%s838 + $0x78] sm:$0xff]
        %v858 = vunpack.c.l.b16 %v818
        %v859 = vunpack.c.l.b16 %v819
        %v860 = vunpack.c.l.b16 %v820
        %v861 = vpack.c.b16 %v859, %v858
        %v862 = vpack.c.b16 %v860, %v860
        %vm863 = vsmask.f32 4352
        %v865 = vshrl.u32 %v861, 16
        %v867 = vrot.slane %v865, 3
        %v868 = vshll.u32 %v861, 16
        %v870 = vrot.slane %v868, 4
        %v871 = vor.u32 %v867, %v870
        %v873 = vshrl.u32 %v862, 16
        %v875 = vrot.slane %v873, 3
        %v876 = vshll.u32 %v862, 16
        %v878 = vrot.slane %v876, 4
        %v879 = vor.u32 %v875, %v878
        %v880 = vsel %vm863, %v871, %v879
        %v898 = vunpack.c.l.b16 %v839
        %v899 = vunpack.c.h.b16 %v839
        %v900 = vunpack.c.l.b16 %v840
        %v901 = vunpack.c.h.b16 %v840
        %v902 = vunpack.c.l.b16 %v841
        %v903 = vunpack.c.h.b16 %v841
        %v904 = vunpack.c.l.b16 %v842
        %v905 = vunpack.c.h.b16 %v842
        %v906 = vunpack.c.l.b16 %v843
        %v907 = vunpack.c.h.b16 %v843
        %v908 = vunpack.c.l.b16 %v844
        %v909 = vunpack.c.h.b16 %v844
        %v910 = vunpack.c.l.b16 %v845
        %v911 = vunpack.c.h.b16 %v845
        %v912 = vunpack.c.l.b16 %v846
        %v913 = vunpack.c.h.b16 %v846
        %v914 = vunpack.c.l.b16 %v847
        %v915 = vunpack.c.h.b16 %v847
        %v916 = vunpack.c.l.b16 %v848
        %v917 = vunpack.c.h.b16 %v848
        %v918 = vunpack.c.l.b16 %v849
        %v919 = vunpack.c.h.b16 %v849
        %v920 = vunpack.c.l.b16 %v850
        %v921 = vunpack.c.h.b16 %v850
        %v922 = vunpack.c.l.b16 %v851
        %v923 = vunpack.c.h.b16 %v851
        %v924 = vunpack.c.l.b16 %v852
        %v925 = vunpack.c.h.b16 %v852
        %v926 = vunpack.c.l.b16 %v853
        %v927 = vunpack.c.h.b16 %v853
        %v928 = vunpack.c.l.b16 %v854
        %v929 = vunpack.c.h.b16 %v854
        %v930 = vpack.c.b16 %v900, %v898
        %v931 = vpack.c.b16 %v901, %v899
        %v932 = vpack.c.b16 %v904, %v902
        %v933 = vpack.c.b16 %v905, %v903
        %v934 = vpack.c.b16 %v908, %v906
        %v935 = vpack.c.b16 %v909, %v907
        %v936 = vpack.c.b16 %v912, %v910
        %v937 = vpack.c.b16 %v913, %v911
        %v938 = vpack.c.b16 %v916, %v914
        %v939 = vpack.c.b16 %v917, %v915
        %v940 = vpack.c.b16 %v920, %v918
        %v941 = vpack.c.b16 %v921, %v919
        %v942 = vpack.c.b16 %v924, %v922
        %v943 = vpack.c.b16 %v925, %v923
        %v944 = vpack.c.b16 %v928, %v926
        %v945 = vpack.c.b16 %v929, %v927
        %962 = vmatprep.subr.bf16.mxu0 %v931
        %963 = vmatpush1.bf16.msra.mxu0 %v930
        %964 = vmatprep.subr.bf16.mxu0 %v933
        %965 = vmatpush1.bf16.msra.mxu0 %v932
        %966 = vmatprep.subr.bf16.mxu0 %v935
        %967 = vmatpush1.bf16.msra.mxu0 %v934
        %968 = vmatprep.subr.bf16.mxu0 %v937
        %969 = vmatpush1.bf16.msra.mxu0 %v936
        %970 = vmatprep.subr.bf16.mxu0 %v939
        %971 = vmatpush1.bf16.msra.mxu0 %v938
        %972 = vmatprep.subr.bf16.mxu0 %v941
        %973 = vmatpush1.bf16.msra.mxu0 %v940
        %974 = vmatprep.subr.bf16.mxu0 %v943
        %975 = vmatpush1.bf16.msra.mxu0 %v942
        %976 = vmatprep.subr.bf16.mxu0 %v945
        %977 = vmatpush1.bf16.msra.mxu0 %v944
        %978 = vmatprep.subr.bf16.mxu0 0
        %979 = vmatpush1.bf16.msra.mxu0 0
        %980 = vmatprep.subr.bf16.mxu0 0
        %981 = vmatpush1.bf16.msra.mxu0 0
        %982 = vmatprep.subr.bf16.mxu0 0
        %983 = vmatpush1.bf16.msra.mxu0 0
        %984 = vmatprep.subr.bf16.mxu0 0
        %985 = vmatpush1.bf16.msra.mxu0 0
        %986 = vmatprep.subr.bf16.mxu0 0
        %987 = vmatpush1.bf16.msra.mxu0 0
        %988 = vmatprep.subr.bf16.mxu0 0
        %989 = vmatpush1.bf16.msra.mxu0 0
        %990 = vmatprep.subr.bf16.mxu0 0
        %991 = vmatpush1.bf16.msra.mxu0 0
        %992 = vmatprep.subr.bf16.mxu0 0
        %993 = vmatpush1.bf16.msra.mxu0 0
        %994 = vmatprep.mubr.bf16.mxu0 0
        %995 = vmatmul.mubr.bf16.gmra.mrb[0].mxu0 %v880
        %v996 = vpop.f32.mrb[0].mxu0
        %v997 = vadd.f32 0.0, %v996
        %v998 = vpop.f32.mrb[0].mxu0
        %v999 = vadd.f32 0.0, %v998
        %v1000 = vpop.f32.mrb[0].mxu0
        %v1001 = vadd.f32 0.0, %v1000
        %v1002 = vpop.f32.mrb[0].mxu0
        %v1003 = vadd.f32 0.0, %v1002
        %1004 = vdwg.mxu0
        %vm1005 = vcmask 1044480
        %v1006 = vrot.slane %v861, 3
        %v1007 = vrot.slane %v862, 3
        %v1008 = vsel %vm1005, %v1006, %v1007
        %v1026 = vunpack.c.l.b16 %v822
        %v1027 = vunpack.c.h.b16 %v822
        %v1028 = vunpack.c.l.b16 %v823
        %v1029 = vunpack.c.h.b16 %v823
        %v1030 = vunpack.c.l.b16 %v824
        %v1031 = vunpack.c.h.b16 %v824
        %v1032 = vunpack.c.l.b16 %v825
        %v1033 = vunpack.c.h.b16 %v825
        %v1034 = vunpack.c.l.b16 %v826
        %v1035 = vunpack.c.h.b16 %v826
        %v1036 = vunpack.c.l.b16 %v827
        %v1037 = vunpack.c.h.b16 %v827
        %v1038 = vunpack.c.l.b16 %v828
        %v1039 = vunpack.c.h.b16 %v828
        %v1040 = vunpack.c.l.b16 %v829
        %v1041 = vunpack.c.h.b16 %v829
        %v1042 = vunpack.c.l.b16 %v830
        %v1043 = vunpack.c.h.b16 %v830
        %v1044 = vunpack.c.l.b16 %v831
        %v1045 = vunpack.c.h.b16 %v831
        %v1046 = vunpack.c.l.b16 %v832
        %v1047 = vunpack.c.h.b16 %v832
        %v1048 = vunpack.c.l.b16 %v833
        %v1049 = vunpack.c.h.b16 %v833
        %v1050 = vunpack.c.l.b16 %v834
        %v1051 = vunpack.c.h.b16 %v834
        %v1052 = vunpack.c.l.b16 %v835
        %v1053 = vunpack.c.h.b16 %v835
        %v1054 = vunpack.c.l.b16 %v836
        %v1055 = vunpack.c.h.b16 %v836
        %v1056 = vunpack.c.l.b16 %v837
        %v1057 = vunpack.c.h.b16 %v837
        %v1058 = vpack.c.b16 %v1028, %v1026
        %v1059 = vpack.c.b16 %v1029, %v1027
        %v1060 = vpack.c.b16 %v1032, %v1030
        %v1061 = vpack.c.b16 %v1033, %v1031
        %v1062 = vpack.c.b16 %v1036, %v1034
        %v1063 = vpack.c.b16 %v1037, %v1035
        %v1064 = vpack.c.b16 %v1040, %v1038
        %v1065 = vpack.c.b16 %v1041, %v1039
        %v1066 = vpack.c.b16 %v1044, %v1042
        %v1067 = vpack.c.b16 %v1045, %v1043
        %v1068 = vpack.c.b16 %v1048, %v1046
        %v1069 = vpack.c.b16 %v1049, %v1047
        %v1070 = vpack.c.b16 %v1052, %v1050
        %v1071 = vpack.c.b16 %v1053, %v1051
        %v1072 = vpack.c.b16 %v1056, %v1054
        %v1073 = vpack.c.b16 %v1057, %v1055
        %1090 = vmatprep.subr.bf16.mxu0 %v1059
        %1091 = vmatpush1.bf16.msra.mxu0 %v1058
        %1092 = vmatprep.subr.bf16.mxu0 %v1061
        %1093 = vmatpush1.bf16.msra.mxu0 %v1060
        %1094 = vmatprep.subr.bf16.mxu0 %v1063
        %1095 = vmatpush1.bf16.msra.mxu0 %v1062
        %1096 = vmatprep.subr.bf16.mxu0 %v1065
        %1097 = vmatpush1.bf16.msra.mxu0 %v1064
        %1098 = vmatprep.subr.bf16.mxu0 %v1067
        %1099 = vmatpush1.bf16.msra.mxu0 %v1066
        %1100 = vmatprep.subr.bf16.mxu0 %v1069
        %1101 = vmatpush1.bf16.msra.mxu0 %v1068
        %1102 = vmatprep.subr.bf16.mxu0 %v1071
        %1103 = vmatpush1.bf16.msra.mxu0 %v1070
        %1104 = vmatprep.subr.bf16.mxu0 %v1073
        %1105 = vmatpush1.bf16.msra.mxu0 %v1072
        %1106 = vmatprep.subr.bf16.mxu0 0
        %1107 = vmatpush1.bf16.msra.mxu0 0
        %1108 = vmatprep.subr.bf16.mxu0 0
        %1109 = vmatpush1.bf16.msra.mxu0 0
        %1110 = vmatprep.subr.bf16.mxu0 0
        %1111 = vmatpush1.bf16.msra.mxu0 0
        %1112 = vmatprep.subr.bf16.mxu0 0
        %1113 = vmatpush1.bf16.msra.mxu0 0
        %1114 = vmatprep.subr.bf16.mxu0 0
        %1115 = vmatpush1.bf16.msra.mxu0 0
        %1116 = vmatprep.subr.bf16.mxu0 0
        %1117 = vmatpush1.bf16.msra.mxu0 0
        %1118 = vmatprep.subr.bf16.mxu0 0
        %1119 = vmatpush1.bf16.msra.mxu0 0
        %1120 = vmatprep.subr.bf16.mxu0 0
        %1121 = vmatpush1.bf16.msra.mxu0 0
        %1122 = vmatprep.mubr.bf16.mxu0 0
        %1123 = vmatmul.mubr.bf16.gmra.mrb[0].mxu0 %v1008
        %v1124 = vpop.f32.mrb[0].mxu0
        %v1125 = vadd.f32 %v997, %v1124
        %v1126 = vpop.f32.mrb[0].mxu0
        %v1127 = vadd.f32 %v999, %v1126
        %v1128 = vpop.f32.mrb[0].mxu0
        %v1129 = vadd.f32 %v1001, %v1128
        %v1130 = vpop.f32.mrb[0].mxu0
        %v1131 = vadd.f32 %v1003, %v1130
        %1132 = vdwg.mxu0
        %s1133 = scalar_lea.vmem %s1, 256
        %v1134 = vld [vmem:[%s1133] sm:$0xff]
        %v1135 = vld [vmem:[%s1133 + $0x8] sm:$0xff]
        %v1136 = vld [vmem:[%s1133 + $0x10] sm:$0xff]
        %v1137 = vld [vmem:[%s1133 + $0x18] sm:$0xff]
        %v1138 = vld [vmem:[%s1133 + $0x20] sm:$0xff]
        %v1139 = vld [vmem:[%s1133 + $0x28] sm:$0xff]
        %v1140 = vld [vmem:[%s1133 + $0x30] sm:$0xff]
        %v1141 = vld [vmem:[%s1133 + $0x38] sm:$0xff]
        %v1142 = vld [vmem:[%s1133 + $0x40] sm:$0xff]
        %v1143 = vld [vmem:[%s1133 + $0x48] sm:$0xff]
        %v1144 = vld [vmem:[%s1133 + $0x50] sm:$0xff]
        %v1145 = vld [vmem:[%s1133 + $0x58] sm:$0xff]
        %v1146 = vld [vmem:[%s1133 + $0x60] sm:$0xff]
        %v1147 = vld [vmem:[%s1133 + $0x68] sm:$0xff]
        %v1148 = vld [vmem:[%s1133 + $0x70] sm:$0xff]
        %v1149 = vld [vmem:[%s1133 + $0x78] sm:$0xff]
        %v1150 = vpack.c.b16 %v860, %v859
        %v1168 = vunpack.c.l.b16 %v1134
        %v1169 = vunpack.c.h.b16 %v1134
        %v1170 = vunpack.c.l.b16 %v1135
        %v1171 = vunpack.c.h.b16 %v1135
        %v1172 = vunpack.c.l.b16 %v1136
        %v1173 = vunpack.c.h.b16 %v1136
        %v1174 = vunpack.c.l.b16 %v1137
        %v1175 = vunpack.c.h.b16 %v1137
        %v1176 = vunpack.c.l.b16 %v1138
        %v1177 = vunpack.c.h.b16 %v1138
        %v1178 = vunpack.c.l.b16 %v1139
        %v1179 = vunpack.c.h.b16 %v1139
        %v1180 = vunpack.c.l.b16 %v1140
        %v1181 = vunpack.c.h.b16 %v1140
        %v1182 = vunpack.c.l.b16 %v1141
        %v1183 = vunpack.c.h.b16 %v1141
        %v1184 = vunpack.c.l.b16 %v1142
        %v1185 = vunpack.c.h.b16 %v1142
        %v1186 = vunpack.c.l.b16 %v1143
        %v1187 = vunpack.c.h.b16 %v1143
        %v1188 = vunpack.c.l.b16 %v1144
        %v1189 = vunpack.c.h.b16 %v1144
        %v1190 = vunpack.c.l.b16 %v1145
        %v1191 = vunpack.c.h.b16 %v1145
        %v1192 = vunpack.c.l.b16 %v1146
        %v1193 = vunpack.c.h.b16 %v1146
        %v1194 = vunpack.c.l.b16 %v1147
        %v1195 = vunpack.c.h.b16 %v1147
        %v1196 = vunpack.c.l.b16 %v1148
        %v1197 = vunpack.c.h.b16 %v1148
        %v1198 = vunpack.c.l.b16 %v1149
        %v1199 = vunpack.c.h.b16 %v1149
        %v1200 = vpack.c.b16 %v1170, %v1168
        %v1201 = vpack.c.b16 %v1171, %v1169
        %v1202 = vpack.c.b16 %v1174, %v1172
        %v1203 = vpack.c.b16 %v1175, %v1173
        %v1204 = vpack.c.b16 %v1178, %v1176
        %v1205 = vpack.c.b16 %v1179, %v1177
        %v1206 = vpack.c.b16 %v1182, %v1180
        %v1207 = vpack.c.b16 %v1183, %v1181
        %v1208 = vpack.c.b16 %v1186, %v1184
        %v1209 = vpack.c.b16 %v1187, %v1185
        %v1210 = vpack.c.b16 %v1190, %v1188
        %v1211 = vpack.c.b16 %v1191, %v1189
        %v1212 = vpack.c.b16 %v1194, %v1192
        %v1213 = vpack.c.b16 %v1195, %v1193
        %v1214 = vpack.c.b16 %v1198, %v1196
        %v1215 = vpack.c.b16 %v1199, %v1197
        %1232 = vmatprep.subr.bf16.mxu0 %v1201
        %1233 = vmatpush1.bf16.msra.mxu0 %v1200
        %1234 = vmatprep.subr.bf16.mxu0 %v1203
        %1235 = vmatpush1.bf16.msra.mxu0 %v1202
        %1236 = vmatprep.subr.bf16.mxu0 %v1205
        %1237 = vmatpush1.bf16.msra.mxu0 %v1204
        %1238 = vmatprep.subr.bf16.mxu0 %v1207
        %1239 = vmatpush1.bf16.msra.mxu0 %v1206
        %1240 = vmatprep.subr.bf16.mxu0 %v1209
        %1241 = vmatpush1.bf16.msra.mxu0 %v1208
        %1242 = vmatprep.subr.bf16.mxu0 %v1211
        %1243 = vmatpush1.bf16.msra.mxu0 %v1210
        %1244 = vmatprep.subr.bf16.mxu0 %v1213
        %1245 = vmatpush1.bf16.msra.mxu0 %v1212
        %1246 = vmatprep.subr.bf16.mxu0 %v1215
        %1247 = vmatpush1.bf16.msra.mxu0 %v1214
        %1248 = vmatprep.subr.bf16.mxu0 0
        %1249 = vmatpush1.bf16.msra.mxu0 0
        %1250 = vmatprep.subr.bf16.mxu0 0
        %1251 = vmatpush1.bf16.msra.mxu0 0
        %1252 = vmatprep.subr.bf16.mxu0 0
        %1253 = vmatpush1.bf16.msra.mxu0 0
        %1254 = vmatprep.subr.bf16.mxu0 0
        %1255 = vmatpush1.bf16.msra.mxu0 0
        %1256 = vmatprep.subr.bf16.mxu0 0
        %1257 = vmatpush1.bf16.msra.mxu0 0
        %1258 = vmatprep.subr.bf16.mxu0 0
        %1259 = vmatpush1.bf16.msra.mxu0 0
        %1260 = vmatprep.subr.bf16.mxu0 0
        %1261 = vmatpush1.bf16.msra.mxu0 0
        %1262 = vmatprep.subr.bf16.mxu0 0
        %1263 = vmatpush1.bf16.msra.mxu0 0
        %1264 = vmatprep.mubr.bf16.mxu0 0
        %1265 = vmatmul.mubr.bf16.gmra.mrb[0].mxu0 %v1150
        %v1266 = vpop.f32.mrb[0].mxu0
        %v1267 = vadd.f32 0.0, %v1266
        %v1268 = vpop.f32.mrb[0].mxu0
        %v1269 = vadd.f32 0.0, %v1268
        %v1270 = vpop.f32.mrb[0].mxu0
        %v1271 = vadd.f32 0.0, %v1270
        %v1272 = vpop.f32.mrb[0].mxu0
        %v1273 = vadd.f32 0.0, %v1272
        %1274 = vdwg.mxu0
        %v1275 = vadd.f32 %v1125, %v1267
        %v1276 = vadd.f32 %v1127, %v1269
        %v1277 = vadd.f32 %v1129, %v1271
        %v1278 = vadd.f32 %v1131, %v1273
        %s1279 = scalar_lea.vmem %s1, 384
        %v1280 = vld [vmem:[%s1279] sm:$0xff]
        %v1281 = vld [vmem:[%s1279 + $0x8] sm:$0xff]
        %v1282 = vld [vmem:[%s1279 + $0x10] sm:$0xff]
        %v1283 = vld [vmem:[%s1279 + $0x18] sm:$0xff]
        %v1284 = vld [vmem:[%s1279 + $0x20] sm:$0xff]
        %v1285 = vld [vmem:[%s1279 + $0x28] sm:$0xff]
        %v1286 = vld [vmem:[%s1279 + $0x30] sm:$0xff]
        %v1287 = vld [vmem:[%s1279 + $0x38] sm:$0xff]
        %v1288 = vld [vmem:[%s1279 + $0x40] sm:$0xff]
        %v1289 = vld [vmem:[%s1279 + $0x48] sm:$0xff]
        %v1290 = vld [vmem:[%s1279 + $0x50] sm:$0xff]
        %v1291 = vld [vmem:[%s1279 + $0x58] sm:$0xff]
        %v1292 = vld [vmem:[%s1279 + $0x60] sm:$0xff]
        %v1293 = vld [vmem:[%s1279 + $0x68] sm:$0xff]
        %v1294 = vld [vmem:[%s1279 + $0x70] sm:$0xff]
        %v1295 = vld [vmem:[%s1279 + $0x78] sm:$0xff]
        %v1297 = vunpack.c.l.b16 %v821
        %v1298 = vpack.c.b16 %v1297, %v1297
        %vm1299 = vsmask.f32 7424
        %v1301 = vshrl.u32 %v1150, 16
        %v1303 = vshll.u32 %v1150, 16
        %v1305 = vrot.slane %v1303, 1
        %v1306 = vor.u32 %v1301, %v1305
        %v1308 = vshll.u32 %v1298, 16
        %v1310 = vrot.slane %v1308, 1
        %v1311 = vsel %vm1299, %v1306, %v1310
        %v1329 = vunpack.c.l.b16 %v1280
        %v1330 = vunpack.c.h.b16 %v1280
        %v1331 = vunpack.c.l.b16 %v1281
        %v1332 = vunpack.c.h.b16 %v1281
        %v1333 = vunpack.c.l.b16 %v1282
        %v1334 = vunpack.c.h.b16 %v1282
        %v1335 = vunpack.c.l.b16 %v1283
        %v1336 = vunpack.c.h.b16 %v1283
        %v1337 = vunpack.c.l.b16 %v1284
        %v1338 = vunpack.c.h.b16 %v1284
        %v1339 = vunpack.c.l.b16 %v1285
        %v1340 = vunpack.c.h.b16 %v1285
        %v1341 = vunpack.c.l.b16 %v1286
        %v1342 = vunpack.c.h.b16 %v1286
        %v1343 = vunpack.c.l.b16 %v1287
        %v1344 = vunpack.c.h.b16 %v1287
        %v1345 = vunpack.c.l.b16 %v1288
        %v1346 = vunpack.c.h.b16 %v1288
        %v1347 = vunpack.c.l.b16 %v1289
        %v1348 = vunpack.c.h.b16 %v1289
        %v1349 = vunpack.c.l.b16 %v1290
        %v1350 = vunpack.c.h.b16 %v1290
        %v1351 = vunpack.c.l.b16 %v1291
        %v1352 = vunpack.c.h.b16 %v1291
        %v1353 = vunpack.c.l.b16 %v1292
        %v1354 = vunpack.c.h.b16 %v1292
        %v1355 = vunpack.c.l.b16 %v1293
        %v1356 = vunpack.c.h.b16 %v1293
        %v1357 = vunpack.c.l.b16 %v1294
        %v1358 = vunpack.c.h.b16 %v1294
        %v1359 = vunpack.c.l.b16 %v1295
        %v1360 = vunpack.c.h.b16 %v1295
        %v1361 = vpack.c.b16 %v1331, %v1329
        %v1362 = vpack.c.b16 %v1332, %v1330
        %v1363 = vpack.c.b16 %v1335, %v1333
        %v1364 = vpack.c.b16 %v1336, %v1334
        %v1365 = vpack.c.b16 %v1339, %v1337
        %v1366 = vpack.c.b16 %v1340, %v1338
        %v1367 = vpack.c.b16 %v1343, %v1341
        %v1368 = vpack.c.b16 %v1344, %v1342
        %v1369 = vpack.c.b16 %v1347, %v1345
        %v1370 = vpack.c.b16 %v1348, %v1346
        %v1371 = vpack.c.b16 %v1351, %v1349
        %v1372 = vpack.c.b16 %v1352, %v1350
        %v1373 = vpack.c.b16 %v1355, %v1353
        %v1374 = vpack.c.b16 %v1356, %v1354
        %v1375 = vpack.c.b16 %v1359, %v1357
        %v1376 = vpack.c.b16 %v1360, %v1358
        %1393 = vmatprep.subr.bf16.mxu0 %v1362
        %1394 = vmatpush1.bf16.msra.mxu0 %v1361
        %1395 = vmatprep.subr.bf16.mxu0 %v1364
        %1396 = vmatpush1.bf16.msra.mxu0 %v1363
        %1397 = vmatprep.subr.bf16.mxu0 %v1366
        %1398 = vmatpush1.bf16.msra.mxu0 %v1365
        %1399 = vmatprep.subr.bf16.mxu0 %v1368
        %1400 = vmatpush1.bf16.msra.mxu0 %v1367
        %1401 = vmatprep.subr.bf16.mxu0 %v1370
        %1402 = vmatpush1.bf16.msra.mxu0 %v1369
        %1403 = vmatprep.subr.bf16.mxu0 %v1372
        %1404 = vmatpush1.bf16.msra.mxu0 %v1371
        %1405 = vmatprep.subr.bf16.mxu0 %v1374
        %1406 = vmatpush1.bf16.msra.mxu0 %v1373
        %1407 = vmatprep.subr.bf16.mxu0 %v1376
        %1408 = vmatpush1.bf16.msra.mxu0 %v1375
        %1409 = vmatprep.subr.bf16.mxu0 0
        %1410 = vmatpush1.bf16.msra.mxu0 0
        %1411 = vmatprep.subr.bf16.mxu0 0
        %1412 = vmatpush1.bf16.msra.mxu0 0
        %1413 = vmatprep.subr.bf16.mxu0 0
        %1414 = vmatpush1.bf16.msra.mxu0 0
        %1415 = vmatprep.subr.bf16.mxu0 0
        %1416 = vmatpush1.bf16.msra.mxu0 0
        %1417 = vmatprep.subr.bf16.mxu0 0
        %1418 = vmatpush1.bf16.msra.mxu0 0
        %1419 = vmatprep.subr.bf16.mxu0 0
        %1420 = vmatpush1.bf16.msra.mxu0 0
        %1421 = vmatprep.subr.bf16.mxu0 0
        %1422 = vmatpush1.bf16.msra.mxu0 0
        %1423 = vmatprep.subr.bf16.mxu0 0
        %1424 = vmatpush1.bf16.msra.mxu0 0
        %1425 = vmatprep.mubr.bf16.mxu0 0
        %1426 = vmatmul.mubr.bf16.gmra.mrb[0].mxu0 %v1311
        %v1427 = vpop.f32.mrb[0].mxu0
        %v1428 = vadd.f32 0.0, %v1427
        %v1429 = vpop.f32.mrb[0].mxu0
        %v1430 = vadd.f32 0.0, %v1429
        %v1431 = vpop.f32.mrb[0].mxu0
        %v1432 = vadd.f32 0.0, %v1431
        %v1433 = vpop.f32.mrb[0].mxu0
        %v1434 = vadd.f32 0.0, %v1433
        %1435 = vdwg.mxu0
        %v1436 = vadd.f32 %v1275, %v1428
        %v1437 = vadd.f32 %v1276, %v1430
        %v1438 = vadd.f32 %v1277, %v1432
        %v1439 = vadd.f32 %v1278, %v1434
        %s1440 = scalar_lea.vmem %s1, 512
        %v1441 = vld [vmem:[%s1440] sm:$0xff]
        %v1442 = vld [vmem:[%s1440 + $0x8] sm:$0xff]
        %v1443 = vld [vmem:[%s1440 + $0x10] sm:$0xff]
        %v1444 = vld [vmem:[%s1440 + $0x18] sm:$0xff]
        %v1445 = vld [vmem:[%s1440 + $0x20] sm:$0xff]
        %v1446 = vld [vmem:[%s1440 + $0x28] sm:$0xff]
        %v1447 = vld [vmem:[%s1440 + $0x30] sm:$0xff]
        %v1448 = vld [vmem:[%s1440 + $0x38] sm:$0xff]
        %v1449 = vld [vmem:[%s1440 + $0x40] sm:$0xff]
        %v1450 = vld [vmem:[%s1440 + $0x48] sm:$0xff]
        %v1451 = vld [vmem:[%s1440 + $0x50] sm:$0xff]
        %v1452 = vld [vmem:[%s1440 + $0x58] sm:$0xff]
        %v1453 = vld [vmem:[%s1440 + $0x60] sm:$0xff]
        %v1454 = vld [vmem:[%s1440 + $0x68] sm:$0xff]
        %v1455 = vld [vmem:[%s1440 + $0x70] sm:$0xff]
        %v1456 = vld [vmem:[%s1440 + $0x78] sm:$0xff]
        %vm1457 = vcmask 1046528
        %v1458 = vrot.slane %v1150, 1
        %v1459 = vrot.slane %v1298, 1
        %v1460 = vsel %vm1457, %v1458, %v1459
        %v1478 = vunpack.c.l.b16 %v1441
        %v1479 = vunpack.c.h.b16 %v1441
        %v1480 = vunpack.c.l.b16 %v1442
        %v1481 = vunpack.c.h.b16 %v1442
        %v1482 = vunpack.c.l.b16 %v1443
        %v1483 = vunpack.c.h.b16 %v1443
        %v1484 = vunpack.c.l.b16 %v1444
        %v1485 = vunpack.c.h.b16 %v1444
        %v1486 = vunpack.c.l.b16 %v1445
        %v1487 = vunpack.c.h.b16 %v1445
        %v1488 = vunpack.c.l.b16 %v1446
        %v1489 = vunpack.c.h.b16 %v1446
        %v1490 = vunpack.c.l.b16 %v1447
        %v1491 = vunpack.c.h.b16 %v1447
        %v1492 = vunpack.c.l.b16 %v1448
        %v1493 = vunpack.c.h.b16 %v1448
        %v1494 = vunpack.c.l.b16 %v1449
        %v1495 = vunpack.c.h.b16 %v1449
        %v1496 = vunpack.c.l.b16 %v1450
        %v1497 = vunpack.c.h.b16 %v1450
        %v1498 = vunpack.c.l.b16 %v1451
        %v1499 = vunpack.c.h.b16 %v1451
        %v1500 = vunpack.c.l.b16 %v1452
        %v1501 = vunpack.c.h.b16 %v1452
        %v1502 = vunpack.c.l.b16 %v1453
        %v1503 = vunpack.c.h.b16 %v1453
        %v1504 = vunpack.c.l.b16 %v1454
        %v1505 = vunpack.c.h.b16 %v1454
        %v1506 = vunpack.c.l.b16 %v1455
        %v1507 = vunpack.c.h.b16 %v1455
        %v1508 = vunpack.c.l.b16 %v1456
        %v1509 = vunpack.c.h.b16 %v1456
        %v1510 = vpack.c.b16 %v1480, %v1478
        %v1511 = vpack.c.b16 %v1481, %v1479
        %v1512 = vpack.c.b16 %v1484, %v1482
        %v1513 = vpack.c.b16 %v1485, %v1483
        %v1514 = vpack.c.b16 %v1488, %v1486
        %v1515 = vpack.c.b16 %v1489, %v1487
        %v1516 = vpack.c.b16 %v1492, %v1490
        %v1517 = vpack.c.b16 %v1493, %v1491
        %v1518 = vpack.c.b16 %v1496, %v1494
        %v1519 = vpack.c.b16 %v1497, %v1495
        %v1520 = vpack.c.b16 %v1500, %v1498
        %v1521 = vpack.c.b16 %v1501, %v1499
        %v1522 = vpack.c.b16 %v1504, %v1502
        %v1523 = vpack.c.b16 %v1505, %v1503
        %v1524 = vpack.c.b16 %v1508, %v1506
        %v1525 = vpack.c.b16 %v1509, %v1507
        %1542 = vmatprep.subr.bf16.mxu0 %v1511
        %1543 = vmatpush1.bf16.msra.mxu0 %v1510
        %1544 = vmatprep.subr.bf16.mxu0 %v1513
        %1545 = vmatpush1.bf16.msra.mxu0 %v1512
        %1546 = vmatprep.subr.bf16.mxu0 %v1515
        %1547 = vmatpush1.bf16.msra.mxu0 %v1514
        %1548 = vmatprep.subr.bf16.mxu0 %v1517
        %1549 = vmatpush1.bf16.msra.mxu0 %v1516
        %1550 = vmatprep.subr.bf16.mxu0 %v1519
        %1551 = vmatpush1.bf16.msra.mxu0 %v1518
        %1552 = vmatprep.subr.bf16.mxu0 %v1521
        %1553 = vmatpush1.bf16.msra.mxu0 %v1520
        %1554 = vmatprep.subr.bf16.mxu0 %v1523
        %1555 = vmatpush1.bf16.msra.mxu0 %v1522
        %1556 = vmatprep.subr.bf16.mxu0 %v1525
        %1557 = vmatpush1.bf16.msra.mxu0 %v1524
        %1558 = vmatprep.subr.bf16.mxu0 0
        %1559 = vmatpush1.bf16.msra.mxu0 0
        %1560 = vmatprep.subr.bf16.mxu0 0
        %1561 = vmatpush1.bf16.msra.mxu0 0
        %1562 = vmatprep.subr.bf16.mxu0 0
        %1563 = vmatpush1.bf16.msra.mxu0 0
        %1564 = vmatprep.subr.bf16.mxu0 0
        %1565 = vmatpush1.bf16.msra.mxu0 0
        %1566 = vmatprep.subr.bf16.mxu0 0
        %1567 = vmatpush1.bf16.msra.mxu0 0
        %1568 = vmatprep.subr.bf16.mxu0 0
        %1569 = vmatpush1.bf16.msra.mxu0 0
        %1570 = vmatprep.subr.bf16.mxu0 0
        %1571 = vmatpush1.bf16.msra.mxu0 0
        %1572 = vmatprep.subr.bf16.mxu0 0
        %1573 = vmatpush1.bf16.msra.mxu0 0
        %1574 = vmatprep.mubr.bf16.mxu0 0
        %1575 = vmatmul.mubr.bf16.gmra.mrb[0].mxu0 %v1460
        %v1576 = vpop.f32.mrb[0].mxu0
        %v1577 = vadd.f32 0.0, %v1576
        %v1578 = vpop.f32.mrb[0].mxu0
        %v1579 = vadd.f32 0.0, %v1578
        %v1580 = vpop.f32.mrb[0].mxu0
        %v1581 = vadd.f32 0.0, %v1580
        %v1582 = vpop.f32.mrb[0].mxu0
        %v1583 = vadd.f32 0.0, %v1582
        %1584 = vdwg.mxu0
        %v1585 = vadd.f32 %v1436, %v1577
        %v1586 = vadd.f32 %v1437, %v1579
        %v1587 = vadd.f32 %v1438, %v1581
        %v1588 = vadd.f32 %v1439, %v1583
        %v1589 = vld [vmem:[%s2] sm:$0x3]
        %v1591 = vlaneseq
        %v1592 = vshrl.u32 %v1591, 7
        %v1593 = vsub.s32 0, %v1592
        %v1594 = vrot.slane %v1589, %v1593
        %v1595 = vlaneseq
        %v1596 = vshrl.u32 %v1595, 7
        %v1597 = vsub.s32 1, %v1596
        %v1598 = vrot.slane %v1589, %v1597
        %v1601 = vadd.f32 %v1585, %v1594
        %v1602 = vadd.f32 %v1586, %v1598
        %v1603 = vadd.f32 %v1587, %v1594
        %v1604 = vadd.f32 %v1588, %v1598
        %v1605 = vmax.f32 %v1601, 0.0
        %v1606 = vmax.f32 %v1602, 0.0
        %v1607 = vmax.f32 %v1603, 0.0
        %v1608 = vmax.f32 %v1604, 0.0
        %v1609 = vpack.c.bf16 %v1607, %v1605
        %v1610 = vpack.c.bf16 %v1608, %v1606
        %v1611 = vld [vmem:[%s15] sm:$0xf]
        %vm1612 = vcmask 130048
        %v1614 = vsel %vm1612, %v1611, 0
        %1616 = vmatprep.subr.bf16.mxu0 %v1610
        %1617 = vmatpush1.bf16.msra.mxu0 %v1609
        %1618 = vmatprep.subr.bf16.mxu0 0
        %1619 = vmatpush1.bf16.msra.mxu0 0
        %1620 = vmatprep.subr.bf16.mxu0 0
        %1621 = vmatpush1.bf16.msra.mxu0 0
        %1622 = vmatprep.subr.bf16.mxu0 0
        %1623 = vmatpush1.bf16.msra.mxu0 0
        %1624 = vmatprep.subr.bf16.mxu0 0
        %1625 = vmatpush1.bf16.msra.mxu0 0
        %1626 = vmatprep.subr.bf16.mxu0 0
        %1627 = vmatpush1.bf16.msra.mxu0 0
        %1628 = vmatprep.subr.bf16.mxu0 0
        %1629 = vmatpush1.bf16.msra.mxu0 0
        %1630 = vmatprep.subr.bf16.mxu0 0
        %1631 = vmatpush1.bf16.msra.mxu0 0
        %1632 = vmatprep.subr.bf16.mxu0 0
        %1633 = vmatpush1.bf16.msra.mxu0 0
        %1634 = vmatprep.subr.bf16.mxu0 0
        %1635 = vmatpush1.bf16.msra.mxu0 0
        %1636 = vmatprep.subr.bf16.mxu0 0
        %1637 = vmatpush1.bf16.msra.mxu0 0
        %1638 = vmatprep.subr.bf16.mxu0 0
        %1639 = vmatpush1.bf16.msra.mxu0 0
        %1640 = vmatprep.subr.bf16.mxu0 0
        %1641 = vmatpush1.bf16.msra.mxu0 0
        %1642 = vmatprep.subr.bf16.mxu0 0
        %1643 = vmatpush1.bf16.msra.mxu0 0
        %1644 = vmatprep.subr.bf16.mxu0 0
        %1645 = vmatpush1.bf16.msra.mxu0 0
        %1646 = vmatprep.subr.bf16.mxu0 0
        %1647 = vmatpush1.bf16.msra.mxu0 0
        %1648 = vmatprep.mubr.bf16.mxu0 0
        %1649 = vmatmul.mubr.bf16.gmra.mrb[0].mxu0 %v1614
        %v1650 = vpop.f32.mrb[0].mxu0
        %v1651 = vadd.f32 0.0, %v1650
        %v1652 = vpop.f32.mrb[0].mxu0
        %v1653 = vadd.f32 0.0, %v1652
        %v1654 = vpop.f32.mrb[0].mxu0
        %v1655 = vpop.f32.mrb[0].mxu0
        %1656 = vdwg.mxu0
        %v1657 = vld [vmem:[%s16] sm:$0xf]
        %v1659 = vsel %vm1612, %v1657, 0
        %1661 = vmatprep.subr.bf16.mxu0 %v1610
        %1662 = vmatpush1.bf16.msra.mxu0 %v1609
        %1663 = vmatprep.subr.bf16.mxu0 0
        %1664 = vmatpush1.bf16.msra.mxu0 0
        %1665 = vmatprep.subr.bf16.mxu0 0
        %1666 = vmatpush1.bf16.msra.mxu0 0
        %1667 = vmatprep.subr.bf16.mxu0 0
        %1668 = vmatpush1.bf16.msra.mxu0 0
        %1669 = vmatprep.subr.bf16.mxu0 0
        %1670 = vmatpush1.bf16.msra.mxu0 0
        %1671 = vmatprep.subr.bf16.mxu0 0
        %1672 = vmatpush1.bf16.msra.mxu0 0
        %1673 = vmatprep.subr.bf16.mxu0 0
        %1674 = vmatpush1.bf16.msra.mxu0 0
        %1675 = vmatprep.subr.bf16.mxu0 0
        %1676 = vmatpush1.bf16.msra.mxu0 0
        %1677 = vmatprep.subr.bf16.mxu0 0
        %1678 = vmatpush1.bf16.msra.mxu0 0
        %1679 = vmatprep.subr.bf16.mxu0 0
        %1680 = vmatpush1.bf16.msra.mxu0 0
        %1681 = vmatprep.subr.bf16.mxu0 0
        %1682 = vmatpush1.bf16.msra.mxu0 0
        %1683 = vmatprep.subr.bf16.mxu0 0
        %1684 = vmatpush1.bf16.msra.mxu0 0
        %1685 = vmatprep.subr.bf16.mxu0 0
        %1686 = vmatpush1.bf16.msra.mxu0 0
        %1687 = vmatprep.subr.bf16.mxu0 0
        %1688 = vmatpush1.bf16.msra.mxu0 0
        %1689 = vmatprep.subr.bf16.mxu0 0
        %1690 = vmatpush1.bf16.msra.mxu0 0
        %1691 = vmatprep.subr.bf16.mxu0 0
        %1692 = vmatpush1.bf16.msra.mxu0 0
        %1693 = vmatprep.mubr.bf16.mxu0 0
        %1694 = vmatmul.mubr.bf16.gmra.mrb[0].mxu0 %v1659
        %v1695 = vpop.f32.mrb[0].mxu0
        %v1696 = vadd.f32 0.0, %v1695
        %v1697 = vpop.f32.mrb[0].mxu0
        %v1698 = vadd.f32 0.0, %v1697
        %v1699 = vpop.f32.mrb[0].mxu0
        %v1700 = vpop.f32.mrb[0].mxu0
        %1701 = vdwg.mxu0
        %v1702 = vmax.f32 %v1651, %v1696
        %v1703 = vmax.f32 %v1653, %v1698
        %v1704 = vpack.c.bf16 %v1702, %v1702
        %v1705 = vpack.c.bf16 %v1703, %v1703
        %v1706 = vld [vmem:[#allocation19] sm:$0xf]
        %v1707 = vld [vmem:[#allocation19 + $0x4] sm:$0xf]
        %v1708 = vld [vmem:[#allocation19 + $0x8] sm:$0xf]
        %v1709 = vld [vmem:[#allocation19 + $0xc] sm:$0xf]
        %v1710 = vld [vmem:[#allocation19 + $0x10] sm:$0xf]
        %v1711 = vld [vmem:[#allocation19 + $0x14] sm:$0xf]
        %v1712 = vld [vmem:[#allocation19 + $0x18] sm:$0xf]
        %v1713 = vld [vmem:[#allocation19 + $0x1c] sm:$0xf]
        %v1714 = vld [vmem:[#allocation19 + $0x20] sm:$0xf]
        %v1715 = vld [vmem:[#allocation19 + $0x24] sm:$0xf]
        %v1716 = vld [vmem:[#allocation19 + $0x28] sm:$0xf]
        %v1717 = vld [vmem:[#allocation19 + $0x2c] sm:$0xf]
        %v1718 = vld [vmem:[#allocation19 + $0x30] sm:$0xf]
        %v1719 = vld [vmem:[#allocation19 + $0x34] sm:$0xf]
        %v1720 = vld [vmem:[#allocation19 + $0x38] sm:$0xf]
        %v1721 = vld [vmem:[#allocation19 + $0x3c] sm:$0xf]
        %v1722 = vld [vmem:[#allocation19 + $0x40] sm:$0xf]
        %v1723 = vld [vmem:[#allocation19 + $0x44] sm:$0xf]
        %v1724 = vld [vmem:[#allocation19 + $0x48] sm:$0xf]
        %v1725 = vld [vmem:[#allocation19 + $0x4c] sm:$0xf]
        %v1726 = vld [vmem:[#allocation19 + $0x50] sm:$0xf]
        %v1727 = vld [vmem:[#allocation19 + $0x54] sm:$0xf]
        %v1728 = vld [vmem:[#allocation19 + $0x58] sm:$0xf]
        %v1729 = vld [vmem:[#allocation19 + $0x5c] sm:$0xf]
        %v1730 = vld [vmem:[#allocation19 + $0x60] sm:$0xf]
        %v1731 = vld [vmem:[#allocation19 + $0x64] sm:$0xf]
        %v1732 = vld [vmem:[#allocation19 + $0x68] sm:$0xf]
        %v1733 = vld [vmem:[#allocation19 + $0x6c] sm:$0xf]
        %v1734 = vld [vmem:[#allocation19 + $0x70] sm:$0xf]
        %v1735 = vld [vmem:[#allocation19 + $0x74] sm:$0xf]
        %v1736 = vld [vmem:[#allocation19 + $0x78] sm:$0xf]
        %v1737 = vld [vmem:[#allocation19 + $0x7c] sm:$0xf]
        %v1770 = vunpack.c.l.b16 %v1706
        %v1771 = vunpack.c.l.b16 %v1707
        %v1772 = vunpack.c.l.b16 %v1708
        %v1773 = vunpack.c.l.b16 %v1709
        %v1774 = vunpack.c.l.b16 %v1710
        %v1775 = vunpack.c.l.b16 %v1711
        %v1776 = vunpack.c.l.b16 %v1712
        %v1777 = vunpack.c.l.b16 %v1713
        %v1778 = vunpack.c.l.b16 %v1714
        %v1779 = vunpack.c.l.b16 %v1715
        %v1780 = vunpack.c.l.b16 %v1716
        %v1781 = vunpack.c.l.b16 %v1717
        %v1782 = vunpack.c.l.b16 %v1718
        %v1783 = vunpack.c.l.b16 %v1719
        %v1784 = vunpack.c.l.b16 %v1720
        %v1785 = vunpack.c.l.b16 %v1721
        %v1786 = vunpack.c.l.b16 %v1722
        %v1787 = vunpack.c.l.b16 %v1723
        %v1788 = vunpack.c.l.b16 %v1724
        %v1789 = vunpack.c.l.b16 %v1725
        %v1790 = vunpack.c.l.b16 %v1726
        %v1791 = vunpack.c.l.b16 %v1727
        %v1792 = vunpack.c.l.b16 %v1728
        %v1793 = vunpack.c.l.b16 %v1729
        %v1794 = vunpack.c.l.b16 %v1730
        %v1795 = vunpack.c.l.b16 %v1731
        %v1796 = vunpack.c.l.b16 %v1732
        %v1797 = vunpack.c.l.b16 %v1733
        %v1798 = vunpack.c.l.b16 %v1734
        %v1799 = vunpack.c.l.b16 %v1735
        %v1800 = vunpack.c.l.b16 %v1736
        %v1801 = vunpack.c.l.b16 %v1737
        %v1802 = vpack.c.b16 %v1771, %v1770
        %v1803 = vpack.c.b16 %v1773, %v1772
        %v1804 = vpack.c.b16 %v1775, %v1774
        %v1805 = vpack.c.b16 %v1777, %v1776
        %v1806 = vpack.c.b16 %v1779, %v1778
        %v1807 = vpack.c.b16 %v1781, %v1780
        %v1808 = vpack.c.b16 %v1783, %v1782
        %v1809 = vpack.c.b16 %v1785, %v1784
        %v1810 = vpack.c.b16 %v1787, %v1786
        %v1811 = vpack.c.b16 %v1789, %v1788
        %v1812 = vpack.c.b16 %v1791, %v1790
        %v1813 = vpack.c.b16 %v1793, %v1792
        %v1814 = vpack.c.b16 %v1795, %v1794
        %v1815 = vpack.c.b16 %v1797, %v1796
        %v1816 = vpack.c.b16 %v1799, %v1798
        %v1817 = vpack.c.b16 %v1801, %v1800
        %1834 = vmatprep.subr.bf16.mxu0 0
        %1835 = vmatpush1.bf16.msra.mxu0 %v1802
        %1836 = vmatprep.subr.bf16.mxu0 0
        %1837 = vmatpush1.bf16.msra.mxu0 %v1803
        %1838 = vmatprep.subr.bf16.mxu0 0
        %1839 = vmatpush1.bf16.msra.mxu0 %v1804
        %1840 = vmatprep.subr.bf16.mxu0 0
        %1841 = vmatpush1.bf16.msra.mxu0 %v1805
        %1842 = vmatprep.subr.bf16.mxu0 0
        %1843 = vmatpush1.bf16.msra.mxu0 %v1806
        %1844 = vmatprep.subr.bf16.mxu0 0
        %1845 = vmatpush1.bf16.msra.mxu0 %v1807
        %1846 = vmatprep.subr.bf16.mxu0 0
        %1847 = vmatpush1.bf16.msra.mxu0 %v1808
        %1848 = vmatprep.subr.bf16.mxu0 0
        %1849 = vmatpush1.bf16.msra.mxu0 %v1809
        %1850 = vmatprep.subr.bf16.mxu0 0
        %1851 = vmatpush1.bf16.msra.mxu0 %v1810
        %1852 = vmatprep.subr.bf16.mxu0 0
        %1853 = vmatpush1.bf16.msra.mxu0 %v1811
        %1854 = vmatprep.subr.bf16.mxu0 0
        %1855 = vmatpush1.bf16.msra.mxu0 %v1812
        %1856 = vmatprep.subr.bf16.mxu0 0
        %1857 = vmatpush1.bf16.msra.mxu0 %v1813
        %1858 = vmatprep.subr.bf16.mxu0 0
        %1859 = vmatpush1.bf16.msra.mxu0 %v1814
        %1860 = vmatprep.subr.bf16.mxu0 0
        %1861 = vmatpush1.bf16.msra.mxu0 %v1815
        %1862 = vmatprep.subr.bf16.mxu0 0
        %1863 = vmatpush1.bf16.msra.mxu0 %v1816
        %1864 = vmatprep.subr.bf16.mxu0 0
        %1865 = vmatpush1.bf16.msra.mxu0 %v1817
        %1866 = vmatprep.mubr.bf16.mxu0 %v1705
        %1867 = vmatmul.mubr.bf16.gmra.mrb[0].mxu0 %v1704
        %v1868 = vpop.f32.mrb[0].mxu0
        %v1869 = vadd.f32 0.0, %v1868
        %v1870 = vpop.f32.mrb[0].mxu0
        %v1871 = vpop.f32.mrb[0].mxu0
        %v1872 = vpop.f32.mrb[0].mxu0
        %1873 = vdwg.mxu0
        %v1874 = vld [vmem:[#allocation20] sm:$0xf]
        %v1875 = vld [vmem:[#allocation20 + $0x4] sm:$0xf]
        %v1876 = vld [vmem:[#allocation20 + $0x8] sm:$0xf]
        %v1877 = vld [vmem:[#allocation20 + $0xc] sm:$0xf]
        %v1878 = vld [vmem:[#allocation20 + $0x10] sm:$0xf]
        %v1879 = vld [vmem:[#allocation20 + $0x14] sm:$0xf]
        %v1880 = vld [vmem:[#allocation20 + $0x18] sm:$0xf]
        %v1881 = vld [vmem:[#allocation20 + $0x1c] sm:$0xf]
        %v1882 = vld [vmem:[#allocation20 + $0x20] sm:$0xf]
        %v1883 = vld [vmem:[#allocation20 + $0x24] sm:$0xf]
        %v1884 = vld [vmem:[#allocation20 + $0x28] sm:$0xf]
        %v1885 = vld [vmem:[#allocation20 + $0x2c] sm:$0xf]
        %v1886 = vld [vmem:[#allocation20 + $0x30] sm:$0xf]
        %v1887 = vld [vmem:[#allocation20 + $0x34] sm:$0xf]
        %v1888 = vld [vmem:[#allocation20 + $0x38] sm:$0xf]
        %v1889 = vld [vmem:[#allocation20 + $0x3c] sm:$0xf]
        %v1890 = vld [vmem:[#allocation20 + $0x40] sm:$0xf]
        %v1891 = vld [vmem:[#allocation20 + $0x44] sm:$0xf]
        %v1892 = vld [vmem:[#allocation20 + $0x48] sm:$0xf]
        %v1893 = vld [vmem:[#allocation20 + $0x4c] sm:$0xf]
        %v1894 = vld [vmem:[#allocation20 + $0x50] sm:$0xf]
        %v1895 = vld [vmem:[#allocation20 + $0x54] sm:$0xf]
        %v1896 = vld [vmem:[#allocation20 + $0x58] sm:$0xf]
        %v1897 = vld [vmem:[#allocation20 + $0x5c] sm:$0xf]
        %v1898 = vld [vmem:[#allocation20 + $0x60] sm:$0xf]
        %v1899 = vld [vmem:[#allocation20 + $0x64] sm:$0xf]
        %v1900 = vld [vmem:[#allocation20 + $0x68] sm:$0xf]
        %v1901 = vld [vmem:[#allocation20 + $0x6c] sm:$0xf]
        %v1902 = vld [vmem:[#allocation20 + $0x70] sm:$0xf]
        %v1903 = vld [vmem:[#allocation20 + $0x74] sm:$0xf]
        %v1904 = vld [vmem:[#allocation20 + $0x78] sm:$0xf]
        %v1905 = vld [vmem:[#allocation20 + $0x7c] sm:$0xf]
        %v1938 = vunpack.c.l.b16 %v1874
        %v1939 = vunpack.c.l.b16 %v1875
        %v1940 = vunpack.c.l.b16 %v1876
        %v1941 = vunpack.c.l.b16 %v1877
        %v1942 = vunpack.c.l.b16 %v1878
        %v1943 = vunpack.c.l.b16 %v1879
        %v1944 = vunpack.c.l.b16 %v1880
        %v1945 = vunpack.c.l.b16 %v1881
        %v1946 = vunpack.c.l.b16 %v1882
        %v1947 = vunpack.c.l.b16 %v1883
        %v1948 = vunpack.c.l.b16 %v1884
        %v1949 = vunpack.c.l.b16 %v1885
        %v1950 = vunpack.c.l.b16 %v1886
        %v1951 = vunpack.c.l.b16 %v1887
        %v1952 = vunpack.c.l.b16 %v1888
        %v1953 = vunpack.c.l.b16 %v1889
        %v1954 = vunpack.c.l.b16 %v1890
        %v1955 = vunpack.c.l.b16 %v1891
        %v1956 = vunpack.c.l.b16 %v1892
        %v1957 = vunpack.c.l.b16 %v1893
        %v1958 = vunpack.c.l.b16 %v1894
        %v1959 = vunpack.c.l.b16 %v1895
        %v1960 = vunpack.c.l.b16 %v1896
        %v1961 = vunpack.c.l.b16 %v1897
        %v1962 = vunpack.c.l.b16 %v1898
        %v1963 = vunpack.c.l.b16 %v1899
        %v1964 = vunpack.c.l.b16 %v1900
        %v1965 = vunpack.c.l.b16 %v1901
        %v1966 = vunpack.c.l.b16 %v1902
        %v1967 = vunpack.c.l.b16 %v1903
        %v1968 = vunpack.c.l.b16 %v1904
        %v1969 = vunpack.c.l.b16 %v1905
        %v1970 = vpack.c.b16 %v1939, %v1938
        %v1971 = vpack.c.b16 %v1941, %v1940
        %v1972 = vpack.c.b16 %v1943, %v1942
        %v1973 = vpack.c.b16 %v1945, %v1944
        %v1974 = vpack.c.b16 %v1947, %v1946
        %v1975 = vpack.c.b16 %v1949, %v1948
        %v1976 = vpack.c.b16 %v1951, %v1950
        %v1977 = vpack.c.b16 %v1953, %v1952
        %v1978 = vpack.c.b16 %v1955, %v1954
        %v1979 = vpack.c.b16 %v1957, %v1956
        %v1980 = vpack.c.b16 %v1959, %v1958
        %v1981 = vpack.c.b16 %v1961, %v1960
        %v1982 = vpack.c.b16 %v1963, %v1962
        %v1983 = vpack.c.b16 %v1965, %v1964
        %v1984 = vpack.c.b16 %v1967, %v1966
        %v1985 = vpack.c.b16 %v1969, %v1968
        %2002 = vmatprep.subr.bf16.mxu0 0
        %2003 = vmatpush1.bf16.msra.mxu0 %v1970
        %2004 = vmatprep.subr.bf16.mxu0 0
        %2005 = vmatpush1.bf16.msra.mxu0 %v1971
        %2006 = vmatprep.subr.bf16.mxu0 0
        %2007 = vmatpush1.bf16.msra.mxu0 %v1972
        %2008 = vmatprep.subr.bf16.mxu0 0
        %2009 = vmatpush1.bf16.msra.mxu0 %v1973
        %2010 = vmatprep.subr.bf16.mxu0 0
        %2011 = vmatpush1.bf16.msra.mxu0 %v1974
        %2012 = vmatprep.subr.bf16.mxu0 0
        %2013 = vmatpush1.bf16.msra.mxu0 %v1975
        %2014 = vmatprep.subr.bf16.mxu0 0
        %2015 = vmatpush1.bf16.msra.mxu0 %v1976
        %2016 = vmatprep.subr.bf16.mxu0 0
        %2017 = vmatpush1.bf16.msra.mxu0 %v1977
        %2018 = vmatprep.subr.bf16.mxu0 0
        %2019 = vmatpush1.bf16.msra.mxu0 %v1978
        %2020 = vmatprep.subr.bf16.mxu0 0
        %2021 = vmatpush1.bf16.msra.mxu0 %v1979
        %2022 = vmatprep.subr.bf16.mxu0 0
        %2023 = vmatpush1.bf16.msra.mxu0 %v1980
        %2024 = vmatprep.subr.bf16.mxu0 0
        %2025 = vmatpush1.bf16.msra.mxu0 %v1981
        %2026 = vmatprep.subr.bf16.mxu0 0
        %2027 = vmatpush1.bf16.msra.mxu0 %v1982
        %2028 = vmatprep.subr.bf16.mxu0 0
        %2029 = vmatpush1.bf16.msra.mxu0 %v1983
        %2030 = vmatprep.subr.bf16.mxu0 0
        %2031 = vmatpush1.bf16.msra.mxu0 %v1984
        %2032 = vmatprep.subr.bf16.mxu0 0
        %2033 = vmatpush1.bf16.msra.mxu0 %v1985
        %2034 = vmatprep.mubr.bf16.mxu0 %v1705
        %2035 = vmatmul.mubr.bf16.gmra.mrb[0].mxu0 %v1704
        %v2036 = vpop.f32.mrb[0].mxu0
        %v2037 = vadd.f32 0.0, %v2036
        %v2038 = vpop.f32.mrb[0].mxu0
        %v2039 = vpop.f32.mrb[0].mxu0
        %v2040 = vpop.f32.mrb[0].mxu0
        %2041 = vdwg.mxu0
        %v2042 = vmax.f32 %v1869, %v2037
        %2043 = vst [vmem:[#allocation2 + $0x8] sm:$0xff] %v2042
        %v2044 = vld [vmem:[#allocation2 + $0x7] sm:$0xff]
        %v2045 = vld [vmem:[#allocation2 + $0xf] sm:$0x3]
        %v2046 = vpack.c.bf16 %v2045, %v2044
        %v2047 = vld [vmem:[#allocation8] sm:$0xf]
        %v2048 = vld [vmem:[#allocation8 + $0x4] sm:$0xf]
        %v2049 = vld [vmem:[#allocation8 + $0x8] sm:$0xf]
        %v2050 = vld [vmem:[#allocation8 + $0xc] sm:$0xf]
        %v2051 = vld [vmem:[#allocation8 + $0x10] sm:$0xf]
        %v2052 = vld [vmem:[#allocation8 + $0x14] sm:$0xf]
        %v2053 = vld [vmem:[#allocation8 + $0x18] sm:$0xf]
        %v2054 = vld [vmem:[#allocation8 + $0x1c] sm:$0xf]
        %v2055 = vld [vmem:[#allocation8 + $0x20] sm:$0xf]
        %v2056 = vld [vmem:[#allocation8 + $0x24] sm:$0xf]
        %v2057 = vld [vmem:[#allocation8 + $0x28] sm:$0xf]
        %v2058 = vld [vmem:[#allocation8 + $0x2c] sm:$0xf]
        %v2059 = vld [vmem:[#allocation8 + $0x30] sm:$0xf]
        %v2060 = vld [vmem:[#allocation8 + $0x34] sm:$0xf]
        %v2061 = vld [vmem:[#allocation8 + $0x38] sm:$0xf]
        %v2062 = vld [vmem:[#allocation8 + $0x3c] sm:$0xf]
        %s2063 = scalar_lea.vmem [#allocation8], 64
        %v2064 = vld [vmem:[%s2063] sm:$0xf]
        %v2065 = vld [vmem:[%s2063 + $0x4] sm:$0xf]
        %v2066 = vld [vmem:[%s2063 + $0x8] sm:$0xf]
        %v2067 = vld [vmem:[%s2063 + $0xc] sm:$0xf]
        %v2068 = vld [vmem:[%s2063 + $0x10] sm:$0xf]
        %v2069 = vld [vmem:[%s2063 + $0x14] sm:$0xf]
        %v2070 = vld [vmem:[%s2063 + $0x18] sm:$0xf]
        %v2071 = vld [vmem:[%s2063 + $0x1c] sm:$0xf]
        %v2072 = vld [vmem:[%s2063 + $0x20] sm:$0xf]
        %v2073 = vld [vmem:[%s2063 + $0x24] sm:$0xf]
        %v2074 = vld [vmem:[%s2063 + $0x28] sm:$0xf]
        %v2075 = vld [vmem:[%s2063 + $0x2c] sm:$0xf]
        %v2076 = vld [vmem:[%s2063 + $0x30] sm:$0xf]
        %v2077 = vld [vmem:[%s2063 + $0x34] sm:$0xf]
        %v2078 = vld [vmem:[%s2063 + $0x38] sm:$0xf]
        %v2079 = vld [vmem:[%s2063 + $0x3c] sm:$0xf]
        %v2081 = vshrl.u32 %v2046, 16
        %v2083 = vshll.u32 %v2046, 16
        %v2085 = vrot.slane %v2083, 1
        %v2086 = vor.u32 %v2081, %v2085
        %v2104 = vunpack.c.l.b16 %v2064
        %v2105 = vunpack.c.l.b16 %v2065
        %v2106 = vunpack.c.l.b16 %v2066
        %v2107 = vunpack.c.l.b16 %v2067
        %v2108 = vunpack.c.l.b16 %v2068
        %v2109 = vunpack.c.l.b16 %v2069
        %v2110 = vunpack.c.l.b16 %v2070
        %v2111 = vunpack.c.l.b16 %v2071
        %v2112 = vunpack.c.l.b16 %v2072
        %v2113 = vunpack.c.l.b16 %v2073
        %v2114 = vunpack.c.l.b16 %v2074
        %v2115 = vunpack.c.l.b16 %v2075
        %v2116 = vunpack.c.l.b16 %v2076
        %v2117 = vunpack.c.l.b16 %v2077
        %v2118 = vunpack.c.l.b16 %v2078
        %v2119 = vunpack.c.l.b16 %v2079
        %v2120 = vpack.c.b16 %v2105, %v2104
        %v2121 = vpack.c.b16 %v2107, %v2106
        %v2122 = vpack.c.b16 %v2109, %v2108
        %v2123 = vpack.c.b16 %v2111, %v2110
        %v2124 = vpack.c.b16 %v2113, %v2112
        %v2125 = vpack.c.b16 %v2115, %v2114
        %v2126 = vpack.c.b16 %v2117, %v2116
        %v2127 = vpack.c.b16 %v2119, %v2118
        %2136 = vmatprep.subr.bf16.mxu0 0
        %2137 = vmatpush1.bf16.msra.mxu0 %v2120
        %2138 = vmatprep.subr.bf16.mxu0 0
        %2139 = vmatpush1.bf16.msra.mxu0 %v2121
        %2140 = vmatprep.subr.bf16.mxu0 0
        %2141 = vmatpush1.bf16.msra.mxu0 %v2122
        %2142 = vmatprep.subr.bf16.mxu0 0
        %2143 = vmatpush1.bf16.msra.mxu0 %v2123
        %2144 = vmatprep.subr.bf16.mxu0 0
        %2145 = vmatpush1.bf16.msra.mxu0 %v2124
        %2146 = vmatprep.subr.bf16.mxu0 0
        %2147 = vmatpush1.bf16.msra.mxu0 %v2125
        %2148 = vmatprep.subr.bf16.mxu0 0
        %2149 = vmatpush1.bf16.msra.mxu0 %v2126
        %2150 = vmatprep.subr.bf16.mxu0 0
        %2151 = vmatpush1.bf16.msra.mxu0 %v2127
        %2152 = vmatprep.subr.bf16.mxu0 0
        %2153 = vmatpush1.bf16.msra.mxu0 0
        %2154 = vmatprep.subr.bf16.mxu0 0
        %2155 = vmatpush1.bf16.msra.mxu0 0
        %2156 = vmatprep.subr.bf16.mxu0 0
        %2157 = vmatpush1.bf16.msra.mxu0 0
        %2158 = vmatprep.subr.bf16.mxu0 0
        %2159 = vmatpush1.bf16.msra.mxu0 0
        %2160 = vmatprep.subr.bf16.mxu0 0
        %2161 = vmatpush1.bf16.msra.mxu0 0
        %2162 = vmatprep.subr.bf16.mxu0 0
        %2163 = vmatpush1.bf16.msra.mxu0 0
        %2164 = vmatprep.subr.bf16.mxu0 0
        %2165 = vmatpush1.bf16.msra.mxu0 0
        %2166 = vmatprep.subr.bf16.mxu0 0
        %2167 = vmatpush1.bf16.msra.mxu0 0
        %2168 = vmatprep.mubr.bf16.mxu0 0
        %2169 = vmatmul.mubr.bf16.gmra.mrb[0].mxu0 %v2086
        %v2170 = vpop.f32.mrb[0].mxu0
        %v2171 = vadd.f32 0.0, %v2170
        %v2172 = vpop.f32.mrb[0].mxu0
        %v2173 = vpop.f32.mrb[0].mxu0
        %v2174 = vpop.f32.mrb[0].mxu0
        %2175 = vdwg.mxu0
        %v2192 = vunpack.c.l.b16 %v2047
        %v2193 = vunpack.c.l.b16 %v2048
        %v2194 = vunpack.c.l.b16 %v2049
        %v2195 = vunpack.c.l.b16 %v2050
        %v2196 = vunpack.c.l.b16 %v2051
        %v2197 = vunpack.c.l.b16 %v2052
        %v2198 = vunpack.c.l.b16 %v2053
        %v2199 = vunpack.c.l.b16 %v2054
        %v2200 = vunpack.c.l.b16 %v2055
        %v2201 = vunpack.c.l.b16 %v2056
        %v2202 = vunpack.c.l.b16 %v2057
        %v2203 = vunpack.c.l.b16 %v2058
        %v2204 = vunpack.c.l.b16 %v2059
        %v2205 = vunpack.c.l.b16 %v2060
        %v2206 = vunpack.c.l.b16 %v2061
        %v2207 = vunpack.c.l.b16 %v2062
        %v2208 = vpack.c.b16 %v2193, %v2192
        %v2209 = vpack.c.b16 %v2195, %v2194
        %v2210 = vpack.c.b16 %v2197, %v2196
        %v2211 = vpack.c.b16 %v2199, %v2198
        %v2212 = vpack.c.b16 %v2201, %v2200
        %v2213 = vpack.c.b16 %v2203, %v2202
        %v2214 = vpack.c.b16 %v2205, %v2204
        %v2215 = vpack.c.b16 %v2207, %v2206
        %2224 = vmatprep.subr.bf16.mxu0 0
        %2225 = vmatpush1.bf16.msra.mxu0 %v2208
        %2226 = vmatprep.subr.bf16.mxu0 0
        %2227 = vmatpush1.bf16.msra.mxu0 %v2209
        %2228 = vmatprep.subr.bf16.mxu0 0
        %2229 = vmatpush1.bf16.msra.mxu0 %v2210
        %2230 = vmatprep.subr.bf16.mxu0 0
        %2231 = vmatpush1.bf16.msra.mxu0 %v2211
        %2232 = vmatprep.subr.bf16.mxu0 0
        %2233 = vmatpush1.bf16.msra.mxu0 %v2212
        %2234 = vmatprep.subr.bf16.mxu0 0
        %2235 = vmatpush1.bf16.msra.mxu0 %v2213
        %2236 = vmatprep.subr.bf16.mxu0 0
        %2237 = vmatpush1.bf16.msra.mxu0 %v2214
        %2238 = vmatprep.subr.bf16.mxu0 0
        %2239 = vmatpush1.bf16.msra.mxu0 %v2215
        %2240 = vmatprep.subr.bf16.mxu0 0
        %2241 = vmatpush1.bf16.msra.mxu0 0
        %2242 = vmatprep.subr.bf16.mxu0 0
        %2243 = vmatpush1.bf16.msra.mxu0 0
        %2244 = vmatprep.subr.bf16.mxu0 0
        %2245 = vmatpush1.bf16.msra.mxu0 0
        %2246 = vmatprep.subr.bf16.mxu0 0
        %2247 = vmatpush1.bf16.msra.mxu0 0
        %2248 = vmatprep.subr.bf16.mxu0 0
        %2249 = vmatpush1.bf16.msra.mxu0 0
        %2250 = vmatprep.subr.bf16.mxu0 0
        %2251 = vmatpush1.bf16.msra.mxu0 0
        %2252 = vmatprep.subr.bf16.mxu0 0
        %2253 = vmatpush1.bf16.msra.mxu0 0
        %2254 = vmatprep.subr.bf16.mxu0 0
        %2255 = vmatpush1.bf16.msra.mxu0 0
        %2256 = vmatprep.mubr.bf16.mxu0 0
        %2257 = vmatmul.mubr.bf16.gmra.mrb[0].mxu0 %v2046
        %v2258 = vpop.f32.mrb[0].mxu0
        %v2259 = vadd.f32 %v2171, %v2258
        %v2260 = vpop.f32.mrb[0].mxu0
        %v2261 = vpop.f32.mrb[0].mxu0
        %v2262 = vpop.f32.mrb[0].mxu0
        %2263 = vdwg.mxu0
        %s2264 = scalar_lea.vmem [#allocation8], 128
        %v2265 = vld [vmem:[%s2264] sm:$0xf]
        %v2266 = vld [vmem:[%s2264 + $0x4] sm:$0xf]
        %v2267 = vld [vmem:[%s2264 + $0x8] sm:$0xf]
        %v2268 = vld [vmem:[%s2264 + $0xc] sm:$0xf]
        %v2269 = vld [vmem:[%s2264 + $0x10] sm:$0xf]
        %v2270 = vld [vmem:[%s2264 + $0x14] sm:$0xf]
        %v2271 = vld [vmem:[%s2264 + $0x18] sm:$0xf]
        %v2272 = vld [vmem:[%s2264 + $0x1c] sm:$0xf]
        %v2273 = vld [vmem:[%s2264 + $0x20] sm:$0xf]
        %v2274 = vld [vmem:[%s2264 + $0x24] sm:$0xf]
        %v2275 = vld [vmem:[%s2264 + $0x28] sm:$0xf]
        %v2276 = vld [vmem:[%s2264 + $0x2c] sm:$0xf]
        %v2277 = vld [vmem:[%s2264 + $0x30] sm:$0xf]
        %v2278 = vld [vmem:[%s2264 + $0x34] sm:$0xf]
        %v2279 = vld [vmem:[%s2264 + $0x38] sm:$0xf]
        %v2280 = vld [vmem:[%s2264 + $0x3c] sm:$0xf]
        %v2282 = vrot.slane %v2046, 1
        %v2300 = vunpack.c.l.b16 %v2265
        %v2301 = vunpack.c.l.b16 %v2266
        %v2302 = vunpack.c.l.b16 %v2267
        %v2303 = vunpack.c.l.b16 %v2268
        %v2304 = vunpack.c.l.b16 %v2269
        %v2305 = vunpack.c.l.b16 %v2270
        %v2306 = vunpack.c.l.b16 %v2271
        %v2307 = vunpack.c.l.b16 %v2272
        %v2308 = vunpack.c.l.b16 %v2273
        %v2309 = vunpack.c.l.b16 %v2274
        %v2310 = vunpack.c.l.b16 %v2275
        %v2311 = vunpack.c.l.b16 %v2276
        %v2312 = vunpack.c.l.b16 %v2277
        %v2313 = vunpack.c.l.b16 %v2278
        %v2314 = vunpack.c.l.b16 %v2279
        %v2315 = vunpack.c.l.b16 %v2280
        %v2316 = vpack.c.b16 %v2301, %v2300
        %v2317 = vpack.c.b16 %v2303, %v2302
        %v2318 = vpack.c.b16 %v2305, %v2304
        %v2319 = vpack.c.b16 %v2307, %v2306
        %v2320 = vpack.c.b16 %v2309, %v2308
        %v2321 = vpack.c.b16 %v2311, %v2310
        %v2322 = vpack.c.b16 %v2313, %v2312
        %v2323 = vpack.c.b16 %v2315, %v2314
        %2332 = vmatprep.subr.bf16.mxu0 0
        %2333 = vmatpush1.bf16.msra.mxu0 %v2316
        %2334 = vmatprep.subr.bf16.mxu0 0
        %2335 = vmatpush1.bf16.msra.mxu0 %v2317
        %2336 = vmatprep.subr.bf16.mxu0 0
        %2337 = vmatpush1.bf16.msra.mxu0 %v2318
        %2338 = vmatprep.subr.bf16.mxu0 0
        %2339 = vmatpush1.bf16.msra.mxu0 %v2319
        %2340 = vmatprep.subr.bf16.mxu0 0
        %2341 = vmatpush1.bf16.msra.mxu0 %v2320
        %2342 = vmatprep.subr.bf16.mxu0 0
        %2343 = vmatpush1.bf16.msra.mxu0 %v2321
        %2344 = vmatprep.subr.bf16.mxu0 0
        %2345 = vmatpush1.bf16.msra.mxu0 %v2322
        %2346 = vmatprep.subr.bf16.mxu0 0
        %2347 = vmatpush1.bf16.msra.mxu0 %v2323
        %2348 = vmatprep.subr.bf16.mxu0 0
        %2349 = vmatpush1.bf16.msra.mxu0 0
        %2350 = vmatprep.subr.bf16.mxu0 0
        %2351 = vmatpush1.bf16.msra.mxu0 0
        %2352 = vmatprep.subr.bf16.mxu0 0
        %2353 = vmatpush1.bf16.msra.mxu0 0
        %2354 = vmatprep.subr.bf16.mxu0 0
        %2355 = vmatpush1.bf16.msra.mxu0 0
        %2356 = vmatprep.subr.bf16.mxu0 0
        %2357 = vmatpush1.bf16.msra.mxu0 0
        %2358 = vmatprep.subr.bf16.mxu0 0
        %2359 = vmatpush1.bf16.msra.mxu0 0
        %2360 = vmatprep.subr.bf16.mxu0 0
        %2361 = vmatpush1.bf16.msra.mxu0 0
        %2362 = vmatprep.subr.bf16.mxu0 0
        %2363 = vmatpush1.bf16.msra.mxu0 0
        %2364 = vmatprep.mubr.bf16.mxu0 0
        %2365 = vmatmul.mubr.bf16.gmra.mrb[0].mxu0 %v2282
        %v2366 = vpop.f32.mrb[0].mxu0
        %v2367 = vadd.f32 0.0, %v2366
        %v2368 = vpop.f32.mrb[0].mxu0
        %v2369 = vpop.f32.mrb[0].mxu0
        %v2370 = vpop.f32.mrb[0].mxu0
        %2371 = vdwg.mxu0
        %v2372 = vadd.f32 %v2259, %v2367
        %v2373 = vld [vmem:[%s4] sm:$0x1]
        %v2375 = vlaneseq
        %v2376 = vshrl.u32 %v2375, 7
        %v2377 = vsub.s32 0, %v2376
        %v2378 = vrot.slane %v2373, %v2377
        %v2380 = vadd.f32 %v2372, %v2378
        %v2381 = vmax.f32 %v2380, 0.0
        %2382 = vst [vmem:[#allocation3 + $0x8] sm:$0xff] %v2381
        %v2383 = vld [vmem:[#allocation3 + $0x7] sm:$0xff]
        %v2384 = vld [vmem:[#allocation3 + $0xf] sm:$0x3]
        %v2385 = vpack.c.bf16 %v2384, %v2383
        %v2386 = vld [vmem:[#allocation11] sm:$0xff]
        %v2387 = vld [vmem:[#allocation11 + $0x8] sm:$0xff]
        %v2388 = vld [vmem:[#allocation11 + $0x10] sm:$0xff]
        %v2389 = vld [vmem:[#allocation11 + $0x18] sm:$0xff]
        %v2390 = vld [vmem:[#allocation11 + $0x20] sm:$0xff]
        %v2391 = vld [vmem:[#allocation11 + $0x28] sm:$0xff]
        %v2392 = vld [vmem:[#allocation11 + $0x30] sm:$0xff]
        %v2393 = vld [vmem:[#allocation11 + $0x38] sm:$0xff]
        %v2394 = vld [vmem:[#allocation11 + $0x40] sm:$0xff]
        %v2395 = vld [vmem:[#allocation11 + $0x48] sm:$0xff]
        %v2396 = vld [vmem:[#allocation11 + $0x50] sm:$0xff]
        %v2397 = vld [vmem:[#allocation11 + $0x58] sm:$0xff]
        %v2398 = vld [vmem:[#allocation11 + $0x60] sm:$0xff]
        %v2399 = vld [vmem:[#allocation11 + $0x68] sm:$0xff]
        %v2400 = vld [vmem:[#allocation11 + $0x70] sm:$0xff]
        %v2401 = vld [vmem:[#allocation11 + $0x78] sm:$0xff]
        %s2402 = scalar_lea.vmem [#allocation11], 128
        %v2403 = vld [vmem:[%s2402] sm:$0xff]
        %v2404 = vld [vmem:[%s2402 + $0x8] sm:$0xff]
        %v2405 = vld [vmem:[%s2402 + $0x10] sm:$0xff]
        %v2406 = vld [vmem:[%s2402 + $0x18] sm:$0xff]
        %v2407 = vld [vmem:[%s2402 + $0x20] sm:$0xff]
        %v2408 = vld [vmem:[%s2402 + $0x28] sm:$0xff]
        %v2409 = vld [vmem:[%s2402 + $0x30] sm:$0xff]
        %v2410 = vld [vmem:[%s2402 + $0x38] sm:$0xff]
        %v2411 = vld [vmem:[%s2402 + $0x40] sm:$0xff]
        %v2412 = vld [vmem:[%s2402 + $0x48] sm:$0xff]
        %v2413 = vld [vmem:[%s2402 + $0x50] sm:$0xff]
        %v2414 = vld [vmem:[%s2402 + $0x58] sm:$0xff]
        %v2415 = vld [vmem:[%s2402 + $0x60] sm:$0xff]
        %v2416 = vld [vmem:[%s2402 + $0x68] sm:$0xff]
        %v2417 = vld [vmem:[%s2402 + $0x70] sm:$0xff]
        %v2418 = vld [vmem:[%s2402 + $0x78] sm:$0xff]
        %v2420 = vshrl.u32 %v2385, 16
        %v2422 = vshll.u32 %v2385, 16
        %v2424 = vrot.slane %v2422, 1
        %v2425 = vor.u32 %v2420, %v2424
        %v2443 = vunpack.c.l.b16 %v2403
        %v2444 = vunpack.c.h.b16 %v2403
        %v2445 = vunpack.c.l.b16 %v2404
        %v2446 = vunpack.c.h.b16 %v2404
        %v2447 = vunpack.c.l.b16 %v2405
        %v2448 = vunpack.c.h.b16 %v2405
        %v2449 = vunpack.c.l.b16 %v2406
        %v2450 = vunpack.c.h.b16 %v2406
        %v2451 = vunpack.c.l.b16 %v2407
        %v2452 = vunpack.c.h.b16 %v2407
        %v2453 = vunpack.c.l.b16 %v2408
        %v2454 = vunpack.c.h.b16 %v2408
        %v2455 = vunpack.c.l.b16 %v2409
        %v2456 = vunpack.c.h.b16 %v2409
        %v2457 = vunpack.c.l.b16 %v2410
        %v2458 = vunpack.c.h.b16 %v2410
        %v2459 = vunpack.c.l.b16 %v2411
        %v2460 = vunpack.c.h.b16 %v2411
        %v2461 = vunpack.c.l.b16 %v2412
        %v2462 = vunpack.c.h.b16 %v2412
        %v2463 = vunpack.c.l.b16 %v2413
        %v2464 = vunpack.c.h.b16 %v2413
        %v2465 = vunpack.c.l.b16 %v2414
        %v2466 = vunpack.c.h.b16 %v2414
        %v2467 = vunpack.c.l.b16 %v2415
        %v2468 = vunpack.c.h.b16 %v2415
        %v2469 = vunpack.c.l.b16 %v2416
        %v2470 = vunpack.c.h.b16 %v2416
        %v2471 = vunpack.c.l.b16 %v2417
        %v2472 = vunpack.c.h.b16 %v2417
        %v2473 = vunpack.c.l.b16 %v2418
        %v2474 = vunpack.c.h.b16 %v2418
        %v2475 = vpack.c.b16 %v2445, %v2443
        %v2476 = vpack.c.b16 %v2446, %v2444
        %v2477 = vpack.c.b16 %v2449, %v2447
        %v2478 = vpack.c.b16 %v2450, %v2448
        %v2479 = vpack.c.b16 %v2453, %v2451
        %v2480 = vpack.c.b16 %v2454, %v2452
        %v2481 = vpack.c.b16 %v2457, %v2455
        %v2482 = vpack.c.b16 %v2458, %v2456
        %v2483 = vpack.c.b16 %v2461, %v2459
        %v2484 = vpack.c.b16 %v2462, %v2460
        %v2485 = vpack.c.b16 %v2465, %v2463
        %v2486 = vpack.c.b16 %v2466, %v2464
        %v2487 = vpack.c.b16 %v2469, %v2467
        %v2488 = vpack.c.b16 %v2470, %v2468
        %v2489 = vpack.c.b16 %v2473, %v2471
        %v2490 = vpack.c.b16 %v2474, %v2472
        %2507 = vmatprep.subr.bf16.mxu0 %v2476
        %2508 = vmatpush1.bf16.msra.mxu0 %v2475
        %2509 = vmatprep.subr.bf16.mxu0 %v2478
        %2510 = vmatpush1.bf16.msra.mxu0 %v2477
        %2511 = vmatprep.subr.bf16.mxu0 %v2480
        %2512 = vmatpush1.bf16.msra.mxu0 %v2479
        %2513 = vmatprep.subr.bf16.mxu0 %v2482
        %2514 = vmatpush1.bf16.msra.mxu0 %v2481
        %2515 = vmatprep.subr.bf16.mxu0 %v2484
        %2516 = vmatpush1.bf16.msra.mxu0 %v2483
        %2517 = vmatprep.subr.bf16.mxu0 %v2486
        %2518 = vmatpush1.bf16.msra.mxu0 %v2485
        %2519 = vmatprep.subr.bf16.mxu0 %v2488
        %2520 = vmatpush1.bf16.msra.mxu0 %v2487
        %2521 = vmatprep.subr.bf16.mxu0 %v2490
        %2522 = vmatpush1.bf16.msra.mxu0 %v2489
        %2523 = vmatprep.subr.bf16.mxu0 0
        %2524 = vmatpush1.bf16.msra.mxu0 0
        %2525 = vmatprep.subr.bf16.mxu0 0
        %2526 = vmatpush1.bf16.msra.mxu0 0
        %2527 = vmatprep.subr.bf16.mxu0 0
        %2528 = vmatpush1.bf16.msra.mxu0 0
        %2529 = vmatprep.subr.bf16.mxu0 0
        %2530 = vmatpush1.bf16.msra.mxu0 0
        %2531 = vmatprep.subr.bf16.mxu0 0
        %2532 = vmatpush1.bf16.msra.mxu0 0
        %2533 = vmatprep.subr.bf16.mxu0 0
        %2534 = vmatpush1.bf16.msra.mxu0 0
        %2535 = vmatprep.subr.bf16.mxu0 0
        %2536 = vmatpush1.bf16.msra.mxu0 0
        %2537 = vmatprep.subr.bf16.mxu0 0
        %2538 = vmatpush1.bf16.msra.mxu0 0
        %2539 = vmatprep.mubr.bf16.mxu0 0
        %2540 = vmatmul.mubr.bf16.gmra.mrb[0].mxu0 %v2425
        %v2541 = vpop.f32.mrb[0].mxu0
        %v2542 = vadd.f32 0.0, %v2541
        %v2543 = vpop.f32.mrb[0].mxu0
        %v2544 = vadd.f32 0.0, %v2543
        %v2545 = vpop.f32.mrb[0].mxu0
        %v2546 = vpop.f32.mrb[0].mxu0
        %2547 = vdwg.mxu0
        %v2564 = vunpack.c.l.b16 %v2386
        %v2565 = vunpack.c.h.b16 %v2386
        %v2566 = vunpack.c.l.b16 %v2387
        %v2567 = vunpack.c.h.b16 %v2387
        %v2568 = vunpack.c.l.b16 %v2388
        %v2569 = vunpack.c.h.b16 %v2388
        %v2570 = vunpack.c.l.b16 %v2389
        %v2571 = vunpack.c.h.b16 %v2389
        %v2572 = vunpack.c.l.b16 %v2390
        %v2573 = vunpack.c.h.b16 %v2390
        %v2574 = vunpack.c.l.b16 %v2391
        %v2575 = vunpack.c.h.b16 %v2391
        %v2576 = vunpack.c.l.b16 %v2392
        %v2577 = vunpack.c.h.b16 %v2392
        %v2578 = vunpack.c.l.b16 %v2393
        %v2579 = vunpack.c.h.b16 %v2393
        %v2580 = vunpack.c.l.b16 %v2394
        %v2581 = vunpack.c.h.b16 %v2394
        %v2582 = vunpack.c.l.b16 %v2395
        %v2583 = vunpack.c.h.b16 %v2395
        %v2584 = vunpack.c.l.b16 %v2396
        %v2585 = vunpack.c.h.b16 %v2396
        %v2586 = vunpack.c.l.b16 %v2397
        %v2587 = vunpack.c.h.b16 %v2397
        %v2588 = vunpack.c.l.b16 %v2398
        %v2589 = vunpack.c.h.b16 %v2398
        %v2590 = vunpack.c.l.b16 %v2399
        %v2591 = vunpack.c.h.b16 %v2399
        %v2592 = vunpack.c.l.b16 %v2400
        %v2593 = vunpack.c.h.b16 %v2400
        %v2594 = vunpack.c.l.b16 %v2401
        %v2595 = vunpack.c.h.b16 %v2401
        %v2596 = vpack.c.b16 %v2566, %v2564
        %v2597 = vpack.c.b16 %v2567, %v2565
        %v2598 = vpack.c.b16 %v2570, %v2568
        %v2599 = vpack.c.b16 %v2571, %v2569
        %v2600 = vpack.c.b16 %v2574, %v2572
        %v2601 = vpack.c.b16 %v2575, %v2573
        %v2602 = vpack.c.b16 %v2578, %v2576
        %v2603 = vpack.c.b16 %v2579, %v2577
        %v2604 = vpack.c.b16 %v2582, %v2580
        %v2605 = vpack.c.b16 %v2583, %v2581
        %v2606 = vpack.c.b16 %v2586, %v2584
        %v2607 = vpack.c.b16 %v2587, %v2585
        %v2608 = vpack.c.b16 %v2590, %v2588
        %v2609 = vpack.c.b16 %v2591, %v2589
        %v2610 = vpack.c.b16 %v2594, %v2592
        %v2611 = vpack.c.b16 %v2595, %v2593
        %2628 = vmatprep.subr.bf16.mxu0 %v2597
        %2629 = vmatpush1.bf16.msra.mxu0 %v2596
        %2630 = vmatprep.subr.bf16.mxu0 %v2599
        %2631 = vmatpush1.bf16.msra.mxu0 %v2598
        %2632 = vmatprep.subr.bf16.mxu0 %v2601
        %2633 = vmatpush1.bf16.msra.mxu0 %v2600
        %2634 = vmatprep.subr.bf16.mxu0 %v2603
        %2635 = vmatpush1.bf16.msra.mxu0 %v2602
        %2636 = vmatprep.subr.bf16.mxu0 %v2605
        %2637 = vmatpush1.bf16.msra.mxu0 %v2604
        %2638 = vmatprep.subr.bf16.mxu0 %v2607
        %2639 = vmatpush1.bf16.msra.mxu0 %v2606
        %2640 = vmatprep.subr.bf16.mxu0 %v2609
        %2641 = vmatpush1.bf16.msra.mxu0 %v2608
        %2642 = vmatprep.subr.bf16.mxu0 %v2611
        %2643 = vmatpush1.bf16.msra.mxu0 %v2610
        %2644 = vmatprep.subr.bf16.mxu0 0
        %2645 = vmatpush1.bf16.msra.mxu0 0
        %2646 = vmatprep.subr.bf16.mxu0 0
        %2647 = vmatpush1.bf16.msra.mxu0 0
        %2648 = vmatprep.subr.bf16.mxu0 0
        %2649 = vmatpush1.bf16.msra.mxu0 0
        %2650 = vmatprep.subr.bf16.mxu0 0
        %2651 = vmatpush1.bf16.msra.mxu0 0
        %2652 = vmatprep.subr.bf16.mxu0 0
        %2653 = vmatpush1.bf16.msra.mxu0 0
        %2654 = vmatprep.subr.bf16.mxu0 0
        %2655 = vmatpush1.bf16.msra.mxu0 0
        %2656 = vmatprep.subr.bf16.mxu0 0
        %2657 = vmatpush1.bf16.msra.mxu0 0
        %2658 = vmatprep.subr.bf16.mxu0 0
        %2659 = vmatpush1.bf16.msra.mxu0 0
        %2660 = vmatprep.mubr.bf16.mxu0 0
        %2661 = vmatmul.mubr.bf16.gmra.mrb[0].mxu0 %v2385
        %v2662 = vpop.f32.mrb[0].mxu0
        %v2663 = vadd.f32 %v2542, %v2662
        %v2664 = vpop.f32.mrb[0].mxu0
        %v2665 = vadd.f32 %v2544, %v2664
        %v2666 = vpop.f32.mrb[0].mxu0
        %v2667 = vpop.f32.mrb[0].mxu0
        %2668 = vdwg.mxu0
        %s2669 = scalar_lea.vmem [#allocation11], 256
        %v2670 = vld [vmem:[%s2669] sm:$0xff]
        %v2671 = vld [vmem:[%s2669 + $0x8] sm:$0xff]
        %v2672 = vld [vmem:[%s2669 + $0x10] sm:$0xff]
        %v2673 = vld [vmem:[%s2669 + $0x18] sm:$0xff]
        %v2674 = vld [vmem:[%s2669 + $0x20] sm:$0xff]
        %v2675 = vld [vmem:[%s2669 + $0x28] sm:$0xff]
        %v2676 = vld [vmem:[%s2669 + $0x30] sm:$0xff]
        %v2677 = vld [vmem:[%s2669 + $0x38] sm:$0xff]
        %v2678 = vld [vmem:[%s2669 + $0x40] sm:$0xff]
        %v2679 = vld [vmem:[%s2669 + $0x48] sm:$0xff]
        %v2680 = vld [vmem:[%s2669 + $0x50] sm:$0xff]
        %v2681 = vld [vmem:[%s2669 + $0x58] sm:$0xff]
        %v2682 = vld [vmem:[%s2669 + $0x60] sm:$0xff]
        %v2683 = vld [vmem:[%s2669 + $0x68] sm:$0xff]
        %v2684 = vld [vmem:[%s2669 + $0x70] sm:$0xff]
        %v2685 = vld [vmem:[%s2669 + $0x78] sm:$0xff]
        %v2687 = vrot.slane %v2385, 1
        %v2705 = vunpack.c.l.b16 %v2670
        %v2706 = vunpack.c.h.b16 %v2670
        %v2707 = vunpack.c.l.b16 %v2671
        %v2708 = vunpack.c.h.b16 %v2671
        %v2709 = vunpack.c.l.b16 %v2672
        %v2710 = vunpack.c.h.b16 %v2672
        %v2711 = vunpack.c.l.b16 %v2673
        %v2712 = vunpack.c.h.b16 %v2673
        %v2713 = vunpack.c.l.b16 %v2674
        %v2714 = vunpack.c.h.b16 %v2674
        %v2715 = vunpack.c.l.b16 %v2675
        %v2716 = vunpack.c.h.b16 %v2675
        %v2717 = vunpack.c.l.b16 %v2676
        %v2718 = vunpack.c.h.b16 %v2676
        %v2719 = vunpack.c.l.b16 %v2677
        %v2720 = vunpack.c.h.b16 %v2677
        %v2721 = vunpack.c.l.b16 %v2678
        %v2722 = vunpack.c.h.b16 %v2678
        %v2723 = vunpack.c.l.b16 %v2679
        %v2724 = vunpack.c.h.b16 %v2679
        %v2725 = vunpack.c.l.b16 %v2680
        %v2726 = vunpack.c.h.b16 %v2680
        %v2727 = vunpack.c.l.b16 %v2681
        %v2728 = vunpack.c.h.b16 %v2681
        %v2729 = vunpack.c.l.b16 %v2682
        %v2730 = vunpack.c.h.b16 %v2682
        %v2731 = vunpack.c.l.b16 %v2683
        %v2732 = vunpack.c.h.b16 %v2683
        %v2733 = vunpack.c.l.b16 %v2684
        %v2734 = vunpack.c.h.b16 %v2684
        %v2735 = vunpack.c.l.b16 %v2685
        %v2736 = vunpack.c.h.b16 %v2685
        %v2737 = vpack.c.b16 %v2707, %v2705
        %v2738 = vpack.c.b16 %v2708, %v2706
        %v2739 = vpack.c.b16 %v2711, %v2709
        %v2740 = vpack.c.b16 %v2712, %v2710
        %v2741 = vpack.c.b16 %v2715, %v2713
        %v2742 = vpack.c.b16 %v2716, %v2714
        %v2743 = vpack.c.b16 %v2719, %v2717
        %v2744 = vpack.c.b16 %v2720, %v2718
        %v2745 = vpack.c.b16 %v2723, %v2721
        %v2746 = vpack.c.b16 %v2724, %v2722
        %v2747 = vpack.c.b16 %v2727, %v2725
        %v2748 = vpack.c.b16 %v2728, %v2726
        %v2749 = vpack.c.b16 %v2731, %v2729
        %v2750 = vpack.c.b16 %v2732, %v2730
        %v2751 = vpack.c.b16 %v2735, %v2733
        %v2752 = vpack.c.b16 %v2736, %v2734
        %2769 = vmatprep.subr.bf16.mxu0 %v2738
        %2770 = vmatpush1.bf16.msra.mxu0 %v2737
        %2771 = vmatprep.subr.bf16.mxu0 %v2740
        %2772 = vmatpush1.bf16.msra.mxu0 %v2739
        %2773 = vmatprep.subr.bf16.mxu0 %v2742
        %2774 = vmatpush1.bf16.msra.mxu0 %v2741
        %2775 = vmatprep.subr.bf16.mxu0 %v2744
        %2776 = vmatpush1.bf16.msra.mxu0 %v2743
        %2777 = vmatprep.subr.bf16.mxu0 %v2746
        %2778 = vmatpush1.bf16.msra.mxu0 %v2745
        %2779 = vmatprep.subr.bf16.mxu0 %v2748
        %2780 = vmatpush1.bf16.msra.mxu0 %v2747
        %2781 = vmatprep.subr.bf16.mxu0 %v2750
        %2782 = vmatpush1.bf16.msra.mxu0 %v2749
        %2783 = vmatprep.subr.bf16.mxu0 %v2752
        %2784 = vmatpush1.bf16.msra.mxu0 %v2751
        %2785 = vmatprep.subr.bf16.mxu0 0
        %2786 = vmatpush1.bf16.msra.mxu0 0
        %2787 = vmatprep.subr.bf16.mxu0 0
        %2788 = vmatpush1.bf16.msra.mxu0 0
        %2789 = vmatprep.subr.bf16.mxu0 0
        %2790 = vmatpush1.bf16.msra.mxu0 0
        %2791 = vmatprep.subr.bf16.mxu0 0
        %2792 = vmatpush1.bf16.msra.mxu0 0
        %2793 = vmatprep.subr.bf16.mxu0 0
        %2794 = vmatpush1.bf16.msra.mxu0 0
        %2795 = vmatprep.subr.bf16.mxu0 0
        %2796 = vmatpush1.bf16.msra.mxu0 0
        %2797 = vmatprep.subr.bf16.mxu0 0
        %2798 = vmatpush1.bf16.msra.mxu0 0
        %2799 = vmatprep.subr.bf16.mxu0 0
        %2800 = vmatpush1.bf16.msra.mxu0 0
        %2801 = vmatprep.mubr.bf16.mxu0 0
        %2802 = vmatmul.mubr.bf16.gmra.mrb[0].mxu0 %v2687
        %v2803 = vpop.f32.mrb[0].mxu0
        %v2804 = vadd.f32 0.0, %v2803
        %v2805 = vpop.f32.mrb[0].mxu0
        %v2806 = vadd.f32 0.0, %v2805
        %v2807 = vpop.f32.mrb[0].mxu0
        %v2808 = vpop.f32.mrb[0].mxu0
        %2809 = vdwg.mxu0
        %v2810 = vadd.f32 %v2663, %v2804
        %v2811 = vadd.f32 %v2665, %v2806
        %v2812 = vld [vmem:[%s6] sm:$0x3]
        %v2814 = vlaneseq
        %v2815 = vshrl.u32 %v2814, 7
        %v2816 = vsub.s32 0, %v2815
        %v2817 = vrot.slane %v2812, %v2816
        %v2818 = vlaneseq
        %v2819 = vshrl.u32 %v2818, 7
        %v2820 = vsub.s32 1, %v2819
        %v2821 = vrot.slane %v2812, %v2820
        %v2824 = vadd.f32 %v2810, %v2817
        %v2825 = vadd.f32 %v2811, %v2821
        %v2826 = vmax.f32 %v2824, 0.0
        %v2827 = vmax.f32 %v2825, 0.0
        %2828 = vst [vmem:[#allocation4 + $0x10] sm:$0xff] %v2826
        %2829 = vst [vmem:[#allocation4 + $0x18] sm:$0xff] %v2827
        %v2830 = vld [vmem:[#allocation4] sm:$0x80]
        %v2831 = vld [vmem:[#allocation4 + $0x8] sm:$0x80]
        %v2832 = vld [vmem:[#allocation4 + $0x10] sm:$0xff]
        %v2833 = vld [vmem:[#allocation4 + $0x18] sm:$0xff]
        %v2834 = vld [vmem:[#allocation4 + $0x20] sm:$0x1]
        %v2835 = vld [vmem:[#allocation4 + $0x28] sm:$0x1]
        %v2836 = vpack.c.bf16 %v2832, %v2830
        %v2837 = vpack.c.bf16 %v2833, %v2831
        %v2838 = vpack.c.bf16 %v2834, %v2834
        %v2839 = vpack.c.bf16 %v2835, %v2835
        %v2840 = vld [vmem:[#allocation13] sm:$0xff]
        %v2841 = vld [vmem:[#allocation13 + $0x8] sm:$0xff]
        %v2842 = vld [vmem:[#allocation13 + $0x10] sm:$0xff]
        %v2843 = vld [vmem:[#allocation13 + $0x18] sm:$0xff]
        %v2844 = vld [vmem:[#allocation13 + $0x20] sm:$0xff]
        %v2845 = vld [vmem:[#allocation13 + $0x28] sm:$0xff]
        %v2846 = vld [vmem:[#allocation13 + $0x30] sm:$0xff]
        %v2847 = vld [vmem:[#allocation13 + $0x38] sm:$0xff]
        %v2848 = vld [vmem:[#allocation13 + $0x40] sm:$0xff]
        %v2849 = vld [vmem:[#allocation13 + $0x48] sm:$0xff]
        %v2850 = vld [vmem:[#allocation13 + $0x50] sm:$0xff]
        %v2851 = vld [vmem:[#allocation13 + $0x58] sm:$0xff]
        %v2852 = vld [vmem:[#allocation13 + $0x60] sm:$0xff]
        %v2853 = vld [vmem:[#allocation13 + $0x68] sm:$0xff]
        %v2854 = vld [vmem:[#allocation13 + $0x70] sm:$0xff]
        %v2855 = vld [vmem:[#allocation13 + $0x78] sm:$0xff]
        %v2856 = vld [vmem:[#allocation13 + $0x80] sm:$0xff]
        %v2857 = vld [vmem:[#allocation13 + $0x88] sm:$0xff]
        %v2858 = vld [vmem:[#allocation13 + $0x90] sm:$0xff]
        %v2859 = vld [vmem:[#allocation13 + $0x98] sm:$0xff]
        %v2860 = vld [vmem:[#allocation13 + $0xa0] sm:$0xff]
        %v2861 = vld [vmem:[#allocation13 + $0xa8] sm:$0xff]
        %v2862 = vld [vmem:[#allocation13 + $0xb0] sm:$0xff]
        %v2863 = vld [vmem:[#allocation13 + $0xb8] sm:$0xff]
        %v2864 = vld [vmem:[#allocation13 + $0xc0] sm:$0xff]
        %v2865 = vld [vmem:[#allocation13 + $0xc8] sm:$0xff]
        %v2866 = vld [vmem:[#allocation13 + $0xd0] sm:$0xff]
        %v2867 = vld [vmem:[#allocation13 + $0xd8] sm:$0xff]
        %v2868 = vld [vmem:[#allocation13 + $0xe0] sm:$0xff]
        %v2869 = vld [vmem:[#allocation13 + $0xe8] sm:$0xff]
        %v2870 = vld [vmem:[#allocation13 + $0xf0] sm:$0xff]
        %v2871 = vld [vmem:[#allocation13 + $0xf8] sm:$0xff]
        %s2872 = scalar_lea.vmem [#allocation13], 256
        %v2873 = vld [vmem:[%s2872] sm:$0xff]
        %v2874 = vld [vmem:[%s2872 + $0x8] sm:$0xff]
        %v2875 = vld [vmem:[%s2872 + $0x10] sm:$0xff]
        %v2876 = vld [vmem:[%s2872 + $0x18] sm:$0xff]
        %v2877 = vld [vmem:[%s2872 + $0x20] sm:$0xff]
        %v2878 = vld [vmem:[%s2872 + $0x28] sm:$0xff]
        %v2879 = vld [vmem:[%s2872 + $0x30] sm:$0xff]
        %v2880 = vld [vmem:[%s2872 + $0x38] sm:$0xff]
        %v2881 = vld [vmem:[%s2872 + $0x40] sm:$0xff]
        %v2882 = vld [vmem:[%s2872 + $0x48] sm:$0xff]
        %v2883 = vld [vmem:[%s2872 + $0x50] sm:$0xff]
        %v2884 = vld [vmem:[%s2872 + $0x58] sm:$0xff]
        %v2885 = vld [vmem:[%s2872 + $0x60] sm:$0xff]
        %v2886 = vld [vmem:[%s2872 + $0x68] sm:$0xff]
        %v2887 = vld [vmem:[%s2872 + $0x70] sm:$0xff]
        %v2888 = vld [vmem:[%s2872 + $0x78] sm:$0xff]
        %v2889 = vld [vmem:[%s2872 + $0x80] sm:$0xff]
        %v2890 = vld [vmem:[%s2872 + $0x88] sm:$0xff]
        %v2891 = vld [vmem:[%s2872 + $0x90] sm:$0xff]
        %v2892 = vld [vmem:[%s2872 + $0x98] sm:$0xff]
        %v2893 = vld [vmem:[%s2872 + $0xa0] sm:$0xff]
        %v2894 = vld [vmem:[%s2872 + $0xa8] sm:$0xff]
        %v2895 = vld [vmem:[%s2872 + $0xb0] sm:$0xff]
        %v2896 = vld [vmem:[%s2872 + $0xb8] sm:$0xff]
        %v2897 = vld [vmem:[%s2872 + $0xc0] sm:$0xff]
        %v2898 = vld [vmem:[%s2872 + $0xc8] sm:$0xff]
        %v2899 = vld [vmem:[%s2872 + $0xd0] sm:$0xff]
        %v2900 = vld [vmem:[%s2872 + $0xd8] sm:$0xff]
        %v2901 = vld [vmem:[%s2872 + $0xe0] sm:$0xff]
        %v2902 = vld [vmem:[%s2872 + $0xe8] sm:$0xff]
        %v2903 = vld [vmem:[%s2872 + $0xf0] sm:$0xff]
        %v2904 = vld [vmem:[%s2872 + $0xf8] sm:$0xff]
        %v2907 = vrot.slane %v2836, 4
        %v2908 = vrot.slane %v2837, 4
        %v2943 = vunpack.c.l.b16 %v2873
        %v2944 = vunpack.c.h.b16 %v2873
        %v2945 = vunpack.c.l.b16 %v2874
        %v2946 = vunpack.c.h.b16 %v2874
        %v2947 = vunpack.c.l.b16 %v2875
        %v2948 = vunpack.c.h.b16 %v2875
        %v2949 = vunpack.c.l.b16 %v2876
        %v2950 = vunpack.c.h.b16 %v2876
        %v2951 = vunpack.c.l.b16 %v2877
        %v2952 = vunpack.c.h.b16 %v2877
        %v2953 = vunpack.c.l.b16 %v2878
        %v2954 = vunpack.c.h.b16 %v2878
        %v2955 = vunpack.c.l.b16 %v2879
        %v2956 = vunpack.c.h.b16 %v2879
        %v2957 = vunpack.c.l.b16 %v2880
        %v2958 = vunpack.c.h.b16 %v2880
        %v2959 = vunpack.c.l.b16 %v2881
        %v2960 = vunpack.c.h.b16 %v2881
        %v2961 = vunpack.c.l.b16 %v2882
        %v2962 = vunpack.c.h.b16 %v2882
        %v2963 = vunpack.c.l.b16 %v2883
        %v2964 = vunpack.c.h.b16 %v2883
        %v2965 = vunpack.c.l.b16 %v2884
        %v2966 = vunpack.c.h.b16 %v2884
        %v2967 = vunpack.c.l.b16 %v2885
        %v2968 = vunpack.c.h.b16 %v2885
        %v2969 = vunpack.c.l.b16 %v2886
        %v2970 = vunpack.c.h.b16 %v2886
        %v2971 = vunpack.c.l.b16 %v2887
        %v2972 = vunpack.c.h.b16 %v2887
        %v2973 = vunpack.c.l.b16 %v2888
        %v2974 = vunpack.c.h.b16 %v2888
        %v2975 = vunpack.c.l.b16 %v2889
        %v2976 = vunpack.c.h.b16 %v2889
        %v2977 = vunpack.c.l.b16 %v2890
        %v2978 = vunpack.c.h.b16 %v2890
        %v2979 = vunpack.c.l.b16 %v2891
        %v2980 = vunpack.c.h.b16 %v2891
        %v2981 = vunpack.c.l.b16 %v2892
        %v2982 = vunpack.c.h.b16 %v2892
        %v2983 = vunpack.c.l.b16 %v2893
        %v2984 = vunpack.c.h.b16 %v2893
        %v2985 = vunpack.c.l.b16 %v2894
        %v2986 = vunpack.c.h.b16 %v2894
        %v2987 = vunpack.c.l.b16 %v2895
        %v2988 = vunpack.c.h.b16 %v2895
        %v2989 = vunpack.c.l.b16 %v2896
        %v2990 = vunpack.c.h.b16 %v2896
        %v2991 = vunpack.c.l.b16 %v2897
        %v2992 = vunpack.c.h.b16 %v2897
        %v2993 = vunpack.c.l.b16 %v2898
        %v2994 = vunpack.c.h.b16 %v2898
        %v2995 = vunpack.c.l.b16 %v2899
        %v2996 = vunpack.c.h.b16 %v2899
        %v2997 = vunpack.c.l.b16 %v2900
        %v2998 = vunpack.c.h.b16 %v2900
        %v2999 = vunpack.c.l.b16 %v2901
        %v3000 = vunpack.c.h.b16 %v2901
        %v3001 = vunpack.c.l.b16 %v2902
        %v3002 = vunpack.c.h.b16 %v2902
        %v3003 = vunpack.c.l.b16 %v2903
        %v3004 = vunpack.c.h.b16 %v2903
        %v3005 = vunpack.c.l.b16 %v2904
        %v3006 = vunpack.c.h.b16 %v2904
        %v3007 = vpack.c.b16 %v2945, %v2943
        %v3008 = vpack.c.b16 %v2946, %v2944
        %v3009 = vpack.c.b16 %v2949, %v2947
        %v3010 = vpack.c.b16 %v2950, %v2948
        %v3011 = vpack.c.b16 %v2953, %v2951
        %v3012 = vpack.c.b16 %v2954, %v2952
        %v3013 = vpack.c.b16 %v2957, %v2955
        %v3014 = vpack.c.b16 %v2958, %v2956
        %v3015 = vpack.c.b16 %v2961, %v2959
        %v3016 = vpack.c.b16 %v2962, %v2960
        %v3017 = vpack.c.b16 %v2965, %v2963
        %v3018 = vpack.c.b16 %v2966, %v2964
        %v3019 = vpack.c.b16 %v2969, %v2967
        %v3020 = vpack.c.b16 %v2970, %v2968
        %v3021 = vpack.c.b16 %v2973, %v2971
        %v3022 = vpack.c.b16 %v2974, %v2972
        %v3023 = vpack.c.b16 %v2977, %v2975
        %v3024 = vpack.c.b16 %v2978, %v2976
        %v3025 = vpack.c.b16 %v2981, %v2979
        %v3026 = vpack.c.b16 %v2982, %v2980
        %v3027 = vpack.c.b16 %v2985, %v2983
        %v3028 = vpack.c.b16 %v2986, %v2984
        %v3029 = vpack.c.b16 %v2989, %v2987
        %v3030 = vpack.c.b16 %v2990, %v2988
        %v3031 = vpack.c.b16 %v2993, %v2991
        %v3032 = vpack.c.b16 %v2994, %v2992
        %v3033 = vpack.c.b16 %v2997, %v2995
        %v3034 = vpack.c.b16 %v2998, %v2996
        %v3035 = vpack.c.b16 %v3001, %v2999
        %v3036 = vpack.c.b16 %v3002, %v3000
        %v3037 = vpack.c.b16 %v3005, %v3003
        %v3038 = vpack.c.b16 %v3006, %v3004
        %3071 = vmatprep.subr.bf16.mxu0 %v3008
        %3072 = vmatpush1.bf16.msra.mxu0 %v3007
        %3073 = vmatprep.subr.bf16.mxu0 %v3010
        %3074 = vmatpush1.bf16.msra.mxu0 %v3009
        %3075 = vmatprep.subr.bf16.mxu0 %v3012
        %3076 = vmatpush1.bf16.msra.mxu0 %v3011
        %3077 = vmatprep.subr.bf16.mxu0 %v3014
        %3078 = vmatpush1.bf16.msra.mxu0 %v3013
        %3079 = vmatprep.subr.bf16.mxu0 %v3016
        %3080 = vmatpush1.bf16.msra.mxu0 %v3015
        %3081 = vmatprep.subr.bf16.mxu0 %v3018
        %3082 = vmatpush1.bf16.msra.mxu0 %v3017
        %3083 = vmatprep.subr.bf16.mxu0 %v3020
        %3084 = vmatpush1.bf16.msra.mxu0 %v3019
        %3085 = vmatprep.subr.bf16.mxu0 %v3022
        %3086 = vmatpush1.bf16.msra.mxu0 %v3021
        %3087 = vmatprep.subr.bf16.mxu0 %v3024
        %3088 = vmatpush1.bf16.msra.mxu0 %v3023
        %3089 = vmatprep.subr.bf16.mxu0 %v3026
        %3090 = vmatpush1.bf16.msra.mxu0 %v3025
        %3091 = vmatprep.subr.bf16.mxu0 %v3028
        %3092 = vmatpush1.bf16.msra.mxu0 %v3027
        %3093 = vmatprep.subr.bf16.mxu0 %v3030
        %3094 = vmatpush1.bf16.msra.mxu0 %v3029
        %3095 = vmatprep.subr.bf16.mxu0 %v3032
        %3096 = vmatpush1.bf16.msra.mxu0 %v3031
        %3097 = vmatprep.subr.bf16.mxu0 %v3034
        %3098 = vmatpush1.bf16.msra.mxu0 %v3033
        %3099 = vmatprep.subr.bf16.mxu0 %v3036
        %3100 = vmatpush1.bf16.msra.mxu0 %v3035
        %3101 = vmatprep.subr.bf16.mxu0 %v3038
        %3102 = vmatpush1.bf16.msra.mxu0 %v3037
        %3103 = vmatprep.mubr.bf16.mxu0 %v2908
        %3104 = vmatmul.mubr.bf16.gmra.mrb[0].mxu0 %v2907
        %v3105 = vpop.f32.mrb[0].mxu0
        %v3106 = vadd.f32 0.0, %v3105
        %v3107 = vpop.f32.mrb[0].mxu0
        %v3108 = vadd.f32 0.0, %v3107
        %v3109 = vpop.f32.mrb[0].mxu0
        %v3110 = vpop.f32.mrb[0].mxu0
        %3111 = vdwg.mxu0
        %v3113 = vshrl.u32 %v2836, 16
        %v3115 = vrot.slane %v3113, 3
        %v3116 = vshll.u32 %v2836, 16
        %v3118 = vrot.slane %v3116, 4
        %v3119 = vor.u32 %v3115, %v3118
        %v3121 = vshrl.u32 %v2837, 16
        %v3123 = vrot.slane %v3121, 3
        %v3124 = vshll.u32 %v2837, 16
        %v3126 = vrot.slane %v3124, 4
        %v3127 = vor.u32 %v3123, %v3126
        %v3162 = vunpack.c.l.b16 %v2840
        %v3163 = vunpack.c.h.b16 %v2840
        %v3164 = vunpack.c.l.b16 %v2841
        %v3165 = vunpack.c.h.b16 %v2841
        %v3166 = vunpack.c.l.b16 %v2842
        %v3167 = vunpack.c.h.b16 %v2842
        %v3168 = vunpack.c.l.b16 %v2843
        %v3169 = vunpack.c.h.b16 %v2843
        %v3170 = vunpack.c.l.b16 %v2844
        %v3171 = vunpack.c.h.b16 %v2844
        %v3172 = vunpack.c.l.b16 %v2845
        %v3173 = vunpack.c.h.b16 %v2845
        %v3174 = vunpack.c.l.b16 %v2846
        %v3175 = vunpack.c.h.b16 %v2846
        %v3176 = vunpack.c.l.b16 %v2847
        %v3177 = vunpack.c.h.b16 %v2847
        %v3178 = vunpack.c.l.b16 %v2848
        %v3179 = vunpack.c.h.b16 %v2848
        %v3180 = vunpack.c.l.b16 %v2849
        %v3181 = vunpack.c.h.b16 %v2849
        %v3182 = vunpack.c.l.b16 %v2850
        %v3183 = vunpack.c.h.b16 %v2850
        %v3184 = vunpack.c.l.b16 %v2851
        %v3185 = vunpack.c.h.b16 %v2851
        %v3186 = vunpack.c.l.b16 %v2852
        %v3187 = vunpack.c.h.b16 %v2852
        %v3188 = vunpack.c.l.b16 %v2853
        %v3189 = vunpack.c.h.b16 %v2853
        %v3190 = vunpack.c.l.b16 %v2854
        %v3191 = vunpack.c.h.b16 %v2854
        %v3192 = vunpack.c.l.b16 %v2855
        %v3193 = vunpack.c.h.b16 %v2855
        %v3194 = vunpack.c.l.b16 %v2856
        %v3195 = vunpack.c.h.b16 %v2856
        %v3196 = vunpack.c.l.b16 %v2857
        %v3197 = vunpack.c.h.b16 %v2857
        %v3198 = vunpack.c.l.b16 %v2858
        %v3199 = vunpack.c.h.b16 %v2858
        %v3200 = vunpack.c.l.b16 %v2859
        %v3201 = vunpack.c.h.b16 %v2859
        %v3202 = vunpack.c.l.b16 %v2860
        %v3203 = vunpack.c.h.b16 %v2860
        %v3204 = vunpack.c.l.b16 %v2861
        %v3205 = vunpack.c.h.b16 %v2861
        %v3206 = vunpack.c.l.b16 %v2862
        %v3207 = vunpack.c.h.b16 %v2862
        %v3208 = vunpack.c.l.b16 %v2863
        %v3209 = vunpack.c.h.b16 %v2863
        %v3210 = vunpack.c.l.b16 %v2864
        %v3211 = vunpack.c.h.b16 %v2864
        %v3212 = vunpack.c.l.b16 %v2865
        %v3213 = vunpack.c.h.b16 %v2865
        %v3214 = vunpack.c.l.b16 %v2866
        %v3215 = vunpack.c.h.b16 %v2866
        %v3216 = vunpack.c.l.b16 %v2867
        %v3217 = vunpack.c.h.b16 %v2867
        %v3218 = vunpack.c.l.b16 %v2868
        %v3219 = vunpack.c.h.b16 %v2868
        %v3220 = vunpack.c.l.b16 %v2869
        %v3221 = vunpack.c.h.b16 %v2869
        %v3222 = vunpack.c.l.b16 %v2870
        %v3223 = vunpack.c.h.b16 %v2870
        %v3224 = vunpack.c.l.b16 %v2871
        %v3225 = vunpack.c.h.b16 %v2871
        %v3226 = vpack.c.b16 %v3164, %v3162
        %v3227 = vpack.c.b16 %v3165, %v3163
        %v3228 = vpack.c.b16 %v3168, %v3166
        %v3229 = vpack.c.b16 %v3169, %v3167
        %v3230 = vpack.c.b16 %v3172, %v3170
        %v3231 = vpack.c.b16 %v3173, %v3171
        %v3232 = vpack.c.b16 %v3176, %v3174
        %v3233 = vpack.c.b16 %v3177, %v3175
        %v3234 = vpack.c.b16 %v3180, %v3178
        %v3235 = vpack.c.b16 %v3181, %v3179
        %v3236 = vpack.c.b16 %v3184, %v3182
        %v3237 = vpack.c.b16 %v3185, %v3183
        %v3238 = vpack.c.b16 %v3188, %v3186
        %v3239 = vpack.c.b16 %v3189, %v3187
        %v3240 = vpack.c.b16 %v3192, %v3190
        %v3241 = vpack.c.b16 %v3193, %v3191
        %v3242 = vpack.c.b16 %v3196, %v3194
        %v3243 = vpack.c.b16 %v3197, %v3195
        %v3244 = vpack.c.b16 %v3200, %v3198
        %v3245 = vpack.c.b16 %v3201, %v3199
        %v3246 = vpack.c.b16 %v3204, %v3202
        %v3247 = vpack.c.b16 %v3205, %v3203
        %v3248 = vpack.c.b16 %v3208, %v3206
        %v3249 = vpack.c.b16 %v3209, %v3207
        %v3250 = vpack.c.b16 %v3212, %v3210
        %v3251 = vpack.c.b16 %v3213, %v3211
        %v3252 = vpack.c.b16 %v3216, %v3214
        %v3253 = vpack.c.b16 %v3217, %v3215
        %v3254 = vpack.c.b16 %v3220, %v3218
        %v3255 = vpack.c.b16 %v3221, %v3219
        %v3256 = vpack.c.b16 %v3224, %v3222
        %v3257 = vpack.c.b16 %v3225, %v3223
        %3290 = vmatprep.subr.bf16.mxu0 %v3227
        %3291 = vmatpush1.bf16.msra.mxu0 %v3226
        %3292 = vmatprep.subr.bf16.mxu0 %v3229
        %3293 = vmatpush1.bf16.msra.mxu0 %v3228
        %3294 = vmatprep.subr.bf16.mxu0 %v3231
        %3295 = vmatpush1.bf16.msra.mxu0 %v3230
        %3296 = vmatprep.subr.bf16.mxu0 %v3233
        %3297 = vmatpush1.bf16.msra.mxu0 %v3232
        %3298 = vmatprep.subr.bf16.mxu0 %v3235
        %3299 = vmatpush1.bf16.msra.mxu0 %v3234
        %3300 = vmatprep.subr.bf16.mxu0 %v3237
        %3301 = vmatpush1.bf16.msra.mxu0 %v3236
        %3302 = vmatprep.subr.bf16.mxu0 %v3239
        %3303 = vmatpush1.bf16.msra.mxu0 %v3238
        %3304 = vmatprep.subr.bf16.mxu0 %v3241
        %3305 = vmatpush1.bf16.msra.mxu0 %v3240
        %3306 = vmatprep.subr.bf16.mxu0 %v3243
        %3307 = vmatpush1.bf16.msra.mxu0 %v3242
        %3308 = vmatprep.subr.bf16.mxu0 %v3245
        %3309 = vmatpush1.bf16.msra.mxu0 %v3244
        %3310 = vmatprep.subr.bf16.mxu0 %v3247
        %3311 = vmatpush1.bf16.msra.mxu0 %v3246
        %3312 = vmatprep.subr.bf16.mxu0 %v3249
        %3313 = vmatpush1.bf16.msra.mxu0 %v3248
        %3314 = vmatprep.subr.bf16.mxu0 %v3251
        %3315 = vmatpush1.bf16.msra.mxu0 %v3250
        %3316 = vmatprep.subr.bf16.mxu0 %v3253
        %3317 = vmatpush1.bf16.msra.mxu0 %v3252
        %3318 = vmatprep.subr.bf16.mxu0 %v3255
        %3319 = vmatpush1.bf16.msra.mxu0 %v3254
        %3320 = vmatprep.subr.bf16.mxu0 %v3257
        %3321 = vmatpush1.bf16.msra.mxu0 %v3256
        %3322 = vmatprep.mubr.bf16.mxu0 %v3127
        %3323 = vmatmul.mubr.bf16.gmra.mrb[0].mxu0 %v3119
        %v3324 = vpop.f32.mrb[0].mxu0
        %v3325 = vadd.f32 %v3106, %v3324
        %v3326 = vpop.f32.mrb[0].mxu0
        %v3327 = vadd.f32 %v3108, %v3326
        %v3328 = vpop.f32.mrb[0].mxu0
        %v3329 = vpop.f32.mrb[0].mxu0
        %3330 = vdwg.mxu0
        %s3331 = scalar_lea.vmem [#allocation13], 512
        %v3332 = vld [vmem:[%s3331] sm:$0xff]
        %v3333 = vld [vmem:[%s3331 + $0x8] sm:$0xff]
        %v3334 = vld [vmem:[%s3331 + $0x10] sm:$0xff]
        %v3335 = vld [vmem:[%s3331 + $0x18] sm:$0xff]
        %v3336 = vld [vmem:[%s3331 + $0x20] sm:$0xff]
        %v3337 = vld [vmem:[%s3331 + $0x28] sm:$0xff]
        %v3338 = vld [vmem:[%s3331 + $0x30] sm:$0xff]
        %v3339 = vld [vmem:[%s3331 + $0x38] sm:$0xff]
        %v3340 = vld [vmem:[%s3331 + $0x40] sm:$0xff]
        %v3341 = vld [vmem:[%s3331 + $0x48] sm:$0xff]
        %v3342 = vld [vmem:[%s3331 + $0x50] sm:$0xff]
        %v3343 = vld [vmem:[%s3331 + $0x58] sm:$0xff]
        %v3344 = vld [vmem:[%s3331 + $0x60] sm:$0xff]
        %v3345 = vld [vmem:[%s3331 + $0x68] sm:$0xff]
        %v3346 = vld [vmem:[%s3331 + $0x70] sm:$0xff]
        %v3347 = vld [vmem:[%s3331 + $0x78] sm:$0xff]
        %v3348 = vld [vmem:[%s3331 + $0x80] sm:$0xff]
        %v3349 = vld [vmem:[%s3331 + $0x88] sm:$0xff]
        %v3350 = vld [vmem:[%s3331 + $0x90] sm:$0xff]
        %v3351 = vld [vmem:[%s3331 + $0x98] sm:$0xff]
        %v3352 = vld [vmem:[%s3331 + $0xa0] sm:$0xff]
        %v3353 = vld [vmem:[%s3331 + $0xa8] sm:$0xff]
        %v3354 = vld [vmem:[%s3331 + $0xb0] sm:$0xff]
        %v3355 = vld [vmem:[%s3331 + $0xb8] sm:$0xff]
        %v3356 = vld [vmem:[%s3331 + $0xc0] sm:$0xff]
        %v3357 = vld [vmem:[%s3331 + $0xc8] sm:$0xff]
        %v3358 = vld [vmem:[%s3331 + $0xd0] sm:$0xff]
        %v3359 = vld [vmem:[%s3331 + $0xd8] sm:$0xff]
        %v3360 = vld [vmem:[%s3331 + $0xe0] sm:$0xff]
        %v3361 = vld [vmem:[%s3331 + $0xe8] sm:$0xff]
        %v3362 = vld [vmem:[%s3331 + $0xf0] sm:$0xff]
        %v3363 = vld [vmem:[%s3331 + $0xf8] sm:$0xff]
        %vm3364 = vsmask.f32 3328
        %v3365 = vrot.slane %v3113, 4
        %v3366 = vrot.slane %v3116, 5
        %v3367 = vor.u32 %v3365, %v3366
        %v3369 = vshll.u32 %v2838, 16
        %v3371 = vrot.slane %v3369, 5
        %v3372 = vsel %vm3364, %v3367, %v3371
        %v3373 = vrot.slane %v3121, 4
        %v3374 = vrot.slane %v3124, 5
        %v3375 = vor.u32 %v3373, %v3374
        %v3377 = vshll.u32 %v2839, 16
        %v3379 = vrot.slane %v3377, 5
        %v3380 = vsel %vm3364, %v3375, %v3379
        %v3415 = vunpack.c.l.b16 %v3332
        %v3416 = vunpack.c.h.b16 %v3332
        %v3417 = vunpack.c.l.b16 %v3333
        %v3418 = vunpack.c.h.b16 %v3333
        %v3419 = vunpack.c.l.b16 %v3334
        %v3420 = vunpack.c.h.b16 %v3334
        %v3421 = vunpack.c.l.b16 %v3335
        %v3422 = vunpack.c.h.b16 %v3335
        %v3423 = vunpack.c.l.b16 %v3336
        %v3424 = vunpack.c.h.b16 %v3336
        %v3425 = vunpack.c.l.b16 %v3337
        %v3426 = vunpack.c.h.b16 %v3337
        %v3427 = vunpack.c.l.b16 %v3338
        %v3428 = vunpack.c.h.b16 %v3338
        %v3429 = vunpack.c.l.b16 %v3339
        %v3430 = vunpack.c.h.b16 %v3339
        %v3431 = vunpack.c.l.b16 %v3340
        %v3432 = vunpack.c.h.b16 %v3340
        %v3433 = vunpack.c.l.b16 %v3341
        %v3434 = vunpack.c.h.b16 %v3341
        %v3435 = vunpack.c.l.b16 %v3342
        %v3436 = vunpack.c.h.b16 %v3342
        %v3437 = vunpack.c.l.b16 %v3343
        %v3438 = vunpack.c.h.b16 %v3343
        %v3439 = vunpack.c.l.b16 %v3344
        %v3440 = vunpack.c.h.b16 %v3344
        %v3441 = vunpack.c.l.b16 %v3345
        %v3442 = vunpack.c.h.b16 %v3345
        %v3443 = vunpack.c.l.b16 %v3346
        %v3444 = vunpack.c.h.b16 %v3346
        %v3445 = vunpack.c.l.b16 %v3347
        %v3446 = vunpack.c.h.b16 %v3347
        %v3447 = vunpack.c.l.b16 %v3348
        %v3448 = vunpack.c.h.b16 %v3348
        %v3449 = vunpack.c.l.b16 %v3349
        %v3450 = vunpack.c.h.b16 %v3349
        %v3451 = vunpack.c.l.b16 %v3350
        %v3452 = vunpack.c.h.b16 %v3350
        %v3453 = vunpack.c.l.b16 %v3351
        %v3454 = vunpack.c.h.b16 %v3351
        %v3455 = vunpack.c.l.b16 %v3352
        %v3456 = vunpack.c.h.b16 %v3352
        %v3457 = vunpack.c.l.b16 %v3353
        %v3458 = vunpack.c.h.b16 %v3353
        %v3459 = vunpack.c.l.b16 %v3354
        %v3460 = vunpack.c.h.b16 %v3354
        %v3461 = vunpack.c.l.b16 %v3355
        %v3462 = vunpack.c.h.b16 %v3355
        %v3463 = vunpack.c.l.b16 %v3356
        %v3464 = vunpack.c.h.b16 %v3356
        %v3465 = vunpack.c.l.b16 %v3357
        %v3466 = vunpack.c.h.b16 %v3357
        %v3467 = vunpack.c.l.b16 %v3358
        %v3468 = vunpack.c.h.b16 %v3358
        %v3469 = vunpack.c.l.b16 %v3359
        %v3470 = vunpack.c.h.b16 %v3359
        %v3471 = vunpack.c.l.b16 %v3360
        %v3472 = vunpack.c.h.b16 %v3360
        %v3473 = vunpack.c.l.b16 %v3361
        %v3474 = vunpack.c.h.b16 %v3361
        %v3475 = vunpack.c.l.b16 %v3362
        %v3476 = vunpack.c.h.b16 %v3362
        %v3477 = vunpack.c.l.b16 %v3363
        %v3478 = vunpack.c.h.b16 %v3363
        %v3479 = vpack.c.b16 %v3417, %v3415
        %v3480 = vpack.c.b16 %v3418, %v3416
        %v3481 = vpack.c.b16 %v3421, %v3419
        %v3482 = vpack.c.b16 %v3422, %v3420
        %v3483 = vpack.c.b16 %v3425, %v3423
        %v3484 = vpack.c.b16 %v3426, %v3424
        %v3485 = vpack.c.b16 %v3429, %v3427
        %v3486 = vpack.c.b16 %v3430, %v3428
        %v3487 = vpack.c.b16 %v3433, %v3431
        %v3488 = vpack.c.b16 %v3434, %v3432
        %v3489 = vpack.c.b16 %v3437, %v3435
        %v3490 = vpack.c.b16 %v3438, %v3436
        %v3491 = vpack.c.b16 %v3441, %v3439
        %v3492 = vpack.c.b16 %v3442, %v3440
        %v3493 = vpack.c.b16 %v3445, %v3443
        %v3494 = vpack.c.b16 %v3446, %v3444
        %v3495 = vpack.c.b16 %v3449, %v3447
        %v3496 = vpack.c.b16 %v3450, %v3448
        %v3497 = vpack.c.b16 %v3453, %v3451
        %v3498 = vpack.c.b16 %v3454, %v3452
        %v3499 = vpack.c.b16 %v3457, %v3455
        %v3500 = vpack.c.b16 %v3458, %v3456
        %v3501 = vpack.c.b16 %v3461, %v3459
        %v3502 = vpack.c.b16 %v3462, %v3460
        %v3503 = vpack.c.b16 %v3465, %v3463
        %v3504 = vpack.c.b16 %v3466, %v3464
        %v3505 = vpack.c.b16 %v3469, %v3467
        %v3506 = vpack.c.b16 %v3470, %v3468
        %v3507 = vpack.c.b16 %v3473, %v3471
        %v3508 = vpack.c.b16 %v3474, %v3472
        %v3509 = vpack.c.b16 %v3477, %v3475
        %v3510 = vpack.c.b16 %v3478, %v3476
        %3543 = vmatprep.subr.bf16.mxu0 %v3480
        %3544 = vmatpush1.bf16.msra.mxu0 %v3479
        %3545 = vmatprep.subr.bf16.mxu0 %v3482
        %3546 = vmatpush1.bf16.msra.mxu0 %v3481
        %3547 = vmatprep.subr.bf16.mxu0 %v3484
        %3548 = vmatpush1.bf16.msra.mxu0 %v3483
        %3549 = vmatprep.subr.bf16.mxu0 %v3486
        %3550 = vmatpush1.bf16.msra.mxu0 %v3485
        %3551 = vmatprep.subr.bf16.mxu0 %v3488
        %3552 = vmatpush1.bf16.msra.mxu0 %v3487
        %3553 = vmatprep.subr.bf16.mxu0 %v3490
        %3554 = vmatpush1.bf16.msra.mxu0 %v3489
        %3555 = vmatprep.subr.bf16.mxu0 %v3492
        %3556 = vmatpush1.bf16.msra.mxu0 %v3491
        %3557 = vmatprep.subr.bf16.mxu0 %v3494
        %3558 = vmatpush1.bf16.msra.mxu0 %v3493
        %3559 = vmatprep.subr.bf16.mxu0 %v3496
        %3560 = vmatpush1.bf16.msra.mxu0 %v3495
        %3561 = vmatprep.subr.bf16.mxu0 %v3498
        %3562 = vmatpush1.bf16.msra.mxu0 %v3497
        %3563 = vmatprep.subr.bf16.mxu0 %v3500
        %3564 = vmatpush1.bf16.msra.mxu0 %v3499
        %3565 = vmatprep.subr.bf16.mxu0 %v3502
        %3566 = vmatpush1.bf16.msra.mxu0 %v3501
        %3567 = vmatprep.subr.bf16.mxu0 %v3504
        %3568 = vmatpush1.bf16.msra.mxu0 %v3503
        %3569 = vmatprep.subr.bf16.mxu0 %v3506
        %3570 = vmatpush1.bf16.msra.mxu0 %v3505
        %3571 = vmatprep.subr.bf16.mxu0 %v3508
        %3572 = vmatpush1.bf16.msra.mxu0 %v3507
        %3573 = vmatprep.subr.bf16.mxu0 %v3510
        %3574 = vmatpush1.bf16.msra.mxu0 %v3509
        %3575 = vmatprep.mubr.bf16.mxu0 %v3380
        %3576 = vmatmul.mubr.bf16.gmra.mrb[0].mxu0 %v3372
        %v3577 = vpop.f32.mrb[0].mxu0
        %v3578 = vadd.f32 0.0, %v3577
        %v3579 = vpop.f32.mrb[0].mxu0
        %v3580 = vadd.f32 0.0, %v3579
        %v3581 = vpop.f32.mrb[0].mxu0
        %v3582 = vpop.f32.mrb[0].mxu0
        %3583 = vdwg.mxu0
        %v3584 = vadd.f32 %v3325, %v3578
        %v3585 = vadd.f32 %v3327, %v3580
        %v3586 = vld [vmem:[%s8] sm:$0x3]
        %v3588 = vlaneseq
        %v3589 = vshrl.u32 %v3588, 7
        %v3590 = vsub.s32 0, %v3589
        %v3591 = vrot.slane %v3586, %v3590
        %v3592 = vlaneseq
        %v3593 = vshrl.u32 %v3592, 7
        %v3594 = vsub.s32 1, %v3593
        %v3595 = vrot.slane %v3586, %v3594
        %v3598 = vadd.f32 %v3584, %v3591
        %v3599 = vadd.f32 %v3585, %v3595
        %v3600 = vmax.f32 %v3598, 0.0
        %v3601 = vmax.f32 %v3599, 0.0
        %3602 = vst [vmem:[#allocation5 + $0x10] sm:$0xff] %v3600
        %3603 = vst [vmem:[#allocation5 + $0x18] sm:$0xff] %v3601
        %v3604 = vld [vmem:[#allocation5] sm:$0x80]
        %v3605 = vld [vmem:[#allocation5 + $0x8] sm:$0x80]
        %v3606 = vld [vmem:[#allocation5 + $0x10] sm:$0xff]
        %v3607 = vld [vmem:[#allocation5 + $0x18] sm:$0xff]
        %v3608 = vld [vmem:[#allocation5 + $0x20] sm:$0x1]
        %v3609 = vld [vmem:[#allocation5 + $0x28] sm:$0x1]
        %v3610 = vpack.c.bf16 %v3606, %v3604
        %v3611 = vpack.c.bf16 %v3607, %v3605
        %v3612 = vpack.c.bf16 %v3608, %v3608
        %v3613 = vpack.c.bf16 %v3609, %v3609
        %v3614 = vld [vmem:[#allocation14] sm:$0xff]
        %v3615 = vld [vmem:[#allocation14 + $0x8] sm:$0xff]
        %v3616 = vld [vmem:[#allocation14 + $0x10] sm:$0xff]
        %v3617 = vld [vmem:[#allocation14 + $0x18] sm:$0xff]
        %v3618 = vld [vmem:[#allocation14 + $0x20] sm:$0xff]
        %v3619 = vld [vmem:[#allocation14 + $0x28] sm:$0xff]
        %v3620 = vld [vmem:[#allocation14 + $0x30] sm:$0xff]
        %v3621 = vld [vmem:[#allocation14 + $0x38] sm:$0xff]
        %v3622 = vld [vmem:[#allocation14 + $0x40] sm:$0xff]
        %v3623 = vld [vmem:[#allocation14 + $0x48] sm:$0xff]
        %v3624 = vld [vmem:[#allocation14 + $0x50] sm:$0xff]
        %v3625 = vld [vmem:[#allocation14 + $0x58] sm:$0xff]
        %v3626 = vld [vmem:[#allocation14 + $0x60] sm:$0xff]
        %v3627 = vld [vmem:[#allocation14 + $0x68] sm:$0xff]
        %v3628 = vld [vmem:[#allocation14 + $0x70] sm:$0xff]
        %v3629 = vld [vmem:[#allocation14 + $0x78] sm:$0xff]
        %v3630 = vld [vmem:[#allocation14 + $0x80] sm:$0xff]
        %v3631 = vld [vmem:[#allocation14 + $0x88] sm:$0xff]
        %v3632 = vld [vmem:[#allocation14 + $0x90] sm:$0xff]
        %v3633 = vld [vmem:[#allocation14 + $0x98] sm:$0xff]
        %v3634 = vld [vmem:[#allocation14 + $0xa0] sm:$0xff]
        %v3635 = vld [vmem:[#allocation14 + $0xa8] sm:$0xff]
        %v3636 = vld [vmem:[#allocation14 + $0xb0] sm:$0xff]
        %v3637 = vld [vmem:[#allocation14 + $0xb8] sm:$0xff]
        %v3638 = vld [vmem:[#allocation14 + $0xc0] sm:$0xff]
        %v3639 = vld [vmem:[#allocation14 + $0xc8] sm:$0xff]
        %v3640 = vld [vmem:[#allocation14 + $0xd0] sm:$0xff]
        %v3641 = vld [vmem:[#allocation14 + $0xd8] sm:$0xff]
        %v3642 = vld [vmem:[#allocation14 + $0xe0] sm:$0xff]
        %v3643 = vld [vmem:[#allocation14 + $0xe8] sm:$0xff]
        %v3644 = vld [vmem:[#allocation14 + $0xf0] sm:$0xff]
        %v3645 = vld [vmem:[#allocation14 + $0xf8] sm:$0xff]
        %s3646 = scalar_lea.vmem [#allocation14], 256
        %v3647 = vld [vmem:[%s3646] sm:$0xff]
        %v3648 = vld [vmem:[%s3646 + $0x8] sm:$0xff]
        %v3649 = vld [vmem:[%s3646 + $0x10] sm:$0xff]
        %v3650 = vld [vmem:[%s3646 + $0x18] sm:$0xff]
        %v3651 = vld [vmem:[%s3646 + $0x20] sm:$0xff]
        %v3652 = vld [vmem:[%s3646 + $0x28] sm:$0xff]
        %v3653 = vld [vmem:[%s3646 + $0x30] sm:$0xff]
        %v3654 = vld [vmem:[%s3646 + $0x38] sm:$0xff]
        %v3655 = vld [vmem:[%s3646 + $0x40] sm:$0xff]
        %v3656 = vld [vmem:[%s3646 + $0x48] sm:$0xff]
        %v3657 = vld [vmem:[%s3646 + $0x50] sm:$0xff]
        %v3658 = vld [vmem:[%s3646 + $0x58] sm:$0xff]
        %v3659 = vld [vmem:[%s3646 + $0x60] sm:$0xff]
        %v3660 = vld [vmem:[%s3646 + $0x68] sm:$0xff]
        %v3661 = vld [vmem:[%s3646 + $0x70] sm:$0xff]
        %v3662 = vld [vmem:[%s3646 + $0x78] sm:$0xff]
        %v3663 = vld [vmem:[%s3646 + $0x80] sm:$0xff]
        %v3664 = vld [vmem:[%s3646 + $0x88] sm:$0xff]
        %v3665 = vld [vmem:[%s3646 + $0x90] sm:$0xff]
        %v3666 = vld [vmem:[%s3646 + $0x98] sm:$0xff]
        %v3667 = vld [vmem:[%s3646 + $0xa0] sm:$0xff]
        %v3668 = vld [vmem:[%s3646 + $0xa8] sm:$0xff]
        %v3669 = vld [vmem:[%s3646 + $0xb0] sm:$0xff]
        %v3670 = vld [vmem:[%s3646 + $0xb8] sm:$0xff]
        %v3671 = vld [vmem:[%s3646 + $0xc0] sm:$0xff]
        %v3672 = vld [vmem:[%s3646 + $0xc8] sm:$0xff]
        %v3673 = vld [vmem:[%s3646 + $0xd0] sm:$0xff]
        %v3674 = vld [vmem:[%s3646 + $0xd8] sm:$0xff]
        %v3675 = vld [vmem:[%s3646 + $0xe0] sm:$0xff]
        %v3676 = vld [vmem:[%s3646 + $0xe8] sm:$0xff]
        %v3677 = vld [vmem:[%s3646 + $0xf0] sm:$0xff]
        %v3678 = vld [vmem:[%s3646 + $0xf8] sm:$0xff]
        %v3681 = vrot.slane %v3610, 4
        %v3682 = vrot.slane %v3611, 4
        %v3717 = vunpack.c.l.b16 %v3647
        %v3718 = vunpack.c.h.b16 %v3647
        %v3719 = vunpack.c.l.b16 %v3648
        %v3720 = vunpack.c.h.b16 %v3648
        %v3721 = vunpack.c.l.b16 %v3649
        %v3722 = vunpack.c.h.b16 %v3649
        %v3723 = vunpack.c.l.b16 %v3650
        %v3724 = vunpack.c.h.b16 %v3650
        %v3725 = vunpack.c.l.b16 %v3651
        %v3726 = vunpack.c.h.b16 %v3651
        %v3727 = vunpack.c.l.b16 %v3652
        %v3728 = vunpack.c.h.b16 %v3652
        %v3729 = vunpack.c.l.b16 %v3653
        %v3730 = vunpack.c.h.b16 %v3653
        %v3731 = vunpack.c.l.b16 %v3654
        %v3732 = vunpack.c.h.b16 %v3654
        %v3733 = vunpack.c.l.b16 %v3655
        %v3734 = vunpack.c.h.b16 %v3655
        %v3735 = vunpack.c.l.b16 %v3656
        %v3736 = vunpack.c.h.b16 %v3656
        %v3737 = vunpack.c.l.b16 %v3657
        %v3738 = vunpack.c.h.b16 %v3657
        %v3739 = vunpack.c.l.b16 %v3658
        %v3740 = vunpack.c.h.b16 %v3658
        %v3741 = vunpack.c.l.b16 %v3659
        %v3742 = vunpack.c.h.b16 %v3659
        %v3743 = vunpack.c.l.b16 %v3660
        %v3744 = vunpack.c.h.b16 %v3660
        %v3745 = vunpack.c.l.b16 %v3661
        %v3746 = vunpack.c.h.b16 %v3661
        %v3747 = vunpack.c.l.b16 %v3662
        %v3748 = vunpack.c.h.b16 %v3662
        %v3749 = vunpack.c.l.b16 %v3663
        %v3750 = vunpack.c.h.b16 %v3663
        %v3751 = vunpack.c.l.b16 %v3664
        %v3752 = vunpack.c.h.b16 %v3664
        %v3753 = vunpack.c.l.b16 %v3665
        %v3754 = vunpack.c.h.b16 %v3665
        %v3755 = vunpack.c.l.b16 %v3666
        %v3756 = vunpack.c.h.b16 %v3666
        %v3757 = vunpack.c.l.b16 %v3667
        %v3758 = vunpack.c.h.b16 %v3667
        %v3759 = vunpack.c.l.b16 %v3668
        %v3760 = vunpack.c.h.b16 %v3668
        %v3761 = vunpack.c.l.b16 %v3669
        %v3762 = vunpack.c.h.b16 %v3669
        %v3763 = vunpack.c.l.b16 %v3670
        %v3764 = vunpack.c.h.b16 %v3670
        %v3765 = vunpack.c.l.b16 %v3671
        %v3766 = vunpack.c.h.b16 %v3671
        %v3767 = vunpack.c.l.b16 %v3672
        %v3768 = vunpack.c.h.b16 %v3672
        %v3769 = vunpack.c.l.b16 %v3673
        %v3770 = vunpack.c.h.b16 %v3673
        %v3771 = vunpack.c.l.b16 %v3674
        %v3772 = vunpack.c.h.b16 %v3674
        %v3773 = vunpack.c.l.b16 %v3675
        %v3774 = vunpack.c.h.b16 %v3675
        %v3775 = vunpack.c.l.b16 %v3676
        %v3776 = vunpack.c.h.b16 %v3676
        %v3777 = vunpack.c.l.b16 %v3677
        %v3778 = vunpack.c.h.b16 %v3677
        %v3779 = vunpack.c.l.b16 %v3678
        %v3780 = vunpack.c.h.b16 %v3678
        %v3781 = vpack.c.b16 %v3719, %v3717
        %v3782 = vpack.c.b16 %v3720, %v3718
        %v3783 = vpack.c.b16 %v3723, %v3721
        %v3784 = vpack.c.b16 %v3724, %v3722
        %v3785 = vpack.c.b16 %v3727, %v3725
        %v3786 = vpack.c.b16 %v3728, %v3726
        %v3787 = vpack.c.b16 %v3731, %v3729
        %v3788 = vpack.c.b16 %v3732, %v3730
        %v3789 = vpack.c.b16 %v3735, %v3733
        %v3790 = vpack.c.b16 %v3736, %v3734
        %v3791 = vpack.c.b16 %v3739, %v3737
        %v3792 = vpack.c.b16 %v3740, %v3738
        %v3793 = vpack.c.b16 %v3743, %v3741
        %v3794 = vpack.c.b16 %v3744, %v3742
        %v3795 = vpack.c.b16 %v3747, %v3745
        %v3796 = vpack.c.b16 %v3748, %v3746
        %v3797 = vpack.c.b16 %v3751, %v3749
        %v3798 = vpack.c.b16 %v3752, %v3750
        %v3799 = vpack.c.b16 %v3755, %v3753
        %v3800 = vpack.c.b16 %v3756, %v3754
        %v3801 = vpack.c.b16 %v3759, %v3757
        %v3802 = vpack.c.b16 %v3760, %v3758
        %v3803 = vpack.c.b16 %v3763, %v3761
        %v3804 = vpack.c.b16 %v3764, %v3762
        %v3805 = vpack.c.b16 %v3767, %v3765
        %v3806 = vpack.c.b16 %v3768, %v3766
        %v3807 = vpack.c.b16 %v3771, %v3769
        %v3808 = vpack.c.b16 %v3772, %v3770
        %v3809 = vpack.c.b16 %v3775, %v3773
        %v3810 = vpack.c.b16 %v3776, %v3774
        %v3811 = vpack.c.b16 %v3779, %v3777
        %v3812 = vpack.c.b16 %v3780, %v3778
        %3845 = vmatprep.subr.bf16.mxu0 %v3782
        %3846 = vmatpush1.bf16.msra.mxu0 %v3781
        %3847 = vmatprep.subr.bf16.mxu0 %v3784
        %3848 = vmatpush1.bf16.msra.mxu0 %v3783
        %3849 = vmatprep.subr.bf16.mxu0 %v3786
        %3850 = vmatpush1.bf16.msra.mxu0 %v3785
        %3851 = vmatprep.subr.bf16.mxu0 %v3788
        %3852 = vmatpush1.bf16.msra.mxu0 %v3787
        %3853 = vmatprep.subr.bf16.mxu0 %v3790
        %3854 = vmatpush1.bf16.msra.mxu0 %v3789
        %3855 = vmatprep.subr.bf16.mxu0 %v3792
        %3856 = vmatpush1.bf16.msra.mxu0 %v3791
        %3857 = vmatprep.subr.bf16.mxu0 %v3794
        %3858 = vmatpush1.bf16.msra.mxu0 %v3793
        %3859 = vmatprep.subr.bf16.mxu0 %v3796
        %3860 = vmatpush1.bf16.msra.mxu0 %v3795
        %3861 = vmatprep.subr.bf16.mxu0 %v3798
        %3862 = vmatpush1.bf16.msra.mxu0 %v3797
        %3863 = vmatprep.subr.bf16.mxu0 %v3800
        %3864 = vmatpush1.bf16.msra.mxu0 %v3799
        %3865 = vmatprep.subr.bf16.mxu0 %v3802
        %3866 = vmatpush1.bf16.msra.mxu0 %v3801
        %3867 = vmatprep.subr.bf16.mxu0 %v3804
        %3868 = vmatpush1.bf16.msra.mxu0 %v3803
        %3869 = vmatprep.subr.bf16.mxu0 %v3806
        %3870 = vmatpush1.bf16.msra.mxu0 %v3805
        %3871 = vmatprep.subr.bf16.mxu0 %v3808
        %3872 = vmatpush1.bf16.msra.mxu0 %v3807
        %3873 = vmatprep.subr.bf16.mxu0 %v3810
        %3874 = vmatpush1.bf16.msra.mxu0 %v3809
        %3875 = vmatprep.subr.bf16.mxu0 %v3812
        %3876 = vmatpush1.bf16.msra.mxu0 %v3811
        %3877 = vmatprep.mubr.bf16.mxu0 %v3682
        %3878 = vmatmul.mubr.bf16.gmra.mrb[0].mxu0 %v3681
        %v3879 = vpop.f32.mrb[0].mxu0
        %v3880 = vadd.f32 0.0, %v3879
        %v3881 = vpop.f32.mrb[0].mxu0
        %v3882 = vadd.f32 0.0, %v3881
        %v3883 = vpop.f32.mrb[0].mxu0
        %v3884 = vpop.f32.mrb[0].mxu0
        %3885 = vdwg.mxu0
        %v3887 = vshrl.u32 %v3610, 16
        %v3889 = vrot.slane %v3887, 3
        %v3890 = vshll.u32 %v3610, 16
        %v3892 = vrot.slane %v3890, 4
        %v3893 = vor.u32 %v3889, %v3892
        %v3895 = vshrl.u32 %v3611, 16
        %v3897 = vrot.slane %v3895, 3
        %v3898 = vshll.u32 %v3611, 16
        %v3900 = vrot.slane %v3898, 4
        %v3901 = vor.u32 %v3897, %v3900
        %v3936 = vunpack.c.l.b16 %v3614
        %v3937 = vunpack.c.h.b16 %v3614
        %v3938 = vunpack.c.l.b16 %v3615
        %v3939 = vunpack.c.h.b16 %v3615
        %v3940 = vunpack.c.l.b16 %v3616
        %v3941 = vunpack.c.h.b16 %v3616
        %v3942 = vunpack.c.l.b16 %v3617
        %v3943 = vunpack.c.h.b16 %v3617
        %v3944 = vunpack.c.l.b16 %v3618
        %v3945 = vunpack.c.h.b16 %v3618
        %v3946 = vunpack.c.l.b16 %v3619
        %v3947 = vunpack.c.h.b16 %v3619
        %v3948 = vunpack.c.l.b16 %v3620
        %v3949 = vunpack.c.h.b16 %v3620
        %v3950 = vunpack.c.l.b16 %v3621
        %v3951 = vunpack.c.h.b16 %v3621
        %v3952 = vunpack.c.l.b16 %v3622
        %v3953 = vunpack.c.h.b16 %v3622
        %v3954 = vunpack.c.l.b16 %v3623
        %v3955 = vunpack.c.h.b16 %v3623
        %v3956 = vunpack.c.l.b16 %v3624
        %v3957 = vunpack.c.h.b16 %v3624
        %v3958 = vunpack.c.l.b16 %v3625
        %v3959 = vunpack.c.h.b16 %v3625
        %v3960 = vunpack.c.l.b16 %v3626
        %v3961 = vunpack.c.h.b16 %v3626
        %v3962 = vunpack.c.l.b16 %v3627
        %v3963 = vunpack.c.h.b16 %v3627
        %v3964 = vunpack.c.l.b16 %v3628
        %v3965 = vunpack.c.h.b16 %v3628
        %v3966 = vunpack.c.l.b16 %v3629
        %v3967 = vunpack.c.h.b16 %v3629
        %v3968 = vunpack.c.l.b16 %v3630
        %v3969 = vunpack.c.h.b16 %v3630
        %v3970 = vunpack.c.l.b16 %v3631
        %v3971 = vunpack.c.h.b16 %v3631
        %v3972 = vunpack.c.l.b16 %v3632
        %v3973 = vunpack.c.h.b16 %v3632
        %v3974 = vunpack.c.l.b16 %v3633
        %v3975 = vunpack.c.h.b16 %v3633
        %v3976 = vunpack.c.l.b16 %v3634
        %v3977 = vunpack.c.h.b16 %v3634
        %v3978 = vunpack.c.l.b16 %v3635
        %v3979 = vunpack.c.h.b16 %v3635
        %v3980 = vunpack.c.l.b16 %v3636
        %v3981 = vunpack.c.h.b16 %v3636
        %v3982 = vunpack.c.l.b16 %v3637
        %v3983 = vunpack.c.h.b16 %v3637
        %v3984 = vunpack.c.l.b16 %v3638
        %v3985 = vunpack.c.h.b16 %v3638
        %v3986 = vunpack.c.l.b16 %v3639
        %v3987 = vunpack.c.h.b16 %v3639
        %v3988 = vunpack.c.l.b16 %v3640
        %v3989 = vunpack.c.h.b16 %v3640
        %v3990 = vunpack.c.l.b16 %v3641
        %v3991 = vunpack.c.h.b16 %v3641
        %v3992 = vunpack.c.l.b16 %v3642
        %v3993 = vunpack.c.h.b16 %v3642
        %v3994 = vunpack.c.l.b16 %v3643
        %v3995 = vunpack.c.h.b16 %v3643
        %v3996 = vunpack.c.l.b16 %v3644
        %v3997 = vunpack.c.h.b16 %v3644
        %v3998 = vunpack.c.l.b16 %v3645
        %v3999 = vunpack.c.h.b16 %v3645
        %v4000 = vpack.c.b16 %v3938, %v3936
        %v4001 = vpack.c.b16 %v3939, %v3937
        %v4002 = vpack.c.b16 %v3942, %v3940
        %v4003 = vpack.c.b16 %v3943, %v3941
        %v4004 = vpack.c.b16 %v3946, %v3944
        %v4005 = vpack.c.b16 %v3947, %v3945
        %v4006 = vpack.c.b16 %v3950, %v3948
        %v4007 = vpack.c.b16 %v3951, %v3949
        %v4008 = vpack.c.b16 %v3954, %v3952
        %v4009 = vpack.c.b16 %v3955, %v3953
        %v4010 = vpack.c.b16 %v3958, %v3956
        %v4011 = vpack.c.b16 %v3959, %v3957
        %v4012 = vpack.c.b16 %v3962, %v3960
        %v4013 = vpack.c.b16 %v3963, %v3961
        %v4014 = vpack.c.b16 %v3966, %v3964
        %v4015 = vpack.c.b16 %v3967, %v3965
        %v4016 = vpack.c.b16 %v3970, %v3968
        %v4017 = vpack.c.b16 %v3971, %v3969
        %v4018 = vpack.c.b16 %v3974, %v3972
        %v4019 = vpack.c.b16 %v3975, %v3973
        %v4020 = vpack.c.b16 %v3978, %v3976
        %v4021 = vpack.c.b16 %v3979, %v3977
        %v4022 = vpack.c.b16 %v3982, %v3980
        %v4023 = vpack.c.b16 %v3983, %v3981
        %v4024 = vpack.c.b16 %v3986, %v3984
        %v4025 = vpack.c.b16 %v3987, %v3985
        %v4026 = vpack.c.b16 %v3990, %v3988
        %v4027 = vpack.c.b16 %v3991, %v3989
        %v4028 = vpack.c.b16 %v3994, %v3992
        %v4029 = vpack.c.b16 %v3995, %v3993
        %v4030 = vpack.c.b16 %v3998, %v3996
        %v4031 = vpack.c.b16 %v3999, %v3997
        %4064 = vmatprep.subr.bf16.mxu0 %v4001
        %4065 = vmatpush1.bf16.msra.mxu0 %v4000
        %4066 = vmatprep.subr.bf16.mxu0 %v4003
        %4067 = vmatpush1.bf16.msra.mxu0 %v4002
        %4068 = vmatprep.subr.bf16.mxu0 %v4005
        %4069 = vmatpush1.bf16.msra.mxu0 %v4004
        %4070 = vmatprep.subr.bf16.mxu0 %v4007
        %4071 = vmatpush1.bf16.msra.mxu0 %v4006
        %4072 = vmatprep.subr.bf16.mxu0 %v4009
        %4073 = vmatpush1.bf16.msra.mxu0 %v4008
        %4074 = vmatprep.subr.bf16.mxu0 %v4011
        %4075 = vmatpush1.bf16.msra.mxu0 %v4010
        %4076 = vmatprep.subr.bf16.mxu0 %v4013
        %4077 = vmatpush1.bf16.msra.mxu0 %v4012
        %4078 = vmatprep.subr.bf16.mxu0 %v4015
        %4079 = vmatpush1.bf16.msra.mxu0 %v4014
        %4080 = vmatprep.subr.bf16.mxu0 %v4017
        %4081 = vmatpush1.bf16.msra.mxu0 %v4016
        %4082 = vmatprep.subr.bf16.mxu0 %v4019
        %4083 = vmatpush1.bf16.msra.mxu0 %v4018
        %4084 = vmatprep.subr.bf16.mxu0 %v4021
        %4085 = vmatpush1.bf16.msra.mxu0 %v4020
        %4086 = vmatprep.subr.bf16.mxu0 %v4023
        %4087 = vmatpush1.bf16.msra.mxu0 %v4022
        %4088 = vmatprep.subr.bf16.mxu0 %v4025
        %4089 = vmatpush1.bf16.msra.mxu0 %v4024
        %4090 = vmatprep.subr.bf16.mxu0 %v4027
        %4091 = vmatpush1.bf16.msra.mxu0 %v4026
        %4092 = vmatprep.subr.bf16.mxu0 %v4029
        %4093 = vmatpush1.bf16.msra.mxu0 %v4028
        %4094 = vmatprep.subr.bf16.mxu0 %v4031
        %4095 = vmatpush1.bf16.msra.mxu0 %v4030
        %4096 = vmatprep.mubr.bf16.mxu0 %v3901
        %4097 = vmatmul.mubr.bf16.gmra.mrb[0].mxu0 %v3893
        %v4098 = vpop.f32.mrb[0].mxu0
        %v4099 = vadd.f32 %v3880, %v4098
        %v4100 = vpop.f32.mrb[0].mxu0
        %v4101 = vadd.f32 %v3882, %v4100
        %v4102 = vpop.f32.mrb[0].mxu0
        %v4103 = vpop.f32.mrb[0].mxu0
        %4104 = vdwg.mxu0
        %s4105 = scalar_lea.vmem [#allocation14], 512
        %v4106 = vld [vmem:[%s4105] sm:$0xff]
        %v4107 = vld [vmem:[%s4105 + $0x8] sm:$0xff]
        %v4108 = vld [vmem:[%s4105 + $0x10] sm:$0xff]
        %v4109 = vld [vmem:[%s4105 + $0x18] sm:$0xff]
        %v4110 = vld [vmem:[%s4105 + $0x20] sm:$0xff]
        %v4111 = vld [vmem:[%s4105 + $0x28] sm:$0xff]
        %v4112 = vld [vmem:[%s4105 + $0x30] sm:$0xff]
        %v4113 = vld [vmem:[%s4105 + $0x38] sm:$0xff]
        %v4114 = vld [vmem:[%s4105 + $0x40] sm:$0xff]
        %v4115 = vld [vmem:[%s4105 + $0x48] sm:$0xff]
        %v4116 = vld [vmem:[%s4105 + $0x50] sm:$0xff]
        %v4117 = vld [vmem:[%s4105 + $0x58] sm:$0xff]
        %v4118 = vld [vmem:[%s4105 + $0x60] sm:$0xff]
        %v4119 = vld [vmem:[%s4105 + $0x68] sm:$0xff]
        %v4120 = vld [vmem:[%s4105 + $0x70] sm:$0xff]
        %v4121 = vld [vmem:[%s4105 + $0x78] sm:$0xff]
        %v4122 = vld [vmem:[%s4105 + $0x80] sm:$0xff]
        %v4123 = vld [vmem:[%s4105 + $0x88] sm:$0xff]
        %v4124 = vld [vmem:[%s4105 + $0x90] sm:$0xff]
        %v4125 = vld [vmem:[%s4105 + $0x98] sm:$0xff]
        %v4126 = vld [vmem:[%s4105 + $0xa0] sm:$0xff]
        %v4127 = vld [vmem:[%s4105 + $0xa8] sm:$0xff]
        %v4128 = vld [vmem:[%s4105 + $0xb0] sm:$0xff]
        %v4129 = vld [vmem:[%s4105 + $0xb8] sm:$0xff]
        %v4130 = vld [vmem:[%s4105 + $0xc0] sm:$0xff]
        %v4131 = vld [vmem:[%s4105 + $0xc8] sm:$0xff]
        %v4132 = vld [vmem:[%s4105 + $0xd0] sm:$0xff]
        %v4133 = vld [vmem:[%s4105 + $0xd8] sm:$0xff]
        %v4134 = vld [vmem:[%s4105 + $0xe0] sm:$0xff]
        %v4135 = vld [vmem:[%s4105 + $0xe8] sm:$0xff]
        %v4136 = vld [vmem:[%s4105 + $0xf0] sm:$0xff]
        %v4137 = vld [vmem:[%s4105 + $0xf8] sm:$0xff]
        %v4138 = vrot.slane %v3887, 4
        %v4139 = vrot.slane %v3890, 5
        %v4140 = vor.u32 %v4138, %v4139
        %v4142 = vshll.u32 %v3612, 16
        %v4144 = vrot.slane %v4142, 5
        %v4145 = vsel %vm3364, %v4140, %v4144
        %v4146 = vrot.slane %v3895, 4
        %v4147 = vrot.slane %v3898, 5
        %v4148 = vor.u32 %v4146, %v4147
        %v4150 = vshll.u32 %v3613, 16
        %v4152 = vrot.slane %v4150, 5
        %v4153 = vsel %vm3364, %v4148, %v4152
        %v4188 = vunpack.c.l.b16 %v4106
        %v4189 = vunpack.c.h.b16 %v4106
        %v4190 = vunpack.c.l.b16 %v4107
        %v4191 = vunpack.c.h.b16 %v4107
        %v4192 = vunpack.c.l.b16 %v4108
        %v4193 = vunpack.c.h.b16 %v4108
        %v4194 = vunpack.c.l.b16 %v4109
        %v4195 = vunpack.c.h.b16 %v4109
        %v4196 = vunpack.c.l.b16 %v4110
        %v4197 = vunpack.c.h.b16 %v4110
        %v4198 = vunpack.c.l.b16 %v4111
        %v4199 = vunpack.c.h.b16 %v4111
        %v4200 = vunpack.c.l.b16 %v4112
        %v4201 = vunpack.c.h.b16 %v4112
        %v4202 = vunpack.c.l.b16 %v4113
        %v4203 = vunpack.c.h.b16 %v4113
        %v4204 = vunpack.c.l.b16 %v4114
        %v4205 = vunpack.c.h.b16 %v4114
        %v4206 = vunpack.c.l.b16 %v4115
        %v4207 = vunpack.c.h.b16 %v4115
        %v4208 = vunpack.c.l.b16 %v4116
        %v4209 = vunpack.c.h.b16 %v4116
        %v4210 = vunpack.c.l.b16 %v4117
        %v4211 = vunpack.c.h.b16 %v4117
        %v4212 = vunpack.c.l.b16 %v4118
        %v4213 = vunpack.c.h.b16 %v4118
        %v4214 = vunpack.c.l.b16 %v4119
        %v4215 = vunpack.c.h.b16 %v4119
        %v4216 = vunpack.c.l.b16 %v4120
        %v4217 = vunpack.c.h.b16 %v4120
        %v4218 = vunpack.c.l.b16 %v4121
        %v4219 = vunpack.c.h.b16 %v4121
        %v4220 = vunpack.c.l.b16 %v4122
        %v4221 = vunpack.c.h.b16 %v4122
        %v4222 = vunpack.c.l.b16 %v4123
        %v4223 = vunpack.c.h.b16 %v4123
        %v4224 = vunpack.c.l.b16 %v4124
        %v4225 = vunpack.c.h.b16 %v4124
        %v4226 = vunpack.c.l.b16 %v4125
        %v4227 = vunpack.c.h.b16 %v4125
        %v4228 = vunpack.c.l.b16 %v4126
        %v4229 = vunpack.c.h.b16 %v4126
        %v4230 = vunpack.c.l.b16 %v4127
        %v4231 = vunpack.c.h.b16 %v4127
        %v4232 = vunpack.c.l.b16 %v4128
        %v4233 = vunpack.c.h.b16 %v4128
        %v4234 = vunpack.c.l.b16 %v4129
        %v4235 = vunpack.c.h.b16 %v4129
        %v4236 = vunpack.c.l.b16 %v4130
        %v4237 = vunpack.c.h.b16 %v4130
        %v4238 = vunpack.c.l.b16 %v4131
        %v4239 = vunpack.c.h.b16 %v4131
        %v4240 = vunpack.c.l.b16 %v4132
        %v4241 = vunpack.c.h.b16 %v4132
        %v4242 = vunpack.c.l.b16 %v4133
        %v4243 = vunpack.c.h.b16 %v4133
        %v4244 = vunpack.c.l.b16 %v4134
        %v4245 = vunpack.c.h.b16 %v4134
        %v4246 = vunpack.c.l.b16 %v4135
        %v4247 = vunpack.c.h.b16 %v4135
        %v4248 = vunpack.c.l.b16 %v4136
        %v4249 = vunpack.c.h.b16 %v4136
        %v4250 = vunpack.c.l.b16 %v4137
        %v4251 = vunpack.c.h.b16 %v4137
        %v4252 = vpack.c.b16 %v4190, %v4188
        %v4253 = vpack.c.b16 %v4191, %v4189
        %v4254 = vpack.c.b16 %v4194, %v4192
        %v4255 = vpack.c.b16 %v4195, %v4193
        %v4256 = vpack.c.b16 %v4198, %v4196
        %v4257 = vpack.c.b16 %v4199, %v4197
        %v4258 = vpack.c.b16 %v4202, %v4200
        %v4259 = vpack.c.b16 %v4203, %v4201
        %v4260 = vpack.c.b16 %v4206, %v4204
        %v4261 = vpack.c.b16 %v4207, %v4205
        %v4262 = vpack.c.b16 %v4210, %v4208
        %v4263 = vpack.c.b16 %v4211, %v4209
        %v4264 = vpack.c.b16 %v4214, %v4212
        %v4265 = vpack.c.b16 %v4215, %v4213
        %v4266 = vpack.c.b16 %v4218, %v4216
        %v4267 = vpack.c.b16 %v4219, %v4217
        %v4268 = vpack.c.b16 %v4222, %v4220
        %v4269 = vpack.c.b16 %v4223, %v4221
        %v4270 = vpack.c.b16 %v4226, %v4224
        %v4271 = vpack.c.b16 %v4227, %v4225
        %v4272 = vpack.c.b16 %v4230, %v4228
        %v4273 = vpack.c.b16 %v4231, %v4229
        %v4274 = vpack.c.b16 %v4234, %v4232
        %v4275 = vpack.c.b16 %v4235, %v4233
        %v4276 = vpack.c.b16 %v4238, %v4236
        %v4277 = vpack.c.b16 %v4239, %v4237
        %v4278 = vpack.c.b16 %v4242, %v4240
        %v4279 = vpack.c.b16 %v4243, %v4241
        %v4280 = vpack.c.b16 %v4246, %v4244
        %v4281 = vpack.c.b16 %v4247, %v4245
        %v4282 = vpack.c.b16 %v4250, %v4248
        %v4283 = vpack.c.b16 %v4251, %v4249
        %4316 = vmatprep.subr.bf16.mxu0 %v4253
        %4317 = vmatpush1.bf16.msra.mxu0 %v4252
        %4318 = vmatprep.subr.bf16.mxu0 %v4255
        %4319 = vmatpush1.bf16.msra.mxu0 %v4254
        %4320 = vmatprep.subr.bf16.mxu0 %v4257
        %4321 = vmatpush1.bf16.msra.mxu0 %v4256
        %4322 = vmatprep.subr.bf16.mxu0 %v4259
        %4323 = vmatpush1.bf16.msra.mxu0 %v4258
        %4324 = vmatprep.subr.bf16.mxu0 %v4261
        %4325 = vmatpush1.bf16.msra.mxu0 %v4260
        %4326 = vmatprep.subr.bf16.mxu0 %v4263
        %4327 = vmatpush1.bf16.msra.mxu0 %v4262
        %4328 = vmatprep.subr.bf16.mxu0 %v4265
        %4329 = vmatpush1.bf16.msra.mxu0 %v4264
        %4330 = vmatprep.subr.bf16.mxu0 %v4267
        %4331 = vmatpush1.bf16.msra.mxu0 %v4266
        %4332 = vmatprep.subr.bf16.mxu0 %v4269
        %4333 = vmatpush1.bf16.msra.mxu0 %v4268
        %4334 = vmatprep.subr.bf16.mxu0 %v4271
        %4335 = vmatpush1.bf16.msra.mxu0 %v4270
        %4336 = vmatprep.subr.bf16.mxu0 %v4273
        %4337 = vmatpush1.bf16.msra.mxu0 %v4272
        %4338 = vmatprep.subr.bf16.mxu0 %v4275
        %4339 = vmatpush1.bf16.msra.mxu0 %v4274
        %4340 = vmatprep.subr.bf16.mxu0 %v4277
        %4341 = vmatpush1.bf16.msra.mxu0 %v4276
        %4342 = vmatprep.subr.bf16.mxu0 %v4279
        %4343 = vmatpush1.bf16.msra.mxu0 %v4278
        %4344 = vmatprep.subr.bf16.mxu0 %v4281
        %4345 = vmatpush1.bf16.msra.mxu0 %v4280
        %4346 = vmatprep.subr.bf16.mxu0 %v4283
        %4347 = vmatpush1.bf16.msra.mxu0 %v4282
        %4348 = vmatprep.mubr.bf16.mxu0 %v4153
        %4349 = vmatmul.mubr.bf16.gmra.mrb[0].mxu0 %v4145
        %v4350 = vpop.f32.mrb[0].mxu0
        %v4351 = vadd.f32 0.0, %v4350
        %v4352 = vpop.f32.mrb[0].mxu0
        %v4353 = vadd.f32 0.0, %v4352
        %v4354 = vpop.f32.mrb[0].mxu0
        %v4355 = vpop.f32.mrb[0].mxu0
        %4356 = vdwg.mxu0
        %v4357 = vadd.f32 %v4099, %v4351
        %v4358 = vadd.f32 %v4101, %v4353
        %v4359 = vld [vmem:[%s10] sm:$0x3]
        %v4361 = vlaneseq
        %v4362 = vshrl.u32 %v4361, 7
        %v4363 = vsub.s32 0, %v4362
        %v4364 = vrot.slane %v4359, %v4363
        %v4365 = vlaneseq
        %v4366 = vshrl.u32 %v4365, 7
        %v4367 = vsub.s32 1, %v4366
        %v4368 = vrot.slane %v4359, %v4367
        %v4371 = vadd.f32 %v4357, %v4364
        %v4372 = vadd.f32 %v4358, %v4368
        %v4373 = vmax.f32 %v4371, 0.0
        %v4374 = vmax.f32 %v4372, 0.0
        %4375 = vst [vmem:[#allocation6 + $0x10] sm:$0xff] %v4373
        %4376 = vst [vmem:[#allocation6 + $0x18] sm:$0xff] %v4374
        %v4377 = vld [vmem:[#allocation6] sm:$0x80]
        %v4378 = vld [vmem:[#allocation6 + $0x8] sm:$0x80]
        %v4379 = vld [vmem:[#allocation6 + $0x10] sm:$0xff]
        %v4380 = vld [vmem:[#allocation6 + $0x18] sm:$0xff]
        %v4381 = vld [vmem:[#allocation6 + $0x20] sm:$0x1]
        %v4382 = vld [vmem:[#allocation6 + $0x28] sm:$0x1]
        %v4383 = vpack.c.bf16 %v4379, %v4377
        %v4384 = vpack.c.bf16 %v4380, %v4378
        %v4385 = vpack.c.bf16 %v4381, %v4381
        %v4386 = vpack.c.bf16 %v4382, %v4382
        %v4387 = vld [vmem:[#allocation16] sm:$0xff]
        %v4388 = vld [vmem:[#allocation16 + $0x8] sm:$0xff]
        %v4389 = vld [vmem:[#allocation16 + $0x10] sm:$0xff]
        %v4390 = vld [vmem:[#allocation16 + $0x18] sm:$0xff]
        %v4391 = vld [vmem:[#allocation16 + $0x20] sm:$0xff]
        %v4392 = vld [vmem:[#allocation16 + $0x28] sm:$0xff]
        %v4393 = vld [vmem:[#allocation16 + $0x30] sm:$0xff]
        %v4394 = vld [vmem:[#allocation16 + $0x38] sm:$0xff]
        %v4395 = vld [vmem:[#allocation16 + $0x40] sm:$0xff]
        %v4396 = vld [vmem:[#allocation16 + $0x48] sm:$0xff]
        %v4397 = vld [vmem:[#allocation16 + $0x50] sm:$0xff]
        %v4398 = vld [vmem:[#allocation16 + $0x58] sm:$0xff]
        %v4399 = vld [vmem:[#allocation16 + $0x60] sm:$0xff]
        %v4400 = vld [vmem:[#allocation16 + $0x68] sm:$0xff]
        %v4401 = vld [vmem:[#allocation16 + $0x70] sm:$0xff]
        %v4402 = vld [vmem:[#allocation16 + $0x78] sm:$0xff]
        %v4403 = vld [vmem:[#allocation16 + $0x80] sm:$0xff]
        %v4404 = vld [vmem:[#allocation16 + $0x88] sm:$0xff]
        %v4405 = vld [vmem:[#allocation16 + $0x90] sm:$0xff]
        %v4406 = vld [vmem:[#allocation16 + $0x98] sm:$0xff]
        %v4407 = vld [vmem:[#allocation16 + $0xa0] sm:$0xff]
        %v4408 = vld [vmem:[#allocation16 + $0xa8] sm:$0xff]
        %v4409 = vld [vmem:[#allocation16 + $0xb0] sm:$0xff]
        %v4410 = vld [vmem:[#allocation16 + $0xb8] sm:$0xff]
        %v4411 = vld [vmem:[#allocation16 + $0xc0] sm:$0xff]
        %v4412 = vld [vmem:[#allocation16 + $0xc8] sm:$0xff]
        %v4413 = vld [vmem:[#allocation16 + $0xd0] sm:$0xff]
        %v4414 = vld [vmem:[#allocation16 + $0xd8] sm:$0xff]
        %v4415 = vld [vmem:[#allocation16 + $0xe0] sm:$0xff]
        %v4416 = vld [vmem:[#allocation16 + $0xe8] sm:$0xff]
        %v4417 = vld [vmem:[#allocation16 + $0xf0] sm:$0xff]
        %v4418 = vld [vmem:[#allocation16 + $0xf8] sm:$0xff]
        %s4419 = scalar_lea.vmem [#allocation16], 256
        %v4420 = vld [vmem:[%s4419] sm:$0xff]
        %v4421 = vld [vmem:[%s4419 + $0x8] sm:$0xff]
        %v4422 = vld [vmem:[%s4419 + $0x10] sm:$0xff]
        %v4423 = vld [vmem:[%s4419 + $0x18] sm:$0xff]
        %v4424 = vld [vmem:[%s4419 + $0x20] sm:$0xff]
        %v4425 = vld [vmem:[%s4419 + $0x28] sm:$0xff]
        %v4426 = vld [vmem:[%s4419 + $0x30] sm:$0xff]
        %v4427 = vld [vmem:[%s4419 + $0x38] sm:$0xff]
        %v4428 = vld [vmem:[%s4419 + $0x40] sm:$0xff]
        %v4429 = vld [vmem:[%s4419 + $0x48] sm:$0xff]
        %v4430 = vld [vmem:[%s4419 + $0x50] sm:$0xff]
        %v4431 = vld [vmem:[%s4419 + $0x58] sm:$0xff]
        %v4432 = vld [vmem:[%s4419 + $0x60] sm:$0xff]
        %v4433 = vld [vmem:[%s4419 + $0x68] sm:$0xff]
        %v4434 = vld [vmem:[%s4419 + $0x70] sm:$0xff]
        %v4435 = vld [vmem:[%s4419 + $0x78] sm:$0xff]
        %v4436 = vld [vmem:[%s4419 + $0x80] sm:$0xff]
        %v4437 = vld [vmem:[%s4419 + $0x88] sm:$0xff]
        %v4438 = vld [vmem:[%s4419 + $0x90] sm:$0xff]
        %v4439 = vld [vmem:[%s4419 + $0x98] sm:$0xff]
        %v4440 = vld [vmem:[%s4419 + $0xa0] sm:$0xff]
        %v4441 = vld [vmem:[%s4419 + $0xa8] sm:$0xff]
        %v4442 = vld [vmem:[%s4419 + $0xb0] sm:$0xff]
        %v4443 = vld [vmem:[%s4419 + $0xb8] sm:$0xff]
        %v4444 = vld [vmem:[%s4419 + $0xc0] sm:$0xff]
        %v4445 = vld [vmem:[%s4419 + $0xc8] sm:$0xff]
        %v4446 = vld [vmem:[%s4419 + $0xd0] sm:$0xff]
        %v4447 = vld [vmem:[%s4419 + $0xd8] sm:$0xff]
        %v4448 = vld [vmem:[%s4419 + $0xe0] sm:$0xff]
        %v4449 = vld [vmem:[%s4419 + $0xe8] sm:$0xff]
        %v4450 = vld [vmem:[%s4419 + $0xf0] sm:$0xff]
        %v4451 = vld [vmem:[%s4419 + $0xf8] sm:$0xff]
        %v4454 = vrot.slane %v4383, 4
        %v4455 = vrot.slane %v4384, 4
        %v4490 = vunpack.c.l.b16 %v4420
        %v4491 = vunpack.c.h.b16 %v4420
        %v4492 = vunpack.c.l.b16 %v4421
        %v4493 = vunpack.c.h.b16 %v4421
        %v4494 = vunpack.c.l.b16 %v4422
        %v4495 = vunpack.c.h.b16 %v4422
        %v4496 = vunpack.c.l.b16 %v4423
        %v4497 = vunpack.c.h.b16 %v4423
        %v4498 = vunpack.c.l.b16 %v4424
        %v4499 = vunpack.c.h.b16 %v4424
        %v4500 = vunpack.c.l.b16 %v4425
        %v4501 = vunpack.c.h.b16 %v4425
        %v4502 = vunpack.c.l.b16 %v4426
        %v4503 = vunpack.c.h.b16 %v4426
        %v4504 = vunpack.c.l.b16 %v4427
        %v4505 = vunpack.c.h.b16 %v4427
        %v4506 = vunpack.c.l.b16 %v4428
        %v4507 = vunpack.c.h.b16 %v4428
        %v4508 = vunpack.c.l.b16 %v4429
        %v4509 = vunpack.c.h.b16 %v4429
        %v4510 = vunpack.c.l.b16 %v4430
        %v4511 = vunpack.c.h.b16 %v4430
        %v4512 = vunpack.c.l.b16 %v4431
        %v4513 = vunpack.c.h.b16 %v4431
        %v4514 = vunpack.c.l.b16 %v4432
        %v4515 = vunpack.c.h.b16 %v4432
        %v4516 = vunpack.c.l.b16 %v4433
        %v4517 = vunpack.c.h.b16 %v4433
        %v4518 = vunpack.c.l.b16 %v4434
        %v4519 = vunpack.c.h.b16 %v4434
        %v4520 = vunpack.c.l.b16 %v4435
        %v4521 = vunpack.c.h.b16 %v4435
        %v4522 = vunpack.c.l.b16 %v4436
        %v4523 = vunpack.c.h.b16 %v4436
        %v4524 = vunpack.c.l.b16 %v4437
        %v4525 = vunpack.c.h.b16 %v4437
        %v4526 = vunpack.c.l.b16 %v4438
        %v4527 = vunpack.c.h.b16 %v4438
        %v4528 = vunpack.c.l.b16 %v4439
        %v4529 = vunpack.c.h.b16 %v4439
        %v4530 = vunpack.c.l.b16 %v4440
        %v4531 = vunpack.c.h.b16 %v4440
        %v4532 = vunpack.c.l.b16 %v4441
        %v4533 = vunpack.c.h.b16 %v4441
        %v4534 = vunpack.c.l.b16 %v4442
        %v4535 = vunpack.c.h.b16 %v4442
        %v4536 = vunpack.c.l.b16 %v4443
        %v4537 = vunpack.c.h.b16 %v4443
        %v4538 = vunpack.c.l.b16 %v4444
        %v4539 = vunpack.c.h.b16 %v4444
        %v4540 = vunpack.c.l.b16 %v4445
        %v4541 = vunpack.c.h.b16 %v4445
        %v4542 = vunpack.c.l.b16 %v4446
        %v4543 = vunpack.c.h.b16 %v4446
        %v4544 = vunpack.c.l.b16 %v4447
        %v4545 = vunpack.c.h.b16 %v4447
        %v4546 = vunpack.c.l.b16 %v4448
        %v4547 = vunpack.c.h.b16 %v4448
        %v4548 = vunpack.c.l.b16 %v4449
        %v4549 = vunpack.c.h.b16 %v4449
        %v4550 = vunpack.c.l.b16 %v4450
        %v4551 = vunpack.c.h.b16 %v4450
        %v4552 = vunpack.c.l.b16 %v4451
        %v4553 = vunpack.c.h.b16 %v4451
        %v4554 = vpack.c.b16 %v4492, %v4490
        %v4555 = vpack.c.b16 %v4493, %v4491
        %v4556 = vpack.c.b16 %v4496, %v4494
        %v4557 = vpack.c.b16 %v4497, %v4495
        %v4558 = vpack.c.b16 %v4500, %v4498
        %v4559 = vpack.c.b16 %v4501, %v4499
        %v4560 = vpack.c.b16 %v4504, %v4502
        %v4561 = vpack.c.b16 %v4505, %v4503
        %v4562 = vpack.c.b16 %v4508, %v4506
        %v4563 = vpack.c.b16 %v4509, %v4507
        %v4564 = vpack.c.b16 %v4512, %v4510
        %v4565 = vpack.c.b16 %v4513, %v4511
        %v4566 = vpack.c.b16 %v4516, %v4514
        %v4567 = vpack.c.b16 %v4517, %v4515
        %v4568 = vpack.c.b16 %v4520, %v4518
        %v4569 = vpack.c.b16 %v4521, %v4519
        %v4570 = vpack.c.b16 %v4524, %v4522
        %v4571 = vpack.c.b16 %v4525, %v4523
        %v4572 = vpack.c.b16 %v4528, %v4526
        %v4573 = vpack.c.b16 %v4529, %v4527
        %v4574 = vpack.c.b16 %v4532, %v4530
        %v4575 = vpack.c.b16 %v4533, %v4531
        %v4576 = vpack.c.b16 %v4536, %v4534
        %v4577 = vpack.c.b16 %v4537, %v4535
        %v4578 = vpack.c.b16 %v4540, %v4538
        %v4579 = vpack.c.b16 %v4541, %v4539
        %v4580 = vpack.c.b16 %v4544, %v4542
        %v4581 = vpack.c.b16 %v4545, %v4543
        %v4582 = vpack.c.b16 %v4548, %v4546
        %v4583 = vpack.c.b16 %v4549, %v4547
        %v4584 = vpack.c.b16 %v4552, %v4550
        %v4585 = vpack.c.b16 %v4553, %v4551
        %4618 = vmatprep.subr.bf16.mxu0 %v4555
        %4619 = vmatpush1.bf16.msra.mxu0 %v4554
        %4620 = vmatprep.subr.bf16.mxu0 %v4557
        %4621 = vmatpush1.bf16.msra.mxu0 %v4556
        %4622 = vmatprep.subr.bf16.mxu0 %v4559
        %4623 = vmatpush1.bf16.msra.mxu0 %v4558
        %4624 = vmatprep.subr.bf16.mxu0 %v4561
        %4625 = vmatpush1.bf16.msra.mxu0 %v4560
        %4626 = vmatprep.subr.bf16.mxu0 %v4563
        %4627 = vmatpush1.bf16.msra.mxu0 %v4562
        %4628 = vmatprep.subr.bf16.mxu0 %v4565
        %4629 = vmatpush1.bf16.msra.mxu0 %v4564
        %4630 = vmatprep.subr.bf16.mxu0 %v4567
        %4631 = vmatpush1.bf16.msra.mxu0 %v4566
        %4632 = vmatprep.subr.bf16.mxu0 %v4569
        %4633 = vmatpush1.bf16.msra.mxu0 %v4568
        %4634 = vmatprep.subr.bf16.mxu0 %v4571
        %4635 = vmatpush1.bf16.msra.mxu0 %v4570
        %4636 = vmatprep.subr.bf16.mxu0 %v4573
        %4637 = vmatpush1.bf16.msra.mxu0 %v4572
        %4638 = vmatprep.subr.bf16.mxu0 %v4575
        %4639 = vmatpush1.bf16.msra.mxu0 %v4574
        %4640 = vmatprep.subr.bf16.mxu0 %v4577
        %4641 = vmatpush1.bf16.msra.mxu0 %v4576
        %4642 = vmatprep.subr.bf16.mxu0 %v4579
        %4643 = vmatpush1.bf16.msra.mxu0 %v4578
        %4644 = vmatprep.subr.bf16.mxu0 %v4581
        %4645 = vmatpush1.bf16.msra.mxu0 %v4580
        %4646 = vmatprep.subr.bf16.mxu0 %v4583
        %4647 = vmatpush1.bf16.msra.mxu0 %v4582
        %4648 = vmatprep.subr.bf16.mxu0 %v4585
        %4649 = vmatpush1.bf16.msra.mxu0 %v4584
        %4650 = vmatprep.mubr.bf16.mxu0 %v4455
        %4651 = vmatmul.mubr.bf16.gmra.mrb[0].mxu0 %v4454
        %v4652 = vpop.f32.mrb[0].mxu0
        %v4653 = vadd.f32 0.0, %v4652
        %v4654 = vpop.f32.mrb[0].mxu0
        %v4655 = vadd.f32 0.0, %v4654
        %v4656 = vpop.f32.mrb[0].mxu0
        %v4657 = vpop.f32.mrb[0].mxu0
        %4658 = vdwg.mxu0
        %v4660 = vshrl.u32 %v4383, 16
        %v4662 = vrot.slane %v4660, 3
        %v4663 = vshll.u32 %v4383, 16
        %v4665 = vrot.slane %v4663, 4
        %v4666 = vor.u32 %v4662, %v4665
        %v4668 = vshrl.u32 %v4384, 16
        %v4670 = vrot.slane %v4668, 3
        %v4671 = vshll.u32 %v4384, 16
        %v4673 = vrot.slane %v4671, 4
        %v4674 = vor.u32 %v4670, %v4673
        %v4709 = vunpack.c.l.b16 %v4387
        %v4710 = vunpack.c.h.b16 %v4387
        %v4711 = vunpack.c.l.b16 %v4388
        %v4712 = vunpack.c.h.b16 %v4388
        %v4713 = vunpack.c.l.b16 %v4389
        %v4714 = vunpack.c.h.b16 %v4389
        %v4715 = vunpack.c.l.b16 %v4390
        %v4716 = vunpack.c.h.b16 %v4390
        %v4717 = vunpack.c.l.b16 %v4391
        %v4718 = vunpack.c.h.b16 %v4391
        %v4719 = vunpack.c.l.b16 %v4392
        %v4720 = vunpack.c.h.b16 %v4392
        %v4721 = vunpack.c.l.b16 %v4393
        %v4722 = vunpack.c.h.b16 %v4393
        %v4723 = vunpack.c.l.b16 %v4394
        %v4724 = vunpack.c.h.b16 %v4394
        %v4725 = vunpack.c.l.b16 %v4395
        %v4726 = vunpack.c.h.b16 %v4395
        %v4727 = vunpack.c.l.b16 %v4396
        %v4728 = vunpack.c.h.b16 %v4396
        %v4729 = vunpack.c.l.b16 %v4397
        %v4730 = vunpack.c.h.b16 %v4397
        %v4731 = vunpack.c.l.b16 %v4398
        %v4732 = vunpack.c.h.b16 %v4398
        %v4733 = vunpack.c.l.b16 %v4399
        %v4734 = vunpack.c.h.b16 %v4399
        %v4735 = vunpack.c.l.b16 %v4400
        %v4736 = vunpack.c.h.b16 %v4400
        %v4737 = vunpack.c.l.b16 %v4401
        %v4738 = vunpack.c.h.b16 %v4401
        %v4739 = vunpack.c.l.b16 %v4402
        %v4740 = vunpack.c.h.b16 %v4402
        %v4741 = vunpack.c.l.b16 %v4403
        %v4742 = vunpack.c.h.b16 %v4403
        %v4743 = vunpack.c.l.b16 %v4404
        %v4744 = vunpack.c.h.b16 %v4404
        %v4745 = vunpack.c.l.b16 %v4405
        %v4746 = vunpack.c.h.b16 %v4405
        %v4747 = vunpack.c.l.b16 %v4406
        %v4748 = vunpack.c.h.b16 %v4406
        %v4749 = vunpack.c.l.b16 %v4407
        %v4750 = vunpack.c.h.b16 %v4407
        %v4751 = vunpack.c.l.b16 %v4408
        %v4752 = vunpack.c.h.b16 %v4408
        %v4753 = vunpack.c.l.b16 %v4409
        %v4754 = vunpack.c.h.b16 %v4409
        %v4755 = vunpack.c.l.b16 %v4410
        %v4756 = vunpack.c.h.b16 %v4410
        %v4757 = vunpack.c.l.b16 %v4411
        %v4758 = vunpack.c.h.b16 %v4411
        %v4759 = vunpack.c.l.b16 %v4412
        %v4760 = vunpack.c.h.b16 %v4412
        %v4761 = vunpack.c.l.b16 %v4413
        %v4762 = vunpack.c.h.b16 %v4413
        %v4763 = vunpack.c.l.b16 %v4414
        %v4764 = vunpack.c.h.b16 %v4414
        %v4765 = vunpack.c.l.b16 %v4415
        %v4766 = vunpack.c.h.b16 %v4415
        %v4767 = vunpack.c.l.b16 %v4416
        %v4768 = vunpack.c.h.b16 %v4416
        %v4769 = vunpack.c.l.b16 %v4417
        %v4770 = vunpack.c.h.b16 %v4417
        %v4771 = vunpack.c.l.b16 %v4418
        %v4772 = vunpack.c.h.b16 %v4418
        %v4773 = vpack.c.b16 %v4711, %v4709
        %v4774 = vpack.c.b16 %v4712, %v4710
        %v4775 = vpack.c.b16 %v4715, %v4713
        %v4776 = vpack.c.b16 %v4716, %v4714
        %v4777 = vpack.c.b16 %v4719, %v4717
        %v4778 = vpack.c.b16 %v4720, %v4718
        %v4779 = vpack.c.b16 %v4723, %v4721
        %v4780 = vpack.c.b16 %v4724, %v4722
        %v4781 = vpack.c.b16 %v4727, %v4725
        %v4782 = vpack.c.b16 %v4728, %v4726
        %v4783 = vpack.c.b16 %v4731, %v4729
        %v4784 = vpack.c.b16 %v4732, %v4730
        %v4785 = vpack.c.b16 %v4735, %v4733
        %v4786 = vpack.c.b16 %v4736, %v4734
        %v4787 = vpack.c.b16 %v4739, %v4737
        %v4788 = vpack.c.b16 %v4740, %v4738
        %v4789 = vpack.c.b16 %v4743, %v4741
        %v4790 = vpack.c.b16 %v4744, %v4742
        %v4791 = vpack.c.b16 %v4747, %v4745
        %v4792 = vpack.c.b16 %v4748, %v4746
        %v4793 = vpack.c.b16 %v4751, %v4749
        %v4794 = vpack.c.b16 %v4752, %v4750
        %v4795 = vpack.c.b16 %v4755, %v4753
        %v4796 = vpack.c.b16 %v4756, %v4754
        %v4797 = vpack.c.b16 %v4759, %v4757
        %v4798 = vpack.c.b16 %v4760, %v4758
        %v4799 = vpack.c.b16 %v4763, %v4761
        %v4800 = vpack.c.b16 %v4764, %v4762
        %v4801 = vpack.c.b16 %v4767, %v4765
        %v4802 = vpack.c.b16 %v4768, %v4766
        %v4803 = vpack.c.b16 %v4771, %v4769
        %v4804 = vpack.c.b16 %v4772, %v4770
        %4837 = vmatprep.subr.bf16.mxu0 %v4774
        %4838 = vmatpush1.bf16.msra.mxu0 %v4773
        %4839 = vmatprep.subr.bf16.mxu0 %v4776
        %4840 = vmatpush1.bf16.msra.mxu0 %v4775
        %4841 = vmatprep.subr.bf16.mxu0 %v4778
        %4842 = vmatpush1.bf16.msra.mxu0 %v4777
        %4843 = vmatprep.subr.bf16.mxu0 %v4780
        %4844 = vmatpush1.bf16.msra.mxu0 %v4779
        %4845 = vmatprep.subr.bf16.mxu0 %v4782
        %4846 = vmatpush1.bf16.msra.mxu0 %v4781
        %4847 = vmatprep.subr.bf16.mxu0 %v4784
        %4848 = vmatpush1.bf16.msra.mxu0 %v4783
        %4849 = vmatprep.subr.bf16.mxu0 %v4786
        %4850 = vmatpush1.bf16.msra.mxu0 %v4785
        %4851 = vmatprep.subr.bf16.mxu0 %v4788
        %4852 = vmatpush1.bf16.msra.mxu0 %v4787
        %4853 = vmatprep.subr.bf16.mxu0 %v4790
        %4854 = vmatpush1.bf16.msra.mxu0 %v4789
        %4855 = vmatprep.subr.bf16.mxu0 %v4792
        %4856 = vmatpush1.bf16.msra.mxu0 %v4791
        %4857 = vmatprep.subr.bf16.mxu0 %v4794
        %4858 = vmatpush1.bf16.msra.mxu0 %v4793
        %4859 = vmatprep.subr.bf16.mxu0 %v4796
        %4860 = vmatpush1.bf16.msra.mxu0 %v4795
        %4861 = vmatprep.subr.bf16.mxu0 %v4798
        %4862 = vmatpush1.bf16.msra.mxu0 %v4797
        %4863 = vmatprep.subr.bf16.mxu0 %v4800
        %4864 = vmatpush1.bf16.msra.mxu0 %v4799
        %4865 = vmatprep.subr.bf16.mxu0 %v4802
        %4866 = vmatpush1.bf16.msra.mxu0 %v4801
        %4867 = vmatprep.subr.bf16.mxu0 %v4804
        %4868 = vmatpush1.bf16.msra.mxu0 %v4803
        %4869 = vmatprep.mubr.bf16.mxu0 %v4674
        %4870 = vmatmul.mubr.bf16.gmra.mrb[0].mxu0 %v4666
        %v4871 = vpop.f32.mrb[0].mxu0
        %v4872 = vadd.f32 %v4653, %v4871
        %v4873 = vpop.f32.mrb[0].mxu0
        %v4874 = vadd.f32 %v4655, %v4873
        %v4875 = vpop.f32.mrb[0].mxu0
        %v4876 = vpop.f32.mrb[0].mxu0
        %4877 = vdwg.mxu0
        %s4878 = scalar_lea.vmem [#allocation16], 512
        %v4879 = vld [vmem:[%s4878] sm:$0xff]
        %v4880 = vld [vmem:[%s4878 + $0x8] sm:$0xff]
        %v4881 = vld [vmem:[%s4878 + $0x10] sm:$0xff]
        %v4882 = vld [vmem:[%s4878 + $0x18] sm:$0xff]
        %v4883 = vld [vmem:[%s4878 + $0x20] sm:$0xff]
        %v4884 = vld [vmem:[%s4878 + $0x28] sm:$0xff]
        %v4885 = vld [vmem:[%s4878 + $0x30] sm:$0xff]
        %v4886 = vld [vmem:[%s4878 + $0x38] sm:$0xff]
        %v4887 = vld [vmem:[%s4878 + $0x40] sm:$0xff]
        %v4888 = vld [vmem:[%s4878 + $0x48] sm:$0xff]
        %v4889 = vld [vmem:[%s4878 + $0x50] sm:$0xff]
        %v4890 = vld [vmem:[%s4878 + $0x58] sm:$0xff]
        %v4891 = vld [vmem:[%s4878 + $0x60] sm:$0xff]
        %v4892 = vld [vmem:[%s4878 + $0x68] sm:$0xff]
        %v4893 = vld [vmem:[%s4878 + $0x70] sm:$0xff]
        %v4894 = vld [vmem:[%s4878 + $0x78] sm:$0xff]
        %v4895 = vld [vmem:[%s4878 + $0x80] sm:$0xff]
        %v4896 = vld [vmem:[%s4878 + $0x88] sm:$0xff]
        %v4897 = vld [vmem:[%s4878 + $0x90] sm:$0xff]
        %v4898 = vld [vmem:[%s4878 + $0x98] sm:$0xff]
        %v4899 = vld [vmem:[%s4878 + $0xa0] sm:$0xff]
        %v4900 = vld [vmem:[%s4878 + $0xa8] sm:$0xff]
        %v4901 = vld [vmem:[%s4878 + $0xb0] sm:$0xff]
        %v4902 = vld [vmem:[%s4878 + $0xb8] sm:$0xff]
        %v4903 = vld [vmem:[%s4878 + $0xc0] sm:$0xff]
        %v4904 = vld [vmem:[%s4878 + $0xc8] sm:$0xff]
        %v4905 = vld [vmem:[%s4878 + $0xd0] sm:$0xff]
        %v4906 = vld [vmem:[%s4878 + $0xd8] sm:$0xff]
        %v4907 = vld [vmem:[%s4878 + $0xe0] sm:$0xff]
        %v4908 = vld [vmem:[%s4878 + $0xe8] sm:$0xff]
        %v4909 = vld [vmem:[%s4878 + $0xf0] sm:$0xff]
        %v4910 = vld [vmem:[%s4878 + $0xf8] sm:$0xff]
        %v4911 = vrot.slane %v4660, 4
        %v4912 = vrot.slane %v4663, 5
        %v4913 = vor.u32 %v4911, %v4912
        %v4915 = vshll.u32 %v4385, 16
        %v4917 = vrot.slane %v4915, 5
        %v4918 = vsel %vm3364, %v4913, %v4917
        %v4919 = vrot.slane %v4668, 4
        %v4920 = vrot.slane %v4671, 5
        %v4921 = vor.u32 %v4919, %v4920
        %v4923 = vshll.u32 %v4386, 16
        %v4925 = vrot.slane %v4923, 5
        %v4926 = vsel %vm3364, %v4921, %v4925
        %v4961 = vunpack.c.l.b16 %v4879
        %v4962 = vunpack.c.h.b16 %v4879
        %v4963 = vunpack.c.l.b16 %v4880
        %v4964 = vunpack.c.h.b16 %v4880
        %v4965 = vunpack.c.l.b16 %v4881
        %v4966 = vunpack.c.h.b16 %v4881
        %v4967 = vunpack.c.l.b16 %v4882
        %v4968 = vunpack.c.h.b16 %v4882
        %v4969 = vunpack.c.l.b16 %v4883
        %v4970 = vunpack.c.h.b16 %v4883
        %v4971 = vunpack.c.l.b16 %v4884
        %v4972 = vunpack.c.h.b16 %v4884
        %v4973 = vunpack.c.l.b16 %v4885
        %v4974 = vunpack.c.h.b16 %v4885
        %v4975 = vunpack.c.l.b16 %v4886
        %v4976 = vunpack.c.h.b16 %v4886
        %v4977 = vunpack.c.l.b16 %v4887
        %v4978 = vunpack.c.h.b16 %v4887
        %v4979 = vunpack.c.l.b16 %v4888
        %v4980 = vunpack.c.h.b16 %v4888
        %v4981 = vunpack.c.l.b16 %v4889
        %v4982 = vunpack.c.h.b16 %v4889
        %v4983 = vunpack.c.l.b16 %v4890
        %v4984 = vunpack.c.h.b16 %v4890
        %v4985 = vunpack.c.l.b16 %v4891
        %v4986 = vunpack.c.h.b16 %v4891
        %v4987 = vunpack.c.l.b16 %v4892
        %v4988 = vunpack.c.h.b16 %v4892
        %v4989 = vunpack.c.l.b16 %v4893
        %v4990 = vunpack.c.h.b16 %v4893
        %v4991 = vunpack.c.l.b16 %v4894
        %v4992 = vunpack.c.h.b16 %v4894
        %v4993 = vunpack.c.l.b16 %v4895
        %v4994 = vunpack.c.h.b16 %v4895
        %v4995 = vunpack.c.l.b16 %v4896
        %v4996 = vunpack.c.h.b16 %v4896
        %v4997 = vunpack.c.l.b16 %v4897
        %v4998 = vunpack.c.h.b16 %v4897
        %v4999 = vunpack.c.l.b16 %v4898
        %v5000 = vunpack.c.h.b16 %v4898
        %v5001 = vunpack.c.l.b16 %v4899
        %v5002 = vunpack.c.h.b16 %v4899
        %v5003 = vunpack.c.l.b16 %v4900
        %v5004 = vunpack.c.h.b16 %v4900
        %v5005 = vunpack.c.l.b16 %v4901
        %v5006 = vunpack.c.h.b16 %v4901
        %v5007 = vunpack.c.l.b16 %v4902
        %v5008 = vunpack.c.h.b16 %v4902
        %v5009 = vunpack.c.l.b16 %v4903
        %v5010 = vunpack.c.h.b16 %v4903
        %v5011 = vunpack.c.l.b16 %v4904
        %v5012 = vunpack.c.h.b16 %v4904
        %v5013 = vunpack.c.l.b16 %v4905
        %v5014 = vunpack.c.h.b16 %v4905
        %v5015 = vunpack.c.l.b16 %v4906
        %v5016 = vunpack.c.h.b16 %v4906
        %v5017 = vunpack.c.l.b16 %v4907
        %v5018 = vunpack.c.h.b16 %v4907
        %v5019 = vunpack.c.l.b16 %v4908
        %v5020 = vunpack.c.h.b16 %v4908
        %v5021 = vunpack.c.l.b16 %v4909
        %v5022 = vunpack.c.h.b16 %v4909
        %v5023 = vunpack.c.l.b16 %v4910
        %v5024 = vunpack.c.h.b16 %v4910
        %v5025 = vpack.c.b16 %v4963, %v4961
        %v5026 = vpack.c.b16 %v4964, %v4962
        %v5027 = vpack.c.b16 %v4967, %v4965
        %v5028 = vpack.c.b16 %v4968, %v4966
        %v5029 = vpack.c.b16 %v4971, %v4969
        %v5030 = vpack.c.b16 %v4972, %v4970
        %v5031 = vpack.c.b16 %v4975, %v4973
        %v5032 = vpack.c.b16 %v4976, %v4974
        %v5033 = vpack.c.b16 %v4979, %v4977
        %v5034 = vpack.c.b16 %v4980, %v4978
        %v5035 = vpack.c.b16 %v4983, %v4981
        %v5036 = vpack.c.b16 %v4984, %v4982
        %v5037 = vpack.c.b16 %v4987, %v4985
        %v5038 = vpack.c.b16 %v4988, %v4986
        %v5039 = vpack.c.b16 %v4991, %v4989
        %v5040 = vpack.c.b16 %v4992, %v4990
        %v5041 = vpack.c.b16 %v4995, %v4993
        %v5042 = vpack.c.b16 %v4996, %v4994
        %v5043 = vpack.c.b16 %v4999, %v4997
        %v5044 = vpack.c.b16 %v5000, %v4998
        %v5045 = vpack.c.b16 %v5003, %v5001
        %v5046 = vpack.c.b16 %v5004, %v5002
        %v5047 = vpack.c.b16 %v5007, %v5005
        %v5048 = vpack.c.b16 %v5008, %v5006
        %v5049 = vpack.c.b16 %v5011, %v5009
        %v5050 = vpack.c.b16 %v5012, %v5010
        %v5051 = vpack.c.b16 %v5015, %v5013
        %v5052 = vpack.c.b16 %v5016, %v5014
        %v5053 = vpack.c.b16 %v5019, %v5017
        %v5054 = vpack.c.b16 %v5020, %v5018
        %v5055 = vpack.c.b16 %v5023, %v5021
        %v5056 = vpack.c.b16 %v5024, %v5022
        %5089 = vmatprep.subr.bf16.mxu0 %v5026
        %5090 = vmatpush1.bf16.msra.mxu0 %v5025
        %5091 = vmatprep.subr.bf16.mxu0 %v5028
        %5092 = vmatpush1.bf16.msra.mxu0 %v5027
        %5093 = vmatprep.subr.bf16.mxu0 %v5030
        %5094 = vmatpush1.bf16.msra.mxu0 %v5029
        %5095 = vmatprep.subr.bf16.mxu0 %v5032
        %5096 = vmatpush1.bf16.msra.mxu0 %v5031
        %5097 = vmatprep.subr.bf16.mxu0 %v5034
        %5098 = vmatpush1.bf16.msra.mxu0 %v5033
        %5099 = vmatprep.subr.bf16.mxu0 %v5036
        %5100 = vmatpush1.bf16.msra.mxu0 %v5035
        %5101 = vmatprep.subr.bf16.mxu0 %v5038
        %5102 = vmatpush1.bf16.msra.mxu0 %v5037
        %5103 = vmatprep.subr.bf16.mxu0 %v5040
        %5104 = vmatpush1.bf16.msra.mxu0 %v5039
        %5105 = vmatprep.subr.bf16.mxu0 %v5042
        %5106 = vmatpush1.bf16.msra.mxu0 %v5041
        %5107 = vmatprep.subr.bf16.mxu0 %v5044
        %5108 = vmatpush1.bf16.msra.mxu0 %v5043
        %5109 = vmatprep.subr.bf16.mxu0 %v5046
        %5110 = vmatpush1.bf16.msra.mxu0 %v5045
        %5111 = vmatprep.subr.bf16.mxu0 %v5048
        %5112 = vmatpush1.bf16.msra.mxu0 %v5047
        %5113 = vmatprep.subr.bf16.mxu0 %v5050
        %5114 = vmatpush1.bf16.msra.mxu0 %v5049
        %5115 = vmatprep.subr.bf16.mxu0 %v5052
        %5116 = vmatpush1.bf16.msra.mxu0 %v5051
        %5117 = vmatprep.subr.bf16.mxu0 %v5054
        %5118 = vmatpush1.bf16.msra.mxu0 %v5053
        %5119 = vmatprep.subr.bf16.mxu0 %v5056
        %5120 = vmatpush1.bf16.msra.mxu0 %v5055
        %5121 = vmatprep.mubr.bf16.mxu0 %v4926
        %5122 = vmatmul.mubr.bf16.gmra.mrb[0].mxu0 %v4918
        %v5123 = vpop.f32.mrb[0].mxu0
        %v5124 = vadd.f32 0.0, %v5123
        %v5125 = vpop.f32.mrb[0].mxu0
        %v5126 = vadd.f32 0.0, %v5125
        %v5127 = vpop.f32.mrb[0].mxu0
        %v5128 = vpop.f32.mrb[0].mxu0
        %5129 = vdwg.mxu0
        %v5130 = vadd.f32 %v4872, %v5124
        %v5131 = vadd.f32 %v4874, %v5126
        %v5132 = vld [vmem:[%s12] sm:$0x3]
        %v5134 = vlaneseq
        %v5135 = vshrl.u32 %v5134, 7
        %v5136 = vsub.s32 0, %v5135
        %v5137 = vrot.slane %v5132, %v5136
        %v5138 = vlaneseq
        %v5139 = vshrl.u32 %v5138, 7
        %v5140 = vsub.s32 1, %v5139
        %v5141 = vrot.slane %v5132, %v5140
        %v5144 = vadd.f32 %v5130, %v5137
        %v5145 = vadd.f32 %v5131, %v5141
        %v5146 = vmax.f32 %v5144, 0.0
        %v5147 = vmax.f32 %v5145, 0.0
        %5148 = vst [vmem:[#allocation7 + $0x10] sm:$0xff] %v5146
        %5149 = vst [vmem:[#allocation7 + $0x18] sm:$0xff] %v5147
        %v5150 = vld [vmem:[#allocation7] sm:$0x80]
        %v5151 = vld [vmem:[#allocation7 + $0x8] sm:$0x80]
        %v5152 = vld [vmem:[#allocation7 + $0x10] sm:$0xff]
        %v5153 = vld [vmem:[#allocation7 + $0x18] sm:$0xff]
        %v5154 = vld [vmem:[#allocation7 + $0x20] sm:$0x1]
        %v5155 = vld [vmem:[#allocation7 + $0x28] sm:$0x1]
        %v5156 = vpack.c.bf16 %v5152, %v5150
        %v5157 = vpack.c.bf16 %v5153, %v5151
        %v5158 = vpack.c.bf16 %v5154, %v5154
        %v5159 = vpack.c.bf16 %v5155, %v5155
        %v5160 = vld [vmem:[#allocation17] sm:$0xff]
        %v5161 = vld [vmem:[#allocation17 + $0x8] sm:$0xff]
        %v5162 = vld [vmem:[#allocation17 + $0x10] sm:$0xff]
        %v5163 = vld [vmem:[#allocation17 + $0x18] sm:$0xff]
        %v5164 = vld [vmem:[#allocation17 + $0x20] sm:$0xff]
        %v5165 = vld [vmem:[#allocation17 + $0x28] sm:$0xff]
        %v5166 = vld [vmem:[#allocation17 + $0x30] sm:$0xff]
        %v5167 = vld [vmem:[#allocation17 + $0x38] sm:$0xff]
        %v5168 = vld [vmem:[#allocation17 + $0x40] sm:$0xff]
        %v5169 = vld [vmem:[#allocation17 + $0x48] sm:$0xff]
        %v5170 = vld [vmem:[#allocation17 + $0x50] sm:$0xff]
        %v5171 = vld [vmem:[#allocation17 + $0x58] sm:$0xff]
        %v5172 = vld [vmem:[#allocation17 + $0x60] sm:$0xff]
        %v5173 = vld [vmem:[#allocation17 + $0x68] sm:$0xff]
        %v5174 = vld [vmem:[#allocation17 + $0x70] sm:$0xff]
        %v5175 = vld [vmem:[#allocation17 + $0x78] sm:$0xff]
        %v5176 = vld [vmem:[#allocation17 + $0x80] sm:$0xff]
        %v5177 = vld [vmem:[#allocation17 + $0x88] sm:$0xff]
        %v5178 = vld [vmem:[#allocation17 + $0x90] sm:$0xff]
        %v5179 = vld [vmem:[#allocation17 + $0x98] sm:$0xff]
        %v5180 = vld [vmem:[#allocation17 + $0xa0] sm:$0xff]
        %v5181 = vld [vmem:[#allocation17 + $0xa8] sm:$0xff]
        %v5182 = vld [vmem:[#allocation17 + $0xb0] sm:$0xff]
        %v5183 = vld [vmem:[#allocation17 + $0xb8] sm:$0xff]
        %v5184 = vld [vmem:[#allocation17 + $0xc0] sm:$0xff]
        %v5185 = vld [vmem:[#allocation17 + $0xc8] sm:$0xff]
        %v5186 = vld [vmem:[#allocation17 + $0xd0] sm:$0xff]
        %v5187 = vld [vmem:[#allocation17 + $0xd8] sm:$0xff]
        %v5188 = vld [vmem:[#allocation17 + $0xe0] sm:$0xff]
        %v5189 = vld [vmem:[#allocation17 + $0xe8] sm:$0xff]
        %v5190 = vld [vmem:[#allocation17 + $0xf0] sm:$0xff]
        %v5191 = vld [vmem:[#allocation17 + $0xf8] sm:$0xff]
        %v5192 = vld [vmem:[#allocation17 + $0x100] sm:$0xff]
        %v5193 = vld [vmem:[#allocation17 + $0x108] sm:$0xff]
        %v5194 = vld [vmem:[#allocation17 + $0x110] sm:$0xff]
        %v5195 = vld [vmem:[#allocation17 + $0x118] sm:$0xff]
        %v5196 = vld [vmem:[#allocation17 + $0x120] sm:$0xff]
        %v5197 = vld [vmem:[#allocation17 + $0x128] sm:$0xff]
        %v5198 = vld [vmem:[#allocation17 + $0x130] sm:$0xff]
        %v5199 = vld [vmem:[#allocation17 + $0x138] sm:$0xff]
        %v5200 = vld [vmem:[#allocation17 + $0x140] sm:$0xff]
        %v5201 = vld [vmem:[#allocation17 + $0x148] sm:$0xff]
        %v5202 = vld [vmem:[#allocation17 + $0x150] sm:$0xff]
        %v5203 = vld [vmem:[#allocation17 + $0x158] sm:$0xff]
        %v5204 = vld [vmem:[#allocation17 + $0x160] sm:$0xff]
        %v5205 = vld [vmem:[#allocation17 + $0x168] sm:$0xff]
        %v5206 = vld [vmem:[#allocation17 + $0x170] sm:$0xff]
        %v5207 = vld [vmem:[#allocation17 + $0x178] sm:$0xff]
        %v5208 = vld [vmem:[#allocation17 + $0x180] sm:$0xff]
        %v5209 = vld [vmem:[#allocation17 + $0x188] sm:$0xff]
        %v5210 = vld [vmem:[#allocation17 + $0x190] sm:$0xff]
        %v5211 = vld [vmem:[#allocation17 + $0x198] sm:$0xff]
        %v5212 = vld [vmem:[#allocation17 + $0x1a0] sm:$0xff]
        %v5213 = vld [vmem:[#allocation17 + $0x1a8] sm:$0xff]
        %v5214 = vld [vmem:[#allocation17 + $0x1b0] sm:$0xff]
        %v5215 = vld [vmem:[#allocation17 + $0x1b8] sm:$0xff]
        %v5216 = vld [vmem:[#allocation17 + $0x1c0] sm:$0xff]
        %v5217 = vld [vmem:[#allocation17 + $0x1c8] sm:$0xff]
        %v5218 = vld [vmem:[#allocation17 + $0x1d0] sm:$0xff]
        %v5219 = vld [vmem:[#allocation17 + $0x1d8] sm:$0xff]
        %v5220 = vld [vmem:[#allocation17 + $0x1e0] sm:$0xff]
        %v5221 = vld [vmem:[#allocation17 + $0x1e8] sm:$0xff]
        %v5222 = vld [vmem:[#allocation17 + $0x1f0] sm:$0xff]
        %v5223 = vld [vmem:[#allocation17 + $0x1f8] sm:$0xff]
        %s5224 = scalar_lea.vmem [#allocation17], 512
        %v5225 = vld [vmem:[%s5224] sm:$0xff]
        %v5226 = vld [vmem:[%s5224 + $0x8] sm:$0xff]
        %v5227 = vld [vmem:[%s5224 + $0x10] sm:$0xff]
        %v5228 = vld [vmem:[%s5224 + $0x18] sm:$0xff]
        %v5229 = vld [vmem:[%s5224 + $0x20] sm:$0xff]
        %v5230 = vld [vmem:[%s5224 + $0x28] sm:$0xff]
        %v5231 = vld [vmem:[%s5224 + $0x30] sm:$0xff]
        %v5232 = vld [vmem:[%s5224 + $0x38] sm:$0xff]
        %v5233 = vld [vmem:[%s5224 + $0x40] sm:$0xff]
        %v5234 = vld [vmem:[%s5224 + $0x48] sm:$0xff]
        %v5235 = vld [vmem:[%s5224 + $0x50] sm:$0xff]
        %v5236 = vld [vmem:[%s5224 + $0x58] sm:$0xff]
        %v5237 = vld [vmem:[%s5224 + $0x60] sm:$0xff]
        %v5238 = vld [vmem:[%s5224 + $0x68] sm:$0xff]
        %v5239 = vld [vmem:[%s5224 + $0x70] sm:$0xff]
        %v5240 = vld [vmem:[%s5224 + $0x78] sm:$0xff]
        %v5241 = vld [vmem:[%s5224 + $0x80] sm:$0xff]
        %v5242 = vld [vmem:[%s5224 + $0x88] sm:$0xff]
        %v5243 = vld [vmem:[%s5224 + $0x90] sm:$0xff]
        %v5244 = vld [vmem:[%s5224 + $0x98] sm:$0xff]
        %v5245 = vld [vmem:[%s5224 + $0xa0] sm:$0xff]
        %v5246 = vld [vmem:[%s5224 + $0xa8] sm:$0xff]
        %v5247 = vld [vmem:[%s5224 + $0xb0] sm:$0xff]
        %v5248 = vld [vmem:[%s5224 + $0xb8] sm:$0xff]
        %v5249 = vld [vmem:[%s5224 + $0xc0] sm:$0xff]
        %v5250 = vld [vmem:[%s5224 + $0xc8] sm:$0xff]
        %v5251 = vld [vmem:[%s5224 + $0xd0] sm:$0xff]
        %v5252 = vld [vmem:[%s5224 + $0xd8] sm:$0xff]
        %v5253 = vld [vmem:[%s5224 + $0xe0] sm:$0xff]
        %v5254 = vld [vmem:[%s5224 + $0xe8] sm:$0xff]
        %v5255 = vld [vmem:[%s5224 + $0xf0] sm:$0xff]
        %v5256 = vld [vmem:[%s5224 + $0xf8] sm:$0xff]
        %v5257 = vld [vmem:[%s5224 + $0x100] sm:$0xff]
        %v5258 = vld [vmem:[%s5224 + $0x108] sm:$0xff]
        %v5259 = vld [vmem:[%s5224 + $0x110] sm:$0xff]
        %v5260 = vld [vmem:[%s5224 + $0x118] sm:$0xff]
        %v5261 = vld [vmem:[%s5224 + $0x120] sm:$0xff]
        %v5262 = vld [vmem:[%s5224 + $0x128] sm:$0xff]
        %v5263 = vld [vmem:[%s5224 + $0x130] sm:$0xff]
        %v5264 = vld [vmem:[%s5224 + $0x138] sm:$0xff]
        %v5265 = vld [vmem:[%s5224 + $0x140] sm:$0xff]
        %v5266 = vld [vmem:[%s5224 + $0x148] sm:$0xff]
        %v5267 = vld [vmem:[%s5224 + $0x150] sm:$0xff]
        %v5268 = vld [vmem:[%s5224 + $0x158] sm:$0xff]
        %v5269 = vld [vmem:[%s5224 + $0x160] sm:$0xff]
        %v5270 = vld [vmem:[%s5224 + $0x168] sm:$0xff]
        %v5271 = vld [vmem:[%s5224 + $0x170] sm:$0xff]
        %v5272 = vld [vmem:[%s5224 + $0x178] sm:$0xff]
        %v5273 = vld [vmem:[%s5224 + $0x180] sm:$0xff]
        %v5274 = vld [vmem:[%s5224 + $0x188] sm:$0xff]
        %v5275 = vld [vmem:[%s5224 + $0x190] sm:$0xff]
        %v5276 = vld [vmem:[%s5224 + $0x198] sm:$0xff]
        %v5277 = vld [vmem:[%s5224 + $0x1a0] sm:$0xff]
        %v5278 = vld [vmem:[%s5224 + $0x1a8] sm:$0xff]
        %v5279 = vld [vmem:[%s5224 + $0x1b0] sm:$0xff]
        %v5280 = vld [vmem:[%s5224 + $0x1b8] sm:$0xff]
        %v5281 = vld [vmem:[%s5224 + $0x1c0] sm:$0xff]
        %v5282 = vld [vmem:[%s5224 + $0x1c8] sm:$0xff]
        %v5283 = vld [vmem:[%s5224 + $0x1d0] sm:$0xff]
        %v5284 = vld [vmem:[%s5224 + $0x1d8] sm:$0xff]
        %v5285 = vld [vmem:[%s5224 + $0x1e0] sm:$0xff]
        %v5286 = vld [vmem:[%s5224 + $0x1e8] sm:$0xff]
        %v5287 = vld [vmem:[%s5224 + $0x1f0] sm:$0xff]
        %v5288 = vld [vmem:[%s5224 + $0x1f8] sm:$0xff]
        %v5291 = vrot.slane %v5156, 4
        %v5292 = vrot.slane %v5157, 4
        %v5359 = vunpack.c.l.b16 %v5225
        %v5360 = vunpack.c.h.b16 %v5225
        %v5361 = vunpack.c.l.b16 %v5226
        %v5362 = vunpack.c.h.b16 %v5226
        %v5363 = vunpack.c.l.b16 %v5227
        %v5364 = vunpack.c.h.b16 %v5227
        %v5365 = vunpack.c.l.b16 %v5228
        %v5366 = vunpack.c.h.b16 %v5228
        %v5367 = vunpack.c.l.b16 %v5229
        %v5368 = vunpack.c.h.b16 %v5229
        %v5369 = vunpack.c.l.b16 %v5230
        %v5370 = vunpack.c.h.b16 %v5230
        %v5371 = vunpack.c.l.b16 %v5231
        %v5372 = vunpack.c.h.b16 %v5231
        %v5373 = vunpack.c.l.b16 %v5232
        %v5374 = vunpack.c.h.b16 %v5232
        %v5375 = vunpack.c.l.b16 %v5233
        %v5376 = vunpack.c.h.b16 %v5233
        %v5377 = vunpack.c.l.b16 %v5234
        %v5378 = vunpack.c.h.b16 %v5234
        %v5379 = vunpack.c.l.b16 %v5235
        %v5380 = vunpack.c.h.b16 %v5235
        %v5381 = vunpack.c.l.b16 %v5236
        %v5382 = vunpack.c.h.b16 %v5236
        %v5383 = vunpack.c.l.b16 %v5237
        %v5384 = vunpack.c.h.b16 %v5237
        %v5385 = vunpack.c.l.b16 %v5238
        %v5386 = vunpack.c.h.b16 %v5238
        %v5387 = vunpack.c.l.b16 %v5239
        %v5388 = vunpack.c.h.b16 %v5239
        %v5389 = vunpack.c.l.b16 %v5240
        %v5390 = vunpack.c.h.b16 %v5240
        %v5391 = vunpack.c.l.b16 %v5241
        %v5392 = vunpack.c.h.b16 %v5241
        %v5393 = vunpack.c.l.b16 %v5242
        %v5394 = vunpack.c.h.b16 %v5242
        %v5395 = vunpack.c.l.b16 %v5243
        %v5396 = vunpack.c.h.b16 %v5243
        %v5397 = vunpack.c.l.b16 %v5244
        %v5398 = vunpack.c.h.b16 %v5244
        %v5399 = vunpack.c.l.b16 %v5245
        %v5400 = vunpack.c.h.b16 %v5245
        %v5401 = vunpack.c.l.b16 %v5246
        %v5402 = vunpack.c.h.b16 %v5246
        %v5403 = vunpack.c.l.b16 %v5247
        %v5404 = vunpack.c.h.b16 %v5247
        %v5405 = vunpack.c.l.b16 %v5248
        %v5406 = vunpack.c.h.b16 %v5248
        %v5407 = vunpack.c.l.b16 %v5249
        %v5408 = vunpack.c.h.b16 %v5249
        %v5409 = vunpack.c.l.b16 %v5250
        %v5410 = vunpack.c.h.b16 %v5250
        %v5411 = vunpack.c.l.b16 %v5251
        %v5412 = vunpack.c.h.b16 %v5251
        %v5413 = vunpack.c.l.b16 %v5252
        %v5414 = vunpack.c.h.b16 %v5252
        %v5415 = vunpack.c.l.b16 %v5253
        %v5416 = vunpack.c.h.b16 %v5253
        %v5417 = vunpack.c.l.b16 %v5254
        %v5418 = vunpack.c.h.b16 %v5254
        %v5419 = vunpack.c.l.b16 %v5255
        %v5420 = vunpack.c.h.b16 %v5255
        %v5421 = vunpack.c.l.b16 %v5256
        %v5422 = vunpack.c.h.b16 %v5256
        %v5423 = vunpack.c.l.b16 %v5257
        %v5424 = vunpack.c.h.b16 %v5257
        %v5425 = vunpack.c.l.b16 %v5258
        %v5426 = vunpack.c.h.b16 %v5258
        %v5427 = vunpack.c.l.b16 %v5259
        %v5428 = vunpack.c.h.b16 %v5259
        %v5429 = vunpack.c.l.b16 %v5260
        %v5430 = vunpack.c.h.b16 %v5260
        %v5431 = vunpack.c.l.b16 %v5261
        %v5432 = vunpack.c.h.b16 %v5261
        %v5433 = vunpack.c.l.b16 %v5262
        %v5434 = vunpack.c.h.b16 %v5262
        %v5435 = vunpack.c.l.b16 %v5263
        %v5436 = vunpack.c.h.b16 %v5263
        %v5437 = vunpack.c.l.b16 %v5264
        %v5438 = vunpack.c.h.b16 %v5264
        %v5439 = vunpack.c.l.b16 %v5265
        %v5440 = vunpack.c.h.b16 %v5265
        %v5441 = vunpack.c.l.b16 %v5266
        %v5442 = vunpack.c.h.b16 %v5266
        %v5443 = vunpack.c.l.b16 %v5267
        %v5444 = vunpack.c.h.b16 %v5267
        %v5445 = vunpack.c.l.b16 %v5268
        %v5446 = vunpack.c.h.b16 %v5268
        %v5447 = vunpack.c.l.b16 %v5269
        %v5448 = vunpack.c.h.b16 %v5269
        %v5449 = vunpack.c.l.b16 %v5270
        %v5450 = vunpack.c.h.b16 %v5270
        %v5451 = vunpack.c.l.b16 %v5271
        %v5452 = vunpack.c.h.b16 %v5271
        %v5453 = vunpack.c.l.b16 %v5272
        %v5454 = vunpack.c.h.b16 %v5272
        %v5455 = vunpack.c.l.b16 %v5273
        %v5456 = vunpack.c.h.b16 %v5273
        %v5457 = vunpack.c.l.b16 %v5274
        %v5458 = vunpack.c.h.b16 %v5274
        %v5459 = vunpack.c.l.b16 %v5275
        %v5460 = vunpack.c.h.b16 %v5275
        %v5461 = vunpack.c.l.b16 %v5276
        %v5462 = vunpack.c.h.b16 %v5276
        %v5463 = vunpack.c.l.b16 %v5277
        %v5464 = vunpack.c.h.b16 %v5277
        %v5465 = vunpack.c.l.b16 %v5278
        %v5466 = vunpack.c.h.b16 %v5278
        %v5467 = vunpack.c.l.b16 %v5279
        %v5468 = vunpack.c.h.b16 %v5279
        %v5469 = vunpack.c.l.b16 %v5280
        %v5470 = vunpack.c.h.b16 %v5280
        %v5471 = vunpack.c.l.b16 %v5281
        %v5472 = vunpack.c.h.b16 %v5281
        %v5473 = vunpack.c.l.b16 %v5282
        %v5474 = vunpack.c.h.b16 %v5282
        %v5475 = vunpack.c.l.b16 %v5283
        %v5476 = vunpack.c.h.b16 %v5283
        %v5477 = vunpack.c.l.b16 %v5284
        %v5478 = vunpack.c.h.b16 %v5284
        %v5479 = vunpack.c.l.b16 %v5285
        %v5480 = vunpack.c.h.b16 %v5285
        %v5481 = vunpack.c.l.b16 %v5286
        %v5482 = vunpack.c.h.b16 %v5286
        %v5483 = vunpack.c.l.b16 %v5287
        %v5484 = vunpack.c.h.b16 %v5287
        %v5485 = vunpack.c.l.b16 %v5288
        %v5486 = vunpack.c.h.b16 %v5288
        %v5487 = vpack.c.b16 %v5363, %v5359
        %v5488 = vpack.c.b16 %v5364, %v5360
        %v5489 = vpack.c.b16 %v5365, %v5361
        %v5490 = vpack.c.b16 %v5366, %v5362
        %v5491 = vpack.c.b16 %v5371, %v5367
        %v5492 = vpack.c.b16 %v5372, %v5368
        %v5493 = vpack.c.b16 %v5373, %v5369
        %v5494 = vpack.c.b16 %v5374, %v5370
        %v5495 = vpack.c.b16 %v5379, %v5375
        %v5496 = vpack.c.b16 %v5380, %v5376
        %v5497 = vpack.c.b16 %v5381, %v5377
        %v5498 = vpack.c.b16 %v5382, %v5378
        %v5499 = vpack.c.b16 %v5387, %v5383
        %v5500 = vpack.c.b16 %v5388, %v5384
        %v5501 = vpack.c.b16 %v5389, %v5385
        %v5502 = vpack.c.b16 %v5390, %v5386
        %v5503 = vpack.c.b16 %v5395, %v5391
        %v5504 = vpack.c.b16 %v5396, %v5392
        %v5505 = vpack.c.b16 %v5397, %v5393
        %v5506 = vpack.c.b16 %v5398, %v5394
        %v5507 = vpack.c.b16 %v5403, %v5399
        %v5508 = vpack.c.b16 %v5404, %v5400
        %v5509 = vpack.c.b16 %v5405, %v5401
        %v5510 = vpack.c.b16 %v5406, %v5402
        %v5511 = vpack.c.b16 %v5411, %v5407
        %v5512 = vpack.c.b16 %v5412, %v5408
        %v5513 = vpack.c.b16 %v5413, %v5409
        %v5514 = vpack.c.b16 %v5414, %v5410
        %v5515 = vpack.c.b16 %v5419, %v5415
        %v5516 = vpack.c.b16 %v5420, %v5416
        %v5517 = vpack.c.b16 %v5421, %v5417
        %v5518 = vpack.c.b16 %v5422, %v5418
        %v5519 = vpack.c.b16 %v5427, %v5423
        %v5520 = vpack.c.b16 %v5428, %v5424
        %v5521 = vpack.c.b16 %v5429, %v5425
        %v5522 = vpack.c.b16 %v5430, %v5426
        %v5523 = vpack.c.b16 %v5435, %v5431
        %v5524 = vpack.c.b16 %v5436, %v5432
        %v5525 = vpack.c.b16 %v5437, %v5433
        %v5526 = vpack.c.b16 %v5438, %v5434
        %v5527 = vpack.c.b16 %v5443, %v5439
        %v5528 = vpack.c.b16 %v5444, %v5440
        %v5529 = vpack.c.b16 %v5445, %v5441
        %v5530 = vpack.c.b16 %v5446, %v5442
        %v5531 = vpack.c.b16 %v5451, %v5447
        %v5532 = vpack.c.b16 %v5452, %v5448
        %v5533 = vpack.c.b16 %v5453, %v5449
        %v5534 = vpack.c.b16 %v5454, %v5450
        %v5535 = vpack.c.b16 %v5459, %v5455
        %v5536 = vpack.c.b16 %v5460, %v5456
        %v5537 = vpack.c.b16 %v5461, %v5457
        %v5538 = vpack.c.b16 %v5462, %v5458
        %v5539 = vpack.c.b16 %v5467, %v5463
        %v5540 = vpack.c.b16 %v5468, %v5464
        %v5541 = vpack.c.b16 %v5469, %v5465
        %v5542 = vpack.c.b16 %v5470, %v5466
        %v5543 = vpack.c.b16 %v5475, %v5471
        %v5544 = vpack.c.b16 %v5476, %v5472
        %v5545 = vpack.c.b16 %v5477, %v5473
        %v5546 = vpack.c.b16 %v5478, %v5474
        %v5547 = vpack.c.b16 %v5483, %v5479
        %v5548 = vpack.c.b16 %v5484, %v5480
        %v5549 = vpack.c.b16 %v5485, %v5481
        %v5550 = vpack.c.b16 %v5486, %v5482
        %5615 = vmatprep.subr.bf16.mxu0 %v5488
        %5616 = vmatpush1.bf16.msra.mxu0 %v5487
        %5617 = vmatprep.subr.bf16.mxu0 %v5492
        %5618 = vmatpush1.bf16.msra.mxu0 %v5491
        %5619 = vmatprep.subr.bf16.mxu0 %v5496
        %5620 = vmatpush1.bf16.msra.mxu0 %v5495
        %5621 = vmatprep.subr.bf16.mxu0 %v5500
        %5622 = vmatpush1.bf16.msra.mxu0 %v5499
        %5623 = vmatprep.subr.bf16.mxu0 %v5504
        %5624 = vmatpush1.bf16.msra.mxu0 %v5503
        %5625 = vmatprep.subr.bf16.mxu0 %v5508
        %5626 = vmatpush1.bf16.msra.mxu0 %v5507
        %5627 = vmatprep.subr.bf16.mxu0 %v5512
        %5628 = vmatpush1.bf16.msra.mxu0 %v5511
        %5629 = vmatprep.subr.bf16.mxu0 %v5516
        %5630 = vmatpush1.bf16.msra.mxu0 %v5515
        %5631 = vmatprep.subr.bf16.mxu0 %v5520
        %5632 = vmatpush1.bf16.msra.mxu0 %v5519
        %5633 = vmatprep.subr.bf16.mxu0 %v5524
        %5634 = vmatpush1.bf16.msra.mxu0 %v5523
        %5635 = vmatprep.subr.bf16.mxu0 %v5528
        %5636 = vmatpush1.bf16.msra.mxu0 %v5527
        %5637 = vmatprep.subr.bf16.mxu0 %v5532
        %5638 = vmatpush1.bf16.msra.mxu0 %v5531
        %5639 = vmatprep.subr.bf16.mxu0 %v5536
        %5640 = vmatpush1.bf16.msra.mxu0 %v5535
        %5641 = vmatprep.subr.bf16.mxu0 %v5540
        %5642 = vmatpush1.bf16.msra.mxu0 %v5539
        %5643 = vmatprep.subr.bf16.mxu0 %v5544
        %5644 = vmatpush1.bf16.msra.mxu0 %v5543
        %5645 = vmatprep.subr.bf16.mxu0 %v5548
        %5646 = vmatpush1.bf16.msra.mxu0 %v5547
        %5647 = vmatprep.mubr.bf16.mxu0 %v5292
        %5648 = vmatmul.mubr.bf16.gmra.mrb[0].mxu0 %v5291
        %v5649 = vpop.f32.mrb[0].mxu0
        %v5650 = vadd.f32 0.0, %v5649
        %v5651 = vpop.f32.mrb[0].mxu0
        %v5652 = vadd.f32 0.0, %v5651
        %v5653 = vpop.f32.mrb[0].mxu0
        %v5654 = vpop.f32.mrb[0].mxu0
        %5655 = vdwg.mxu0
        %5656 = vmatprep.subr.bf16.mxu0 %v5490
        %5657 = vmatpush1.bf16.msra.mxu0 %v5489
        %5658 = vmatprep.subr.bf16.mxu0 %v5494
        %5659 = vmatpush1.bf16.msra.mxu0 %v5493
        %5660 = vmatprep.subr.bf16.mxu0 %v5498
        %5661 = vmatpush1.bf16.msra.mxu0 %v5497
        %5662 = vmatprep.subr.bf16.mxu0 %v5502
        %5663 = vmatpush1.bf16.msra.mxu0 %v5501
        %5664 = vmatprep.subr.bf16.mxu0 %v5506
        %5665 = vmatpush1.bf16.msra.mxu0 %v5505
        %5666 = vmatprep.subr.bf16.mxu0 %v5510
        %5667 = vmatpush1.bf16.msra.mxu0 %v5509
        %5668 = vmatprep.subr.bf16.mxu0 %v5514
        %5669 = vmatpush1.bf16.msra.mxu0 %v5513
        %5670 = vmatprep.subr.bf16.mxu0 %v5518
        %5671 = vmatpush1.bf16.msra.mxu0 %v5517
        %5672 = vmatprep.subr.bf16.mxu0 %v5522
        %5673 = vmatpush1.bf16.msra.mxu0 %v5521
        %5674 = vmatprep.subr.bf16.mxu0 %v5526
        %5675 = vmatpush1.bf16.msra.mxu0 %v5525
        %5676 = vmatprep.subr.bf16.mxu0 %v5530
        %5677 = vmatpush1.bf16.msra.mxu0 %v5529
        %5678 = vmatprep.subr.bf16.mxu0 %v5534
        %5679 = vmatpush1.bf16.msra.mxu0 %v5533
        %5680 = vmatprep.subr.bf16.mxu0 %v5538
        %5681 = vmatpush1.bf16.msra.mxu0 %v5537
        %5682 = vmatprep.subr.bf16.mxu0 %v5542
        %5683 = vmatpush1.bf16.msra.mxu0 %v5541
        %5684 = vmatprep.subr.bf16.mxu0 %v5546
        %5685 = vmatpush1.bf16.msra.mxu0 %v5545
        %5686 = vmatprep.subr.bf16.mxu0 %v5550
        %5687 = vmatpush1.bf16.msra.mxu0 %v5549
        %5688 = vmatprep.mubr.bf16.mxu0 %v5292
        %5689 = vmatmul.mubr.bf16.gmra.mrb[0].mxu0 %v5291
        %v5690 = vpop.f32.mrb[0].mxu0
        %v5691 = vadd.f32 0.0, %v5690
        %v5692 = vpop.f32.mrb[0].mxu0
        %v5693 = vadd.f32 0.0, %v5692
        %v5694 = vpop.f32.mrb[0].mxu0
        %v5695 = vpop.f32.mrb[0].mxu0
        %5696 = vdwg.mxu0
        %v5698 = vshrl.u32 %v5156, 16
        %v5700 = vrot.slane %v5698, 3
        %v5701 = vshll.u32 %v5156, 16
        %v5703 = vrot.slane %v5701, 4
        %v5704 = vor.u32 %v5700, %v5703
        %v5706 = vshrl.u32 %v5157, 16
        %v5708 = vrot.slane %v5706, 3
        %v5709 = vshll.u32 %v5157, 16
        %v5711 = vrot.slane %v5709, 4
        %v5712 = vor.u32 %v5708, %v5711
        %v5779 = vunpack.c.l.b16 %v5160
        %v5780 = vunpack.c.h.b16 %v5160
        %v5781 = vunpack.c.l.b16 %v5161
        %v5782 = vunpack.c.h.b16 %v5161
        %v5783 = vunpack.c.l.b16 %v5162
        %v5784 = vunpack.c.h.b16 %v5162
        %v5785 = vunpack.c.l.b16 %v5163
        %v5786 = vunpack.c.h.b16 %v5163
        %v5787 = vunpack.c.l.b16 %v5164
        %v5788 = vunpack.c.h.b16 %v5164
        %v5789 = vunpack.c.l.b16 %v5165
        %v5790 = vunpack.c.h.b16 %v5165
        %v5791 = vunpack.c.l.b16 %v5166
        %v5792 = vunpack.c.h.b16 %v5166
        %v5793 = vunpack.c.l.b16 %v5167
        %v5794 = vunpack.c.h.b16 %v5167
        %v5795 = vunpack.c.l.b16 %v5168
        %v5796 = vunpack.c.h.b16 %v5168
        %v5797 = vunpack.c.l.b16 %v5169
        %v5798 = vunpack.c.h.b16 %v5169
        %v5799 = vunpack.c.l.b16 %v5170
        %v5800 = vunpack.c.h.b16 %v5170
        %v5801 = vunpack.c.l.b16 %v5171
        %v5802 = vunpack.c.h.b16 %v5171
        %v5803 = vunpack.c.l.b16 %v5172
        %v5804 = vunpack.c.h.b16 %v5172
        %v5805 = vunpack.c.l.b16 %v5173
        %v5806 = vunpack.c.h.b16 %v5173
        %v5807 = vunpack.c.l.b16 %v5174
        %v5808 = vunpack.c.h.b16 %v5174
        %v5809 = vunpack.c.l.b16 %v5175
        %v5810 = vunpack.c.h.b16 %v5175
        %v5811 = vunpack.c.l.b16 %v5176
        %v5812 = vunpack.c.h.b16 %v5176
        %v5813 = vunpack.c.l.b16 %v5177
        %v5814 = vunpack.c.h.b16 %v5177
        %v5815 = vunpack.c.l.b16 %v5178
        %v5816 = vunpack.c.h.b16 %v5178
        %v5817 = vunpack.c.l.b16 %v5179
        %v5818 = vunpack.c.h.b16 %v5179
        %v5819 = vunpack.c.l.b16 %v5180
        %v5820 = vunpack.c.h.b16 %v5180
        %v5821 = vunpack.c.l.b16 %v5181
        %v5822 = vunpack.c.h.b16 %v5181
        %v5823 = vunpack.c.l.b16 %v5182
        %v5824 = vunpack.c.h.b16 %v5182
        %v5825 = vunpack.c.l.b16 %v5183
        %v5826 = vunpack.c.h.b16 %v5183
        %v5827 = vunpack.c.l.b16 %v5184
        %v5828 = vunpack.c.h.b16 %v5184
        %v5829 = vunpack.c.l.b16 %v5185
        %v5830 = vunpack.c.h.b16 %v5185
        %v5831 = vunpack.c.l.b16 %v5186
        %v5832 = vunpack.c.h.b16 %v5186
        %v5833 = vunpack.c.l.b16 %v5187
        %v5834 = vunpack.c.h.b16 %v5187
        %v5835 = vunpack.c.l.b16 %v5188
        %v5836 = vunpack.c.h.b16 %v5188
        %v5837 = vunpack.c.l.b16 %v5189
        %v5838 = vunpack.c.h.b16 %v5189
        %v5839 = vunpack.c.l.b16 %v5190
        %v5840 = vunpack.c.h.b16 %v5190
        %v5841 = vunpack.c.l.b16 %v5191
        %v5842 = vunpack.c.h.b16 %v5191
        %v5843 = vunpack.c.l.b16 %v5192
        %v5844 = vunpack.c.h.b16 %v5192
        %v5845 = vunpack.c.l.b16 %v5193
        %v5846 = vunpack.c.h.b16 %v5193
        %v5847 = vunpack.c.l.b16 %v5194
        %v5848 = vunpack.c.h.b16 %v5194
        %v5849 = vunpack.c.l.b16 %v5195
        %v5850 = vunpack.c.h.b16 %v5195
        %v5851 = vunpack.c.l.b16 %v5196
        %v5852 = vunpack.c.h.b16 %v5196
        %v5853 = vunpack.c.l.b16 %v5197
        %v5854 = vunpack.c.h.b16 %v5197
        %v5855 = vunpack.c.l.b16 %v5198
        %v5856 = vunpack.c.h.b16 %v5198
        %v5857 = vunpack.c.l.b16 %v5199
        %v5858 = vunpack.c.h.b16 %v5199
        %v5859 = vunpack.c.l.b16 %v5200
        %v5860 = vunpack.c.h.b16 %v5200
        %v5861 = vunpack.c.l.b16 %v5201
        %v5862 = vunpack.c.h.b16 %v5201
        %v5863 = vunpack.c.l.b16 %v5202
        %v5864 = vunpack.c.h.b16 %v5202
        %v5865 = vunpack.c.l.b16 %v5203
        %v5866 = vunpack.c.h.b16 %v5203
        %v5867 = vunpack.c.l.b16 %v5204
        %v5868 = vunpack.c.h.b16 %v5204
        %v5869 = vunpack.c.l.b16 %v5205
        %v5870 = vunpack.c.h.b16 %v5205
        %v5871 = vunpack.c.l.b16 %v5206
        %v5872 = vunpack.c.h.b16 %v5206
        %v5873 = vunpack.c.l.b16 %v5207
        %v5874 = vunpack.c.h.b16 %v5207
        %v5875 = vunpack.c.l.b16 %v5208
        %v5876 = vunpack.c.h.b16 %v5208
        %v5877 = vunpack.c.l.b16 %v5209
        %v5878 = vunpack.c.h.b16 %v5209
        %v5879 = vunpack.c.l.b16 %v5210
        %v5880 = vunpack.c.h.b16 %v5210
        %v5881 = vunpack.c.l.b16 %v5211
        %v5882 = vunpack.c.h.b16 %v5211
        %v5883 = vunpack.c.l.b16 %v5212
        %v5884 = vunpack.c.h.b16 %v5212
        %v5885 = vunpack.c.l.b16 %v5213
        %v5886 = vunpack.c.h.b16 %v5213
        %v5887 = vunpack.c.l.b16 %v5214
        %v5888 = vunpack.c.h.b16 %v5214
        %v5889 = vunpack.c.l.b16 %v5215
        %v5890 = vunpack.c.h.b16 %v5215
        %v5891 = vunpack.c.l.b16 %v5216
        %v5892 = vunpack.c.h.b16 %v5216
        %v5893 = vunpack.c.l.b16 %v5217
        %v5894 = vunpack.c.h.b16 %v5217
        %v5895 = vunpack.c.l.b16 %v5218
        %v5896 = vunpack.c.h.b16 %v5218
        %v5897 = vunpack.c.l.b16 %v5219
        %v5898 = vunpack.c.h.b16 %v5219
        %v5899 = vunpack.c.l.b16 %v5220
        %v5900 = vunpack.c.h.b16 %v5220
        %v5901 = vunpack.c.l.b16 %v5221
        %v5902 = vunpack.c.h.b16 %v5221
        %v5903 = vunpack.c.l.b16 %v5222
        %v5904 = vunpack.c.h.b16 %v5222
        %v5905 = vunpack.c.l.b16 %v5223
        %v5906 = vunpack.c.h.b16 %v5223
        %v5907 = vpack.c.b16 %v5783, %v5779
        %v5908 = vpack.c.b16 %v5784, %v5780
        %v5909 = vpack.c.b16 %v5785, %v5781
        %v5910 = vpack.c.b16 %v5786, %v5782
        %v5911 = vpack.c.b16 %v5791, %v5787
        %v5912 = vpack.c.b16 %v5792, %v5788
        %v5913 = vpack.c.b16 %v5793, %v5789
        %v5914 = vpack.c.b16 %v5794, %v5790
        %v5915 = vpack.c.b16 %v5799, %v5795
        %v5916 = vpack.c.b16 %v5800, %v5796
        %v5917 = vpack.c.b16 %v5801, %v5797
        %v5918 = vpack.c.b16 %v5802, %v5798
        %v5919 = vpack.c.b16 %v5807, %v5803
        %v5920 = vpack.c.b16 %v5808, %v5804
        %v5921 = vpack.c.b16 %v5809, %v5805
        %v5922 = vpack.c.b16 %v5810, %v5806
        %v5923 = vpack.c.b16 %v5815, %v5811
        %v5924 = vpack.c.b16 %v5816, %v5812
        %v5925 = vpack.c.b16 %v5817, %v5813
        %v5926 = vpack.c.b16 %v5818, %v5814
        %v5927 = vpack.c.b16 %v5823, %v5819
        %v5928 = vpack.c.b16 %v5824, %v5820
        %v5929 = vpack.c.b16 %v5825, %v5821
        %v5930 = vpack.c.b16 %v5826, %v5822
        %v5931 = vpack.c.b16 %v5831, %v5827
        %v5932 = vpack.c.b16 %v5832, %v5828
        %v5933 = vpack.c.b16 %v5833, %v5829
        %v5934 = vpack.c.b16 %v5834, %v5830
        %v5935 = vpack.c.b16 %v5839, %v5835
        %v5936 = vpack.c.b16 %v5840, %v5836
        %v5937 = vpack.c.b16 %v5841, %v5837
        %v5938 = vpack.c.b16 %v5842, %v5838
        %v5939 = vpack.c.b16 %v5847, %v5843
        %v5940 = vpack.c.b16 %v5848, %v5844
        %v5941 = vpack.c.b16 %v5849, %v5845
        %v5942 = vpack.c.b16 %v5850, %v5846
        %v5943 = vpack.c.b16 %v5855, %v5851
        %v5944 = vpack.c.b16 %v5856, %v5852
        %v5945 = vpack.c.b16 %v5857, %v5853
        %v5946 = vpack.c.b16 %v5858, %v5854
        %v5947 = vpack.c.b16 %v5863, %v5859
        %v5948 = vpack.c.b16 %v5864, %v5860
        %v5949 = vpack.c.b16 %v5865, %v5861
        %v5950 = vpack.c.b16 %v5866, %v5862
        %v5951 = vpack.c.b16 %v5871, %v5867
        %v5952 = vpack.c.b16 %v5872, %v5868
        %v5953 = vpack.c.b16 %v5873, %v5869
        %v5954 = vpack.c.b16 %v5874, %v5870
        %v5955 = vpack.c.b16 %v5879, %v5875
        %v5956 = vpack.c.b16 %v5880, %v5876
        %v5957 = vpack.c.b16 %v5881, %v5877
        %v5958 = vpack.c.b16 %v5882, %v5878
        %v5959 = vpack.c.b16 %v5887, %v5883
        %v5960 = vpack.c.b16 %v5888, %v5884
        %v5961 = vpack.c.b16 %v5889, %v5885
        %v5962 = vpack.c.b16 %v5890, %v5886
        %v5963 = vpack.c.b16 %v5895, %v5891
        %v5964 = vpack.c.b16 %v5896, %v5892
        %v5965 = vpack.c.b16 %v5897, %v5893
        %v5966 = vpack.c.b16 %v5898, %v5894
        %v5967 = vpack.c.b16 %v5903, %v5899
        %v5968 = vpack.c.b16 %v5904, %v5900
        %v5969 = vpack.c.b16 %v5905, %v5901
        %v5970 = vpack.c.b16 %v5906, %v5902
        %6035 = vmatprep.subr.bf16.mxu0 %v5908
        %6036 = vmatpush1.bf16.msra.mxu0 %v5907
        %6037 = vmatprep.subr.bf16.mxu0 %v5912
        %6038 = vmatpush1.bf16.msra.mxu0 %v5911
        %6039 = vmatprep.subr.bf16.mxu0 %v5916
        %6040 = vmatpush1.bf16.msra.mxu0 %v5915
        %6041 = vmatprep.subr.bf16.mxu0 %v5920
        %6042 = vmatpush1.bf16.msra.mxu0 %v5919
        %6043 = vmatprep.subr.bf16.mxu0 %v5924
        %6044 = vmatpush1.bf16.msra.mxu0 %v5923
        %6045 = vmatprep.subr.bf16.mxu0 %v5928
        %6046 = vmatpush1.bf16.msra.mxu0 %v5927
        %6047 = vmatprep.subr.bf16.mxu0 %v5932
        %6048 = vmatpush1.bf16.msra.mxu0 %v5931
        %6049 = vmatprep.subr.bf16.mxu0 %v5936
        %6050 = vmatpush1.bf16.msra.mxu0 %v5935
        %6051 = vmatprep.subr.bf16.mxu0 %v5940
        %6052 = vmatpush1.bf16.msra.mxu0 %v5939
        %6053 = vmatprep.subr.bf16.mxu0 %v5944
        %6054 = vmatpush1.bf16.msra.mxu0 %v5943
        %6055 = vmatprep.subr.bf16.mxu0 %v5948
        %6056 = vmatpush1.bf16.msra.mxu0 %v5947
        %6057 = vmatprep.subr.bf16.mxu0 %v5952
        %6058 = vmatpush1.bf16.msra.mxu0 %v5951
        %6059 = vmatprep.subr.bf16.mxu0 %v5956
        %6060 = vmatpush1.bf16.msra.mxu0 %v5955
        %6061 = vmatprep.subr.bf16.mxu0 %v5960
        %6062 = vmatpush1.bf16.msra.mxu0 %v5959
        %6063 = vmatprep.subr.bf16.mxu0 %v5964
        %6064 = vmatpush1.bf16.msra.mxu0 %v5963
        %6065 = vmatprep.subr.bf16.mxu0 %v5968
        %6066 = vmatpush1.bf16.msra.mxu0 %v5967
        %6067 = vmatprep.mubr.bf16.mxu0 %v5712
        %6068 = vmatmul.mubr.bf16.gmra.mrb[0].mxu0 %v5704
        %v6069 = vpop.f32.mrb[0].mxu0
        %v6070 = vadd.f32 %v5650, %v6069
        %v6071 = vpop.f32.mrb[0].mxu0
        %v6072 = vadd.f32 %v5652, %v6071
        %v6073 = vpop.f32.mrb[0].mxu0
        %v6074 = vpop.f32.mrb[0].mxu0
        %6075 = vdwg.mxu0
        %6076 = vmatprep.subr.bf16.mxu0 %v5910
        %6077 = vmatpush1.bf16.msra.mxu0 %v5909
        %6078 = vmatprep.subr.bf16.mxu0 %v5914
        %6079 = vmatpush1.bf16.msra.mxu0 %v5913
        %6080 = vmatprep.subr.bf16.mxu0 %v5918
        %6081 = vmatpush1.bf16.msra.mxu0 %v5917
        %6082 = vmatprep.subr.bf16.mxu0 %v5922
        %6083 = vmatpush1.bf16.msra.mxu0 %v5921
        %6084 = vmatprep.subr.bf16.mxu0 %v5926
        %6085 = vmatpush1.bf16.msra.mxu0 %v5925
        %6086 = vmatprep.subr.bf16.mxu0 %v5930
        %6087 = vmatpush1.bf16.msra.mxu0 %v5929
        %6088 = vmatprep.subr.bf16.mxu0 %v5934
        %6089 = vmatpush1.bf16.msra.mxu0 %v5933
        %6090 = vmatprep.subr.bf16.mxu0 %v5938
        %6091 = vmatpush1.bf16.msra.mxu0 %v5937
        %6092 = vmatprep.subr.bf16.mxu0 %v5942
        %6093 = vmatpush1.bf16.msra.mxu0 %v5941
        %6094 = vmatprep.subr.bf16.mxu0 %v5946
        %6095 = vmatpush1.bf16.msra.mxu0 %v5945
        %6096 = vmatprep.subr.bf16.mxu0 %v5950
        %6097 = vmatpush1.bf16.msra.mxu0 %v5949
        %6098 = vmatprep.subr.bf16.mxu0 %v5954
        %6099 = vmatpush1.bf16.msra.mxu0 %v5953
        %6100 = vmatprep.subr.bf16.mxu0 %v5958
        %6101 = vmatpush1.bf16.msra.mxu0 %v5957
        %6102 = vmatprep.subr.bf16.mxu0 %v5962
        %6103 = vmatpush1.bf16.msra.mxu0 %v5961
        %6104 = vmatprep.subr.bf16.mxu0 %v5966
        %6105 = vmatpush1.bf16.msra.mxu0 %v5965
        %6106 = vmatprep.subr.bf16.mxu0 %v5970
        %6107 = vmatpush1.bf16.msra.mxu0 %v5969
        %6108 = vmatprep.mubr.bf16.mxu0 %v5712
        %6109 = vmatmul.mubr.bf16.gmra.mrb[0].mxu0 %v5704
        %v6110 = vpop.f32.mrb[0].mxu0
        %v6111 = vadd.f32 %v5691, %v6110
        %v6112 = vpop.f32.mrb[0].mxu0
        %v6113 = vadd.f32 %v5693, %v6112
        %v6114 = vpop.f32.mrb[0].mxu0
        %v6115 = vpop.f32.mrb[0].mxu0
        %6116 = vdwg.mxu0
        %s6117 = scalar_lea.vmem [#allocation17], 1024
        %v6118 = vld [vmem:[%s6117] sm:$0xff]
        %v6119 = vld [vmem:[%s6117 + $0x8] sm:$0xff]
        %v6120 = vld [vmem:[%s6117 + $0x10] sm:$0xff]
        %v6121 = vld [vmem:[%s6117 + $0x18] sm:$0xff]
        %v6122 = vld [vmem:[%s6117 + $0x20] sm:$0xff]
        %v6123 = vld [vmem:[%s6117 + $0x28] sm:$0xff]
        %v6124 = vld [vmem:[%s6117 + $0x30] sm:$0xff]
        %v6125 = vld [vmem:[%s6117 + $0x38] sm:$0xff]
        %v6126 = vld [vmem:[%s6117 + $0x40] sm:$0xff]
        %v6127 = vld [vmem:[%s6117 + $0x48] sm:$0xff]
        %v6128 = vld [vmem:[%s6117 + $0x50] sm:$0xff]
        %v6129 = vld [vmem:[%s6117 + $0x58] sm:$0xff]
        %v6130 = vld [vmem:[%s6117 + $0x60] sm:$0xff]
        %v6131 = vld [vmem:[%s6117 + $0x68] sm:$0xff]
        %v6132 = vld [vmem:[%s6117 + $0x70] sm:$0xff]
        %v6133 = vld [vmem:[%s6117 + $0x78] sm:$0xff]
        %v6134 = vld [vmem:[%s6117 + $0x80] sm:$0xff]
        %v6135 = vld [vmem:[%s6117 + $0x88] sm:$0xff]
        %v6136 = vld [vmem:[%s6117 + $0x90] sm:$0xff]
        %v6137 = vld [vmem:[%s6117 + $0x98] sm:$0xff]
        %v6138 = vld [vmem:[%s6117 + $0xa0] sm:$0xff]
        %v6139 = vld [vmem:[%s6117 + $0xa8] sm:$0xff]
        %v6140 = vld [vmem:[%s6117 + $0xb0] sm:$0xff]
        %v6141 = vld [vmem:[%s6117 + $0xb8] sm:$0xff]
        %v6142 = vld [vmem:[%s6117 + $0xc0] sm:$0xff]
        %v6143 = vld [vmem:[%s6117 + $0xc8] sm:$0xff]
        %v6144 = vld [vmem:[%s6117 + $0xd0] sm:$0xff]
        %v6145 = vld [vmem:[%s6117 + $0xd8] sm:$0xff]
        %v6146 = vld [vmem:[%s6117 + $0xe0] sm:$0xff]
        %v6147 = vld [vmem:[%s6117 + $0xe8] sm:$0xff]
        %v6148 = vld [vmem:[%s6117 + $0xf0] sm:$0xff]
        %v6149 = vld [vmem:[%s6117 + $0xf8] sm:$0xff]
        %v6150 = vld [vmem:[%s6117 + $0x100] sm:$0xff]
        %v6151 = vld [vmem:[%s6117 + $0x108] sm:$0xff]
        %v6152 = vld [vmem:[%s6117 + $0x110] sm:$0xff]
        %v6153 = vld [vmem:[%s6117 + $0x118] sm:$0xff]
        %v6154 = vld [vmem:[%s6117 + $0x120] sm:$0xff]
        %v6155 = vld [vmem:[%s6117 + $0x128] sm:$0xff]
        %v6156 = vld [vmem:[%s6117 + $0x130] sm:$0xff]
        %v6157 = vld [vmem:[%s6117 + $0x138] sm:$0xff]
        %v6158 = vld [vmem:[%s6117 + $0x140] sm:$0xff]
        %v6159 = vld [vmem:[%s6117 + $0x148] sm:$0xff]
        %v6160 = vld [vmem:[%s6117 + $0x150] sm:$0xff]
        %v6161 = vld [vmem:[%s6117 + $0x158] sm:$0xff]
        %v6162 = vld [vmem:[%s6117 + $0x160] sm:$0xff]
        %v6163 = vld [vmem:[%s6117 + $0x168] sm:$0xff]
        %v6164 = vld [vmem:[%s6117 + $0x170] sm:$0xff]
        %v6165 = vld [vmem:[%s6117 + $0x178] sm:$0xff]
        %v6166 = vld [vmem:[%s6117 + $0x180] sm:$0xff]
        %v6167 = vld [vmem:[%s6117 + $0x188] sm:$0xff]
        %v6168 = vld [vmem:[%s6117 + $0x190] sm:$0xff]
        %v6169 = vld [vmem:[%s6117 + $0x198] sm:$0xff]
        %v6170 = vld [vmem:[%s6117 + $0x1a0] sm:$0xff]
        %v6171 = vld [vmem:[%s6117 + $0x1a8] sm:$0xff]
        %v6172 = vld [vmem:[%s6117 + $0x1b0] sm:$0xff]
        %v6173 = vld [vmem:[%s6117 + $0x1b8] sm:$0xff]
        %v6174 = vld [vmem:[%s6117 + $0x1c0] sm:$0xff]
        %v6175 = vld [vmem:[%s6117 + $0x1c8] sm:$0xff]
        %v6176 = vld [vmem:[%s6117 + $0x1d0] sm:$0xff]
        %v6177 = vld [vmem:[%s6117 + $0x1d8] sm:$0xff]
        %v6178 = vld [vmem:[%s6117 + $0x1e0] sm:$0xff]
        %v6179 = vld [vmem:[%s6117 + $0x1e8] sm:$0xff]
        %v6180 = vld [vmem:[%s6117 + $0x1f0] sm:$0xff]
        %v6181 = vld [vmem:[%s6117 + $0x1f8] sm:$0xff]
        %v6182 = vrot.slane %v5698, 4
        %v6183 = vrot.slane %v5701, 5
        %v6184 = vor.u32 %v6182, %v6183
        %v6186 = vshll.u32 %v5158, 16
        %v6188 = vrot.slane %v6186, 5
        %v6189 = vsel %vm3364, %v6184, %v6188
        %v6190 = vrot.slane %v5706, 4
        %v6191 = vrot.slane %v5709, 5
        %v6192 = vor.u32 %v6190, %v6191
        %v6194 = vshll.u32 %v5159, 16
        %v6196 = vrot.slane %v6194, 5
        %v6197 = vsel %vm3364, %v6192, %v6196
        %v6264 = vunpack.c.l.b16 %v6118
        %v6265 = vunpack.c.h.b16 %v6118
        %v6266 = vunpack.c.l.b16 %v6119
        %v6267 = vunpack.c.h.b16 %v6119
        %v6268 = vunpack.c.l.b16 %v6120
        %v6269 = vunpack.c.h.b16 %v6120
        %v6270 = vunpack.c.l.b16 %v6121
        %v6271 = vunpack.c.h.b16 %v6121
        %v6272 = vunpack.c.l.b16 %v6122
        %v6273 = vunpack.c.h.b16 %v6122
        %v6274 = vunpack.c.l.b16 %v6123
        %v6275 = vunpack.c.h.b16 %v6123
        %v6276 = vunpack.c.l.b16 %v6124
        %v6277 = vunpack.c.h.b16 %v6124
        %v6278 = vunpack.c.l.b16 %v6125
        %v6279 = vunpack.c.h.b16 %v6125
        %v6280 = vunpack.c.l.b16 %v6126
        %v6281 = vunpack.c.h.b16 %v6126
        %v6282 = vunpack.c.l.b16 %v6127
        %v6283 = vunpack.c.h.b16 %v6127
        %v6284 = vunpack.c.l.b16 %v6128
        %v6285 = vunpack.c.h.b16 %v6128
        %v6286 = vunpack.c.l.b16 %v6129
        %v6287 = vunpack.c.h.b16 %v6129
        %v6288 = vunpack.c.l.b16 %v6130
        %v6289 = vunpack.c.h.b16 %v6130
        %v6290 = vunpack.c.l.b16 %v6131
        %v6291 = vunpack.c.h.b16 %v6131
        %v6292 = vunpack.c.l.b16 %v6132
        %v6293 = vunpack.c.h.b16 %v6132
        %v6294 = vunpack.c.l.b16 %v6133
        %v6295 = vunpack.c.h.b16 %v6133
        %v6296 = vunpack.c.l.b16 %v6134
        %v6297 = vunpack.c.h.b16 %v6134
        %v6298 = vunpack.c.l.b16 %v6135
        %v6299 = vunpack.c.h.b16 %v6135
        %v6300 = vunpack.c.l.b16 %v6136
        %v6301 = vunpack.c.h.b16 %v6136
        %v6302 = vunpack.c.l.b16 %v6137
        %v6303 = vunpack.c.h.b16 %v6137
        %v6304 = vunpack.c.l.b16 %v6138
        %v6305 = vunpack.c.h.b16 %v6138
        %v6306 = vunpack.c.l.b16 %v6139
        %v6307 = vunpack.c.h.b16 %v6139
        %v6308 = vunpack.c.l.b16 %v6140
        %v6309 = vunpack.c.h.b16 %v6140
        %v6310 = vunpack.c.l.b16 %v6141
        %v6311 = vunpack.c.h.b16 %v6141
        %v6312 = vunpack.c.l.b16 %v6142
        %v6313 = vunpack.c.h.b16 %v6142
        %v6314 = vunpack.c.l.b16 %v6143
        %v6315 = vunpack.c.h.b16 %v6143
        %v6316 = vunpack.c.l.b16 %v6144
        %v6317 = vunpack.c.h.b16 %v6144
        %v6318 = vunpack.c.l.b16 %v6145
        %v6319 = vunpack.c.h.b16 %v6145
        %v6320 = vunpack.c.l.b16 %v6146
        %v6321 = vunpack.c.h.b16 %v6146
        %v6322 = vunpack.c.l.b16 %v6147
        %v6323 = vunpack.c.h.b16 %v6147
        %v6324 = vunpack.c.l.b16 %v6148
        %v6325 = vunpack.c.h.b16 %v6148
        %v6326 = vunpack.c.l.b16 %v6149
        %v6327 = vunpack.c.h.b16 %v6149
        %v6328 = vunpack.c.l.b16 %v6150
        %v6329 = vunpack.c.h.b16 %v6150
        %v6330 = vunpack.c.l.b16 %v6151
        %v6331 = vunpack.c.h.b16 %v6151
        %v6332 = vunpack.c.l.b16 %v6152
        %v6333 = vunpack.c.h.b16 %v6152
        %v6334 = vunpack.c.l.b16 %v6153
        %v6335 = vunpack.c.h.b16 %v6153
        %v6336 = vunpack.c.l.b16 %v6154
        %v6337 = vunpack.c.h.b16 %v6154
        %v6338 = vunpack.c.l.b16 %v6155
        %v6339 = vunpack.c.h.b16 %v6155
        %v6340 = vunpack.c.l.b16 %v6156
        %v6341 = vunpack.c.h.b16 %v6156
        %v6342 = vunpack.c.l.b16 %v6157
        %v6343 = vunpack.c.h.b16 %v6157
        %v6344 = vunpack.c.l.b16 %v6158
        %v6345 = vunpack.c.h.b16 %v6158
        %v6346 = vunpack.c.l.b16 %v6159
        %v6347 = vunpack.c.h.b16 %v6159
        %v6348 = vunpack.c.l.b16 %v6160
        %v6349 = vunpack.c.h.b16 %v6160
        %v6350 = vunpack.c.l.b16 %v6161
        %v6351 = vunpack.c.h.b16 %v6161
        %v6352 = vunpack.c.l.b16 %v6162
        %v6353 = vunpack.c.h.b16 %v6162
        %v6354 = vunpack.c.l.b16 %v6163
        %v6355 = vunpack.c.h.b16 %v6163
        %v6356 = vunpack.c.l.b16 %v6164
        %v6357 = vunpack.c.h.b16 %v6164
        %v6358 = vunpack.c.l.b16 %v6165
        %v6359 = vunpack.c.h.b16 %v6165
        %v6360 = vunpack.c.l.b16 %v6166
        %v6361 = vunpack.c.h.b16 %v6166
        %v6362 = vunpack.c.l.b16 %v6167
        %v6363 = vunpack.c.h.b16 %v6167
        %v6364 = vunpack.c.l.b16 %v6168
        %v6365 = vunpack.c.h.b16 %v6168
        %v6366 = vunpack.c.l.b16 %v6169
        %v6367 = vunpack.c.h.b16 %v6169
        %v6368 = vunpack.c.l.b16 %v6170
        %v6369 = vunpack.c.h.b16 %v6170
        %v6370 = vunpack.c.l.b16 %v6171
        %v6371 = vunpack.c.h.b16 %v6171
        %v6372 = vunpack.c.l.b16 %v6172
        %v6373 = vunpack.c.h.b16 %v6172
        %v6374 = vunpack.c.l.b16 %v6173
        %v6375 = vunpack.c.h.b16 %v6173
        %v6376 = vunpack.c.l.b16 %v6174
        %v6377 = vunpack.c.h.b16 %v6174
        %v6378 = vunpack.c.l.b16 %v6175
        %v6379 = vunpack.c.h.b16 %v6175
        %v6380 = vunpack.c.l.b16 %v6176
        %v6381 = vunpack.c.h.b16 %v6176
        %v6382 = vunpack.c.l.b16 %v6177
        %v6383 = vunpack.c.h.b16 %v6177
        %v6384 = vunpack.c.l.b16 %v6178
        %v6385 = vunpack.c.h.b16 %v6178
        %v6386 = vunpack.c.l.b16 %v6179
        %v6387 = vunpack.c.h.b16 %v6179
        %v6388 = vunpack.c.l.b16 %v6180
        %v6389 = vunpack.c.h.b16 %v6180
        %v6390 = vunpack.c.l.b16 %v6181
        %v6391 = vunpack.c.h.b16 %v6181
        %v6392 = vpack.c.b16 %v6268, %v6264
        %v6393 = vpack.c.b16 %v6269, %v6265
        %v6394 = vpack.c.b16 %v6270, %v6266
        %v6395 = vpack.c.b16 %v6271, %v6267
        %v6396 = vpack.c.b16 %v6276, %v6272
        %v6397 = vpack.c.b16 %v6277, %v6273
        %v6398 = vpack.c.b16 %v6278, %v6274
        %v6399 = vpack.c.b16 %v6279, %v6275
        %v6400 = vpack.c.b16 %v6284, %v6280
        %v6401 = vpack.c.b16 %v6285, %v6281
        %v6402 = vpack.c.b16 %v6286, %v6282
        %v6403 = vpack.c.b16 %v6287, %v6283
        %v6404 = vpack.c.b16 %v6292, %v6288
        %v6405 = vpack.c.b16 %v6293, %v6289
        %v6406 = vpack.c.b16 %v6294, %v6290
        %v6407 = vpack.c.b16 %v6295, %v6291
        %v6408 = vpack.c.b16 %v6300, %v6296
        %v6409 = vpack.c.b16 %v6301, %v6297
        %v6410 = vpack.c.b16 %v6302, %v6298
        %v6411 = vpack.c.b16 %v6303, %v6299
        %v6412 = vpack.c.b16 %v6308, %v6304
        %v6413 = vpack.c.b16 %v6309, %v6305
        %v6414 = vpack.c.b16 %v6310, %v6306
        %v6415 = vpack.c.b16 %v6311, %v6307
        %v6416 = vpack.c.b16 %v6316, %v6312
        %v6417 = vpack.c.b16 %v6317, %v6313
        %v6418 = vpack.c.b16 %v6318, %v6314
        %v6419 = vpack.c.b16 %v6319, %v6315
        %v6420 = vpack.c.b16 %v6324, %v6320
        %v6421 = vpack.c.b16 %v6325, %v6321
        %v6422 = vpack.c.b16 %v6326, %v6322
        %v6423 = vpack.c.b16 %v6327, %v6323
        %v6424 = vpack.c.b16 %v6332, %v6328
        %v6425 = vpack.c.b16 %v6333, %v6329
        %v6426 = vpack.c.b16 %v6334, %v6330
        %v6427 = vpack.c.b16 %v6335, %v6331
        %v6428 = vpack.c.b16 %v6340, %v6336
        %v6429 = vpack.c.b16 %v6341, %v6337
        %v6430 = vpack.c.b16 %v6342, %v6338
        %v6431 = vpack.c.b16 %v6343, %v6339
        %v6432 = vpack.c.b16 %v6348, %v6344
        %v6433 = vpack.c.b16 %v6349, %v6345
        %v6434 = vpack.c.b16 %v6350, %v6346
        %v6435 = vpack.c.b16 %v6351, %v6347
        %v6436 = vpack.c.b16 %v6356, %v6352
        %v6437 = vpack.c.b16 %v6357, %v6353
        %v6438 = vpack.c.b16 %v6358, %v6354
        %v6439 = vpack.c.b16 %v6359, %v6355
        %v6440 = vpack.c.b16 %v6364, %v6360
        %v6441 = vpack.c.b16 %v6365, %v6361
        %v6442 = vpack.c.b16 %v6366, %v6362
        %v6443 = vpack.c.b16 %v6367, %v6363
        %v6444 = vpack.c.b16 %v6372, %v6368
        %v6445 = vpack.c.b16 %v6373, %v6369
        %v6446 = vpack.c.b16 %v6374, %v6370
        %v6447 = vpack.c.b16 %v6375, %v6371
        %v6448 = vpack.c.b16 %v6380, %v6376
        %v6449 = vpack.c.b16 %v6381, %v6377
        %v6450 = vpack.c.b16 %v6382, %v6378
        %v6451 = vpack.c.b16 %v6383, %v6379
        %v6452 = vpack.c.b16 %v6388, %v6384
        %v6453 = vpack.c.b16 %v6389, %v6385
        %v6454 = vpack.c.b16 %v6390, %v6386
        %v6455 = vpack.c.b16 %v6391, %v6387
        %6520 = vmatprep.subr.bf16.mxu0 %v6393
        %6521 = vmatpush1.bf16.msra.mxu0 %v6392
        %6522 = vmatprep.subr.bf16.mxu0 %v6397
        %6523 = vmatpush1.bf16.msra.mxu0 %v6396
        %6524 = vmatprep.subr.bf16.mxu0 %v6401
        %6525 = vmatpush1.bf16.msra.mxu0 %v6400
        %6526 = vmatprep.subr.bf16.mxu0 %v6405
        %6527 = vmatpush1.bf16.msra.mxu0 %v6404
        %6528 = vmatprep.subr.bf16.mxu0 %v6409
        %6529 = vmatpush1.bf16.msra.mxu0 %v6408
        %6530 = vmatprep.subr.bf16.mxu0 %v6413
        %6531 = vmatpush1.bf16.msra.mxu0 %v6412
        %6532 = vmatprep.subr.bf16.mxu0 %v6417
        %6533 = vmatpush1.bf16.msra.mxu0 %v6416
        %6534 = vmatprep.subr.bf16.mxu0 %v6421
        %6535 = vmatpush1.bf16.msra.mxu0 %v6420
        %6536 = vmatprep.subr.bf16.mxu0 %v6425
        %6537 = vmatpush1.bf16.msra.mxu0 %v6424
        %6538 = vmatprep.subr.bf16.mxu0 %v6429
        %6539 = vmatpush1.bf16.msra.mxu0 %v6428
        %6540 = vmatprep.subr.bf16.mxu0 %v6433
        %6541 = vmatpush1.bf16.msra.mxu0 %v6432
        %6542 = vmatprep.subr.bf16.mxu0 %v6437
        %6543 = vmatpush1.bf16.msra.mxu0 %v6436
        %6544 = vmatprep.subr.bf16.mxu0 %v6441
        %6545 = vmatpush1.bf16.msra.mxu0 %v6440
        %6546 = vmatprep.subr.bf16.mxu0 %v6445
        %6547 = vmatpush1.bf16.msra.mxu0 %v6444
        %6548 = vmatprep.subr.bf16.mxu0 %v6449
        %6549 = vmatpush1.bf16.msra.mxu0 %v6448
        %6550 = vmatprep.subr.bf16.mxu0 %v6453
        %6551 = vmatpush1.bf16.msra.mxu0 %v6452
        %6552 = vmatprep.mubr.bf16.mxu0 %v6197
        %6553 = vmatmul.mubr.bf16.gmra.mrb[0].mxu0 %v6189
        %v6554 = vpop.f32.mrb[0].mxu0
        %v6555 = vadd.f32 0.0, %v6554
        %v6556 = vpop.f32.mrb[0].mxu0
        %v6557 = vadd.f32 0.0, %v6556
        %v6558 = vpop.f32.mrb[0].mxu0
        %v6559 = vpop.f32.mrb[0].mxu0
        %6560 = vdwg.mxu0
        %6561 = vmatprep.subr.bf16.mxu0 %v6395
        %6562 = vmatpush1.bf16.msra.mxu0 %v6394
        %6563 = vmatprep.subr.bf16.mxu0 %v6399
        %6564 = vmatpush1.bf16.msra.mxu0 %v6398
        %6565 = vmatprep.subr.bf16.mxu0 %v6403
        %6566 = vmatpush1.bf16.msra.mxu0 %v6402
        %6567 = vmatprep.subr.bf16.mxu0 %v6407
        %6568 = vmatpush1.bf16.msra.mxu0 %v6406
        %6569 = vmatprep.subr.bf16.mxu0 %v6411
        %6570 = vmatpush1.bf16.msra.mxu0 %v6410
        %6571 = vmatprep.subr.bf16.mxu0 %v6415
        %6572 = vmatpush1.bf16.msra.mxu0 %v6414
        %6573 = vmatprep.subr.bf16.mxu0 %v6419
        %6574 = vmatpush1.bf16.msra.mxu0 %v6418
        %6575 = vmatprep.subr.bf16.mxu0 %v6423
        %6576 = vmatpush1.bf16.msra.mxu0 %v6422
        %6577 = vmatprep.subr.bf16.mxu0 %v6427
        %6578 = vmatpush1.bf16.msra.mxu0 %v6426
        %6579 = vmatprep.subr.bf16.mxu0 %v6431
        %6580 = vmatpush1.bf16.msra.mxu0 %v6430
        %6581 = vmatprep.subr.bf16.mxu0 %v6435
        %6582 = vmatpush1.bf16.msra.mxu0 %v6434
        %6583 = vmatprep.subr.bf16.mxu0 %v6439
        %6584 = vmatpush1.bf16.msra.mxu0 %v6438
        %6585 = vmatprep.subr.bf16.mxu0 %v6443
        %6586 = vmatpush1.bf16.msra.mxu0 %v6442
        %6587 = vmatprep.subr.bf16.mxu0 %v6447
        %6588 = vmatpush1.bf16.msra.mxu0 %v6446
        %6589 = vmatprep.subr.bf16.mxu0 %v6451
        %6590 = vmatpush1.bf16.msra.mxu0 %v6450
        %6591 = vmatprep.subr.bf16.mxu0 %v6455
        %6592 = vmatpush1.bf16.msra.mxu0 %v6454
        %6593 = vmatprep.mubr.bf16.mxu0 %v6197
        %6594 = vmatmul.mubr.bf16.gmra.mrb[0].mxu0 %v6189
        %v6595 = vpop.f32.mrb[0].mxu0
        %v6596 = vadd.f32 0.0, %v6595
        %v6597 = vpop.f32.mrb[0].mxu0
        %v6598 = vadd.f32 0.0, %v6597
        %v6599 = vpop.f32.mrb[0].mxu0
        %v6600 = vpop.f32.mrb[0].mxu0
        %6601 = vdwg.mxu0
        %v6602 = vadd.f32 %v6070, %v6555
        %v6603 = vadd.f32 %v6072, %v6557
        %v6604 = vadd.f32 %v6111, %v6596
        %v6605 = vadd.f32 %v6113, %v6598
        %v6606 = vld [vmem:[%s14] sm:$0xf]
        %v6608 = vlaneseq
        %v6609 = vshrl.u32 %v6608, 7
        %v6610 = vsub.s32 0, %v6609
        %v6611 = vrot.slane %v6606, %v6610
        %v6612 = vlaneseq
        %v6613 = vshrl.u32 %v6612, 7
        %v6614 = vsub.s32 1, %v6613
        %v6615 = vrot.slane %v6606, %v6614
        %v6616 = vlaneseq
        %v6617 = vshrl.u32 %v6616, 7
        %v6618 = vsub.s32 2, %v6617
        %v6619 = vrot.slane %v6606, %v6618
        %v6620 = vlaneseq
        %v6621 = vshrl.u32 %v6620, 7
        %v6622 = vsub.s32 3, %v6621
        %v6623 = vrot.slane %v6606, %v6622
        %v6628 = vadd.f32 %v6602, %v6611
        %v6629 = vadd.f32 %v6603, %v6615
        %v6630 = vadd.f32 %v6604, %v6619
        %v6631 = vadd.f32 %v6605, %v6623
        %v6632 = vmax.f32 %v6628, 0.0
        %v6633 = vmax.f32 %v6629, 0.0
        %v6634 = vmax.f32 %v6630, 0.0
        %v6635 = vmax.f32 %v6631, 0.0
        %v6636 = vrot.slane %v6632, 4
        %v6637 = vadd.f32 %v6632, %v6636
        %v6638 = vrot.slane %v6637, 2
        %v6639 = vadd.f32 %v6637, %v6638
        %v6640 = vrot.slane %v6639, 1
        %v6641 = vadd.f32 %v6639, %v6640
        %v6642 = vrot.slane %v6633, 4
        %v6643 = vadd.f32 %v6633, %v6642
        %v6644 = vrot.slane %v6643, 2
        %v6645 = vadd.f32 %v6643, %v6644
        %v6646 = vrot.slane %v6645, 1
        %v6647 = vadd.f32 %v6645, %v6646
        %v6648 = vrot.slane %v6634, 4
        %v6649 = vadd.f32 %v6634, %v6648
        %v6650 = vrot.slane %v6649, 2
        %v6651 = vadd.f32 %v6649, %v6650
        %v6652 = vrot.slane %v6651, 1
        %v6653 = vadd.f32 %v6651, %v6652
        %v6654 = vrot.slane %v6635, 4
        %v6655 = vadd.f32 %v6635, %v6654
        %v6656 = vrot.slane %v6655, 2
        %v6657 = vadd.f32 %v6655, %v6656
        %v6658 = vrot.slane %v6657, 1
        %v6659 = vadd.f32 %v6657, %v6658
        %v6660 = vpack.c.bf16 %v6641, %v6641
        %v6661 = vpack.c.bf16 %v6647, %v6647
        %v6662 = vpack.c.bf16 %v6653, %v6653
        %v6663 = vpack.c.bf16 %v6659, %v6659
        %v6664 = vld [vmem:[#allocation22] sm:$0xf]
        %v6665 = vld [vmem:[#allocation22 + $0x4] sm:$0xf]
        %v6666 = vld [vmem:[#allocation22 + $0x8] sm:$0xf]
        %v6667 = vld [vmem:[#allocation22 + $0xc] sm:$0xf]
        %v6668 = vld [vmem:[#allocation22 + $0x10] sm:$0xf]
        %v6669 = vld [vmem:[#allocation22 + $0x14] sm:$0xf]
        %v6670 = vld [vmem:[#allocation22 + $0x18] sm:$0xf]
        %v6671 = vld [vmem:[#allocation22 + $0x1c] sm:$0xf]
        %v6672 = vld [vmem:[#allocation22 + $0x20] sm:$0xf]
        %v6673 = vld [vmem:[#allocation22 + $0x24] sm:$0xf]
        %v6674 = vld [vmem:[#allocation22 + $0x28] sm:$0xf]
        %v6675 = vld [vmem:[#allocation22 + $0x2c] sm:$0xf]
        %v6676 = vld [vmem:[#allocation22 + $0x30] sm:$0xf]
        %v6677 = vld [vmem:[#allocation22 + $0x34] sm:$0xf]
        %v6678 = vld [vmem:[#allocation22 + $0x38] sm:$0xf]
        %v6679 = vld [vmem:[#allocation22 + $0x3c] sm:$0xf]
        %v6680 = vld [vmem:[#allocation22 + $0x40] sm:$0xf]
        %v6681 = vld [vmem:[#allocation22 + $0x44] sm:$0xf]
        %v6682 = vld [vmem:[#allocation22 + $0x48] sm:$0xf]
        %v6683 = vld [vmem:[#allocation22 + $0x4c] sm:$0xf]
        %v6684 = vld [vmem:[#allocation22 + $0x50] sm:$0xf]
        %v6685 = vld [vmem:[#allocation22 + $0x54] sm:$0xf]
        %v6686 = vld [vmem:[#allocation22 + $0x58] sm:$0xf]
        %v6687 = vld [vmem:[#allocation22 + $0x5c] sm:$0xf]
        %v6688 = vld [vmem:[#allocation22 + $0x60] sm:$0xf]
        %v6689 = vld [vmem:[#allocation22 + $0x64] sm:$0xf]
        %v6690 = vld [vmem:[#allocation22 + $0x68] sm:$0xf]
        %v6691 = vld [vmem:[#allocation22 + $0x6c] sm:$0xf]
        %v6692 = vld [vmem:[#allocation22 + $0x70] sm:$0xf]
        %v6693 = vld [vmem:[#allocation22 + $0x74] sm:$0xf]
        %v6694 = vld [vmem:[#allocation22 + $0x78] sm:$0xf]
        %v6695 = vld [vmem:[#allocation22 + $0x7c] sm:$0xf]
        %v6696 = vld [vmem:[#allocation22 + $0x80] sm:$0xf]
        %v6697 = vld [vmem:[#allocation22 + $0x84] sm:$0xf]
        %v6698 = vld [vmem:[#allocation22 + $0x88] sm:$0xf]
        %v6699 = vld [vmem:[#allocation22 + $0x8c] sm:$0xf]
        %v6700 = vld [vmem:[#allocation22 + $0x90] sm:$0xf]
        %v6701 = vld [vmem:[#allocation22 + $0x94] sm:$0xf]
        %v6702 = vld [vmem:[#allocation22 + $0x98] sm:$0xf]
        %v6703 = vld [vmem:[#allocation22 + $0x9c] sm:$0xf]
        %v6704 = vld [vmem:[#allocation22 + $0xa0] sm:$0xf]
        %v6705 = vld [vmem:[#allocation22 + $0xa4] sm:$0xf]
        %v6706 = vld [vmem:[#allocation22 + $0xa8] sm:$0xf]
        %v6707 = vld [vmem:[#allocation22 + $0xac] sm:$0xf]
        %v6708 = vld [vmem:[#allocation22 + $0xb0] sm:$0xf]
        %v6709 = vld [vmem:[#allocation22 + $0xb4] sm:$0xf]
        %v6710 = vld [vmem:[#allocation22 + $0xb8] sm:$0xf]
        %v6711 = vld [vmem:[#allocation22 + $0xbc] sm:$0xf]
        %v6712 = vld [vmem:[#allocation22 + $0xc0] sm:$0xf]
        %v6713 = vld [vmem:[#allocation22 + $0xc4] sm:$0xf]
        %v6714 = vld [vmem:[#allocation22 + $0xc8] sm:$0xf]
        %v6715 = vld [vmem:[#allocation22 + $0xcc] sm:$0xf]
        %v6716 = vld [vmem:[#allocation22 + $0xd0] sm:$0xf]
        %v6717 = vld [vmem:[#allocation22 + $0xd4] sm:$0xf]
        %v6718 = vld [vmem:[#allocation22 + $0xd8] sm:$0xf]
        %v6719 = vld [vmem:[#allocation22 + $0xdc] sm:$0xf]
        %v6720 = vld [vmem:[#allocation22 + $0xe0] sm:$0xf]
        %v6721 = vld [vmem:[#allocation22 + $0xe4] sm:$0xf]
        %v6722 = vld [vmem:[#allocation22 + $0xe8] sm:$0xf]
        %v6723 = vld [vmem:[#allocation22 + $0xec] sm:$0xf]
        %v6724 = vld [vmem:[#allocation22 + $0xf0] sm:$0xf]
        %v6725 = vld [vmem:[#allocation22 + $0xf4] sm:$0xf]
        %v6726 = vld [vmem:[#allocation22 + $0xf8] sm:$0xf]
        %v6727 = vld [vmem:[#allocation22 + $0xfc] sm:$0xf]
        %v6728 = vld [vmem:[%s20] sm:$0x1]
        %v6793 = vunpack.c.l.b16 %v6664
        %v6794 = vunpack.c.l.b16 %v6665
        %v6795 = vunpack.c.l.b16 %v6666
        %v6796 = vunpack.c.l.b16 %v6667
        %v6797 = vunpack.c.l.b16 %v6668
        %v6798 = vunpack.c.l.b16 %v6669
        %v6799 = vunpack.c.l.b16 %v6670
        %v6800 = vunpack.c.l.b16 %v6671
        %v6801 = vunpack.c.l.b16 %v6672
        %v6802 = vunpack.c.l.b16 %v6673
        %v6803 = vunpack.c.l.b16 %v6674
        %v6804 = vunpack.c.l.b16 %v6675
        %v6805 = vunpack.c.l.b16 %v6676
        %v6806 = vunpack.c.l.b16 %v6677
        %v6807 = vunpack.c.l.b16 %v6678
        %v6808 = vunpack.c.l.b16 %v6679
        %v6809 = vunpack.c.l.b16 %v6680
        %v6810 = vunpack.c.l.b16 %v6681
        %v6811 = vunpack.c.l.b16 %v6682
        %v6812 = vunpack.c.l.b16 %v6683
        %v6813 = vunpack.c.l.b16 %v6684
        %v6814 = vunpack.c.l.b16 %v6685
        %v6815 = vunpack.c.l.b16 %v6686
        %v6816 = vunpack.c.l.b16 %v6687
        %v6817 = vunpack.c.l.b16 %v6688
        %v6818 = vunpack.c.l.b16 %v6689
        %v6819 = vunpack.c.l.b16 %v6690
        %v6820 = vunpack.c.l.b16 %v6691
        %v6821 = vunpack.c.l.b16 %v6692
        %v6822 = vunpack.c.l.b16 %v6693
        %v6823 = vunpack.c.l.b16 %v6694
        %v6824 = vunpack.c.l.b16 %v6695
        %v6825 = vunpack.c.l.b16 %v6696
        %v6826 = vunpack.c.l.b16 %v6697
        %v6827 = vunpack.c.l.b16 %v6698
        %v6828 = vunpack.c.l.b16 %v6699
        %v6829 = vunpack.c.l.b16 %v6700
        %v6830 = vunpack.c.l.b16 %v6701
        %v6831 = vunpack.c.l.b16 %v6702
        %v6832 = vunpack.c.l.b16 %v6703
        %v6833 = vunpack.c.l.b16 %v6704
        %v6834 = vunpack.c.l.b16 %v6705
        %v6835 = vunpack.c.l.b16 %v6706
        %v6836 = vunpack.c.l.b16 %v6707
        %v6837 = vunpack.c.l.b16 %v6708
        %v6838 = vunpack.c.l.b16 %v6709
        %v6839 = vunpack.c.l.b16 %v6710
        %v6840 = vunpack.c.l.b16 %v6711
        %v6841 = vunpack.c.l.b16 %v6712
        %v6842 = vunpack.c.l.b16 %v6713
        %v6843 = vunpack.c.l.b16 %v6714
        %v6844 = vunpack.c.l.b16 %v6715
        %v6845 = vunpack.c.l.b16 %v6716
        %v6846 = vunpack.c.l.b16 %v6717
        %v6847 = vunpack.c.l.b16 %v6718
        %v6848 = vunpack.c.l.b16 %v6719
        %v6849 = vunpack.c.l.b16 %v6720
        %v6850 = vunpack.c.l.b16 %v6721
        %v6851 = vunpack.c.l.b16 %v6722
        %v6852 = vunpack.c.l.b16 %v6723
        %v6853 = vunpack.c.l.b16 %v6724
        %v6854 = vunpack.c.l.b16 %v6725
        %v6855 = vunpack.c.l.b16 %v6726
        %v6856 = vunpack.c.l.b16 %v6727
        %v6857 = vpack.c.b16 %v6794, %v6793
        %v6858 = vpack.c.b16 %v6796, %v6795
        %v6859 = vpack.c.b16 %v6798, %v6797
        %v6860 = vpack.c.b16 %v6800, %v6799
        %v6861 = vpack.c.b16 %v6802, %v6801
        %v6862 = vpack.c.b16 %v6804, %v6803
        %v6863 = vpack.c.b16 %v6806, %v6805
        %v6864 = vpack.c.b16 %v6808, %v6807
        %v6865 = vpack.c.b16 %v6810, %v6809
        %v6866 = vpack.c.b16 %v6812, %v6811
        %v6867 = vpack.c.b16 %v6814, %v6813
        %v6868 = vpack.c.b16 %v6816, %v6815
        %v6869 = vpack.c.b16 %v6818, %v6817
        %v6870 = vpack.c.b16 %v6820, %v6819
        %v6871 = vpack.c.b16 %v6822, %v6821
        %v6872 = vpack.c.b16 %v6824, %v6823
        %v6873 = vpack.c.b16 %v6826, %v6825
        %v6874 = vpack.c.b16 %v6828, %v6827
        %v6875 = vpack.c.b16 %v6830, %v6829
        %v6876 = vpack.c.b16 %v6832, %v6831
        %v6877 = vpack.c.b16 %v6834, %v6833
        %v6878 = vpack.c.b16 %v6836, %v6835
        %v6879 = vpack.c.b16 %v6838, %v6837
        %v6880 = vpack.c.b16 %v6840, %v6839
        %v6881 = vpack.c.b16 %v6842, %v6841
        %v6882 = vpack.c.b16 %v6844, %v6843
        %v6883 = vpack.c.b16 %v6846, %v6845
        %v6884 = vpack.c.b16 %v6848, %v6847
        %v6885 = vpack.c.b16 %v6850, %v6849
        %v6886 = vpack.c.b16 %v6852, %v6851
        %v6887 = vpack.c.b16 %v6854, %v6853
        %v6888 = vpack.c.b16 %v6856, %v6855
        %6921 = vmatprep.subr.bf16.mxu0 0
        %6922 = vmatpush1.bf16.msra.mxu0 %v6857
        %6923 = vmatprep.subr.bf16.mxu0 0
        %6924 = vmatpush1.bf16.msra.mxu0 %v6858
        %6925 = vmatprep.subr.bf16.mxu0 0
        %6926 = vmatpush1.bf16.msra.mxu0 %v6859
        %6927 = vmatprep.subr.bf16.mxu0 0
        %6928 = vmatpush1.bf16.msra.mxu0 %v6860
        %6929 = vmatprep.subr.bf16.mxu0 0
        %6930 = vmatpush1.bf16.msra.mxu0 %v6861
        %6931 = vmatprep.subr.bf16.mxu0 0
        %6932 = vmatpush1.bf16.msra.mxu0 %v6862
        %6933 = vmatprep.subr.bf16.mxu0 0
        %6934 = vmatpush1.bf16.msra.mxu0 %v6863
        %6935 = vmatprep.subr.bf16.mxu0 0
        %6936 = vmatpush1.bf16.msra.mxu0 %v6864
        %6937 = vmatprep.subr.bf16.mxu0 0
        %6938 = vmatpush1.bf16.msra.mxu0 %v6865
        %6939 = vmatprep.subr.bf16.mxu0 0
        %6940 = vmatpush1.bf16.msra.mxu0 %v6866
        %6941 = vmatprep.subr.bf16.mxu0 0
        %6942 = vmatpush1.bf16.msra.mxu0 %v6867
        %6943 = vmatprep.subr.bf16.mxu0 0
        %6944 = vmatpush1.bf16.msra.mxu0 %v6868
        %6945 = vmatprep.subr.bf16.mxu0 0
        %6946 = vmatpush1.bf16.msra.mxu0 %v6869
        %6947 = vmatprep.subr.bf16.mxu0 0
        %6948 = vmatpush1.bf16.msra.mxu0 %v6870
        %6949 = vmatprep.subr.bf16.mxu0 0
        %6950 = vmatpush1.bf16.msra.mxu0 %v6871
        %6951 = vmatprep.subr.bf16.mxu0 0
        %6952 = vmatpush1.bf16.msra.mxu0 %v6872
        %6953 = vmatprep.mubr.bf16.mxu0 %v6661
        %6954 = vmatmul.mubr.bf16.gmra.mrb[0].mxu0 %v6660
        %v6955 = vpop.f32.mrb[0].mxu0
        %v6956 = vadd.f32 %v6728, %v6955
        %v6957 = vpop.f32.mrb[0].mxu0
        %v6958 = vpop.f32.mrb[0].mxu0
        %v6959 = vpop.f32.mrb[0].mxu0
        %6960 = vdwg.mxu0
        %6961 = vmatprep.subr.bf16.mxu0 0
        %6962 = vmatpush1.bf16.msra.mxu0 %v6873
        %6963 = vmatprep.subr.bf16.mxu0 0
        %6964 = vmatpush1.bf16.msra.mxu0 %v6874
        %6965 = vmatprep.subr.bf16.mxu0 0
        %6966 = vmatpush1.bf16.msra.mxu0 %v6875
        %6967 = vmatprep.subr.bf16.mxu0 0
        %6968 = vmatpush1.bf16.msra.mxu0 %v6876
        %6969 = vmatprep.subr.bf16.mxu0 0
        %6970 = vmatpush1.bf16.msra.mxu0 %v6877
        %6971 = vmatprep.subr.bf16.mxu0 0
        %6972 = vmatpush1.bf16.msra.mxu0 %v6878
        %6973 = vmatprep.subr.bf16.mxu0 0
        %6974 = vmatpush1.bf16.msra.mxu0 %v6879
        %6975 = vmatprep.subr.bf16.mxu0 0
        %6976 = vmatpush1.bf16.msra.mxu0 %v6880
        %6977 = vmatprep.subr.bf16.mxu0 0
        %6978 = vmatpush1.bf16.msra.mxu0 %v6881
        %6979 = vmatprep.subr.bf16.mxu0 0
        %6980 = vmatpush1.bf16.msra.mxu0 %v6882
        %6981 = vmatprep.subr.bf16.mxu0 0
        %6982 = vmatpush1.bf16.msra.mxu0 %v6883
        %6983 = vmatprep.subr.bf16.mxu0 0
        %6984 = vmatpush1.bf16.msra.mxu0 %v6884
        %6985 = vmatprep.subr.bf16.mxu0 0
        %6986 = vmatpush1.bf16.msra.mxu0 %v6885
        %6987 = vmatprep.subr.bf16.mxu0 0
        %6988 = vmatpush1.bf16.msra.mxu0 %v6886
        %6989 = vmatprep.subr.bf16.mxu0 0
        %6990 = vmatpush1.bf16.msra.mxu0 %v6887
        %6991 = vmatprep.subr.bf16.mxu0 0
        %6992 = vmatpush1.bf16.msra.mxu0 %v6888
        %6993 = vmatprep.mubr.bf16.mxu0 %v6663
        %6994 = vmatmul.mubr.bf16.gmra.mrb[0].mxu0 %v6662
        %v6995 = vpop.f32.mrb[0].mxu0
        %v6996 = vadd.f32 %v6956, %v6995
        %v6997 = vpop.f32.mrb[0].mxu0
        %v6998 = vpop.f32.mrb[0].mxu0
        %v6999 = vpop.f32.mrb[0].mxu0
        %7000 = vdwg.mxu0
        %7001 = vst [vmem:[%s779] sm:$0x1] %v6996
        %s7002 = sand.u32 %s494, 1
        %s7003 = scalar_lea.sflag [#allocation10], %s7002
        %s7004 = sand.u32 %s494, 1
        %s7005 = scalar_lea.vmem [#allocation23], %s7004
        // Predicated region
        $region141: #{forward.1} parent=103 // pred_check
          %p7006 = pneg %p504
        $region142: #{forward.1} parent=103 // pred_check_branch
          %7008 = sbr.rel (%p7006) target = $region144
        $region143: #{forward.1} parent=103 // pred_region
          %s7010 = ssub.s32 16, 16
          %7011 = vsyncadd %s7003, %s7010
          %s7012 = smul.addr %s40, 16
          %s7013 = scalar_lea.hbm %s21, %s7012
          %s7015 = sshll.u32 %s7005, 4
          %s7016 = int_to_ptr.vmem [resolvable:$true] %s7015
          %7018 = dma.vmem_to_hbm [thread:$0]  %s7016, 16, %s7013, %s7003
        $region144: #{forward.1} parent=103 // pred_fallthru
          _
      $region104: #{forward.1} parent=5 // pred_fallthru
        _
      %p7019 = scmp.le.s32.totalorder 2, %s35
      // Predicated region
      $region145: #{forward.1} parent=5 // pred_check
        %p7020 = pneg %p7019
      $region146: #{forward.1} parent=5 // pred_check_branch
        %7022 = sbr.rel (%p7020) target = $region148
      $region147: #{forward.1} parent=5 // pred_region
        %s7023 = ssub.s32 %s35, 2
        // Predicated region
        $region149: #{forward.1} parent=147 // pred_check
          %p7024 = pneg %p510
        $region150: #{forward.1} parent=147 // pred_check_branch
          %7026 = sbr.rel (%p7024) target = $region152
        $region151: #{forward.1} parent=147 // pred_region
          %s7027 = sand.u32 %s495, 1
          %s7028 = scalar_lea.sflag [#allocation10], %s7027
          %s7029 = sand.u32 %s495, 1
          %s7030 = scalar_lea.vmem [#allocation23], %s7029
          %7031 = dma.done %s7028, 16
        $region152: #{forward.1} parent=147 // pred_fallthru
          _
      $region148: #{forward.1} parent=5 // pred_fallthru
        _
    $region6: #{forward.1} parent=1 // loop_footer
      %s39 = sadd.s32 1, %s35
    $region7: #{forward.1} parent=1 // loop_footer_branch
      %34 = sbr.rel target = $region3
    $region8: #{forward.1} parent=1 // loop_exit
      _
    %7032 = vsyncpa [#allocation9], 1
    %s7033 = scalar_lea.sflag [#allocation9], 1
    %7034 = vsyncpa %s7033, 1
    %7035 = vsyncpa [#allocation12], 1
    %7036 = vsyncpa [#allocation15], 1
    %7037 = vsyncpa [#allocation18], 1
    %7038 = vsyncpa [#allocation21], 1
    %7039 = vsyncpa [#allocation10], 1
    %s7040 = scalar_lea.sflag [#allocation10], 1
    %7041 = vsyncpa %s7040, 1

</llo_original>
